<compile_context>
chip_gen: v7x
topology: tpu7x:2x2x1
jax: 0.10.0
libtpu: 0.0.40
codegen_flags: <defaults>
</compile_context>

<pallas_src>
import functools

import jax
import jax.numpy as jnp
from jax.experimental import pallas as pl
from jax.experimental.pallas import tpu as pltpu


# ------------------------------ Pallas kernels --------------------------------
def _conv_stage_kernel(p_ref, w_ref, b_ref, o_ref, *, activation):
    # p_ref: (TILE_M, K) bf16 patches, w_ref: (K, Cp) bf16 (BN folded), b_ref: (1, Cp) f32.
    y = jnp.dot(p_ref[...], w_ref[...], preferred_element_type=jnp.float32) + b_ref[...]
    if activation == "relu":
        y = jnp.maximum(y, 0.0)
    elif activation == "tanh":
        y = jnp.tanh(y)
    o_ref[...] = y.astype(o_ref.dtype)


def _conv_stage_res_kernel(p_ref, w_ref, b_ref, r_ref, o_ref, *, activation, res_after_act):
    y = jnp.dot(p_ref[...], w_ref[...], preferred_element_type=jnp.float32) + b_ref[...]
    r = r_ref[...].astype(jnp.float32)
    if res_after_act:
        # U-Net skip fusion: act(conv_bn(x)) + skip.
        if activation == "relu":
            y = jnp.maximum(y, 0.0)
        elif activation == "tanh":
            y = jnp.tanh(y)
        y = y + r
    else:
        # ResBlock: act(conv_bn(x) + skip).
        y = y + r
        if activation == "relu":
            y = jnp.maximum(y, 0.0)
        elif activation == "tanh":
            y = jnp.tanh(y)
    o_ref[...] = y.astype(o_ref.dtype)


def _round_up(x, m):
    return (x + m - 1) // m * m


def _pick_tile_m(m):
    # bf16 patches pack 16 rows per vreg -> tile_m multiple of 16; for medium/large M pick
    # ~M/2 (128-granular, capped at 1024) so the parallel grid has >=2 tiles for dual-TC v7x.
    if m <= 256:
        return _round_up(max(m, 16), 16)
    return min(1024, _round_up((m + 1) // 2, 128))


def _fused_matmul(patches, w, b, *, residual=None, activation="relu", residual_mode="pre_act"):
    """act((patches @ w) + b [+/res]) -> bf16 (M, Cp); M-tiled, lane-dense Cp output."""
    M, K = patches.shape
    Cp = w.shape[1]
    tile_m = _pick_tile_m(M)
    Mp = _round_up(M, tile_m)
    n_tiles = Mp // tile_m

    p = jnp.pad(patches, ((0, Mp - M), (0, 0))) if Mp != M else patches

    in_specs = [
        pl.BlockSpec((tile_m, K), lambda i: (i, 0)),   # patch tile streams over M
        pl.BlockSpec((K, Cp), lambda i: (0, 0)),       # weights resident across the grid
        pl.BlockSpec((1, Cp), lambda i: (0, 0)),       # bias resident
    ]
    args = [p, w, b]
    if residual is None:
        kernel = functools.partial(_conv_stage_kernel, activation=activation)
    else:
        kernel = functools.partial(_conv_stage_res_kernel, activation=activation,
                                   res_after_act=(residual_mode == "post_act"))
        r = jnp.pad(residual, ((0, Mp - M), (0, 0))) if Mp != M else residual
        in_specs.append(pl.BlockSpec((tile_m, Cp), lambda i: (i, 0)))
        args.append(r)

    bytes_accessed = (Mp * K * 2 + K * Cp * 2 + Cp * 4 + Mp * Cp * 2
                      + (Mp * Cp * 2 if residual is not None else 0))
    cost = pl.CostEstimate(
        flops=2 * Mp * K * Cp,
        transcendentals=(Mp * Cp if activation == "tanh" else 0),
        bytes_accessed=bytes_accessed,
    )

    out = pl.pallas_call(
        kernel,
        out_shape=jax.ShapeDtypeStruct((Mp, Cp), jnp.bfloat16),
        grid=(n_tiles,),
        in_specs=in_specs,
        out_specs=pl.BlockSpec((tile_m, Cp), lambda i: (i, 0)),
        compiler_params=pltpu.CompilerParams(dimension_semantics=("parallel",)),
        cost_estimate=cost,
    )(*args)
    return out if Mp == M else out[:M]


# -------------------------------- JAX glue -------------------------------------
def _im2col_nhwc(x, cin, stride):
    """3x3 / pad=1 im2col on the first `cin` channels of a (possibly lane-padded) NHWC map."""
    N, H, W, _ = x.shape
    Ho = (H + 2 - 3) // stride + 1
    Wo = (W + 2 - 3) // stride + 1
    xp = jnp.pad(x[..., :cin], ((0, 0), (1, 1), (1, 1), (0, 0))).astype(jnp.bfloat16)
    taps = [xp[:, kh:kh + stride * Ho:stride, kw:kw + stride * Wo:stride, :]
            for kh in range(3) for kw in range(3)]
    return jnp.concatenate(taps, axis=-1), Ho, Wo


def _im2col_upsample2x_nhwc(x, cin):
    """im2col of nearest-2x-upsample(x) for a 3x3/stride-1/pad-1 conv, without ever
    materializing the 4x-larger upsampled feature map (pure index arithmetic gather)."""
    N, H, W, _ = x.shape
    Ho, Wo = 2 * H, 2 * W
    xp = jnp.pad(x[..., :cin], ((0, 0), (1, 1), (1, 1), (0, 0))).astype(jnp.bfloat16)

    def src_idx(out_size, in_size, k):
        r = jnp.arange(out_size) + (k - 1)                  # coords on the upsampled grid
        return jnp.where(r < 0, 0,
               jnp.where(r >= out_size, in_size + 1, r // 2 + 1))   # index into padded x

    taps = []
    for kh in range(3):
        hs = src_idx(Ho, H, kh)
        for kw in range(3):
            ws = src_idx(Wo, W, kw)
            taps.append(xp[:, hs][:, :, ws])
    return jnp.concatenate(taps, axis=-1), Ho, Wo


def conv_stage(x, prep, *, stride=1, activation="relu",
               residual=None, residual_mode="pre_act", upsample2x=False):
    """One fused Conv2d(3x3, pad=1)[+BN]+act[+residual] stage on a lane-padded NHWC map."""
    N = x.shape[0]
    w, b = prep["w"], prep["b"]
    K, Cp = w.shape
    cin = K // 9                                    # real input channels (static from shape)

    if upsample2x:
        patches, Ho, Wo = _im2col_upsample2x_nhwc(x, cin)
    else:
        patches, Ho, Wo = _im2col_nhwc(x, cin, stride)
    M = N * Ho * Wo
    patches = patches.reshape(M, K)

    res = None
    if residual is not None:
        assert residual.shape[-1] == Cp
        res = residual.reshape(M, Cp)

    out = _fused_matmul(patches, w, b, residual=res, activation=activation,
                        residual_mode=residual_mode)
    return out.reshape(N, Ho, Wo, Cp)


def _nearest_resize(x, ho, wo):
    n, h, w, c = x.shape
    hi = (jnp.arange(ho) * h) // ho
    wi = (jnp.arange(wo) * w) // wo
    return x[:, hi][:, :, wi]


# ------------------------------ Model blocks -----------------------------------
def down_block_fwd(x, p):
    x = conv_stage(x, p["conv1"], stride=2)
    x = conv_stage(x, p["conv2"], stride=1)
    return x


def res_block_fwd(x, p):
    # TODO(synk): fuse conv1+conv2 (weights resident in VMEM) — launch-bound at small spatial.
    y = conv_stage(x, p["conv1"], stride=1)
    return conv_stage(y, p["conv2"], stride=1, residual=x, residual_mode="pre_act")


def up_block_fwd(x, p, *, skip=None, is_last=False):
    y = conv_stage(x, p["conv1"], stride=1)
    act = "tanh" if is_last else "relu"
    if skip is not None:
        th, tw = 2 * y.shape[1], 2 * y.shape[2]
        if skip.shape[1:3] != (th, tw):
            skip = _nearest_resize(skip, th, tw)
    # 2x nearest upsample folded into the patch gather; U-Net skip add fused into the epilogue.
    return conv_stage(y, p["conv2"], activation=act, residual=skip,
                      residual_mode="post_act", upsample2x=True)


@jax.jit
def simple_generator(x_nchw, prepped):
    x = jnp.transpose(x_nchw, (0, 2, 3, 1)).astype(jnp.bfloat16)   # NCHW -> NHWC
    d1 = down_block_fwd(x, prepped["down1"])
    d2 = down_block_fwd(d1, prepped["down2"])
    d3 = down_block_fwd(d2, prepped["down3"])
    d4 = down_block_fwd(d3, prepped["down4"])
    r = d4
    for bp in prepped["res_blocks"]:
        r = res_block_fwd(r, bp)
    u1 = up_block_fwd(r,  prepped["up1"], skip=d3)   # == UpBlock1(r) + d3 (add fused)
    u2 = up_block_fwd(u1, prepped["up2"], skip=d2)   # == UpBlock2(u1+d3) + d2
    u3 = up_block_fwd(u2, prepped["up3"], skip=d1)   # == UpBlock3(u2+d2) + d1
    u4 = up_block_fwd(u3, prepped["up4"], is_last=True)
    out = u4[..., :3].astype(jnp.float32)            # drop lane padding on the final layer only
    return jnp.transpose(out, (0, 3, 1, 2))          # NHWC -> NCHW


# --------------------------- Parameter preparation ------------------------------
def _prep_conv_stage(conv, bn, eps=1e-5):
    """Fold eval BN into weights, OIHW -> (9*Cin, Cout) (tap-major/channel-minor, matching the
    im2col tap order), pad Cout to a 128-lane multiple, cast weights bf16 / bias f32."""
    w_oihw, conv_b = conv["w"], conv["b"]
    cout, cin = int(w_oihw.shape[0]), int(w_oihw.shape[1])
    w_mat = jnp.transpose(w_oihw, (2, 3, 1, 0)).reshape(9 * cin, cout)
    if bn is not None:
        scale = bn["gamma"] * jax.lax.rsqrt(bn["var"] + eps)
        bias = bn["beta"] + (conv_b - bn["mean"]) * scale
        w_mat = w_mat * scale[None, :]
    else:
        bias = conv_b
    cp = _round_up(cout, 128)
    w_mat = jnp.pad(w_mat, ((0, 0), (0, cp - cout))).astype(jnp.bfloat16)
    bias = jnp.pad(bias, (0, cp - cout)).astype(jnp.float32).reshape(1, cp)
    return {"w": w_mat, "b": bias}


def prepare_generator_params(params, eps=1e-5):
    """Run once outside the jitted forward: all per-layer weight prep hoisted here."""
    def two(p):
        return {"conv1": _prep_conv_stage(p["conv1"], p["bn1"], eps),
                "conv2": _prep_conv_stage(p["conv2"], p["bn2"], eps)}
    return {
        "down1": two(params["down1"]), "down2": two(params["down2"]),
        "down3": two(params["down3"]), "down4": two(params["down4"]),
        "res_blocks": [two(bp) for bp in params["res_blocks"]],
        "up1": two(params["up1"]), "up2": two(params["up2"]), "up3": two(params["up3"]),
        "up4": {"conv1": _prep_conv_stage(params["up4"]["conv1"], params["up4"]["bn1"], eps),
                "conv2": _prep_conv_stage(params["up4"]["conv2"], None, eps)},  # last: no BN
    }


# ------------------------------ Parameter init ----------------------------------
def _conv_params(key, cin, cout):
    kw, kb = jax.random.split(key)
    w = (1.0 / jnp.sqrt(9.0 * cin)) * jax.random.normal(kw, (cout, cin, 3, 3), jnp.float32)
    b = 0.05 * jax.random.normal(kb, (cout,), jnp.float32)
    return {"w": w, "b": b}


def _bn_params(c):
    return {"gamma": jnp.ones((c,), jnp.float32),
            "beta": jnp.zeros((c,), jnp.float32),
            "mean": 0.01 * jnp.arange(c, dtype=jnp.float32),
            "var": 1.0 + 0.01 * jnp.arange(c, dtype=jnp.float32)}


def _down_block_params(key, cin, cout):
    k1, k2 = jax.random.split(key)
    return {"conv1": _conv_params(k1, cin, cout), "bn1": _bn_params(cout),
            "conv2": _conv_params(k2, cout, cout), "bn2": _bn_params(cout)}


def _res_block_params(key, c):
    k1, k2 = jax.random.split(key)
    return {"conv1": _conv_params(k1, c, c), "bn1": _bn_params(c),
            "conv2": _conv_params(k2, c, c), "bn2": _bn_params(c)}


def _up_block_params(key, cin, cout):
    k1, k2 = jax.random.split(key)
    return {"conv1": _conv_params(k1, cin, cin), "bn1": _bn_params(cin),
            "conv2": _conv_params(k2, cin, cout), "bn2": _bn_params(cout)}


def init_generator_params(key, num_channel=32, num_blocks=4):
    ks = jax.random.split(key, 8 + num_blocks)
    nc = num_channel
    return {
        "down1": _down_block_params(ks[0], 3, nc),
        "down2": _down_block_params(ks[1], nc, nc * 2),
        "down3": _down_block_params(ks[2], nc * 2, nc * 3),
        "down4": _down_block_params(ks[3], nc * 3, nc * 4),
        "res_blocks": [_res_block_params(ks[4 + i], nc * 4) for i in range(num_blocks)],
        "up1": _up_block_params(ks[4 + num_blocks], nc * 4, nc * 3),
        "up2": _up_block_params(ks[5 + num_blocks], nc * 3, nc * 2),
        "up3": _up_block_params(ks[6 + num_blocks], nc * 2, nc),
        "up4": _up_block_params(ks[7 + num_blocks], nc, 3),
    }


if __name__ == "__main__":
    key = jax.random.PRNGKey(0)
    kx, kp = jax.random.split(key)

    N, C, H, W = 2, 3, 16, 16
    num_channel, num_blocks = 32, 4
    x = jax.random.normal(kx, (N, C, H, W), jnp.float32)
    params = init_generator_params(kp, num_channel, num_blocks)
    prepped = prepare_generator_params(params)     # one-time weight prep (BN fold, pad, bf16)

    out = simple_generator(x, prepped)
    out = jax.block_until_ready(out)

    assert out.shape == (N, 3, H, W), out.shape
    assert out.dtype == jnp.float32
    assert bool(jnp.all(jnp.isfinite(out)))
    assert bool(jnp.all(jnp.abs(out) <= 1.0))      # final Tanh activation
    print("KERNEL_OK")
</pallas_src>

<mosaic_0001>
module attributes {stable_mosaic.version = 11 : i64} {
  func.func @_conv_stage_kernel(%arg0: i32, %arg1: memref<128x27xbf16, #tpu.memory_space<vmem>>, %arg2: memref<27x128xbf16, #tpu.memory_space<vmem>>, %arg3: memref<1x128xf32, #tpu.memory_space<vmem>>, %arg4: memref<128x128xbf16, #tpu.memory_space<vmem>>) attributes {dimension_semantics = [#tpu.dimension_semantics<parallel>], iteration_bounds = array<i64: 1>, scalar_prefetch = 0 : i64, scratch_operands = 0 : i64, tpu.core_type = #tpu.core_type<tc>, window_params = [{transform_indices = @transform_0, window_bounds = array<i64: 128, 27>}, {pipeline_mode = #tpu.pipeline_mode<synchronous>, transform_indices = @transform_1, window_bounds = array<i64: 27, 128>}, {pipeline_mode = #tpu.pipeline_mode<synchronous>, transform_indices = @transform_2, window_bounds = array<i64: 1, 128>}, {transform_indices = @transform_3, window_bounds = array<i64: 128, 128>}]} {
    %c0 = arith.constant 0 : index
    %c0_0 = arith.constant 0 : index
    %0 = vector.load %arg1[%c0, %c0_0] : memref<128x27xbf16, #tpu.memory_space<vmem>>, vector<128x27xbf16>
    %c0_1 = arith.constant 0 : index
    %c0_2 = arith.constant 0 : index
    %1 = vector.load %arg2[%c0_1, %c0_2] : memref<27x128xbf16, #tpu.memory_space<vmem>>, vector<27x128xbf16>
    %cst = arith.constant dense<0.000000e+00> : vector<128x128xf32>
    %2 = tpu.matmul %0, %1, %cst {dimension_numbers = #tpu.dot_dimension_numbers<[1], [0], [0], [1], [0, 0, 1, 1], [], []>} : vector<128x27xbf16>, vector<27x128xbf16>, vector<128x128xf32> -> vector<128x128xf32>
    %c0_3 = arith.constant 0 : index
    %c0_4 = arith.constant 0 : index
    %3 = vector.load %arg3[%c0_3, %c0_4] : memref<1x128xf32, #tpu.memory_space<vmem>>, vector<1x128xf32>
    %4 = vector.broadcast %3 : vector<1x128xf32> to vector<128x128xf32>
    %5 = arith.addf %2, %4 : vector<128x128xf32>
    %cst_5 = arith.constant 0.000000e+00 : f32
    %6 = vector.broadcast %cst_5 : f32 to vector<128x128xf32>
    %7 = arith.maximumf %5, %6 : vector<128x128xf32>
    %8 = arith.truncf %7 : vector<128x128xf32> to vector<128x128xbf16>
    %c0_6 = arith.constant 0 : index
    %c0_7 = arith.constant 0 : index
    %9 = vector.load %arg4[%c0_6, %c0_7] : memref<128x128xbf16, #tpu.memory_space<vmem>>, vector<128x128xbf16>
    tpu.vector_store %arg4[%c0_6, %c0_7], %8 {strides = array<i32>} : memref<128x128xbf16, #tpu.memory_space<vmem>>, vector<128x128xbf16>,
    return
  }
  func.func @transform_0(%arg0: i32) -> (i32, i32) {
    %c0_i32 = arith.constant 0 : i32
    %c0_i32_0 = arith.constant 0 : i32
    return %arg0, %c0_i32 : i32, i32
  }
  func.func @transform_1(%arg0: i32) -> (i32, i32) {
    %c0_i32 = arith.constant 0 : i32
    %c0_i32_0 = arith.constant 0 : i32
    %c0_i32_1 = arith.constant 0 : i32
    return %c0_i32, %c0_i32_0 : i32, i32
  }
  func.func @transform_2(%arg0: i32) -> (i32, i32) {
    %c0_i32 = arith.constant 0 : i32
    %c0_i32_0 = arith.constant 0 : i32
    %c0_i32_1 = arith.constant 0 : i32
    return %c0_i32, %c0_i32_0 : i32, i32
  }
  func.func @transform_3(%arg0: i32) -> (i32, i32) {
    %c0_i32 = arith.constant 0 : i32
    %c0_i32_0 = arith.constant 0 : i32
    return %arg0, %c0_i32 : i32, i32
  }
}

module attributes {stable_mosaic.version = 11 : i64} {
  func.func @_conv_stage_kernel(%arg0: i32, %arg1: memref<128x288xbf16, #tpu.memory_space<vmem>>, %arg2: memref<288x128xbf16, #tpu.memory_space<vmem>>, %arg3: memref<1x128xf32, #tpu.memory_space<vmem>>, %arg4: memref<128x128xbf16, #tpu.memory_space<vmem>>) attributes {dimension_semantics = [#tpu.dimension_semantics<parallel>], iteration_bounds = array<i64: 1>, scalar_prefetch = 0 : i64, scratch_operands = 0 : i64, tpu.core_type = #tpu.core_type<tc>, window_params = [{transform_indices = @transform_0, window_bounds = array<i64: 128, 288>}, {pipeline_mode = #tpu.pipeline_mode<synchronous>, transform_indices = @transform_1, window_bounds = array<i64: 288, 128>}, {pipeline_mode = #tpu.pipeline_mode<synchronous>, transform_indices = @transform_2, window_bounds = array<i64: 1, 128>}, {transform_indices = @transform_3, window_bounds = array<i64: 128, 128>}]} {
    %c0 = arith.constant 0 : index
    %c0_0 = arith.constant 0 : index
    %0 = vector.load %arg1[%c0, %c0_0] : memref<128x288xbf16, #tpu.memory_space<vmem>>, vector<128x288xbf16>
    %c0_1 = arith.constant 0 : index
    %c0_2 = arith.constant 0 : index
    %1 = vector.load %arg2[%c0_1, %c0_2] : memref<288x128xbf16, #tpu.memory_space<vmem>>, vector<288x128xbf16>
    %cst = arith.constant dense<0.000000e+00> : vector<128x128xf32>
    %2 = tpu.matmul %0, %1, %cst {dimension_numbers = #tpu.dot_dimension_numbers<[1], [0], [0], [1], [0, 0, 1, 1], [], []>} : vector<128x288xbf16>, vector<288x128xbf16>, vector<128x128xf32> -> vector<128x128xf32>
    %c0_3 = arith.constant 0 : index
    %c0_4 = arith.constant 0 : index
    %3 = vector.load %arg3[%c0_3, %c0_4] : memref<1x128xf32, #tpu.memory_space<vmem>>, vector<1x128xf32>
    %4 = vector.broadcast %3 : vector<1x128xf32> to vector<128x128xf32>
    %5 = arith.addf %2, %4 : vector<128x128xf32>
    %cst_5 = arith.constant 0.000000e+00 : f32
    %6 = vector.broadcast %cst_5 : f32 to vector<128x128xf32>
    %7 = arith.maximumf %5, %6 : vector<128x128xf32>
    %8 = arith.truncf %7 : vector<128x128xf32> to vector<128x128xbf16>
    %c0_6 = arith.constant 0 : index
    %c0_7 = arith.constant 0 : index
    %9 = vector.load %arg4[%c0_6, %c0_7] : memref<128x128xbf16, #tpu.memory_space<vmem>>, vector<128x128xbf16>
    tpu.vector_store %arg4[%c0_6, %c0_7], %8 {strides = array<i32>} : memref<128x128xbf16, #tpu.memory_space<vmem>>, vector<128x128xbf16>,
    return
  }
  func.func @transform_0(%arg0: i32) -> (i32, i32) {
    %c0_i32 = arith.constant 0 : i32
    %c0_i32_0 = arith.constant 0 : i32
    return %arg0, %c0_i32 : i32, i32
  }
  func.func @transform_1(%arg0: i32) -> (i32, i32) {
    %c0_i32 = arith.constant 0 : i32
    %c0_i32_0 = arith.constant 0 : i32
    %c0_i32_1 = arith.constant 0 : i32
    return %c0_i32, %c0_i32_0 : i32, i32
  }
  func.func @transform_2(%arg0: i32) -> (i32, i32) {
    %c0_i32 = arith.constant 0 : i32
    %c0_i32_0 = arith.constant 0 : i32
    %c0_i32_1 = arith.constant 0 : i32
    return %c0_i32, %c0_i32_0 : i32, i32
  }
  func.func @transform_3(%arg0: i32) -> (i32, i32) {
    %c0_i32 = arith.constant 0 : i32
    %c0_i32_0 = arith.constant 0 : i32
    return %arg0, %c0_i32 : i32, i32
  }
}

module attributes {stable_mosaic.version = 11 : i64} {
  func.func @_conv_stage_kernel(%arg0: i32, %arg1: memref<32x288xbf16, #tpu.memory_space<vmem>>, %arg2: memref<288x128xbf16, #tpu.memory_space<vmem>>, %arg3: memref<1x128xf32, #tpu.memory_space<vmem>>, %arg4: memref<32x128xbf16, #tpu.memory_space<vmem>>) attributes {dimension_semantics = [#tpu.dimension_semantics<parallel>], iteration_bounds = array<i64: 1>, scalar_prefetch = 0 : i64, scratch_operands = 0 : i64, tpu.core_type = #tpu.core_type<tc>, window_params = [{transform_indices = @transform_0, window_bounds = array<i64: 32, 288>}, {pipeline_mode = #tpu.pipeline_mode<synchronous>, transform_indices = @transform_1, window_bounds = array<i64: 288, 128>}, {pipeline_mode = #tpu.pipeline_mode<synchronous>, transform_indices = @transform_2, window_bounds = array<i64: 1, 128>}, {transform_indices = @transform_3, window_bounds = array<i64: 32, 128>}]} {
    %c0 = arith.constant 0 : index
    %c0_0 = arith.constant 0 : index
    %0 = vector.load %arg1[%c0, %c0_0] : memref<32x288xbf16, #tpu.memory_space<vmem>>, vector<32x288xbf16>
    %c0_1 = arith.constant 0 : index
    %c0_2 = arith.constant 0 : index
    %1 = vector.load %arg2[%c0_1, %c0_2] : memref<288x128xbf16, #tpu.memory_space<vmem>>, vector<288x128xbf16>
    %cst = arith.constant dense<0.000000e+00> : vector<32x128xf32>
    %2 = tpu.matmul %0, %1, %cst {dimension_numbers = #tpu.dot_dimension_numbers<[1], [0], [0], [1], [0, 0, 1, 1], [], []>} : vector<32x288xbf16>, vector<288x128xbf16>, vector<32x128xf32> -> vector<32x128xf32>
    %c0_3 = arith.constant 0 : index
    %c0_4 = arith.constant 0 : index
    %3 = vector.load %arg3[%c0_3, %c0_4] : memref<1x128xf32, #tpu.memory_space<vmem>>, vector<1x128xf32>
    %4 = vector.broadcast %3 : vector<1x128xf32> to vector<32x128xf32>
    %5 = arith.addf %2, %4 : vector<32x128xf32>
    %cst_5 = arith.constant 0.000000e+00 : f32
    %6 = vector.broadcast %cst_5 : f32 to vector<32x128xf32>
    %7 = arith.maximumf %5, %6 : vector<32x128xf32>
    %8 = arith.truncf %7 : vector<32x128xf32> to vector<32x128xbf16>
    %c0_6 = arith.constant 0 : index
    %c0_7 = arith.constant 0 : index
    %9 = vector.load %arg4[%c0_6, %c0_7] : memref<32x128xbf16, #tpu.memory_space<vmem>>, vector<32x128xbf16>
    tpu.vector_store %arg4[%c0_6, %c0_7], %8 {strides = array<i32>} : memref<32x128xbf16, #tpu.memory_space<vmem>>, vector<32x128xbf16>,
    return
  }
  func.func @transform_0(%arg0: i32) -> (i32, i32) {
    %c0_i32 = arith.constant 0 : i32
    %c0_i32_0 = arith.constant 0 : i32
    return %arg0, %c0_i32 : i32, i32
  }
  func.func @transform_1(%arg0: i32) -> (i32, i32) {
    %c0_i32 = arith.constant 0 : i32
    %c0_i32_0 = arith.constant 0 : i32
    %c0_i32_1 = arith.constant 0 : i32
    return %c0_i32, %c0_i32_0 : i32, i32
  }
  func.func @transform_2(%arg0: i32) -> (i32, i32) {
    %c0_i32 = arith.constant 0 : i32
    %c0_i32_0 = arith.constant 0 : i32
    %c0_i32_1 = arith.constant 0 : i32
    return %c0_i32, %c0_i32_0 : i32, i32
  }
  func.func @transform_3(%arg0: i32) -> (i32, i32) {
    %c0_i32 = arith.constant 0 : i32
    %c0_i32_0 = arith.constant 0 : i32
    return %arg0, %c0_i32 : i32, i32
  }
}

module attributes {stable_mosaic.version = 11 : i64} {
  func.func @_conv_stage_kernel(%arg0: i32, %arg1: memref<32x576xbf16, #tpu.memory_space<vmem>>, %arg2: memref<576x128xbf16, #tpu.memory_space<vmem>>, %arg3: memref<1x128xf32, #tpu.memory_space<vmem>>, %arg4: memref<32x128xbf16, #tpu.memory_space<vmem>>) attributes {dimension_semantics = [#tpu.dimension_semantics<parallel>], iteration_bounds = array<i64: 1>, scalar_prefetch = 0 : i64, scratch_operands = 0 : i64, tpu.core_type = #tpu.core_type<tc>, window_params = [{transform_indices = @transform_0, window_bounds = array<i64: 32, 576>}, {pipeline_mode = #tpu.pipeline_mode<synchronous>, transform_indices = @transform_1, window_bounds = array<i64: 576, 128>}, {pipeline_mode = #tpu.pipeline_mode<synchronous>, transform_indices = @transform_2, window_bounds = array<i64: 1, 128>}, {transform_indices = @transform_3, window_bounds = array<i64: 32, 128>}]} {
    %c0 = arith.constant 0 : index
    %c0_0 = arith.constant 0 : index
    %0 = vector.load %arg1[%c0, %c0_0] : memref<32x576xbf16, #tpu.memory_space<vmem>>, vector<32x576xbf16>
    %c0_1 = arith.constant 0 : index
    %c0_2 = arith.constant 0 : index
    %1 = vector.load %arg2[%c0_1, %c0_2] : memref<576x128xbf16, #tpu.memory_space<vmem>>, vector<576x128xbf16>
    %cst = arith.constant dense<0.000000e+00> : vector<32x128xf32>
    %2 = tpu.matmul %0, %1, %cst {dimension_numbers = #tpu.dot_dimension_numbers<[1], [0], [0], [1], [0, 0, 1, 1], [], []>} : vector<32x576xbf16>, vector<576x128xbf16>, vector<32x128xf32> -> vector<32x128xf32>
    %c0_3 = arith.constant 0 : index
    %c0_4 = arith.constant 0 : index
    %3 = vector.load %arg3[%c0_3, %c0_4] : memref<1x128xf32, #tpu.memory_space<vmem>>, vector<1x128xf32>
    %4 = vector.broadcast %3 : vector<1x128xf32> to vector<32x128xf32>
    %5 = arith.addf %2, %4 : vector<32x128xf32>
    %cst_5 = arith.constant 0.000000e+00 : f32
    %6 = vector.broadcast %cst_5 : f32 to vector<32x128xf32>
    %7 = arith.maximumf %5, %6 : vector<32x128xf32>
    %8 = arith.truncf %7 : vector<32x128xf32> to vector<32x128xbf16>
    %c0_6 = arith.constant 0 : index
    %c0_7 = arith.constant 0 : index
    %9 = vector.load %arg4[%c0_6, %c0_7] : memref<32x128xbf16, #tpu.memory_space<vmem>>, vector<32x128xbf16>
    tpu.vector_store %arg4[%c0_6, %c0_7], %8 {strides = array<i32>} : memref<32x128xbf16, #tpu.memory_space<vmem>>, vector<32x128xbf16>,
    return
  }
  func.func @transform_0(%arg0: i32) -> (i32, i32) {
    %c0_i32 = arith.constant 0 : i32
    %c0_i32_0 = arith.constant 0 : i32
    return %arg0, %c0_i32 : i32, i32
  }
  func.func @transform_1(%arg0: i32) -> (i32, i32) {
    %c0_i32 = arith.constant 0 : i32
    %c0_i32_0 = arith.constant 0 : i32
    %c0_i32_1 = arith.constant 0 : i32
    return %c0_i32, %c0_i32_0 : i32, i32
  }
  func.func @transform_2(%arg0: i32) -> (i32, i32) {
    %c0_i32 = arith.constant 0 : i32
    %c0_i32_0 = arith.constant 0 : i32
    %c0_i32_1 = arith.constant 0 : i32
    return %c0_i32, %c0_i32_0 : i32, i32
  }
  func.func @transform_3(%arg0: i32) -> (i32, i32) {
    %c0_i32 = arith.constant 0 : i32
    %c0_i32_0 = arith.constant 0 : i32
    return %arg0, %c0_i32 : i32, i32
  }
}

module attributes {stable_mosaic.version = 11 : i64} {
  func.func @_conv_stage_kernel(%arg0: i32, %arg1: memref<16x576xbf16, #tpu.memory_space<vmem>>, %arg2: memref<576x128xbf16, #tpu.memory_space<vmem>>, %arg3: memref<1x128xf32, #tpu.memory_space<vmem>>, %arg4: memref<16x128xbf16, #tpu.memory_space<vmem>>) attributes {dimension_semantics = [#tpu.dimension_semantics<parallel>], iteration_bounds = array<i64: 1>, scalar_prefetch = 0 : i64, scratch_operands = 0 : i64, tpu.core_type = #tpu.core_type<tc>, window_params = [{transform_indices = @transform_0, window_bounds = array<i64: 16, 576>}, {pipeline_mode = #tpu.pipeline_mode<synchronous>, transform_indices = @transform_1, window_bounds = array<i64: 576, 128>}, {pipeline_mode = #tpu.pipeline_mode<synchronous>, transform_indices = @transform_2, window_bounds = array<i64: 1, 128>}, {transform_indices = @transform_3, window_bounds = array<i64: 16, 128>}]} {
    %c0 = arith.constant 0 : index
    %c0_0 = arith.constant 0 : index
    %0 = vector.load %arg1[%c0, %c0_0] : memref<16x576xbf16, #tpu.memory_space<vmem>>, vector<16x576xbf16>
    %c0_1 = arith.constant 0 : index
    %c0_2 = arith.constant 0 : index
    %1 = vector.load %arg2[%c0_1, %c0_2] : memref<576x128xbf16, #tpu.memory_space<vmem>>, vector<576x128xbf16>
    %cst = arith.constant dense<0.000000e+00> : vector<16x128xf32>
    %2 = tpu.matmul %0, %1, %cst {dimension_numbers = #tpu.dot_dimension_numbers<[1], [0], [0], [1], [0, 0, 1, 1], [], []>} : vector<16x576xbf16>, vector<576x128xbf16>, vector<16x128xf32> -> vector<16x128xf32>
    %c0_3 = arith.constant 0 : index
    %c0_4 = arith.constant 0 : index
    %3 = vector.load %arg3[%c0_3, %c0_4] : memref<1x128xf32, #tpu.memory_space<vmem>>, vector<1x128xf32>
    %4 = vector.broadcast %3 : vector<1x128xf32> to vector<16x128xf32>
    %5 = arith.addf %2, %4 : vector<16x128xf32>
    %cst_5 = arith.constant 0.000000e+00 : f32
    %6 = vector.broadcast %cst_5 : f32 to vector<16x128xf32>
    %7 = arith.maximumf %5, %6 : vector<16x128xf32>
    %8 = arith.truncf %7 : vector<16x128xf32> to vector<16x128xbf16>
    %c0_6 = arith.constant 0 : index
    %c0_7 = arith.constant 0 : index
    %9 = vector.load %arg4[%c0_6, %c0_7] : memref<16x128xbf16, #tpu.memory_space<vmem>>, vector<16x128xbf16>
    tpu.vector_store %arg4[%c0_6, %c0_7], %8 {strides = array<i32>} : memref<16x128xbf16, #tpu.memory_space<vmem>>, vector<16x128xbf16>,
    return
  }
  func.func @transform_0(%arg0: i32) -> (i32, i32) {
    %c0_i32 = arith.constant 0 : i32
    %c0_i32_0 = arith.constant 0 : i32
    return %arg0, %c0_i32 : i32, i32
  }
  func.func @transform_1(%arg0: i32) -> (i32, i32) {
    %c0_i32 = arith.constant 0 : i32
    %c0_i32_0 = arith.constant 0 : i32
    %c0_i32_1 = arith.constant 0 : i32
    return %c0_i32, %c0_i32_0 : i32, i32
  }
  func.func @transform_2(%arg0: i32) -> (i32, i32) {
    %c0_i32 = arith.constant 0 : i32
    %c0_i32_0 = arith.constant 0 : i32
    %c0_i32_1 = arith.constant 0 : i32
    return %c0_i32, %c0_i32_0 : i32, i32
  }
  func.func @transform_3(%arg0: i32) -> (i32, i32) {
    %c0_i32 = arith.constant 0 : i32
    %c0_i32_0 = arith.constant 0 : i32
    return %arg0, %c0_i32 : i32, i32
  }
}

module attributes {stable_mosaic.version = 11 : i64} {
  func.func @_conv_stage_kernel(%arg0: i32, %arg1: memref<16x864xbf16, #tpu.memory_space<vmem>>, %arg2: memref<864x128xbf16, #tpu.memory_space<vmem>>, %arg3: memref<1x128xf32, #tpu.memory_space<vmem>>, %arg4: memref<16x128xbf16, #tpu.memory_space<vmem>>) attributes {dimension_semantics = [#tpu.dimension_semantics<parallel>], iteration_bounds = array<i64: 1>, scalar_prefetch = 0 : i64, scratch_operands = 0 : i64, tpu.core_type = #tpu.core_type<tc>, window_params = [{transform_indices = @transform_0, window_bounds = array<i64: 16, 864>}, {pipeline_mode = #tpu.pipeline_mode<synchronous>, transform_indices = @transform_1, window_bounds = array<i64: 864, 128>}, {pipeline_mode = #tpu.pipeline_mode<synchronous>, transform_indices = @transform_2, window_bounds = array<i64: 1, 128>}, {transform_indices = @transform_3, window_bounds = array<i64: 16, 128>}]} {
    %c0 = arith.constant 0 : index
    %c0_0 = arith.constant 0 : index
    %0 = vector.load %arg1[%c0, %c0_0] : memref<16x864xbf16, #tpu.memory_space<vmem>>, vector<16x864xbf16>
    %c0_1 = arith.constant 0 : index
    %c0_2 = arith.constant 0 : index
    %1 = vector.load %arg2[%c0_1, %c0_2] : memref<864x128xbf16, #tpu.memory_space<vmem>>, vector<864x128xbf16>
    %cst = arith.constant dense<0.000000e+00> : vector<16x128xf32>
    %2 = tpu.matmul %0, %1, %cst {dimension_numbers = #tpu.dot_dimension_numbers<[1], [0], [0], [1], [0, 0, 1, 1], [], []>} : vector<16x864xbf16>, vector<864x128xbf16>, vector<16x128xf32> -> vector<16x128xf32>
    %c0_3 = arith.constant 0 : index
    %c0_4 = arith.constant 0 : index
    %3 = vector.load %arg3[%c0_3, %c0_4] : memref<1x128xf32, #tpu.memory_space<vmem>>, vector<1x128xf32>
    %4 = vector.broadcast %3 : vector<1x128xf32> to vector<16x128xf32>
    %5 = arith.addf %2, %4 : vector<16x128xf32>
    %cst_5 = arith.constant 0.000000e+00 : f32
    %6 = vector.broadcast %cst_5 : f32 to vector<16x128xf32>
    %7 = arith.maximumf %5, %6 : vector<16x128xf32>
    %8 = arith.truncf %7 : vector<16x128xf32> to vector<16x128xbf16>
    %c0_6 = arith.constant 0 : index
    %c0_7 = arith.constant 0 : index
    %9 = vector.load %arg4[%c0_6, %c0_7] : memref<16x128xbf16, #tpu.memory_space<vmem>>, vector<16x128xbf16>
    tpu.vector_store %arg4[%c0_6, %c0_7], %8 {strides = array<i32>} : memref<16x128xbf16, #tpu.memory_space<vmem>>, vector<16x128xbf16>,
    return
  }
  func.func @transform_0(%arg0: i32) -> (i32, i32) {
    %c0_i32 = arith.constant 0 : i32
    %c0_i32_0 = arith.constant 0 : i32
    return %arg0, %c0_i32 : i32, i32
  }
  func.func @transform_1(%arg0: i32) -> (i32, i32) {
    %c0_i32 = arith.constant 0 : i32
    %c0_i32_0 = arith.constant 0 : i32
    %c0_i32_1 = arith.constant 0 : i32
    return %c0_i32, %c0_i32_0 : i32, i32
  }
  func.func @transform_2(%arg0: i32) -> (i32, i32) {
    %c0_i32 = arith.constant 0 : i32
    %c0_i32_0 = arith.constant 0 : i32
    %c0_i32_1 = arith.constant 0 : i32
    return %c0_i32, %c0_i32_0 : i32, i32
  }
  func.func @transform_3(%arg0: i32) -> (i32, i32) {
    %c0_i32 = arith.constant 0 : i32
    %c0_i32_0 = arith.constant 0 : i32
    return %arg0, %c0_i32 : i32, i32
  }
}

module attributes {stable_mosaic.version = 11 : i64} {
  func.func @_conv_stage_res_kernel(%arg0: i32, %arg1: memref<16x1152xbf16, #tpu.memory_space<vmem>>, %arg2: memref<1152x128xbf16, #tpu.memory_space<vmem>>, %arg3: memref<1x128xf32, #tpu.memory_space<vmem>>, %arg4: memref<16x128xbf16, #tpu.memory_space<vmem>>, %arg5: memref<16x128xbf16, #tpu.memory_space<vmem>>) attributes {dimension_semantics = [#tpu.dimension_semantics<parallel>], iteration_bounds = array<i64: 1>, scalar_prefetch = 0 : i64, scratch_operands = 0 : i64, tpu.core_type = #tpu.core_type<tc>, window_params = [{transform_indices = @transform_0, window_bounds = array<i64: 16, 1152>}, {pipeline_mode = #tpu.pipeline_mode<synchronous>, transform_indices = @transform_1, window_bounds = array<i64: 1152, 128>}, {pipeline_mode = #tpu.pipeline_mode<synchronous>, transform_indices = @transform_2, window_bounds = array<i64: 1, 128>}, {transform_indices = @transform_3, window_bounds = array<i64: 16, 128>}, {transform_indices = @transform_4, window_bounds = array<i64: 16, 128>}]} {
    %c0 = arith.constant 0 : index
    %c0_0 = arith.constant 0 : index
    %0 = vector.load %arg1[%c0, %c0_0] : memref<16x1152xbf16, #tpu.memory_space<vmem>>, vector<16x1152xbf16>
    %c0_1 = arith.constant 0 : index
    %c0_2 = arith.constant 0 : index
    %1 = vector.load %arg2[%c0_1, %c0_2] : memref<1152x128xbf16, #tpu.memory_space<vmem>>, vector<1152x128xbf16>
    %cst = arith.constant dense<0.000000e+00> : vector<16x128xf32>
    %2 = tpu.matmul %0, %1, %cst {dimension_numbers = #tpu.dot_dimension_numbers<[1], [0], [0], [1], [0, 0, 1, 1], [], []>} : vector<16x1152xbf16>, vector<1152x128xbf16>, vector<16x128xf32> -> vector<16x128xf32>
    %c0_3 = arith.constant 0 : index
    %c0_4 = arith.constant 0 : index
    %3 = vector.load %arg3[%c0_3, %c0_4] : memref<1x128xf32, #tpu.memory_space<vmem>>, vector<1x128xf32>
    %4 = vector.broadcast %3 : vector<1x128xf32> to vector<16x128xf32>
    %5 = arith.addf %2, %4 : vector<16x128xf32>
    %c0_5 = arith.constant 0 : index
    %c0_6 = arith.constant 0 : index
    %6 = vector.load %arg4[%c0_5, %c0_6] : memref<16x128xbf16, #tpu.memory_space<vmem>>, vector<16x128xbf16>
    %7 = arith.extf %6 : vector<16x128xbf16> to vector<16x128xf32>
    %8 = arith.addf %5, %7 : vector<16x128xf32>
    %cst_7 = arith.constant 0.000000e+00 : f32
    %9 = vector.broadcast %cst_7 : f32 to vector<16x128xf32>
    %10 = arith.maximumf %8, %9 : vector<16x128xf32>
    %11 = arith.truncf %10 : vector<16x128xf32> to vector<16x128xbf16>
    %c0_8 = arith.constant 0 : index
    %c0_9 = arith.constant 0 : index
    %12 = vector.load %arg5[%c0_8, %c0_9] : memref<16x128xbf16, #tpu.memory_space<vmem>>, vector<16x128xbf16>
    tpu.vector_store %arg5[%c0_8, %c0_9], %11 {strides = array<i32>} : memref<16x128xbf16, #tpu.memory_space<vmem>>, vector<16x128xbf16>,
    return
  }
  func.func @transform_0(%arg0: i32) -> (i32, i32) {
    %c0_i32 = arith.constant 0 : i32
    %c0_i32_0 = arith.constant 0 : i32
    return %arg0, %c0_i32 : i32, i32
  }
  func.func @transform_1(%arg0: i32) -> (i32, i32) {
    %c0_i32 = arith.constant 0 : i32
    %c0_i32_0 = arith.constant 0 : i32
    %c0_i32_1 = arith.constant 0 : i32
    return %c0_i32, %c0_i32_0 : i32, i32
  }
  func.func @transform_2(%arg0: i32) -> (i32, i32) {
    %c0_i32 = arith.constant 0 : i32
    %c0_i32_0 = arith.constant 0 : i32
    %c0_i32_1 = arith.constant 0 : i32
    return %c0_i32, %c0_i32_0 : i32, i32
  }
  func.func @transform_3(%arg0: i32) -> (i32, i32) {
    %c0_i32 = arith.constant 0 : i32
    %c0_i32_0 = arith.constant 0 : i32
    return %arg0, %c0_i32 : i32, i32
  }
  func.func @transform_4(%arg0: i32) -> (i32, i32) {
    %c0_i32 = arith.constant 0 : i32
    %c0_i32_0 = arith.constant 0 : i32
    return %arg0, %c0_i32 : i32, i32
  }
}

module attributes {stable_mosaic.version = 11 : i64} {
  func.func @_conv_stage_kernel(%arg0: i32, %arg1: memref<16x1152xbf16, #tpu.memory_space<vmem>>, %arg2: memref<1152x128xbf16, #tpu.memory_space<vmem>>, %arg3: memref<1x128xf32, #tpu.memory_space<vmem>>, %arg4: memref<16x128xbf16, #tpu.memory_space<vmem>>) attributes {dimension_semantics = [#tpu.dimension_semantics<parallel>], iteration_bounds = array<i64: 1>, scalar_prefetch = 0 : i64, scratch_operands = 0 : i64, tpu.core_type = #tpu.core_type<tc>, window_params = [{transform_indices = @transform_0, window_bounds = array<i64: 16, 1152>}, {pipeline_mode = #tpu.pipeline_mode<synchronous>, transform_indices = @transform_1, window_bounds = array<i64: 1152, 128>}, {pipeline_mode = #tpu.pipeline_mode<synchronous>, transform_indices = @transform_2, window_bounds = array<i64: 1, 128>}, {transform_indices = @transform_3, window_bounds = array<i64: 16, 128>}]} {
    %c0 = arith.constant 0 : index
    %c0_0 = arith.constant 0 : index
    %0 = vector.load %arg1[%c0, %c0_0] : memref<16x1152xbf16, #tpu.memory_space<vmem>>, vector<16x1152xbf16>
    %c0_1 = arith.constant 0 : index
    %c0_2 = arith.constant 0 : index
    %1 = vector.load %arg2[%c0_1, %c0_2] : memref<1152x128xbf16, #tpu.memory_space<vmem>>, vector<1152x128xbf16>
    %cst = arith.constant dense<0.000000e+00> : vector<16x128xf32>
    %2 = tpu.matmul %0, %1, %cst {dimension_numbers = #tpu.dot_dimension_numbers<[1], [0], [0], [1], [0, 0, 1, 1], [], []>} : vector<16x1152xbf16>, vector<1152x128xbf16>, vector<16x128xf32> -> vector<16x128xf32>
    %c0_3 = arith.constant 0 : index
    %c0_4 = arith.constant 0 : index
    %3 = vector.load %arg3[%c0_3, %c0_4] : memref<1x128xf32, #tpu.memory_space<vmem>>, vector<1x128xf32>
    %4 = vector.broadcast %3 : vector<1x128xf32> to vector<16x128xf32>
    %5 = arith.addf %2, %4 : vector<16x128xf32>
    %cst_5 = arith.constant 0.000000e+00 : f32
    %6 = vector.broadcast %cst_5 : f32 to vector<16x128xf32>
    %7 = arith.maximumf %5, %6 : vector<16x128xf32>
    %8 = arith.truncf %7 : vector<16x128xf32> to vector<16x128xbf16>
    %c0_6 = arith.constant 0 : index
    %c0_7 = arith.constant 0 : index
    %9 = vector.load %arg4[%c0_6, %c0_7] : memref<16x128xbf16, #tpu.memory_space<vmem>>, vector<16x128xbf16>
    tpu.vector_store %arg4[%c0_6, %c0_7], %8 {strides = array<i32>} : memref<16x128xbf16, #tpu.memory_space<vmem>>, vector<16x128xbf16>,
    return
  }
  func.func @transform_0(%arg0: i32) -> (i32, i32) {
    %c0_i32 = arith.constant 0 : i32
    %c0_i32_0 = arith.constant 0 : i32
    return %arg0, %c0_i32 : i32, i32
  }
  func.func @transform_1(%arg0: i32) -> (i32, i32) {
    %c0_i32 = arith.constant 0 : i32
    %c0_i32_0 = arith.constant 0 : i32
    %c0_i32_1 = arith.constant 0 : i32
    return %c0_i32, %c0_i32_0 : i32, i32
  }
  func.func @transform_2(%arg0: i32) -> (i32, i32) {
    %c0_i32 = arith.constant 0 : i32
    %c0_i32_0 = arith.constant 0 : i32
    %c0_i32_1 = arith.constant 0 : i32
    return %c0_i32, %c0_i32_0 : i32, i32
  }
  func.func @transform_3(%arg0: i32) -> (i32, i32) {
    %c0_i32 = arith.constant 0 : i32
    %c0_i32_0 = arith.constant 0 : i32
    return %arg0, %c0_i32 : i32, i32
  }
}

module attributes {stable_mosaic.version = 11 : i64} {
  func.func @_conv_stage_res_kernel(%arg0: i32, %arg1: memref<16x1152xbf16, #tpu.memory_space<vmem>>, %arg2: memref<1152x128xbf16, #tpu.memory_space<vmem>>, %arg3: memref<1x128xf32, #tpu.memory_space<vmem>>, %arg4: memref<16x128xbf16, #tpu.memory_space<vmem>>, %arg5: memref<16x128xbf16, #tpu.memory_space<vmem>>) attributes {dimension_semantics = [#tpu.dimension_semantics<parallel>], iteration_bounds = array<i64: 1>, scalar_prefetch = 0 : i64, scratch_operands = 0 : i64, tpu.core_type = #tpu.core_type<tc>, window_params = [{transform_indices = @transform_0, window_bounds = array<i64: 16, 1152>}, {pipeline_mode = #tpu.pipeline_mode<synchronous>, transform_indices = @transform_1, window_bounds = array<i64: 1152, 128>}, {pipeline_mode = #tpu.pipeline_mode<synchronous>, transform_indices = @transform_2, window_bounds = array<i64: 1, 128>}, {transform_indices = @transform_3, window_bounds = array<i64: 16, 128>}, {transform_indices = @transform_4, window_bounds = array<i64: 16, 128>}]} {
    %c0 = arith.constant 0 : index
    %c0_0 = arith.constant 0 : index
    %0 = vector.load %arg1[%c0, %c0_0] : memref<16x1152xbf16, #tpu.memory_space<vmem>>, vector<16x1152xbf16>
    %c0_1 = arith.constant 0 : index
    %c0_2 = arith.constant 0 : index
    %1 = vector.load %arg2[%c0_1, %c0_2] : memref<1152x128xbf16, #tpu.memory_space<vmem>>, vector<1152x128xbf16>
    %cst = arith.constant dense<0.000000e+00> : vector<16x128xf32>
    %2 = tpu.matmul %0, %1, %cst {dimension_numbers = #tpu.dot_dimension_numbers<[1], [0], [0], [1], [0, 0, 1, 1], [], []>} : vector<16x1152xbf16>, vector<1152x128xbf16>, vector<16x128xf32> -> vector<16x128xf32>
    %c0_3 = arith.constant 0 : index
    %c0_4 = arith.constant 0 : index
    %3 = vector.load %arg3[%c0_3, %c0_4] : memref<1x128xf32, #tpu.memory_space<vmem>>, vector<1x128xf32>
    %4 = vector.broadcast %3 : vector<1x128xf32> to vector<16x128xf32>
    %5 = arith.addf %2, %4 : vector<16x128xf32>
    %c0_5 = arith.constant 0 : index
    %c0_6 = arith.constant 0 : index
    %6 = vector.load %arg4[%c0_5, %c0_6] : memref<16x128xbf16, #tpu.memory_space<vmem>>, vector<16x128xbf16>
    %7 = arith.extf %6 : vector<16x128xbf16> to vector<16x128xf32>
    %cst_7 = arith.constant 0.000000e+00 : f32
    %8 = vector.broadcast %cst_7 : f32 to vector<16x128xf32>
    %9 = arith.maximumf %5, %8 : vector<16x128xf32>
    %10 = arith.addf %9, %7 : vector<16x128xf32>
    %11 = arith.truncf %10 : vector<16x128xf32> to vector<16x128xbf16>
    %c0_8 = arith.constant 0 : index
    %c0_9 = arith.constant 0 : index
    %12 = vector.load %arg5[%c0_8, %c0_9] : memref<16x128xbf16, #tpu.memory_space<vmem>>, vector<16x128xbf16>
    tpu.vector_store %arg5[%c0_8, %c0_9], %11 {strides = array<i32>} : memref<16x128xbf16, #tpu.memory_space<vmem>>, vector<16x128xbf16>,
    return
  }
  func.func @transform_0(%arg0: i32) -> (i32, i32) {
    %c0_i32 = arith.constant 0 : i32
    %c0_i32_0 = arith.constant 0 : i32
    return %arg0, %c0_i32 : i32, i32
  }
  func.func @transform_1(%arg0: i32) -> (i32, i32) {
    %c0_i32 = arith.constant 0 : i32
    %c0_i32_0 = arith.constant 0 : i32
    %c0_i32_1 = arith.constant 0 : i32
    return %c0_i32, %c0_i32_0 : i32, i32
  }
  func.func @transform_2(%arg0: i32) -> (i32, i32) {
    %c0_i32 = arith.constant 0 : i32
    %c0_i32_0 = arith.constant 0 : i32
    %c0_i32_1 = arith.constant 0 : i32
    return %c0_i32, %c0_i32_0 : i32, i32
  }
  func.func @transform_3(%arg0: i32) -> (i32, i32) {
    %c0_i32 = arith.constant 0 : i32
    %c0_i32_0 = arith.constant 0 : i32
    return %arg0, %c0_i32 : i32, i32
  }
  func.func @transform_4(%arg0: i32) -> (i32, i32) {
    %c0_i32 = arith.constant 0 : i32
    %c0_i32_0 = arith.constant 0 : i32
    return %arg0, %c0_i32 : i32, i32
  }
}

module attributes {stable_mosaic.version = 11 : i64} {
  func.func @_conv_stage_res_kernel(%arg0: i32, %arg1: memref<32x864xbf16, #tpu.memory_space<vmem>>, %arg2: memref<864x128xbf16, #tpu.memory_space<vmem>>, %arg3: memref<1x128xf32, #tpu.memory_space<vmem>>, %arg4: memref<32x128xbf16, #tpu.memory_space<vmem>>, %arg5: memref<32x128xbf16, #tpu.memory_space<vmem>>) attributes {dimension_semantics = [#tpu.dimension_semantics<parallel>], iteration_bounds = array<i64: 1>, scalar_prefetch = 0 : i64, scratch_operands = 0 : i64, tpu.core_type = #tpu.core_type<tc>, window_params = [{transform_indices = @transform_0, window_bounds = array<i64: 32, 864>}, {pipeline_mode = #tpu.pipeline_mode<synchronous>, transform_indices = @transform_1, window_bounds = array<i64: 864, 128>}, {pipeline_mode = #tpu.pipeline_mode<synchronous>, transform_indices = @transform_2, window_bounds = array<i64: 1, 128>}, {transform_indices = @transform_3, window_bounds = array<i64: 32, 128>}, {transform_indices = @transform_4, window_bounds = array<i64: 32, 128>}]} {
    %c0 = arith.constant 0 : index
    %c0_0 = arith.constant 0 : index
    %0 = vector.load %arg1[%c0, %c0_0] : memref<32x864xbf16, #tpu.memory_space<vmem>>, vector<32x864xbf16>
    %c0_1 = arith.constant 0 : index
    %c0_2 = arith.constant 0 : index
    %1 = vector.load %arg2[%c0_1, %c0_2] : memref<864x128xbf16, #tpu.memory_space<vmem>>, vector<864x128xbf16>
    %cst = arith.constant dense<0.000000e+00> : vector<32x128xf32>
    %2 = tpu.matmul %0, %1, %cst {dimension_numbers = #tpu.dot_dimension_numbers<[1], [0], [0], [1], [0, 0, 1, 1], [], []>} : vector<32x864xbf16>, vector<864x128xbf16>, vector<32x128xf32> -> vector<32x128xf32>
    %c0_3 = arith.constant 0 : index
    %c0_4 = arith.constant 0 : index
    %3 = vector.load %arg3[%c0_3, %c0_4] : memref<1x128xf32, #tpu.memory_space<vmem>>, vector<1x128xf32>
    %4 = vector.broadcast %3 : vector<1x128xf32> to vector<32x128xf32>
    %5 = arith.addf %2, %4 : vector<32x128xf32>
    %c0_5 = arith.constant 0 : index
    %c0_6 = arith.constant 0 : index
    %6 = vector.load %arg4[%c0_5, %c0_6] : memref<32x128xbf16, #tpu.memory_space<vmem>>, vector<32x128xbf16>
    %7 = arith.extf %6 : vector<32x128xbf16> to vector<32x128xf32>
    %cst_7 = arith.constant 0.000000e+00 : f32
    %8 = vector.broadcast %cst_7 : f32 to vector<32x128xf32>
    %9 = arith.maximumf %5, %8 : vector<32x128xf32>
    %10 = arith.addf %9, %7 : vector<32x128xf32>
    %11 = arith.truncf %10 : vector<32x128xf32> to vector<32x128xbf16>
    %c0_8 = arith.constant 0 : index
    %c0_9 = arith.constant 0 : index
    %12 = vector.load %arg5[%c0_8, %c0_9] : memref<32x128xbf16, #tpu.memory_space<vmem>>, vector<32x128xbf16>
    tpu.vector_store %arg5[%c0_8, %c0_9], %11 {strides = array<i32>} : memref<32x128xbf16, #tpu.memory_space<vmem>>, vector<32x128xbf16>,
    return
  }
  func.func @transform_0(%arg0: i32) -> (i32, i32) {
    %c0_i32 = arith.constant 0 : i32
    %c0_i32_0 = arith.constant 0 : i32
    return %arg0, %c0_i32 : i32, i32
  }
  func.func @transform_1(%arg0: i32) -> (i32, i32) {
    %c0_i32 = arith.constant 0 : i32
    %c0_i32_0 = arith.constant 0 : i32
    %c0_i32_1 = arith.constant 0 : i32
    return %c0_i32, %c0_i32_0 : i32, i32
  }
  func.func @transform_2(%arg0: i32) -> (i32, i32) {
    %c0_i32 = arith.constant 0 : i32
    %c0_i32_0 = arith.constant 0 : i32
    %c0_i32_1 = arith.constant 0 : i32
    return %c0_i32, %c0_i32_0 : i32, i32
  }
  func.func @transform_3(%arg0: i32) -> (i32, i32) {
    %c0_i32 = arith.constant 0 : i32
    %c0_i32_0 = arith.constant 0 : i32
    return %arg0, %c0_i32 : i32, i32
  }
  func.func @transform_4(%arg0: i32) -> (i32, i32) {
    %c0_i32 = arith.constant 0 : i32
    %c0_i32_0 = arith.constant 0 : i32
    return %arg0, %c0_i32 : i32, i32
  }
}

module attributes {stable_mosaic.version = 11 : i64} {
  func.func @_conv_stage_res_kernel(%arg0: i32, %arg1: memref<128x576xbf16, #tpu.memory_space<vmem>>, %arg2: memref<576x128xbf16, #tpu.memory_space<vmem>>, %arg3: memref<1x128xf32, #tpu.memory_space<vmem>>, %arg4: memref<128x128xbf16, #tpu.memory_space<vmem>>, %arg5: memref<128x128xbf16, #tpu.memory_space<vmem>>) attributes {dimension_semantics = [#tpu.dimension_semantics<parallel>], iteration_bounds = array<i64: 1>, scalar_prefetch = 0 : i64, scratch_operands = 0 : i64, tpu.core_type = #tpu.core_type<tc>, window_params = [{transform_indices = @transform_0, window_bounds = array<i64: 128, 576>}, {pipeline_mode = #tpu.pipeline_mode<synchronous>, transform_indices = @transform_1, window_bounds = array<i64: 576, 128>}, {pipeline_mode = #tpu.pipeline_mode<synchronous>, transform_indices = @transform_2, window_bounds = array<i64: 1, 128>}, {transform_indices = @transform_3, window_bounds = array<i64: 128, 128>}, {transform_indices = @transform_4, window_bounds = array<i64: 128, 128>}]} {
    %c0 = arith.constant 0 : index
    %c0_0 = arith.constant 0 : index
    %0 = vector.load %arg1[%c0, %c0_0] : memref<128x576xbf16, #tpu.memory_space<vmem>>, vector<128x576xbf16>
    %c0_1 = arith.constant 0 : index
    %c0_2 = arith.constant 0 : index
    %1 = vector.load %arg2[%c0_1, %c0_2] : memref<576x128xbf16, #tpu.memory_space<vmem>>, vector<576x128xbf16>
    %cst = arith.constant dense<0.000000e+00> : vector<128x128xf32>
    %2 = tpu.matmul %0, %1, %cst {dimension_numbers = #tpu.dot_dimension_numbers<[1], [0], [0], [1], [0, 0, 1, 1], [], []>} : vector<128x576xbf16>, vector<576x128xbf16>, vector<128x128xf32> -> vector<128x128xf32>
    %c0_3 = arith.constant 0 : index
    %c0_4 = arith.constant 0 : index
    %3 = vector.load %arg3[%c0_3, %c0_4] : memref<1x128xf32, #tpu.memory_space<vmem>>, vector<1x128xf32>
    %4 = vector.broadcast %3 : vector<1x128xf32> to vector<128x128xf32>
    %5 = arith.addf %2, %4 : vector<128x128xf32>
    %c0_5 = arith.constant 0 : index
    %c0_6 = arith.constant 0 : index
    %6 = vector.load %arg4[%c0_5, %c0_6] : memref<128x128xbf16, #tpu.memory_space<vmem>>, vector<128x128xbf16>
    %7 = arith.extf %6 : vector<128x128xbf16> to vector<128x128xf32>
    %cst_7 = arith.constant 0.000000e+00 : f32
    %8 = vector.broadcast %cst_7 : f32 to vector<128x128xf32>
    %9 = arith.maximumf %5, %8 : vector<128x128xf32>
    %10 = arith.addf %9, %7 : vector<128x128xf32>
    %11 = arith.truncf %10 : vector<128x128xf32> to vector<128x128xbf16>
    %c0_8 = arith.constant 0 : index
    %c0_9 = arith.constant 0 : index
    %12 = vector.load %arg5[%c0_8, %c0_9] : memref<128x128xbf16, #tpu.memory_space<vmem>>, vector<128x128xbf16>
    tpu.vector_store %arg5[%c0_8, %c0_9], %11 {strides = array<i32>} : memref<128x128xbf16, #tpu.memory_space<vmem>>, vector<128x128xbf16>,
    return
  }
  func.func @transform_0(%arg0: i32) -> (i32, i32) {
    %c0_i32 = arith.constant 0 : i32
    %c0_i32_0 = arith.constant 0 : i32
    return %arg0, %c0_i32 : i32, i32
  }
  func.func @transform_1(%arg0: i32) -> (i32, i32) {
    %c0_i32 = arith.constant 0 : i32
    %c0_i32_0 = arith.constant 0 : i32
    %c0_i32_1 = arith.constant 0 : i32
    return %c0_i32, %c0_i32_0 : i32, i32
  }
  func.func @transform_2(%arg0: i32) -> (i32, i32) {
    %c0_i32 = arith.constant 0 : i32
    %c0_i32_0 = arith.constant 0 : i32
    %c0_i32_1 = arith.constant 0 : i32
    return %c0_i32, %c0_i32_0 : i32, i32
  }
  func.func @transform_3(%arg0: i32) -> (i32, i32) {
    %c0_i32 = arith.constant 0 : i32
    %c0_i32_0 = arith.constant 0 : i32
    return %arg0, %c0_i32 : i32, i32
  }
  func.func @transform_4(%arg0: i32) -> (i32, i32) {
    %c0_i32 = arith.constant 0 : i32
    %c0_i32_0 = arith.constant 0 : i32
    return %arg0, %c0_i32 : i32, i32
  }
}

module attributes {stable_mosaic.version = 11 : i64} {
  func.func @_conv_stage_kernel(%arg0: i32, %arg1: memref<256x288xbf16, #tpu.memory_space<vmem>>, %arg2: memref<288x128xbf16, #tpu.memory_space<vmem>>, %arg3: memref<1x128xf32, #tpu.memory_space<vmem>>, %arg4: memref<256x128xbf16, #tpu.memory_space<vmem>>) attributes {dimension_semantics = [#tpu.dimension_semantics<parallel>], iteration_bounds = array<i64: 2>, scalar_prefetch = 0 : i64, scratch_operands = 0 : i64, tpu.core_type = #tpu.core_type<tc>, window_params = [{transform_indices = @transform_0, window_bounds = array<i64: 256, 288>}, {pipeline_mode = #tpu.pipeline_mode<synchronous>, transform_indices = @transform_1, window_bounds = array<i64: 288, 128>}, {pipeline_mode = #tpu.pipeline_mode<synchronous>, transform_indices = @transform_2, window_bounds = array<i64: 1, 128>}, {transform_indices = @transform_3, window_bounds = array<i64: 256, 128>}]} {
    %c0 = arith.constant 0 : index
    %c0_0 = arith.constant 0 : index
    %0 = vector.load %arg1[%c0, %c0_0] : memref<256x288xbf16, #tpu.memory_space<vmem>>, vector<256x288xbf16>
    %c0_1 = arith.constant 0 : index
    %c0_2 = arith.constant 0 : index
    %1 = vector.load %arg2[%c0_1, %c0_2] : memref<288x128xbf16, #tpu.memory_space<vmem>>, vector<288x128xbf16>
    %cst = arith.constant dense<0.000000e+00> : vector<256x128xf32>
    %2 = tpu.matmul %0, %1, %cst {dimension_numbers = #tpu.dot_dimension_numbers<[1], [0], [0], [1], [0, 0, 1, 1], [], []>} : vector<256x288xbf16>, vector<288x128xbf16>, vector<256x128xf32> -> vector<256x128xf32>
    %c0_3 = arith.constant 0 : index
    %c0_4 = arith.constant 0 : index
    %3 = vector.load %arg3[%c0_3, %c0_4] : memref<1x128xf32, #tpu.memory_space<vmem>>, vector<1x128xf32>
    %4 = vector.broadcast %3 : vector<1x128xf32> to vector<256x128xf32>
    %5 = arith.addf %2, %4 : vector<256x128xf32>
    %6 = math.tanh %5 : vector<256x128xf32>
    %7 = arith.truncf %6 : vector<256x128xf32> to vector<256x128xbf16>
    %c0_5 = arith.constant 0 : index
    %c0_6 = arith.constant 0 : index
    %8 = vector.load %arg4[%c0_5, %c0_6] : memref<256x128xbf16, #tpu.memory_space<vmem>>, vector<256x128xbf16>
    tpu.vector_store %arg4[%c0_5, %c0_6], %7 {strides = array<i32>} : memref<256x128xbf16, #tpu.memory_space<vmem>>, vector<256x128xbf16>,
    return
  }
  func.func @transform_0(%arg0: i32) -> (i32, i32) {
    %c0_i32 = arith.constant 0 : i32
    %c0_i32_0 = arith.constant 0 : i32
    return %arg0, %c0_i32 : i32, i32
  }
  func.func @transform_1(%arg0: i32) -> (i32, i32) {
    %c0_i32 = arith.constant 0 : i32
    %c0_i32_0 = arith.constant 0 : i32
    %c0_i32_1 = arith.constant 0 : i32
    return %c0_i32, %c0_i32_0 : i32, i32
  }
  func.func @transform_2(%arg0: i32) -> (i32, i32) {
    %c0_i32 = arith.constant 0 : i32
    %c0_i32_0 = arith.constant 0 : i32
    %c0_i32_1 = arith.constant 0 : i32
    return %c0_i32, %c0_i32_0 : i32, i32
  }
  func.func @transform_3(%arg0: i32) -> (i32, i32) {
    %c0_i32 = arith.constant 0 : i32
    %c0_i32_0 = arith.constant 0 : i32
    return %arg0, %c0_i32 : i32, i32
  }
}

</mosaic_0001>

<llo_original>
// kernel: simple_generator.24
$region0: #{simple_generator.24}
  #allocation0 [shape = 'u32[]', space=smem, size = 0x4, offset = 0x4, fixed_abs, tag = 'smem constant byte address 0x4 - core index']
  #allocation1 [shape = 'u32[144,128]{1,0:T(1,128)}', space=vmem, size = 0x12000, scoped, tag = 'internal scratch']
  %s0 = inlined_call_operand.vmem [shape: bf16[128,27], index: 0, kind: input, shape index: {}]
  %s1 = inlined_call_operand.vmem [shape: bf16[27,128], index: 1, kind: input, shape index: {}]
  %s2 = inlined_call_operand.vmem [shape: f32[1,128], index: 2, kind: input, shape index: {}]
  %s3 = inlined_call_operand.vmem [shape: bf16[128,128], index: 3, kind: output, shape index: {}]
  %s4 = sld [smem:[#allocation0]]
  $region22: #{simple_generator.24} parent=0
    _
  %s6 = ssub.s32 1, %s4
  %s7 = scalar_select 0, %s6, %s4
  // Predicated region
  $region2: #{simple_generator.24} parent=0 // pred_check
    _
  $region3: #{simple_generator.24} parent=0 // pred_check_branch
    %9 = sbr.rel (0) target = $region5
  $region4: #{simple_generator.24} parent=0 // pred_region
    _
  $region5: #{simple_generator.24} parent=0 // pred_fallthru
    _
  // Predicated region
  $region6: #{simple_generator.24} parent=0 // pred_check
    _
  $region7: #{simple_generator.24} parent=0 // pred_check_branch
    %11 = sbr.rel (0) target = $region9
  $region8: #{simple_generator.24} parent=0 // pred_region
    _
  $region9: #{simple_generator.24} parent=0 // pred_fallthru
    _
  // Predicated region
  $region10: #{simple_generator.24} parent=0 // pred_check
    _
  $region11: #{simple_generator.24} parent=0 // pred_check_branch
    %13 = sbr.rel (0) target = $region13
  $region12: #{simple_generator.24} parent=0 // pred_region
    _
  $region13: #{simple_generator.24} parent=0 // pred_fallthru
    _
  %v15 = vld [vmem:[%s0] sm:$0xf]
  %v16 = vld [vmem:[%s0 + $0x4] sm:$0xf]
  %v17 = vld [vmem:[%s0 + $0x8] sm:$0xf]
  %v18 = vld [vmem:[%s0 + $0xc] sm:$0xf]
  %v19 = vld [vmem:[%s0 + $0x10] sm:$0xf]
  %v20 = vld [vmem:[%s0 + $0x14] sm:$0xf]
  %v21 = vld [vmem:[%s0 + $0x18] sm:$0xf]
  %v22 = vld [vmem:[%s0 + $0x1c] sm:$0xf]
  %v23 = vld [vmem:[%s0 + $0x20] sm:$0xf]
  %v24 = vld [vmem:[%s0 + $0x24] sm:$0xf]
  %v25 = vld [vmem:[%s0 + $0x28] sm:$0xf]
  %v26 = vld [vmem:[%s0 + $0x2c] sm:$0xf]
  %v27 = vld [vmem:[%s0 + $0x30] sm:$0xf]
  %v28 = vld [vmem:[%s0 + $0x34] sm:$0xf]
  %v29 = vld [vmem:[%s0 + $0x38] sm:$0xf]
  %v30 = vld [vmem:[%s0 + $0x3c] sm:$0xf]
  %v31 = vld [vmem:[%s1] sm:$0xf]
  %v32 = vld [vmem:[%s1 + $0x4] sm:$0xf]
  %v33 = vld [vmem:[%s1 + $0x8] sm:$0xf]
  %v34 = vld [vmem:[%s1 + $0xc] sm:$0x3]
  %v35 = vld [vmem:[%s2] sm:$0x1]
  %v37 = vlaneseq
  %v38 = vshrl.u32 %v37, 7
  %v39 = vsub.s32 0, %v38
  %v40 = vrot.slane %v35, %v39
  %v58 = vunpack.c.l.b16 %v15
  %v59 = vunpack.c.l.b16 %v16
  %v60 = vunpack.c.l.b16 %v17
  %v61 = vunpack.c.l.b16 %v18
  %v62 = vunpack.c.l.b16 %v19
  %v63 = vunpack.c.l.b16 %v20
  %v64 = vunpack.c.l.b16 %v21
  %v65 = vunpack.c.l.b16 %v22
  %v66 = vunpack.c.l.b16 %v23
  %v67 = vunpack.c.l.b16 %v24
  %v68 = vunpack.c.l.b16 %v25
  %v69 = vunpack.c.l.b16 %v26
  %v70 = vunpack.c.l.b16 %v27
  %v71 = vunpack.c.l.b16 %v28
  %v72 = vunpack.c.l.b16 %v29
  %v73 = vunpack.c.l.b16 %v30
  %v74 = vpack.c.b16 %v59, %v58
  %v75 = vpack.c.b16 %v61, %v60
  %v76 = vpack.c.b16 %v63, %v62
  %v77 = vpack.c.b16 %v65, %v64
  %v78 = vpack.c.b16 %v67, %v66
  %v79 = vpack.c.b16 %v69, %v68
  %v80 = vpack.c.b16 %v71, %v70
  %v81 = vpack.c.b16 %v73, %v72
  %v86 = vunpack.c.l.b16 %v31
  %v87 = vunpack.c.l.b16 %v32
  %v88 = vunpack.c.l.b16 %v33
  %v89 = vunpack.c.l.b16 %v34
  %v90 = vpack.c.b16 %v87, %v86
  %v91 = vpack.c.b16 %v89, %v88
  %vm93 = vcmask 220160
  %v95 = vsel %vm93, %v74, 0
  %v98 = vsel %vm93, %v75, 0
  %v101 = vsel %vm93, %v76, 0
  %v104 = vsel %vm93, %v77, 0
  %v107 = vsel %vm93, %v78, 0
  %v110 = vsel %vm93, %v79, 0
  %v113 = vsel %vm93, %v80, 0
  %v116 = vsel %vm93, %v81, 0
  %vm118 = vcmask 1044480
  %vm119 = vcmask 1045504
  %v120 = vsel %vm118, 4294967295, 65535
  %v121 = vsel %vm119, %v120, 0
  %v123 = vand.u32 %v91, %v121
  %125 = vmatprep.subr.bf16.mxu0 0
  %126 = vmatpush1.bf16.msra.mxu0 %v90
  %127 = vmatprep.subr.bf16.mxu0 0
  %128 = vmatpush1.bf16.msra.mxu0 %v123
  %129 = vmatprep.subr.bf16.mxu0 0
  %130 = vmatpush1.bf16.msra.mxu0 0
  %131 = vmatprep.subr.bf16.mxu0 0
  %132 = vmatpush1.bf16.msra.mxu0 0
  %133 = vmatprep.subr.bf16.mxu0 0
  %134 = vmatpush1.bf16.msra.mxu0 0
  %135 = vmatprep.subr.bf16.mxu0 0
  %136 = vmatpush1.bf16.msra.mxu0 0
  %137 = vmatprep.subr.bf16.mxu0 0
  %138 = vmatpush1.bf16.msra.mxu0 0
  %139 = vmatprep.subr.bf16.mxu0 0
  %140 = vmatpush1.bf16.msra.mxu0 0
  %141 = vmatprep.subr.bf16.mxu0 0
  %142 = vmatpush1.bf16.msra.mxu0 0
  %143 = vmatprep.subr.bf16.mxu0 0
  %144 = vmatpush1.bf16.msra.mxu0 0
  %145 = vmatprep.subr.bf16.mxu0 0
  %146 = vmatpush1.bf16.msra.mxu0 0
  %147 = vmatprep.subr.bf16.mxu0 0
  %148 = vmatpush1.bf16.msra.mxu0 0
  %149 = vmatprep.subr.bf16.mxu0 0
  %150 = vmatpush1.bf16.msra.mxu0 0
  %151 = vmatprep.subr.bf16.mxu0 0
  %152 = vmatpush1.bf16.msra.mxu0 0
  %153 = vmatprep.subr.bf16.mxu0 0
  %154 = vmatpush1.bf16.msra.mxu0 0
  %155 = vmatprep.subr.bf16.mxu0 0
  %156 = vmatpush1.bf16.msra.mxu0 0
  %157 = vmatprep.mubr.bf16.mxu0 0
  %158 = vmatmul.mubr.bf16.gmra.mrb[0].mxu0 %v95
  %v159 = vpop.f32.mrb[0].mxu0
  %v160 = vadd.f32 %v40, %v159
  %v161 = vpop.f32.mrb[0].mxu0
  %v162 = vpop.f32.mrb[0].mxu0
  %v163 = vadd.f32 %v40, %v162
  %v164 = vpop.f32.mrb[0].mxu0
  %165 = vmatprep.mubr.bf16.mxu0 0
  %166 = vmatmul.mubr.bf16.gmra.mrb[0].mxu0 %v98
  %v167 = vpop.f32.mrb[0].mxu0
  %v168 = vadd.f32 %v40, %v167
  %v169 = vpop.f32.mrb[0].mxu0
  %v170 = vpop.f32.mrb[0].mxu0
  %v171 = vadd.f32 %v40, %v170
  %v172 = vpop.f32.mrb[0].mxu0
  %173 = vmatprep.mubr.bf16.mxu0 0
  %174 = vmatmul.mubr.bf16.gmra.mrb[0].mxu0 %v101
  %v175 = vpop.f32.mrb[0].mxu0
  %v176 = vadd.f32 %v40, %v175
  %v177 = vpop.f32.mrb[0].mxu0
  %v178 = vpop.f32.mrb[0].mxu0
  %v179 = vadd.f32 %v40, %v178
  %v180 = vpop.f32.mrb[0].mxu0
  %181 = vmatprep.mubr.bf16.mxu0 0
  %182 = vmatmul.mubr.bf16.gmra.mrb[0].mxu0 %v104
  %v183 = vpop.f32.mrb[0].mxu0
  %v184 = vadd.f32 %v40, %v183
  %v185 = vpop.f32.mrb[0].mxu0
  %v186 = vpop.f32.mrb[0].mxu0
  %v187 = vadd.f32 %v40, %v186
  %v188 = vpop.f32.mrb[0].mxu0
  %189 = vmatprep.mubr.bf16.mxu0 0
  %190 = vmatmul.mubr.bf16.gmra.mrb[0].mxu0 %v107
  %v191 = vpop.f32.mrb[0].mxu0
  %v192 = vadd.f32 %v40, %v191
  %v193 = vpop.f32.mrb[0].mxu0
  %v194 = vpop.f32.mrb[0].mxu0
  %v195 = vadd.f32 %v40, %v194
  %v196 = vpop.f32.mrb[0].mxu0
  %197 = vmatprep.mubr.bf16.mxu0 0
  %198 = vmatmul.mubr.bf16.gmra.mrb[0].mxu0 %v110
  %v199 = vpop.f32.mrb[0].mxu0
  %v200 = vadd.f32 %v40, %v199
  %v201 = vpop.f32.mrb[0].mxu0
  %v202 = vpop.f32.mrb[0].mxu0
  %v203 = vadd.f32 %v40, %v202
  %v204 = vpop.f32.mrb[0].mxu0
  %205 = vmatprep.mubr.bf16.mxu0 0
  %206 = vmatmul.mubr.bf16.gmra.mrb[0].mxu0 %v113
  %v207 = vpop.f32.mrb[0].mxu0
  %v208 = vadd.f32 %v40, %v207
  %v209 = vpop.f32.mrb[0].mxu0
  %v210 = vpop.f32.mrb[0].mxu0
  %v211 = vadd.f32 %v40, %v210
  %v212 = vpop.f32.mrb[0].mxu0
  %213 = vmatprep.mubr.bf16.mxu0 0
  %214 = vmatmul.mubr.bf16.gmra.mrb[0].mxu0 %v116
  %v215 = vpop.f32.mrb[0].mxu0
  %v216 = vadd.f32 %v40, %v215
  %v217 = vpop.f32.mrb[0].mxu0
  %v218 = vpop.f32.mrb[0].mxu0
  %v219 = vadd.f32 %v40, %v218
  %v220 = vpop.f32.mrb[0].mxu0
  %221 = vdwg.mxu0
  %v222 = vmax.f32 %v160, 0.0
  %v223 = vmax.f32 %v163, 0.0
  %v224 = vmax.f32 %v168, 0.0
  %v225 = vmax.f32 %v171, 0.0
  %v226 = vmax.f32 %v176, 0.0
  %v227 = vmax.f32 %v179, 0.0
  %v228 = vmax.f32 %v184, 0.0
  %v229 = vmax.f32 %v187, 0.0
  %v230 = vmax.f32 %v192, 0.0
  %v231 = vmax.f32 %v195, 0.0
  %v232 = vmax.f32 %v200, 0.0
  %v233 = vmax.f32 %v203, 0.0
  %v234 = vmax.f32 %v208, 0.0
  %v235 = vmax.f32 %v211, 0.0
  %v236 = vmax.f32 %v216, 0.0
  %v237 = vmax.f32 %v219, 0.0
  %v238 = vpack.c.bf16 %v223, %v222
  %v239 = vpack.c.bf16 %v225, %v224
  %v240 = vpack.c.bf16 %v227, %v226
  %v241 = vpack.c.bf16 %v229, %v228
  %v242 = vpack.c.bf16 %v231, %v230
  %v243 = vpack.c.bf16 %v233, %v232
  %v244 = vpack.c.bf16 %v235, %v234
  %v245 = vpack.c.bf16 %v237, %v236
  %v254 = vunpack.c.l.b16 %v238
  %v255 = vunpack.c.h.b16 %v238
  %v256 = vunpack.c.l.b16 %v239
  %v257 = vunpack.c.h.b16 %v239
  %v258 = vunpack.c.l.b16 %v240
  %v259 = vunpack.c.h.b16 %v240
  %v260 = vunpack.c.l.b16 %v241
  %v261 = vunpack.c.h.b16 %v241
  %v262 = vunpack.c.l.b16 %v242
  %v263 = vunpack.c.h.b16 %v242
  %v264 = vunpack.c.l.b16 %v243
  %v265 = vunpack.c.h.b16 %v243
  %v266 = vunpack.c.l.b16 %v244
  %v267 = vunpack.c.h.b16 %v244
  %v268 = vunpack.c.l.b16 %v245
  %v269 = vunpack.c.h.b16 %v245
  %v270 = vpack.c.b16 %v254, %v254
  %v271 = vpack.c.b16 %v255, %v255
  %v272 = vpack.c.b16 %v256, %v256
  %v273 = vpack.c.b16 %v257, %v257
  %v274 = vpack.c.b16 %v258, %v258
  %v275 = vpack.c.b16 %v259, %v259
  %v276 = vpack.c.b16 %v260, %v260
  %v277 = vpack.c.b16 %v261, %v261
  %v278 = vpack.c.b16 %v262, %v262
  %v279 = vpack.c.b16 %v263, %v263
  %v280 = vpack.c.b16 %v264, %v264
  %v281 = vpack.c.b16 %v265, %v265
  %v282 = vpack.c.b16 %v266, %v266
  %v283 = vpack.c.b16 %v267, %v267
  %v284 = vpack.c.b16 %v268, %v268
  %v285 = vpack.c.b16 %v269, %v269
  %302 = vst [vmem:[%s3] sm:$0xf] %v270
  %303 = vst [vmem:[%s3 + $0x4] sm:$0xf] %v271
  %304 = vst [vmem:[%s3 + $0x8] sm:$0xf] %v272
  %305 = vst [vmem:[%s3 + $0xc] sm:$0xf] %v273
  %306 = vst [vmem:[%s3 + $0x10] sm:$0xf] %v274
  %307 = vst [vmem:[%s3 + $0x14] sm:$0xf] %v275
  %308 = vst [vmem:[%s3 + $0x18] sm:$0xf] %v276
  %309 = vst [vmem:[%s3 + $0x1c] sm:$0xf] %v277
  %310 = vst [vmem:[%s3 + $0x20] sm:$0xf] %v278
  %311 = vst [vmem:[%s3 + $0x24] sm:$0xf] %v279
  %312 = vst [vmem:[%s3 + $0x28] sm:$0xf] %v280
  %313 = vst [vmem:[%s3 + $0x2c] sm:$0xf] %v281
  %314 = vst [vmem:[%s3 + $0x30] sm:$0xf] %v282
  %315 = vst [vmem:[%s3 + $0x34] sm:$0xf] %v283
  %316 = vst [vmem:[%s3 + $0x38] sm:$0xf] %v284
  %317 = vst [vmem:[%s3 + $0x3c] sm:$0xf] %v285
  // Predicated region
  $region14: #{simple_generator.24} parent=0 // pred_check
    _
  $region15: #{simple_generator.24} parent=0 // pred_check_branch
    %319 = sbr.rel (0) target = $region17
  $region16: #{simple_generator.24} parent=0 // pred_region
    _
  $region17: #{simple_generator.24} parent=0 // pred_fallthru
    _
  // Predicated region
  $region18: #{simple_generator.24} parent=0 // pred_check
    _
  $region19: #{simple_generator.24} parent=0 // pred_check_branch
    %321 = sbr.rel (0) target = $region21
  $region20: #{simple_generator.24} parent=0 // pred_region
    _
  $region21: #{simple_generator.24} parent=0 // pred_fallthru
    _

// kernel: simple_generator.25
$region0: #{simple_generator.25}
  #allocation0 [shape = 'u32[]', space=smem, size = 0x4, offset = 0x4, fixed_abs, tag = 'smem constant byte address 0x4 - core index']
  #allocation1 [shape = 'u32[144,128]{1,0:T(1,128)}', space=vmem, size = 0x12000, scoped, tag = 'internal scratch']
  %s0 = inlined_call_operand.vmem [shape: bf16[128,288], index: 0, kind: input, shape index: {}]
  %s1 = inlined_call_operand.vmem [shape: bf16[288,128], index: 1, kind: input, shape index: {}]
  %s2 = inlined_call_operand.vmem [shape: f32[1,128], index: 2, kind: input, shape index: {}]
  %s3 = inlined_call_operand.vmem [shape: bf16[128,128], index: 3, kind: output, shape index: {}]
  %s4 = sld [smem:[#allocation0]]
  $region22: #{simple_generator.25} parent=0
    _
  %s6 = ssub.s32 1, %s4
  %s7 = scalar_select 0, %s6, %s4
  // Predicated region
  $region2: #{simple_generator.25} parent=0 // pred_check
    _
  $region3: #{simple_generator.25} parent=0 // pred_check_branch
    %9 = sbr.rel (0) target = $region5
  $region4: #{simple_generator.25} parent=0 // pred_region
    _
  $region5: #{simple_generator.25} parent=0 // pred_fallthru
    _
  // Predicated region
  $region6: #{simple_generator.25} parent=0 // pred_check
    _
  $region7: #{simple_generator.25} parent=0 // pred_check_branch
    %11 = sbr.rel (0) target = $region9
  $region8: #{simple_generator.25} parent=0 // pred_region
    _
  $region9: #{simple_generator.25} parent=0 // pred_fallthru
    _
  // Predicated region
  $region10: #{simple_generator.25} parent=0 // pred_check
    _
  $region11: #{simple_generator.25} parent=0 // pred_check_branch
    %13 = sbr.rel (0) target = $region13
  $region12: #{simple_generator.25} parent=0 // pred_region
    _
  $region13: #{simple_generator.25} parent=0 // pred_fallthru
    _
  %v15 = vld [vmem:[%s0] sm:$0xff]
  %v16 = vld [vmem:[%s0 + $0x8] sm:$0xf]
  %v17 = vld [vmem:[%s0 + $0xc] sm:$0xff]
  %v18 = vld [vmem:[%s0 + $0x14] sm:$0xf]
  %v19 = vld [vmem:[%s0 + $0x18] sm:$0xff]
  %v20 = vld [vmem:[%s0 + $0x20] sm:$0xf]
  %v21 = vld [vmem:[%s0 + $0x24] sm:$0xff]
  %v22 = vld [vmem:[%s0 + $0x2c] sm:$0xf]
  %v23 = vld [vmem:[%s0 + $0x30] sm:$0xff]
  %v24 = vld [vmem:[%s0 + $0x38] sm:$0xf]
  %v25 = vld [vmem:[%s0 + $0x3c] sm:$0xff]
  %v26 = vld [vmem:[%s0 + $0x44] sm:$0xf]
  %v27 = vld [vmem:[%s0 + $0x48] sm:$0xff]
  %v28 = vld [vmem:[%s0 + $0x50] sm:$0xf]
  %v29 = vld [vmem:[%s0 + $0x54] sm:$0xff]
  %v30 = vld [vmem:[%s0 + $0x5c] sm:$0xf]
  %v31 = vld [vmem:[%s0 + $0x60] sm:$0xff]
  %v32 = vld [vmem:[%s0 + $0x68] sm:$0xf]
  %v33 = vld [vmem:[%s0 + $0x6c] sm:$0xff]
  %v34 = vld [vmem:[%s0 + $0x74] sm:$0xf]
  %v35 = vld [vmem:[%s0 + $0x78] sm:$0xff]
  %v36 = vld [vmem:[%s0 + $0x80] sm:$0xf]
  %v37 = vld [vmem:[%s0 + $0x84] sm:$0xff]
  %v38 = vld [vmem:[%s0 + $0x8c] sm:$0xf]
  %v39 = vld [vmem:[%s0 + $0x90] sm:$0xff]
  %v40 = vld [vmem:[%s0 + $0x98] sm:$0xf]
  %v41 = vld [vmem:[%s0 + $0x9c] sm:$0xff]
  %v42 = vld [vmem:[%s0 + $0xa4] sm:$0xf]
  %v43 = vld [vmem:[%s0 + $0xa8] sm:$0xff]
  %v44 = vld [vmem:[%s0 + $0xb0] sm:$0xf]
  %v45 = vld [vmem:[%s0 + $0xb4] sm:$0xff]
  %v46 = vld [vmem:[%s0 + $0xbc] sm:$0xf]
  %v47 = vld [vmem:[%s1] sm:$0xf]
  %v48 = vld [vmem:[%s1 + $0x4] sm:$0xf]
  %v49 = vld [vmem:[%s1 + $0x8] sm:$0xf]
  %v50 = vld [vmem:[%s1 + $0xc] sm:$0xf]
  %v51 = vld [vmem:[%s1 + $0x10] sm:$0xf]
  %v52 = vld [vmem:[%s1 + $0x14] sm:$0xf]
  %v53 = vld [vmem:[%s1 + $0x18] sm:$0xf]
  %v54 = vld [vmem:[%s1 + $0x1c] sm:$0xf]
  %v55 = vld [vmem:[%s1 + $0x20] sm:$0xf]
  %v56 = vld [vmem:[%s1 + $0x24] sm:$0xf]
  %v57 = vld [vmem:[%s1 + $0x28] sm:$0xf]
  %v58 = vld [vmem:[%s1 + $0x2c] sm:$0xf]
  %v59 = vld [vmem:[%s1 + $0x30] sm:$0xf]
  %v60 = vld [vmem:[%s1 + $0x34] sm:$0xf]
  %v61 = vld [vmem:[%s1 + $0x38] sm:$0xf]
  %v62 = vld [vmem:[%s1 + $0x3c] sm:$0xf]
  %v63 = vld [vmem:[%s1 + $0x40] sm:$0xf]
  %v64 = vld [vmem:[%s1 + $0x44] sm:$0xf]
  %v65 = vld [vmem:[%s1 + $0x48] sm:$0xf]
  %v66 = vld [vmem:[%s1 + $0x4c] sm:$0xf]
  %v67 = vld [vmem:[%s1 + $0x50] sm:$0xf]
  %v68 = vld [vmem:[%s1 + $0x54] sm:$0xf]
  %v69 = vld [vmem:[%s1 + $0x58] sm:$0xf]
  %v70 = vld [vmem:[%s1 + $0x5c] sm:$0xf]
  %v71 = vld [vmem:[%s1 + $0x60] sm:$0xf]
  %v72 = vld [vmem:[%s1 + $0x64] sm:$0xf]
  %v73 = vld [vmem:[%s1 + $0x68] sm:$0xf]
  %v74 = vld [vmem:[%s1 + $0x6c] sm:$0xf]
  %v75 = vld [vmem:[%s1 + $0x70] sm:$0xf]
  %v76 = vld [vmem:[%s1 + $0x74] sm:$0xf]
  %v77 = vld [vmem:[%s1 + $0x78] sm:$0xf]
  %v78 = vld [vmem:[%s1 + $0x7c] sm:$0xf]
  %v79 = vld [vmem:[%s1 + $0x80] sm:$0xf]
  %v80 = vld [vmem:[%s1 + $0x84] sm:$0xf]
  %v81 = vld [vmem:[%s1 + $0x88] sm:$0xf]
  %v82 = vld [vmem:[%s1 + $0x8c] sm:$0xf]
  %v83 = vld [vmem:[%s2] sm:$0x1]
  %v85 = vlaneseq
  %v86 = vshrl.u32 %v85, 7
  %v87 = vsub.s32 0, %v86
  %v88 = vrot.slane %v83, %v87
  %v122 = vunpack.c.l.b16 %v15
  %v123 = vunpack.c.h.b16 %v15
  %v124 = vunpack.c.l.b16 %v16
  %v125 = vunpack.c.l.b16 %v17
  %v126 = vunpack.c.h.b16 %v17
  %v127 = vunpack.c.l.b16 %v18
  %v128 = vunpack.c.l.b16 %v19
  %v129 = vunpack.c.h.b16 %v19
  %v130 = vunpack.c.l.b16 %v20
  %v131 = vunpack.c.l.b16 %v21
  %v132 = vunpack.c.h.b16 %v21
  %v133 = vunpack.c.l.b16 %v22
  %v134 = vunpack.c.l.b16 %v23
  %v135 = vunpack.c.h.b16 %v23
  %v136 = vunpack.c.l.b16 %v24
  %v137 = vunpack.c.l.b16 %v25
  %v138 = vunpack.c.h.b16 %v25
  %v139 = vunpack.c.l.b16 %v26
  %v140 = vunpack.c.l.b16 %v27
  %v141 = vunpack.c.h.b16 %v27
  %v142 = vunpack.c.l.b16 %v28
  %v143 = vunpack.c.l.b16 %v29
  %v144 = vunpack.c.h.b16 %v29
  %v145 = vunpack.c.l.b16 %v30
  %v146 = vunpack.c.l.b16 %v31
  %v147 = vunpack.c.h.b16 %v31
  %v148 = vunpack.c.l.b16 %v32
  %v149 = vunpack.c.l.b16 %v33
  %v150 = vunpack.c.h.b16 %v33
  %v151 = vunpack.c.l.b16 %v34
  %v152 = vunpack.c.l.b16 %v35
  %v153 = vunpack.c.h.b16 %v35
  %v154 = vunpack.c.l.b16 %v36
  %v155 = vunpack.c.l.b16 %v37
  %v156 = vunpack.c.h.b16 %v37
  %v157 = vunpack.c.l.b16 %v38
  %v158 = vunpack.c.l.b16 %v39
  %v159 = vunpack.c.h.b16 %v39
  %v160 = vunpack.c.l.b16 %v40
  %v161 = vunpack.c.l.b16 %v41
  %v162 = vunpack.c.h.b16 %v41
  %v163 = vunpack.c.l.b16 %v42
  %v164 = vunpack.c.l.b16 %v43
  %v165 = vunpack.c.h.b16 %v43
  %v166 = vunpack.c.l.b16 %v44
  %v167 = vunpack.c.l.b16 %v45
  %v168 = vunpack.c.h.b16 %v45
  %v169 = vunpack.c.l.b16 %v46
  %v170 = vpack.c.b16 %v125, %v122
  %v171 = vpack.c.b16 %v126, %v123
  %v172 = vpack.c.b16 %v127, %v124
  %v173 = vpack.c.b16 %v131, %v128
  %v174 = vpack.c.b16 %v132, %v129
  %v175 = vpack.c.b16 %v133, %v130
  %v176 = vpack.c.b16 %v137, %v134
  %v177 = vpack.c.b16 %v138, %v135
  %v178 = vpack.c.b16 %v139, %v136
  %v179 = vpack.c.b16 %v143, %v140
  %v180 = vpack.c.b16 %v144, %v141
  %v181 = vpack.c.b16 %v145, %v142
  %v182 = vpack.c.b16 %v149, %v146
  %v183 = vpack.c.b16 %v150, %v147
  %v184 = vpack.c.b16 %v151, %v148
  %v185 = vpack.c.b16 %v155, %v152
  %v186 = vpack.c.b16 %v156, %v153
  %v187 = vpack.c.b16 %v157, %v154
  %v188 = vpack.c.b16 %v161, %v158
  %v189 = vpack.c.b16 %v162, %v159
  %v190 = vpack.c.b16 %v163, %v160
  %v191 = vpack.c.b16 %v167, %v164
  %v192 = vpack.c.b16 %v168, %v165
  %v193 = vpack.c.b16 %v169, %v166
  %v246 = vunpack.c.l.b16 %v47
  %v247 = vunpack.c.l.b16 %v48
  %v248 = vunpack.c.l.b16 %v49
  %v249 = vunpack.c.l.b16 %v50
  %v250 = vunpack.c.l.b16 %v51
  %v251 = vunpack.c.l.b16 %v52
  %v252 = vunpack.c.l.b16 %v53
  %v253 = vunpack.c.l.b16 %v54
  %v254 = vunpack.c.l.b16 %v55
  %v255 = vunpack.c.l.b16 %v56
  %v256 = vunpack.c.l.b16 %v57
  %v257 = vunpack.c.l.b16 %v58
  %v258 = vunpack.c.l.b16 %v59
  %v259 = vunpack.c.l.b16 %v60
  %v260 = vunpack.c.l.b16 %v61
  %v261 = vunpack.c.l.b16 %v62
  %v262 = vunpack.c.l.b16 %v63
  %v263 = vunpack.c.l.b16 %v64
  %v264 = vunpack.c.l.b16 %v65
  %v265 = vunpack.c.l.b16 %v66
  %v266 = vunpack.c.l.b16 %v67
  %v267 = vunpack.c.l.b16 %v68
  %v268 = vunpack.c.l.b16 %v69
  %v269 = vunpack.c.l.b16 %v70
  %v270 = vunpack.c.l.b16 %v71
  %v271 = vunpack.c.l.b16 %v72
  %v272 = vunpack.c.l.b16 %v73
  %v273 = vunpack.c.l.b16 %v74
  %v274 = vunpack.c.l.b16 %v75
  %v275 = vunpack.c.l.b16 %v76
  %v276 = vunpack.c.l.b16 %v77
  %v277 = vunpack.c.l.b16 %v78
  %v278 = vunpack.c.l.b16 %v79
  %v279 = vunpack.c.l.b16 %v80
  %v280 = vunpack.c.l.b16 %v81
  %v281 = vunpack.c.l.b16 %v82
  %v282 = vpack.c.b16 %v247, %v246
  %v283 = vpack.c.b16 %v249, %v248
  %v284 = vpack.c.b16 %v251, %v250
  %v285 = vpack.c.b16 %v253, %v252
  %v286 = vpack.c.b16 %v255, %v254
  %v287 = vpack.c.b16 %v257, %v256
  %v288 = vpack.c.b16 %v259, %v258
  %v289 = vpack.c.b16 %v261, %v260
  %v290 = vpack.c.b16 %v263, %v262
  %v291 = vpack.c.b16 %v265, %v264
  %v292 = vpack.c.b16 %v267, %v266
  %v293 = vpack.c.b16 %v269, %v268
  %v294 = vpack.c.b16 %v271, %v270
  %v295 = vpack.c.b16 %v273, %v272
  %v296 = vpack.c.b16 %v275, %v274
  %v297 = vpack.c.b16 %v277, %v276
  %v298 = vpack.c.b16 %v279, %v278
  %v299 = vpack.c.b16 %v281, %v280
  %vm318 = vcmask 261120
  %v320 = vsel %vm318, %v172, 0
  %v323 = vsel %vm318, %v175, 0
  %v326 = vsel %vm318, %v178, 0
  %v329 = vsel %vm318, %v181, 0
  %v332 = vsel %vm318, %v184, 0
  %v335 = vsel %vm318, %v187, 0
  %v338 = vsel %vm318, %v190, 0
  %v341 = vsel %vm318, %v193, 0
  %343 = vmatprep.subr.bf16.mxu0 0
  %344 = vmatpush1.bf16.msra.mxu0 %v282
  %345 = vmatprep.subr.bf16.mxu0 0
  %346 = vmatpush1.bf16.msra.mxu0 %v283
  %347 = vmatprep.subr.bf16.mxu0 0
  %348 = vmatpush1.bf16.msra.mxu0 %v284
  %349 = vmatprep.subr.bf16.mxu0 0
  %350 = vmatpush1.bf16.msra.mxu0 %v285
  %351 = vmatprep.subr.bf16.mxu0 0
  %352 = vmatpush1.bf16.msra.mxu0 %v286
  %353 = vmatprep.subr.bf16.mxu0 0
  %354 = vmatpush1.bf16.msra.mxu0 %v287
  %355 = vmatprep.subr.bf16.mxu0 0
  %356 = vmatpush1.bf16.msra.mxu0 %v288
  %357 = vmatprep.subr.bf16.mxu0 0
  %358 = vmatpush1.bf16.msra.mxu0 %v289
  %359 = vmatprep.subr.bf16.mxu0 0
  %360 = vmatpush1.bf16.msra.mxu0 %v290
  %361 = vmatprep.subr.bf16.mxu0 0
  %362 = vmatpush1.bf16.msra.mxu0 %v291
  %363 = vmatprep.subr.bf16.mxu0 0
  %364 = vmatpush1.bf16.msra.mxu0 %v292
  %365 = vmatprep.subr.bf16.mxu0 0
  %366 = vmatpush1.bf16.msra.mxu0 %v293
  %367 = vmatprep.subr.bf16.mxu0 0
  %368 = vmatpush1.bf16.msra.mxu0 %v294
  %369 = vmatprep.subr.bf16.mxu0 0
  %370 = vmatpush1.bf16.msra.mxu0 %v295
  %371 = vmatprep.subr.bf16.mxu0 0
  %372 = vmatpush1.bf16.msra.mxu0 %v296
  %373 = vmatprep.subr.bf16.mxu0 0
  %374 = vmatpush1.bf16.msra.mxu0 %v297
  %375 = vmatprep.mubr.bf16.mxu0 %v171
  %376 = vmatmul.mubr.bf16.gmra.mrb[0].mxu0 %v170
  %v377 = vpop.f32.mrb[0].mxu0
  %v378 = vadd.f32 %v88, %v377
  %v379 = vpop.f32.mrb[0].mxu0
  %v380 = vpop.f32.mrb[0].mxu0
  %v381 = vadd.f32 %v88, %v380
  %v382 = vpop.f32.mrb[0].mxu0
  %383 = vmatprep.mubr.bf16.mxu0 %v174
  %384 = vmatmul.mubr.bf16.gmra.mrb[0].mxu0 %v173
  %v385 = vpop.f32.mrb[0].mxu0
  %v386 = vadd.f32 %v88, %v385
  %v387 = vpop.f32.mrb[0].mxu0
  %v388 = vpop.f32.mrb[0].mxu0
  %v389 = vadd.f32 %v88, %v388
  %v390 = vpop.f32.mrb[0].mxu0
  %391 = vmatprep.mubr.bf16.mxu0 %v177
  %392 = vmatmul.mubr.bf16.gmra.mrb[0].mxu0 %v176
  %v393 = vpop.f32.mrb[0].mxu0
  %v394 = vadd.f32 %v88, %v393
  %v395 = vpop.f32.mrb[0].mxu0
  %v396 = vpop.f32.mrb[0].mxu0
  %v397 = vadd.f32 %v88, %v396
  %v398 = vpop.f32.mrb[0].mxu0
  %399 = vmatprep.mubr.bf16.mxu0 %v180
  %400 = vmatmul.mubr.bf16.gmra.mrb[0].mxu0 %v179
  %v401 = vpop.f32.mrb[0].mxu0
  %v402 = vadd.f32 %v88, %v401
  %v403 = vpop.f32.mrb[0].mxu0
  %v404 = vpop.f32.mrb[0].mxu0
  %v405 = vadd.f32 %v88, %v404
  %v406 = vpop.f32.mrb[0].mxu0
  %407 = vmatprep.mubr.bf16.mxu0 %v183
  %408 = vmatmul.mubr.bf16.gmra.mrb[0].mxu0 %v182
  %v409 = vpop.f32.mrb[0].mxu0
  %v410 = vadd.f32 %v88, %v409
  %v411 = vpop.f32.mrb[0].mxu0
  %v412 = vpop.f32.mrb[0].mxu0
  %v413 = vadd.f32 %v88, %v412
  %v414 = vpop.f32.mrb[0].mxu0
  %415 = vmatprep.mubr.bf16.mxu0 %v186
  %416 = vmatmul.mubr.bf16.gmra.mrb[0].mxu0 %v185
  %v417 = vpop.f32.mrb[0].mxu0
  %v418 = vadd.f32 %v88, %v417
  %v419 = vpop.f32.mrb[0].mxu0
  %v420 = vpop.f32.mrb[0].mxu0
  %v421 = vadd.f32 %v88, %v420
  %v422 = vpop.f32.mrb[0].mxu0
  %423 = vmatprep.mubr.bf16.mxu0 %v189
  %424 = vmatmul.mubr.bf16.gmra.mrb[0].mxu0 %v188
  %v425 = vpop.f32.mrb[0].mxu0
  %v426 = vadd.f32 %v88, %v425
  %v427 = vpop.f32.mrb[0].mxu0
  %v428 = vpop.f32.mrb[0].mxu0
  %v429 = vadd.f32 %v88, %v428
  %v430 = vpop.f32.mrb[0].mxu0
  %431 = vmatprep.mubr.bf16.mxu0 %v192
  %432 = vmatmul.mubr.bf16.gmra.mrb[0].mxu0 %v191
  %v433 = vpop.f32.mrb[0].mxu0
  %v434 = vadd.f32 %v88, %v433
  %v435 = vpop.f32.mrb[0].mxu0
  %v436 = vpop.f32.mrb[0].mxu0
  %v437 = vadd.f32 %v88, %v436
  %v438 = vpop.f32.mrb[0].mxu0
  %439 = vdwg.mxu0
  %440 = vmatprep.subr.bf16.mxu0 0
  %441 = vmatpush1.bf16.msra.mxu0 %v298
  %442 = vmatprep.subr.bf16.mxu0 0
  %443 = vmatpush1.bf16.msra.mxu0 %v299
  %444 = vmatprep.subr.bf16.mxu0 0
  %445 = vmatpush1.bf16.msra.mxu0 0
  %446 = vmatprep.subr.bf16.mxu0 0
  %447 = vmatpush1.bf16.msra.mxu0 0
  %448 = vmatprep.subr.bf16.mxu0 0
  %449 = vmatpush1.bf16.msra.mxu0 0
  %450 = vmatprep.subr.bf16.mxu0 0
  %451 = vmatpush1.bf16.msra.mxu0 0
  %452 = vmatprep.subr.bf16.mxu0 0
  %453 = vmatpush1.bf16.msra.mxu0 0
  %454 = vmatprep.subr.bf16.mxu0 0
  %455 = vmatpush1.bf16.msra.mxu0 0
  %456 = vmatprep.subr.bf16.mxu0 0
  %457 = vmatpush1.bf16.msra.mxu0 0
  %458 = vmatprep.subr.bf16.mxu0 0
  %459 = vmatpush1.bf16.msra.mxu0 0
  %460 = vmatprep.subr.bf16.mxu0 0
  %461 = vmatpush1.bf16.msra.mxu0 0
  %462 = vmatprep.subr.bf16.mxu0 0
  %463 = vmatpush1.bf16.msra.mxu0 0
  %464 = vmatprep.subr.bf16.mxu0 0
  %465 = vmatpush1.bf16.msra.mxu0 0
  %466 = vmatprep.subr.bf16.mxu0 0
  %467 = vmatpush1.bf16.msra.mxu0 0
  %468 = vmatprep.subr.bf16.mxu0 0
  %469 = vmatpush1.bf16.msra.mxu0 0
  %470 = vmatprep.subr.bf16.mxu0 0
  %471 = vmatpush1.bf16.msra.mxu0 0
  %472 = vmatprep.mubr.bf16.mxu0 0
  %473 = vmatmul.mubr.bf16.gmra.mrb[0].mxu0 %v320
  %v474 = vpop.f32.mrb[0].mxu0
  %v475 = vadd.f32 %v378, %v474
  %v476 = vpop.f32.mrb[0].mxu0
  %v477 = vpop.f32.mrb[0].mxu0
  %v478 = vadd.f32 %v381, %v477
  %v479 = vpop.f32.mrb[0].mxu0
  %480 = vmatprep.mubr.bf16.mxu0 0
  %481 = vmatmul.mubr.bf16.gmra.mrb[0].mxu0 %v323
  %v482 = vpop.f32.mrb[0].mxu0
  %v483 = vadd.f32 %v386, %v482
  %v484 = vpop.f32.mrb[0].mxu0
  %v485 = vpop.f32.mrb[0].mxu0
  %v486 = vadd.f32 %v389, %v485
  %v487 = vpop.f32.mrb[0].mxu0
  %488 = vmatprep.mubr.bf16.mxu0 0
  %489 = vmatmul.mubr.bf16.gmra.mrb[0].mxu0 %v326
  %v490 = vpop.f32.mrb[0].mxu0
  %v491 = vadd.f32 %v394, %v490
  %v492 = vpop.f32.mrb[0].mxu0
  %v493 = vpop.f32.mrb[0].mxu0
  %v494 = vadd.f32 %v397, %v493
  %v495 = vpop.f32.mrb[0].mxu0
  %496 = vmatprep.mubr.bf16.mxu0 0
  %497 = vmatmul.mubr.bf16.gmra.mrb[0].mxu0 %v329
  %v498 = vpop.f32.mrb[0].mxu0
  %v499 = vadd.f32 %v402, %v498
  %v500 = vpop.f32.mrb[0].mxu0
  %v501 = vpop.f32.mrb[0].mxu0
  %v502 = vadd.f32 %v405, %v501
  %v503 = vpop.f32.mrb[0].mxu0
  %504 = vmatprep.mubr.bf16.mxu0 0
  %505 = vmatmul.mubr.bf16.gmra.mrb[0].mxu0 %v332
  %v506 = vpop.f32.mrb[0].mxu0
  %v507 = vadd.f32 %v410, %v506
  %v508 = vpop.f32.mrb[0].mxu0
  %v509 = vpop.f32.mrb[0].mxu0
  %v510 = vadd.f32 %v413, %v509
  %v511 = vpop.f32.mrb[0].mxu0
  %512 = vmatprep.mubr.bf16.mxu0 0
  %513 = vmatmul.mubr.bf16.gmra.mrb[0].mxu0 %v335
  %v514 = vpop.f32.mrb[0].mxu0
  %v515 = vadd.f32 %v418, %v514
  %v516 = vpop.f32.mrb[0].mxu0
  %v517 = vpop.f32.mrb[0].mxu0
  %v518 = vadd.f32 %v421, %v517
  %v519 = vpop.f32.mrb[0].mxu0
  %520 = vmatprep.mubr.bf16.mxu0 0
  %521 = vmatmul.mubr.bf16.gmra.mrb[0].mxu0 %v338
  %v522 = vpop.f32.mrb[0].mxu0
  %v523 = vadd.f32 %v426, %v522
  %v524 = vpop.f32.mrb[0].mxu0
  %v525 = vpop.f32.mrb[0].mxu0
  %v526 = vadd.f32 %v429, %v525
  %v527 = vpop.f32.mrb[0].mxu0
  %528 = vmatprep.mubr.bf16.mxu0 0
  %529 = vmatmul.mubr.bf16.gmra.mrb[0].mxu0 %v341
  %v530 = vpop.f32.mrb[0].mxu0
  %v531 = vadd.f32 %v434, %v530
  %v532 = vpop.f32.mrb[0].mxu0
  %v533 = vpop.f32.mrb[0].mxu0
  %v534 = vadd.f32 %v437, %v533
  %v535 = vpop.f32.mrb[0].mxu0
  %536 = vdwg.mxu0
  %v537 = vmax.f32 %v475, 0.0
  %v538 = vmax.f32 %v478, 0.0
  %v539 = vmax.f32 %v483, 0.0
  %v540 = vmax.f32 %v486, 0.0
  %v541 = vmax.f32 %v491, 0.0
  %v542 = vmax.f32 %v494, 0.0
  %v543 = vmax.f32 %v499, 0.0
  %v544 = vmax.f32 %v502, 0.0
  %v545 = vmax.f32 %v507, 0.0
  %v546 = vmax.f32 %v510, 0.0
  %v547 = vmax.f32 %v515, 0.0
  %v548 = vmax.f32 %v518, 0.0
  %v549 = vmax.f32 %v523, 0.0
  %v550 = vmax.f32 %v526, 0.0
  %v551 = vmax.f32 %v531, 0.0
  %v552 = vmax.f32 %v534, 0.0
  %v553 = vpack.c.bf16 %v538, %v537
  %v554 = vpack.c.bf16 %v540, %v539
  %v555 = vpack.c.bf16 %v542, %v541
  %v556 = vpack.c.bf16 %v544, %v543
  %v557 = vpack.c.bf16 %v546, %v545
  %v558 = vpack.c.bf16 %v548, %v547
  %v559 = vpack.c.bf16 %v550, %v549
  %v560 = vpack.c.bf16 %v552, %v551
  %v569 = vunpack.c.l.b16 %v553
  %v570 = vunpack.c.h.b16 %v553
  %v571 = vunpack.c.l.b16 %v554
  %v572 = vunpack.c.h.b16 %v554
  %v573 = vunpack.c.l.b16 %v555
  %v574 = vunpack.c.h.b16 %v555
  %v575 = vunpack.c.l.b16 %v556
  %v576 = vunpack.c.h.b16 %v556
  %v577 = vunpack.c.l.b16 %v557
  %v578 = vunpack.c.h.b16 %v557
  %v579 = vunpack.c.l.b16 %v558
  %v580 = vunpack.c.h.b16 %v558
  %v581 = vunpack.c.l.b16 %v559
  %v582 = vunpack.c.h.b16 %v559
  %v583 = vunpack.c.l.b16 %v560
  %v584 = vunpack.c.h.b16 %v560
  %v585 = vpack.c.b16 %v569, %v569
  %v586 = vpack.c.b16 %v570, %v570
  %v587 = vpack.c.b16 %v571, %v571
  %v588 = vpack.c.b16 %v572, %v572
  %v589 = vpack.c.b16 %v573, %v573
  %v590 = vpack.c.b16 %v574, %v574
  %v591 = vpack.c.b16 %v575, %v575
  %v592 = vpack.c.b16 %v576, %v576
  %v593 = vpack.c.b16 %v577, %v577
  %v594 = vpack.c.b16 %v578, %v578
  %v595 = vpack.c.b16 %v579, %v579
  %v596 = vpack.c.b16 %v580, %v580
  %v597 = vpack.c.b16 %v581, %v581
  %v598 = vpack.c.b16 %v582, %v582
  %v599 = vpack.c.b16 %v583, %v583
  %v600 = vpack.c.b16 %v584, %v584
  %617 = vst [vmem:[%s3] sm:$0xf] %v585
  %618 = vst [vmem:[%s3 + $0x4] sm:$0xf] %v586
  %619 = vst [vmem:[%s3 + $0x8] sm:$0xf] %v587
  %620 = vst [vmem:[%s3 + $0xc] sm:$0xf] %v588
  %621 = vst [vmem:[%s3 + $0x10] sm:$0xf] %v589
  %622 = vst [vmem:[%s3 + $0x14] sm:$0xf] %v590
  %623 = vst [vmem:[%s3 + $0x18] sm:$0xf] %v591
  %624 = vst [vmem:[%s3 + $0x1c] sm:$0xf] %v592
  %625 = vst [vmem:[%s3 + $0x20] sm:$0xf] %v593
  %626 = vst [vmem:[%s3 + $0x24] sm:$0xf] %v594
  %627 = vst [vmem:[%s3 + $0x28] sm:$0xf] %v595
  %628 = vst [vmem:[%s3 + $0x2c] sm:$0xf] %v596
  %629 = vst [vmem:[%s3 + $0x30] sm:$0xf] %v597
  %630 = vst [vmem:[%s3 + $0x34] sm:$0xf] %v598
  %631 = vst [vmem:[%s3 + $0x38] sm:$0xf] %v599
  %632 = vst [vmem:[%s3 + $0x3c] sm:$0xf] %v600
  // Predicated region
  $region14: #{simple_generator.25} parent=0 // pred_check
    _
  $region15: #{simple_generator.25} parent=0 // pred_check_branch
    %634 = sbr.rel (0) target = $region17
  $region16: #{simple_generator.25} parent=0 // pred_region
    _
  $region17: #{simple_generator.25} parent=0 // pred_fallthru
    _
  // Predicated region
  $region18: #{simple_generator.25} parent=0 // pred_check
    _
  $region19: #{simple_generator.25} parent=0 // pred_check_branch
    %636 = sbr.rel (0) target = $region21
  $region20: #{simple_generator.25} parent=0 // pred_region
    _
  $region21: #{simple_generator.25} parent=0 // pred_fallthru
    _

// kernel: simple_generator.26
$region0: #{simple_generator.26}
  #allocation0 [shape = 'u32[]', space=smem, size = 0x4, offset = 0x4, fixed_abs, tag = 'smem constant byte address 0x4 - core index']
  #allocation1 [shape = 'u32[144,128]{1,0:T(1,128)}', space=vmem, size = 0x12000, scoped, tag = 'internal scratch']
  %s0 = inlined_call_operand.vmem [shape: bf16[32,288], index: 0, kind: input, shape index: {}]
  %s1 = inlined_call_operand.vmem [shape: bf16[288,128], index: 1, kind: input, shape index: {}]
  %s2 = inlined_call_operand.vmem [shape: f32[1,128], index: 2, kind: input, shape index: {}]
  %s3 = inlined_call_operand.vmem [shape: bf16[32,128], index: 3, kind: output, shape index: {}]
  %s4 = sld [smem:[#allocation0]]
  $region22: #{simple_generator.26} parent=0
    _
  %s6 = ssub.s32 1, %s4
  %s7 = scalar_select 0, %s6, %s4
  // Predicated region
  $region2: #{simple_generator.26} parent=0 // pred_check
    _
  $region3: #{simple_generator.26} parent=0 // pred_check_branch
    %9 = sbr.rel (0) target = $region5
  $region4: #{simple_generator.26} parent=0 // pred_region
    _
  $region5: #{simple_generator.26} parent=0 // pred_fallthru
    _
  // Predicated region
  $region6: #{simple_generator.26} parent=0 // pred_check
    _
  $region7: #{simple_generator.26} parent=0 // pred_check_branch
    %11 = sbr.rel (0) target = $region9
  $region8: #{simple_generator.26} parent=0 // pred_region
    _
  $region9: #{simple_generator.26} parent=0 // pred_fallthru
    _
  // Predicated region
  $region10: #{simple_generator.26} parent=0 // pred_check
    _
  $region11: #{simple_generator.26} parent=0 // pred_check_branch
    %13 = sbr.rel (0) target = $region13
  $region12: #{simple_generator.26} parent=0 // pred_region
    _
  $region13: #{simple_generator.26} parent=0 // pred_fallthru
    _
  %v15 = vld [vmem:[%s0] sm:$0xff]
  %v16 = vld [vmem:[%s0 + $0x8] sm:$0xf]
  %v17 = vld [vmem:[%s0 + $0xc] sm:$0xff]
  %v18 = vld [vmem:[%s0 + $0x14] sm:$0xf]
  %v19 = vld [vmem:[%s0 + $0x18] sm:$0xff]
  %v20 = vld [vmem:[%s0 + $0x20] sm:$0xf]
  %v21 = vld [vmem:[%s0 + $0x24] sm:$0xff]
  %v22 = vld [vmem:[%s0 + $0x2c] sm:$0xf]
  %v23 = vld [vmem:[%s1] sm:$0xf]
  %v24 = vld [vmem:[%s1 + $0x4] sm:$0xf]
  %v25 = vld [vmem:[%s1 + $0x8] sm:$0xf]
  %v26 = vld [vmem:[%s1 + $0xc] sm:$0xf]
  %v27 = vld [vmem:[%s1 + $0x10] sm:$0xf]
  %v28 = vld [vmem:[%s1 + $0x14] sm:$0xf]
  %v29 = vld [vmem:[%s1 + $0x18] sm:$0xf]
  %v30 = vld [vmem:[%s1 + $0x1c] sm:$0xf]
  %v31 = vld [vmem:[%s1 + $0x20] sm:$0xf]
  %v32 = vld [vmem:[%s1 + $0x24] sm:$0xf]
  %v33 = vld [vmem:[%s1 + $0x28] sm:$0xf]
  %v34 = vld [vmem:[%s1 + $0x2c] sm:$0xf]
  %v35 = vld [vmem:[%s1 + $0x30] sm:$0xf]
  %v36 = vld [vmem:[%s1 + $0x34] sm:$0xf]
  %v37 = vld [vmem:[%s1 + $0x38] sm:$0xf]
  %v38 = vld [vmem:[%s1 + $0x3c] sm:$0xf]
  %v39 = vld [vmem:[%s1 + $0x40] sm:$0xf]
  %v40 = vld [vmem:[%s1 + $0x44] sm:$0xf]
  %v41 = vld [vmem:[%s1 + $0x48] sm:$0xf]
  %v42 = vld [vmem:[%s1 + $0x4c] sm:$0xf]
  %v43 = vld [vmem:[%s1 + $0x50] sm:$0xf]
  %v44 = vld [vmem:[%s1 + $0x54] sm:$0xf]
  %v45 = vld [vmem:[%s1 + $0x58] sm:$0xf]
  %v46 = vld [vmem:[%s1 + $0x5c] sm:$0xf]
  %v47 = vld [vmem:[%s1 + $0x60] sm:$0xf]
  %v48 = vld [vmem:[%s1 + $0x64] sm:$0xf]
  %v49 = vld [vmem:[%s1 + $0x68] sm:$0xf]
  %v50 = vld [vmem:[%s1 + $0x6c] sm:$0xf]
  %v51 = vld [vmem:[%s1 + $0x70] sm:$0xf]
  %v52 = vld [vmem:[%s1 + $0x74] sm:$0xf]
  %v53 = vld [vmem:[%s1 + $0x78] sm:$0xf]
  %v54 = vld [vmem:[%s1 + $0x7c] sm:$0xf]
  %v55 = vld [vmem:[%s1 + $0x80] sm:$0xf]
  %v56 = vld [vmem:[%s1 + $0x84] sm:$0xf]
  %v57 = vld [vmem:[%s1 + $0x88] sm:$0xf]
  %v58 = vld [vmem:[%s1 + $0x8c] sm:$0xf]
  %v59 = vld [vmem:[%s2] sm:$0x1]
  %v61 = vlaneseq
  %v62 = vshrl.u32 %v61, 7
  %v63 = vsub.s32 0, %v62
  %v64 = vrot.slane %v59, %v63
  %v74 = vunpack.c.l.b16 %v15
  %v75 = vunpack.c.h.b16 %v15
  %v76 = vunpack.c.l.b16 %v16
  %v77 = vunpack.c.l.b16 %v17
  %v78 = vunpack.c.h.b16 %v17
  %v79 = vunpack.c.l.b16 %v18
  %v80 = vunpack.c.l.b16 %v19
  %v81 = vunpack.c.h.b16 %v19
  %v82 = vunpack.c.l.b16 %v20
  %v83 = vunpack.c.l.b16 %v21
  %v84 = vunpack.c.h.b16 %v21
  %v85 = vunpack.c.l.b16 %v22
  %v86 = vpack.c.b16 %v77, %v74
  %v87 = vpack.c.b16 %v78, %v75
  %v88 = vpack.c.b16 %v79, %v76
  %v89 = vpack.c.b16 %v83, %v80
  %v90 = vpack.c.b16 %v84, %v81
  %v91 = vpack.c.b16 %v85, %v82
  %v132 = vunpack.c.l.b16 %v23
  %v133 = vunpack.c.l.b16 %v24
  %v134 = vunpack.c.l.b16 %v25
  %v135 = vunpack.c.l.b16 %v26
  %v136 = vunpack.c.l.b16 %v27
  %v137 = vunpack.c.l.b16 %v28
  %v138 = vunpack.c.l.b16 %v29
  %v139 = vunpack.c.l.b16 %v30
  %v140 = vunpack.c.l.b16 %v31
  %v141 = vunpack.c.l.b16 %v32
  %v142 = vunpack.c.l.b16 %v33
  %v143 = vunpack.c.l.b16 %v34
  %v144 = vunpack.c.l.b16 %v35
  %v145 = vunpack.c.l.b16 %v36
  %v146 = vunpack.c.l.b16 %v37
  %v147 = vunpack.c.l.b16 %v38
  %v148 = vunpack.c.l.b16 %v39
  %v149 = vunpack.c.l.b16 %v40
  %v150 = vunpack.c.l.b16 %v41
  %v151 = vunpack.c.l.b16 %v42
  %v152 = vunpack.c.l.b16 %v43
  %v153 = vunpack.c.l.b16 %v44
  %v154 = vunpack.c.l.b16 %v45
  %v155 = vunpack.c.l.b16 %v46
  %v156 = vunpack.c.l.b16 %v47
  %v157 = vunpack.c.l.b16 %v48
  %v158 = vunpack.c.l.b16 %v49
  %v159 = vunpack.c.l.b16 %v50
  %v160 = vunpack.c.l.b16 %v51
  %v161 = vunpack.c.l.b16 %v52
  %v162 = vunpack.c.l.b16 %v53
  %v163 = vunpack.c.l.b16 %v54
  %v164 = vunpack.c.l.b16 %v55
  %v165 = vunpack.c.l.b16 %v56
  %v166 = vunpack.c.l.b16 %v57
  %v167 = vunpack.c.l.b16 %v58
  %v168 = vpack.c.b16 %v133, %v132
  %v169 = vpack.c.b16 %v135, %v134
  %v170 = vpack.c.b16 %v137, %v136
  %v171 = vpack.c.b16 %v139, %v138
  %v172 = vpack.c.b16 %v141, %v140
  %v173 = vpack.c.b16 %v143, %v142
  %v174 = vpack.c.b16 %v145, %v144
  %v175 = vpack.c.b16 %v147, %v146
  %v176 = vpack.c.b16 %v149, %v148
  %v177 = vpack.c.b16 %v151, %v150
  %v178 = vpack.c.b16 %v153, %v152
  %v179 = vpack.c.b16 %v155, %v154
  %v180 = vpack.c.b16 %v157, %v156
  %v181 = vpack.c.b16 %v159, %v158
  %v182 = vpack.c.b16 %v161, %v160
  %v183 = vpack.c.b16 %v163, %v162
  %v184 = vpack.c.b16 %v165, %v164
  %v185 = vpack.c.b16 %v167, %v166
  %vm204 = vcmask 261120
  %v206 = vsel %vm204, %v88, 0
  %v209 = vsel %vm204, %v91, 0
  %211 = vmatprep.subr.bf16.mxu0 0
  %212 = vmatpush1.bf16.msra.mxu0 %v168
  %213 = vmatprep.subr.bf16.mxu0 0
  %214 = vmatpush1.bf16.msra.mxu0 %v169
  %215 = vmatprep.subr.bf16.mxu0 0
  %216 = vmatpush1.bf16.msra.mxu0 %v170
  %217 = vmatprep.subr.bf16.mxu0 0
  %218 = vmatpush1.bf16.msra.mxu0 %v171
  %219 = vmatprep.subr.bf16.mxu0 0
  %220 = vmatpush1.bf16.msra.mxu0 %v172
  %221 = vmatprep.subr.bf16.mxu0 0
  %222 = vmatpush1.bf16.msra.mxu0 %v173
  %223 = vmatprep.subr.bf16.mxu0 0
  %224 = vmatpush1.bf16.msra.mxu0 %v174
  %225 = vmatprep.subr.bf16.mxu0 0
  %226 = vmatpush1.bf16.msra.mxu0 %v175
  %227 = vmatprep.subr.bf16.mxu0 0
  %228 = vmatpush1.bf16.msra.mxu0 %v176
  %229 = vmatprep.subr.bf16.mxu0 0
  %230 = vmatpush1.bf16.msra.mxu0 %v177
  %231 = vmatprep.subr.bf16.mxu0 0
  %232 = vmatpush1.bf16.msra.mxu0 %v178
  %233 = vmatprep.subr.bf16.mxu0 0
  %234 = vmatpush1.bf16.msra.mxu0 %v179
  %235 = vmatprep.subr.bf16.mxu0 0
  %236 = vmatpush1.bf16.msra.mxu0 %v180
  %237 = vmatprep.subr.bf16.mxu0 0
  %238 = vmatpush1.bf16.msra.mxu0 %v181
  %239 = vmatprep.subr.bf16.mxu0 0
  %240 = vmatpush1.bf16.msra.mxu0 %v182
  %241 = vmatprep.subr.bf16.mxu0 0
  %242 = vmatpush1.bf16.msra.mxu0 %v183
  %243 = vmatprep.mubr.bf16.mxu0 %v87
  %244 = vmatmul.mubr.bf16.gmra.mrb[0].mxu0 %v86
  %v245 = vpop.f32.mrb[0].mxu0
  %v246 = vadd.f32 %v64, %v245
  %v247 = vpop.f32.mrb[0].mxu0
  %v248 = vpop.f32.mrb[0].mxu0
  %v249 = vadd.f32 %v64, %v248
  %v250 = vpop.f32.mrb[0].mxu0
  %251 = vmatprep.mubr.bf16.mxu0 %v90
  %252 = vmatmul.mubr.bf16.gmra.mrb[0].mxu0 %v89
  %v253 = vpop.f32.mrb[0].mxu0
  %v254 = vadd.f32 %v64, %v253
  %v255 = vpop.f32.mrb[0].mxu0
  %v256 = vpop.f32.mrb[0].mxu0
  %v257 = vadd.f32 %v64, %v256
  %v258 = vpop.f32.mrb[0].mxu0
  %259 = vdwg.mxu0
  %260 = vmatprep.subr.bf16.mxu0 0
  %261 = vmatpush1.bf16.msra.mxu0 %v184
  %262 = vmatprep.subr.bf16.mxu0 0
  %263 = vmatpush1.bf16.msra.mxu0 %v185
  %264 = vmatprep.subr.bf16.mxu0 0
  %265 = vmatpush1.bf16.msra.mxu0 0
  %266 = vmatprep.subr.bf16.mxu0 0
  %267 = vmatpush1.bf16.msra.mxu0 0
  %268 = vmatprep.subr.bf16.mxu0 0
  %269 = vmatpush1.bf16.msra.mxu0 0
  %270 = vmatprep.subr.bf16.mxu0 0
  %271 = vmatpush1.bf16.msra.mxu0 0
  %272 = vmatprep.subr.bf16.mxu0 0
  %273 = vmatpush1.bf16.msra.mxu0 0
  %274 = vmatprep.subr.bf16.mxu0 0
  %275 = vmatpush1.bf16.msra.mxu0 0
  %276 = vmatprep.subr.bf16.mxu0 0
  %277 = vmatpush1.bf16.msra.mxu0 0
  %278 = vmatprep.subr.bf16.mxu0 0
  %279 = vmatpush1.bf16.msra.mxu0 0
  %280 = vmatprep.subr.bf16.mxu0 0
  %281 = vmatpush1.bf16.msra.mxu0 0
  %282 = vmatprep.subr.bf16.mxu0 0
  %283 = vmatpush1.bf16.msra.mxu0 0
  %284 = vmatprep.subr.bf16.mxu0 0
  %285 = vmatpush1.bf16.msra.mxu0 0
  %286 = vmatprep.subr.bf16.mxu0 0
  %287 = vmatpush1.bf16.msra.mxu0 0
  %288 = vmatprep.subr.bf16.mxu0 0
  %289 = vmatpush1.bf16.msra.mxu0 0
  %290 = vmatprep.subr.bf16.mxu0 0
  %291 = vmatpush1.bf16.msra.mxu0 0
  %292 = vmatprep.mubr.bf16.mxu0 0
  %293 = vmatmul.mubr.bf16.gmra.mrb[0].mxu0 %v206
  %v294 = vpop.f32.mrb[0].mxu0
  %v295 = vadd.f32 %v246, %v294
  %v296 = vpop.f32.mrb[0].mxu0
  %v297 = vpop.f32.mrb[0].mxu0
  %v298 = vadd.f32 %v249, %v297
  %v299 = vpop.f32.mrb[0].mxu0
  %300 = vmatprep.mubr.bf16.mxu0 0
  %301 = vmatmul.mubr.bf16.gmra.mrb[0].mxu0 %v209
  %v302 = vpop.f32.mrb[0].mxu0
  %v303 = vadd.f32 %v254, %v302
  %v304 = vpop.f32.mrb[0].mxu0
  %v305 = vpop.f32.mrb[0].mxu0
  %v306 = vadd.f32 %v257, %v305
  %v307 = vpop.f32.mrb[0].mxu0
  %308 = vdwg.mxu0
  %v309 = vmax.f32 %v295, 0.0
  %v310 = vmax.f32 %v298, 0.0
  %v311 = vmax.f32 %v303, 0.0
  %v312 = vmax.f32 %v306, 0.0
  %v313 = vpack.c.bf16 %v310, %v309
  %v314 = vpack.c.bf16 %v312, %v311
  %v317 = vunpack.c.l.b16 %v313
  %v318 = vunpack.c.h.b16 %v313
  %v319 = vunpack.c.l.b16 %v314
  %v320 = vunpack.c.h.b16 %v314
  %v321 = vpack.c.b16 %v317, %v317
  %v322 = vpack.c.b16 %v318, %v318
  %v323 = vpack.c.b16 %v319, %v319
  %v324 = vpack.c.b16 %v320, %v320
  %329 = vst [vmem:[%s3] sm:$0xf] %v321
  %330 = vst [vmem:[%s3 + $0x4] sm:$0xf] %v322
  %331 = vst [vmem:[%s3 + $0x8] sm:$0xf] %v323
  %332 = vst [vmem:[%s3 + $0xc] sm:$0xf] %v324
  // Predicated region
  $region14: #{simple_generator.26} parent=0 // pred_check
    _
  $region15: #{simple_generator.26} parent=0 // pred_check_branch
    %334 = sbr.rel (0) target = $region17
  $region16: #{simple_generator.26} parent=0 // pred_region
    _
  $region17: #{simple_generator.26} parent=0 // pred_fallthru
    _
  // Predicated region
  $region18: #{simple_generator.26} parent=0 // pred_check
    _
  $region19: #{simple_generator.26} parent=0 // pred_check_branch
    %336 = sbr.rel (0) target = $region21
  $region20: #{simple_generator.26} parent=0 // pred_region
    _
  $region21: #{simple_generator.26} parent=0 // pred_fallthru
    _

// kernel: simple_generator.27
$region0: #{simple_generator.27}
  #allocation0 [shape = 'u32[]', space=smem, size = 0x4, offset = 0x4, fixed_abs, tag = 'smem constant byte address 0x4 - core index']
  #allocation1 [shape = 'u32[144,128]{1,0:T(1,128)}', space=vmem, size = 0x12000, scoped, tag = 'internal scratch']
  %s0 = inlined_call_operand.vmem [shape: bf16[32,576], index: 0, kind: input, shape index: {}]
  %s1 = inlined_call_operand.vmem [shape: bf16[576,128], index: 1, kind: input, shape index: {}]
  %s2 = inlined_call_operand.vmem [shape: f32[1,128], index: 2, kind: input, shape index: {}]
  %s3 = inlined_call_operand.vmem [shape: bf16[32,128], index: 3, kind: output, shape index: {}]
  %s4 = sld [smem:[#allocation0]]
  $region22: #{simple_generator.27} parent=0
    _
  %s6 = ssub.s32 1, %s4
  %s7 = scalar_select 0, %s6, %s4
  // Predicated region
  $region2: #{simple_generator.27} parent=0 // pred_check
    _
  $region3: #{simple_generator.27} parent=0 // pred_check_branch
    %9 = sbr.rel (0) target = $region5
  $region4: #{simple_generator.27} parent=0 // pred_region
    _
  $region5: #{simple_generator.27} parent=0 // pred_fallthru
    _
  // Predicated region
  $region6: #{simple_generator.27} parent=0 // pred_check
    _
  $region7: #{simple_generator.27} parent=0 // pred_check_branch
    %11 = sbr.rel (0) target = $region9
  $region8: #{simple_generator.27} parent=0 // pred_region
    _
  $region9: #{simple_generator.27} parent=0 // pred_fallthru
    _
  // Predicated region
  $region10: #{simple_generator.27} parent=0 // pred_check
    _
  $region11: #{simple_generator.27} parent=0 // pred_check_branch
    %13 = sbr.rel (0) target = $region13
  $region12: #{simple_generator.27} parent=0 // pred_region
    _
  $region13: #{simple_generator.27} parent=0 // pred_fallthru
    _
  %v15 = vld [vmem:[%s0] sm:$0xff]
  %v16 = vld [vmem:[%s0 + $0x8] sm:$0xff]
  %v17 = vld [vmem:[%s0 + $0x10] sm:$0xf]
  %v18 = vld [vmem:[%s0 + $0x14] sm:$0xff]
  %v19 = vld [vmem:[%s0 + $0x1c] sm:$0xff]
  %v20 = vld [vmem:[%s0 + $0x24] sm:$0xf]
  %v21 = vld [vmem:[%s0 + $0x28] sm:$0xff]
  %v22 = vld [vmem:[%s0 + $0x30] sm:$0xff]
  %v23 = vld [vmem:[%s0 + $0x38] sm:$0xf]
  %v24 = vld [vmem:[%s0 + $0x3c] sm:$0xff]
  %v25 = vld [vmem:[%s0 + $0x44] sm:$0xff]
  %v26 = vld [vmem:[%s0 + $0x4c] sm:$0xf]
  %v27 = vld [vmem:[%s1] sm:$0xf]
  %v28 = vld [vmem:[%s1 + $0x4] sm:$0xf]
  %v29 = vld [vmem:[%s1 + $0x8] sm:$0xf]
  %v30 = vld [vmem:[%s1 + $0xc] sm:$0xf]
  %v31 = vld [vmem:[%s1 + $0x10] sm:$0xf]
  %v32 = vld [vmem:[%s1 + $0x14] sm:$0xf]
  %v33 = vld [vmem:[%s1 + $0x18] sm:$0xf]
  %v34 = vld [vmem:[%s1 + $0x1c] sm:$0xf]
  %v35 = vld [vmem:[%s1 + $0x20] sm:$0xf]
  %v36 = vld [vmem:[%s1 + $0x24] sm:$0xf]
  %v37 = vld [vmem:[%s1 + $0x28] sm:$0xf]
  %v38 = vld [vmem:[%s1 + $0x2c] sm:$0xf]
  %v39 = vld [vmem:[%s1 + $0x30] sm:$0xf]
  %v40 = vld [vmem:[%s1 + $0x34] sm:$0xf]
  %v41 = vld [vmem:[%s1 + $0x38] sm:$0xf]
  %v42 = vld [vmem:[%s1 + $0x3c] sm:$0xf]
  %v43 = vld [vmem:[%s1 + $0x40] sm:$0xf]
  %v44 = vld [vmem:[%s1 + $0x44] sm:$0xf]
  %v45 = vld [vmem:[%s1 + $0x48] sm:$0xf]
  %v46 = vld [vmem:[%s1 + $0x4c] sm:$0xf]
  %v47 = vld [vmem:[%s1 + $0x50] sm:$0xf]
  %v48 = vld [vmem:[%s1 + $0x54] sm:$0xf]
  %v49 = vld [vmem:[%s1 + $0x58] sm:$0xf]
  %v50 = vld [vmem:[%s1 + $0x5c] sm:$0xf]
  %v51 = vld [vmem:[%s1 + $0x60] sm:$0xf]
  %v52 = vld [vmem:[%s1 + $0x64] sm:$0xf]
  %v53 = vld [vmem:[%s1 + $0x68] sm:$0xf]
  %v54 = vld [vmem:[%s1 + $0x6c] sm:$0xf]
  %v55 = vld [vmem:[%s1 + $0x70] sm:$0xf]
  %v56 = vld [vmem:[%s1 + $0x74] sm:$0xf]
  %v57 = vld [vmem:[%s1 + $0x78] sm:$0xf]
  %v58 = vld [vmem:[%s1 + $0x7c] sm:$0xf]
  %v59 = vld [vmem:[%s1 + $0x80] sm:$0xf]
  %v60 = vld [vmem:[%s1 + $0x84] sm:$0xf]
  %v61 = vld [vmem:[%s1 + $0x88] sm:$0xf]
  %v62 = vld [vmem:[%s1 + $0x8c] sm:$0xf]
  %v63 = vld [vmem:[%s1 + $0x90] sm:$0xf]
  %v64 = vld [vmem:[%s1 + $0x94] sm:$0xf]
  %v65 = vld [vmem:[%s1 + $0x98] sm:$0xf]
  %v66 = vld [vmem:[%s1 + $0x9c] sm:$0xf]
  %v67 = vld [vmem:[%s1 + $0xa0] sm:$0xf]
  %v68 = vld [vmem:[%s1 + $0xa4] sm:$0xf]
  %v69 = vld [vmem:[%s1 + $0xa8] sm:$0xf]
  %v70 = vld [vmem:[%s1 + $0xac] sm:$0xf]
  %v71 = vld [vmem:[%s1 + $0xb0] sm:$0xf]
  %v72 = vld [vmem:[%s1 + $0xb4] sm:$0xf]
  %v73 = vld [vmem:[%s1 + $0xb8] sm:$0xf]
  %v74 = vld [vmem:[%s1 + $0xbc] sm:$0xf]
  %v75 = vld [vmem:[%s1 + $0xc0] sm:$0xf]
  %v76 = vld [vmem:[%s1 + $0xc4] sm:$0xf]
  %v77 = vld [vmem:[%s1 + $0xc8] sm:$0xf]
  %v78 = vld [vmem:[%s1 + $0xcc] sm:$0xf]
  %v79 = vld [vmem:[%s1 + $0xd0] sm:$0xf]
  %v80 = vld [vmem:[%s1 + $0xd4] sm:$0xf]
  %v81 = vld [vmem:[%s1 + $0xd8] sm:$0xf]
  %v82 = vld [vmem:[%s1 + $0xdc] sm:$0xf]
  %v83 = vld [vmem:[%s1 + $0xe0] sm:$0xf]
  %v84 = vld [vmem:[%s1 + $0xe4] sm:$0xf]
  %v85 = vld [vmem:[%s1 + $0xe8] sm:$0xf]
  %v86 = vld [vmem:[%s1 + $0xec] sm:$0xf]
  %v87 = vld [vmem:[%s1 + $0xf0] sm:$0xf]
  %v88 = vld [vmem:[%s1 + $0xf4] sm:$0xf]
  %v89 = vld [vmem:[%s1 + $0xf8] sm:$0xf]
  %v90 = vld [vmem:[%s1 + $0xfc] sm:$0xf]
  %v91 = vld [vmem:[%s1 + $0x100] sm:$0xf]
  %v92 = vld [vmem:[%s1 + $0x104] sm:$0xf]
  %v93 = vld [vmem:[%s1 + $0x108] sm:$0xf]
  %v94 = vld [vmem:[%s1 + $0x10c] sm:$0xf]
  %v95 = vld [vmem:[%s1 + $0x110] sm:$0xf]
  %v96 = vld [vmem:[%s1 + $0x114] sm:$0xf]
  %v97 = vld [vmem:[%s1 + $0x118] sm:$0xf]
  %v98 = vld [vmem:[%s1 + $0x11c] sm:$0xf]
  %v99 = vld [vmem:[%s2] sm:$0x1]
  %v101 = vlaneseq
  %v102 = vshrl.u32 %v101, 7
  %v103 = vsub.s32 0, %v102
  %v104 = vrot.slane %v99, %v103
  %v118 = vunpack.c.l.b16 %v15
  %v119 = vunpack.c.h.b16 %v15
  %v120 = vunpack.c.l.b16 %v16
  %v121 = vunpack.c.h.b16 %v16
  %v122 = vunpack.c.l.b16 %v17
  %v123 = vunpack.c.l.b16 %v18
  %v124 = vunpack.c.h.b16 %v18
  %v125 = vunpack.c.l.b16 %v19
  %v126 = vunpack.c.h.b16 %v19
  %v127 = vunpack.c.l.b16 %v20
  %v128 = vunpack.c.l.b16 %v21
  %v129 = vunpack.c.h.b16 %v21
  %v130 = vunpack.c.l.b16 %v22
  %v131 = vunpack.c.h.b16 %v22
  %v132 = vunpack.c.l.b16 %v23
  %v133 = vunpack.c.l.b16 %v24
  %v134 = vunpack.c.h.b16 %v24
  %v135 = vunpack.c.l.b16 %v25
  %v136 = vunpack.c.h.b16 %v25
  %v137 = vunpack.c.l.b16 %v26
  %v138 = vpack.c.b16 %v123, %v118
  %v139 = vpack.c.b16 %v124, %v119
  %v140 = vpack.c.b16 %v125, %v120
  %v141 = vpack.c.b16 %v126, %v121
  %v142 = vpack.c.b16 %v127, %v122
  %v143 = vpack.c.b16 %v133, %v128
  %v144 = vpack.c.b16 %v134, %v129
  %v145 = vpack.c.b16 %v135, %v130
  %v146 = vpack.c.b16 %v136, %v131
  %v147 = vpack.c.b16 %v137, %v132
  %v228 = vunpack.c.l.b16 %v27
  %v229 = vunpack.c.l.b16 %v28
  %v230 = vunpack.c.l.b16 %v29
  %v231 = vunpack.c.l.b16 %v30
  %v232 = vunpack.c.l.b16 %v31
  %v233 = vunpack.c.l.b16 %v32
  %v234 = vunpack.c.l.b16 %v33
  %v235 = vunpack.c.l.b16 %v34
  %v236 = vunpack.c.l.b16 %v35
  %v237 = vunpack.c.l.b16 %v36
  %v238 = vunpack.c.l.b16 %v37
  %v239 = vunpack.c.l.b16 %v38
  %v240 = vunpack.c.l.b16 %v39
  %v241 = vunpack.c.l.b16 %v40
  %v242 = vunpack.c.l.b16 %v41
  %v243 = vunpack.c.l.b16 %v42
  %v244 = vunpack.c.l.b16 %v43
  %v245 = vunpack.c.l.b16 %v44
  %v246 = vunpack.c.l.b16 %v45
  %v247 = vunpack.c.l.b16 %v46
  %v248 = vunpack.c.l.b16 %v47
  %v249 = vunpack.c.l.b16 %v48
  %v250 = vunpack.c.l.b16 %v49
  %v251 = vunpack.c.l.b16 %v50
  %v252 = vunpack.c.l.b16 %v51
  %v253 = vunpack.c.l.b16 %v52
  %v254 = vunpack.c.l.b16 %v53
  %v255 = vunpack.c.l.b16 %v54
  %v256 = vunpack.c.l.b16 %v55
  %v257 = vunpack.c.l.b16 %v56
  %v258 = vunpack.c.l.b16 %v57
  %v259 = vunpack.c.l.b16 %v58
  %v260 = vunpack.c.l.b16 %v59
  %v261 = vunpack.c.l.b16 %v60
  %v262 = vunpack.c.l.b16 %v61
  %v263 = vunpack.c.l.b16 %v62
  %v264 = vunpack.c.l.b16 %v63
  %v265 = vunpack.c.l.b16 %v64
  %v266 = vunpack.c.l.b16 %v65
  %v267 = vunpack.c.l.b16 %v66
  %v268 = vunpack.c.l.b16 %v67
  %v269 = vunpack.c.l.b16 %v68
  %v270 = vunpack.c.l.b16 %v69
  %v271 = vunpack.c.l.b16 %v70
  %v272 = vunpack.c.l.b16 %v71
  %v273 = vunpack.c.l.b16 %v72
  %v274 = vunpack.c.l.b16 %v73
  %v275 = vunpack.c.l.b16 %v74
  %v276 = vunpack.c.l.b16 %v75
  %v277 = vunpack.c.l.b16 %v76
  %v278 = vunpack.c.l.b16 %v77
  %v279 = vunpack.c.l.b16 %v78
  %v280 = vunpack.c.l.b16 %v79
  %v281 = vunpack.c.l.b16 %v80
  %v282 = vunpack.c.l.b16 %v81
  %v283 = vunpack.c.l.b16 %v82
  %v284 = vunpack.c.l.b16 %v83
  %v285 = vunpack.c.l.b16 %v84
  %v286 = vunpack.c.l.b16 %v85
  %v287 = vunpack.c.l.b16 %v86
  %v288 = vunpack.c.l.b16 %v87
  %v289 = vunpack.c.l.b16 %v88
  %v290 = vunpack.c.l.b16 %v89
  %v291 = vunpack.c.l.b16 %v90
  %v292 = vunpack.c.l.b16 %v91
  %v293 = vunpack.c.l.b16 %v92
  %v294 = vunpack.c.l.b16 %v93
  %v295 = vunpack.c.l.b16 %v94
  %v296 = vunpack.c.l.b16 %v95
  %v297 = vunpack.c.l.b16 %v96
  %v298 = vunpack.c.l.b16 %v97
  %v299 = vunpack.c.l.b16 %v98
  %v300 = vpack.c.b16 %v229, %v228
  %v301 = vpack.c.b16 %v231, %v230
  %v302 = vpack.c.b16 %v233, %v232
  %v303 = vpack.c.b16 %v235, %v234
  %v304 = vpack.c.b16 %v237, %v236
  %v305 = vpack.c.b16 %v239, %v238
  %v306 = vpack.c.b16 %v241, %v240
  %v307 = vpack.c.b16 %v243, %v242
  %v308 = vpack.c.b16 %v245, %v244
  %v309 = vpack.c.b16 %v247, %v246
  %v310 = vpack.c.b16 %v249, %v248
  %v311 = vpack.c.b16 %v251, %v250
  %v312 = vpack.c.b16 %v253, %v252
  %v313 = vpack.c.b16 %v255, %v254
  %v314 = vpack.c.b16 %v257, %v256
  %v315 = vpack.c.b16 %v259, %v258
  %v316 = vpack.c.b16 %v261, %v260
  %v317 = vpack.c.b16 %v263, %v262
  %v318 = vpack.c.b16 %v265, %v264
  %v319 = vpack.c.b16 %v267, %v266
  %v320 = vpack.c.b16 %v269, %v268
  %v321 = vpack.c.b16 %v271, %v270
  %v322 = vpack.c.b16 %v273, %v272
  %v323 = vpack.c.b16 %v275, %v274
  %v324 = vpack.c.b16 %v277, %v276
  %v325 = vpack.c.b16 %v279, %v278
  %v326 = vpack.c.b16 %v281, %v280
  %v327 = vpack.c.b16 %v283, %v282
  %v328 = vpack.c.b16 %v285, %v284
  %v329 = vpack.c.b16 %v287, %v286
  %v330 = vpack.c.b16 %v289, %v288
  %v331 = vpack.c.b16 %v291, %v290
  %v332 = vpack.c.b16 %v293, %v292
  %v333 = vpack.c.b16 %v295, %v294
  %v334 = vpack.c.b16 %v297, %v296
  %v335 = vpack.c.b16 %v299, %v298
  %vm372 = vcmask 523264
  %v374 = vsel %vm372, %v142, 0
  %v377 = vsel %vm372, %v147, 0
  %379 = vmatprep.subr.bf16.mxu0 0
  %380 = vmatpush1.bf16.msra.mxu0 %v300
  %381 = vmatprep.subr.bf16.mxu0 0
  %382 = vmatpush1.bf16.msra.mxu0 %v301
  %383 = vmatprep.subr.bf16.mxu0 0
  %384 = vmatpush1.bf16.msra.mxu0 %v302
  %385 = vmatprep.subr.bf16.mxu0 0
  %386 = vmatpush1.bf16.msra.mxu0 %v303
  %387 = vmatprep.subr.bf16.mxu0 0
  %388 = vmatpush1.bf16.msra.mxu0 %v304
  %389 = vmatprep.subr.bf16.mxu0 0
  %390 = vmatpush1.bf16.msra.mxu0 %v305
  %391 = vmatprep.subr.bf16.mxu0 0
  %392 = vmatpush1.bf16.msra.mxu0 %v306
  %393 = vmatprep.subr.bf16.mxu0 0
  %394 = vmatpush1.bf16.msra.mxu0 %v307
  %395 = vmatprep.subr.bf16.mxu0 0
  %396 = vmatpush1.bf16.msra.mxu0 %v308
  %397 = vmatprep.subr.bf16.mxu0 0
  %398 = vmatpush1.bf16.msra.mxu0 %v309
  %399 = vmatprep.subr.bf16.mxu0 0
  %400 = vmatpush1.bf16.msra.mxu0 %v310
  %401 = vmatprep.subr.bf16.mxu0 0
  %402 = vmatpush1.bf16.msra.mxu0 %v311
  %403 = vmatprep.subr.bf16.mxu0 0
  %404 = vmatpush1.bf16.msra.mxu0 %v312
  %405 = vmatprep.subr.bf16.mxu0 0
  %406 = vmatpush1.bf16.msra.mxu0 %v313
  %407 = vmatprep.subr.bf16.mxu0 0
  %408 = vmatpush1.bf16.msra.mxu0 %v314
  %409 = vmatprep.subr.bf16.mxu0 0
  %410 = vmatpush1.bf16.msra.mxu0 %v315
  %411 = vmatprep.mubr.bf16.mxu0 %v139
  %412 = vmatmul.mubr.bf16.gmra.mrb[0].mxu0 %v138
  %v413 = vpop.f32.mrb[0].mxu0
  %v414 = vadd.f32 %v104, %v413
  %v415 = vpop.f32.mrb[0].mxu0
  %v416 = vpop.f32.mrb[0].mxu0
  %v417 = vadd.f32 %v104, %v416
  %v418 = vpop.f32.mrb[0].mxu0
  %419 = vmatprep.mubr.bf16.mxu0 %v144
  %420 = vmatmul.mubr.bf16.gmra.mrb[0].mxu0 %v143
  %v421 = vpop.f32.mrb[0].mxu0
  %v422 = vadd.f32 %v104, %v421
  %v423 = vpop.f32.mrb[0].mxu0
  %v424 = vpop.f32.mrb[0].mxu0
  %v425 = vadd.f32 %v104, %v424
  %v426 = vpop.f32.mrb[0].mxu0
  %427 = vdwg.mxu0
  %428 = vmatprep.subr.bf16.mxu0 0
  %429 = vmatpush1.bf16.msra.mxu0 %v316
  %430 = vmatprep.subr.bf16.mxu0 0
  %431 = vmatpush1.bf16.msra.mxu0 %v317
  %432 = vmatprep.subr.bf16.mxu0 0
  %433 = vmatpush1.bf16.msra.mxu0 %v318
  %434 = vmatprep.subr.bf16.mxu0 0
  %435 = vmatpush1.bf16.msra.mxu0 %v319
  %436 = vmatprep.subr.bf16.mxu0 0
  %437 = vmatpush1.bf16.msra.mxu0 %v320
  %438 = vmatprep.subr.bf16.mxu0 0
  %439 = vmatpush1.bf16.msra.mxu0 %v321
  %440 = vmatprep.subr.bf16.mxu0 0
  %441 = vmatpush1.bf16.msra.mxu0 %v322
  %442 = vmatprep.subr.bf16.mxu0 0
  %443 = vmatpush1.bf16.msra.mxu0 %v323
  %444 = vmatprep.subr.bf16.mxu0 0
  %445 = vmatpush1.bf16.msra.mxu0 %v324
  %446 = vmatprep.subr.bf16.mxu0 0
  %447 = vmatpush1.bf16.msra.mxu0 %v325
  %448 = vmatprep.subr.bf16.mxu0 0
  %449 = vmatpush1.bf16.msra.mxu0 %v326
  %450 = vmatprep.subr.bf16.mxu0 0
  %451 = vmatpush1.bf16.msra.mxu0 %v327
  %452 = vmatprep.subr.bf16.mxu0 0
  %453 = vmatpush1.bf16.msra.mxu0 %v328
  %454 = vmatprep.subr.bf16.mxu0 0
  %455 = vmatpush1.bf16.msra.mxu0 %v329
  %456 = vmatprep.subr.bf16.mxu0 0
  %457 = vmatpush1.bf16.msra.mxu0 %v330
  %458 = vmatprep.subr.bf16.mxu0 0
  %459 = vmatpush1.bf16.msra.mxu0 %v331
  %460 = vmatprep.mubr.bf16.mxu0 %v141
  %461 = vmatmul.mubr.bf16.gmra.mrb[0].mxu0 %v140
  %v462 = vpop.f32.mrb[0].mxu0
  %v463 = vadd.f32 %v414, %v462
  %v464 = vpop.f32.mrb[0].mxu0
  %v465 = vpop.f32.mrb[0].mxu0
  %v466 = vadd.f32 %v417, %v465
  %v467 = vpop.f32.mrb[0].mxu0
  %468 = vmatprep.mubr.bf16.mxu0 %v146
  %469 = vmatmul.mubr.bf16.gmra.mrb[0].mxu0 %v145
  %v470 = vpop.f32.mrb[0].mxu0
  %v471 = vadd.f32 %v422, %v470
  %v472 = vpop.f32.mrb[0].mxu0
  %v473 = vpop.f32.mrb[0].mxu0
  %v474 = vadd.f32 %v425, %v473
  %v475 = vpop.f32.mrb[0].mxu0
  %476 = vdwg.mxu0
  %477 = vmatprep.subr.bf16.mxu0 0
  %478 = vmatpush1.bf16.msra.mxu0 %v332
  %479 = vmatprep.subr.bf16.mxu0 0
  %480 = vmatpush1.bf16.msra.mxu0 %v333
  %481 = vmatprep.subr.bf16.mxu0 0
  %482 = vmatpush1.bf16.msra.mxu0 %v334
  %483 = vmatprep.subr.bf16.mxu0 0
  %484 = vmatpush1.bf16.msra.mxu0 %v335
  %485 = vmatprep.subr.bf16.mxu0 0
  %486 = vmatpush1.bf16.msra.mxu0 0
  %487 = vmatprep.subr.bf16.mxu0 0
  %488 = vmatpush1.bf16.msra.mxu0 0
  %489 = vmatprep.subr.bf16.mxu0 0
  %490 = vmatpush1.bf16.msra.mxu0 0
  %491 = vmatprep.subr.bf16.mxu0 0
  %492 = vmatpush1.bf16.msra.mxu0 0
  %493 = vmatprep.subr.bf16.mxu0 0
  %494 = vmatpush1.bf16.msra.mxu0 0
  %495 = vmatprep.subr.bf16.mxu0 0
  %496 = vmatpush1.bf16.msra.mxu0 0
  %497 = vmatprep.subr.bf16.mxu0 0
  %498 = vmatpush1.bf16.msra.mxu0 0
  %499 = vmatprep.subr.bf16.mxu0 0
  %500 = vmatpush1.bf16.msra.mxu0 0
  %501 = vmatprep.subr.bf16.mxu0 0
  %502 = vmatpush1.bf16.msra.mxu0 0
  %503 = vmatprep.subr.bf16.mxu0 0
  %504 = vmatpush1.bf16.msra.mxu0 0
  %505 = vmatprep.subr.bf16.mxu0 0
  %506 = vmatpush1.bf16.msra.mxu0 0
  %507 = vmatprep.subr.bf16.mxu0 0
  %508 = vmatpush1.bf16.msra.mxu0 0
  %509 = vmatprep.mubr.bf16.mxu0 0
  %510 = vmatmul.mubr.bf16.gmra.mrb[0].mxu0 %v374
  %v511 = vpop.f32.mrb[0].mxu0
  %v512 = vadd.f32 %v463, %v511
  %v513 = vpop.f32.mrb[0].mxu0
  %v514 = vpop.f32.mrb[0].mxu0
  %v515 = vadd.f32 %v466, %v514
  %v516 = vpop.f32.mrb[0].mxu0
  %517 = vmatprep.mubr.bf16.mxu0 0
  %518 = vmatmul.mubr.bf16.gmra.mrb[0].mxu0 %v377
  %v519 = vpop.f32.mrb[0].mxu0
  %v520 = vadd.f32 %v471, %v519
  %v521 = vpop.f32.mrb[0].mxu0
  %v522 = vpop.f32.mrb[0].mxu0
  %v523 = vadd.f32 %v474, %v522
  %v524 = vpop.f32.mrb[0].mxu0
  %525 = vdwg.mxu0
  %v526 = vmax.f32 %v512, 0.0
  %v527 = vmax.f32 %v515, 0.0
  %v528 = vmax.f32 %v520, 0.0
  %v529 = vmax.f32 %v523, 0.0
  %v530 = vpack.c.bf16 %v527, %v526
  %v531 = vpack.c.bf16 %v529, %v528
  %v534 = vunpack.c.l.b16 %v530
  %v535 = vunpack.c.h.b16 %v530
  %v536 = vunpack.c.l.b16 %v531
  %v537 = vunpack.c.h.b16 %v531
  %v538 = vpack.c.b16 %v534, %v534
  %v539 = vpack.c.b16 %v535, %v535
  %v540 = vpack.c.b16 %v536, %v536
  %v541 = vpack.c.b16 %v537, %v537
  %546 = vst [vmem:[%s3] sm:$0xf] %v538
  %547 = vst [vmem:[%s3 + $0x4] sm:$0xf] %v539
  %548 = vst [vmem:[%s3 + $0x8] sm:$0xf] %v540
  %549 = vst [vmem:[%s3 + $0xc] sm:$0xf] %v541
  // Predicated region
  $region14: #{simple_generator.27} parent=0 // pred_check
    _
  $region15: #{simple_generator.27} parent=0 // pred_check_branch
    %551 = sbr.rel (0) target = $region17
  $region16: #{simple_generator.27} parent=0 // pred_region
    _
  $region17: #{simple_generator.27} parent=0 // pred_fallthru
    _
  // Predicated region
  $region18: #{simple_generator.27} parent=0 // pred_check
    _
  $region19: #{simple_generator.27} parent=0 // pred_check_branch
    %553 = sbr.rel (0) target = $region21
  $region20: #{simple_generator.27} parent=0 // pred_region
    _
  $region21: #{simple_generator.27} parent=0 // pred_fallthru
    _

// kernel: simple_generator.28
$region0: #{simple_generator.28}
  #allocation0 [shape = 'u32[]', space=smem, size = 0x4, offset = 0x4, fixed_abs, tag = 'smem constant byte address 0x4 - core index']
  #allocation1 [shape = 'u32[144,128]{1,0:T(1,128)}', space=vmem, size = 0x12000, scoped, tag = 'internal scratch']
  %s0 = inlined_call_operand.vmem [shape: bf16[16,576], index: 0, kind: input, shape index: {}]
  %s1 = inlined_call_operand.vmem [shape: bf16[576,128], index: 1, kind: input, shape index: {}]
  %s2 = inlined_call_operand.vmem [shape: f32[1,128], index: 2, kind: input, shape index: {}]
  %s3 = inlined_call_operand.vmem [shape: bf16[16,128], index: 3, kind: output, shape index: {}]
  %s4 = sld [smem:[#allocation0]]
  $region22: #{simple_generator.28} parent=0
    _
  %s6 = ssub.s32 1, %s4
  %s7 = scalar_select 0, %s6, %s4
  // Predicated region
  $region2: #{simple_generator.28} parent=0 // pred_check
    _
  $region3: #{simple_generator.28} parent=0 // pred_check_branch
    %9 = sbr.rel (0) target = $region5
  $region4: #{simple_generator.28} parent=0 // pred_region
    _
  $region5: #{simple_generator.28} parent=0 // pred_fallthru
    _
  // Predicated region
  $region6: #{simple_generator.28} parent=0 // pred_check
    _
  $region7: #{simple_generator.28} parent=0 // pred_check_branch
    %11 = sbr.rel (0) target = $region9
  $region8: #{simple_generator.28} parent=0 // pred_region
    _
  $region9: #{simple_generator.28} parent=0 // pred_fallthru
    _
  // Predicated region
  $region10: #{simple_generator.28} parent=0 // pred_check
    _
  $region11: #{simple_generator.28} parent=0 // pred_check_branch
    %13 = sbr.rel (0) target = $region13
  $region12: #{simple_generator.28} parent=0 // pred_region
    _
  $region13: #{simple_generator.28} parent=0 // pred_fallthru
    _
  %v15 = vld [vmem:[%s0] sm:$0xff]
  %v16 = vld [vmem:[%s0 + $0x8] sm:$0xff]
  %v17 = vld [vmem:[%s0 + $0x10] sm:$0xf]
  %v18 = vld [vmem:[%s0 + $0x14] sm:$0xff]
  %v19 = vld [vmem:[%s0 + $0x1c] sm:$0xff]
  %v20 = vld [vmem:[%s0 + $0x24] sm:$0xf]
  %v21 = vld [vmem:[%s1] sm:$0xf]
  %v22 = vld [vmem:[%s1 + $0x4] sm:$0xf]
  %v23 = vld [vmem:[%s1 + $0x8] sm:$0xf]
  %v24 = vld [vmem:[%s1 + $0xc] sm:$0xf]
  %v25 = vld [vmem:[%s1 + $0x10] sm:$0xf]
  %v26 = vld [vmem:[%s1 + $0x14] sm:$0xf]
  %v27 = vld [vmem:[%s1 + $0x18] sm:$0xf]
  %v28 = vld [vmem:[%s1 + $0x1c] sm:$0xf]
  %v29 = vld [vmem:[%s1 + $0x20] sm:$0xf]
  %v30 = vld [vmem:[%s1 + $0x24] sm:$0xf]
  %v31 = vld [vmem:[%s1 + $0x28] sm:$0xf]
  %v32 = vld [vmem:[%s1 + $0x2c] sm:$0xf]
  %v33 = vld [vmem:[%s1 + $0x30] sm:$0xf]
  %v34 = vld [vmem:[%s1 + $0x34] sm:$0xf]
  %v35 = vld [vmem:[%s1 + $0x38] sm:$0xf]
  %v36 = vld [vmem:[%s1 + $0x3c] sm:$0xf]
  %v37 = vld [vmem:[%s1 + $0x40] sm:$0xf]
  %v38 = vld [vmem:[%s1 + $0x44] sm:$0xf]
  %v39 = vld [vmem:[%s1 + $0x48] sm:$0xf]
  %v40 = vld [vmem:[%s1 + $0x4c] sm:$0xf]
  %v41 = vld [vmem:[%s1 + $0x50] sm:$0xf]
  %v42 = vld [vmem:[%s1 + $0x54] sm:$0xf]
  %v43 = vld [vmem:[%s1 + $0x58] sm:$0xf]
  %v44 = vld [vmem:[%s1 + $0x5c] sm:$0xf]
  %v45 = vld [vmem:[%s1 + $0x60] sm:$0xf]
  %v46 = vld [vmem:[%s1 + $0x64] sm:$0xf]
  %v47 = vld [vmem:[%s1 + $0x68] sm:$0xf]
  %v48 = vld [vmem:[%s1 + $0x6c] sm:$0xf]
  %v49 = vld [vmem:[%s1 + $0x70] sm:$0xf]
  %v50 = vld [vmem:[%s1 + $0x74] sm:$0xf]
  %v51 = vld [vmem:[%s1 + $0x78] sm:$0xf]
  %v52 = vld [vmem:[%s1 + $0x7c] sm:$0xf]
  %v53 = vld [vmem:[%s1 + $0x80] sm:$0xf]
  %v54 = vld [vmem:[%s1 + $0x84] sm:$0xf]
  %v55 = vld [vmem:[%s1 + $0x88] sm:$0xf]
  %v56 = vld [vmem:[%s1 + $0x8c] sm:$0xf]
  %v57 = vld [vmem:[%s1 + $0x90] sm:$0xf]
  %v58 = vld [vmem:[%s1 + $0x94] sm:$0xf]
  %v59 = vld [vmem:[%s1 + $0x98] sm:$0xf]
  %v60 = vld [vmem:[%s1 + $0x9c] sm:$0xf]
  %v61 = vld [vmem:[%s1 + $0xa0] sm:$0xf]
  %v62 = vld [vmem:[%s1 + $0xa4] sm:$0xf]
  %v63 = vld [vmem:[%s1 + $0xa8] sm:$0xf]
  %v64 = vld [vmem:[%s1 + $0xac] sm:$0xf]
  %v65 = vld [vmem:[%s1 + $0xb0] sm:$0xf]
  %v66 = vld [vmem:[%s1 + $0xb4] sm:$0xf]
  %v67 = vld [vmem:[%s1 + $0xb8] sm:$0xf]
  %v68 = vld [vmem:[%s1 + $0xbc] sm:$0xf]
  %v69 = vld [vmem:[%s1 + $0xc0] sm:$0xf]
  %v70 = vld [vmem:[%s1 + $0xc4] sm:$0xf]
  %v71 = vld [vmem:[%s1 + $0xc8] sm:$0xf]
  %v72 = vld [vmem:[%s1 + $0xcc] sm:$0xf]
  %v73 = vld [vmem:[%s1 + $0xd0] sm:$0xf]
  %v74 = vld [vmem:[%s1 + $0xd4] sm:$0xf]
  %v75 = vld [vmem:[%s1 + $0xd8] sm:$0xf]
  %v76 = vld [vmem:[%s1 + $0xdc] sm:$0xf]
  %v77 = vld [vmem:[%s1 + $0xe0] sm:$0xf]
  %v78 = vld [vmem:[%s1 + $0xe4] sm:$0xf]
  %v79 = vld [vmem:[%s1 + $0xe8] sm:$0xf]
  %v80 = vld [vmem:[%s1 + $0xec] sm:$0xf]
  %v81 = vld [vmem:[%s1 + $0xf0] sm:$0xf]
  %v82 = vld [vmem:[%s1 + $0xf4] sm:$0xf]
  %v83 = vld [vmem:[%s1 + $0xf8] sm:$0xf]
  %v84 = vld [vmem:[%s1 + $0xfc] sm:$0xf]
  %v85 = vld [vmem:[%s1 + $0x100] sm:$0xf]
  %v86 = vld [vmem:[%s1 + $0x104] sm:$0xf]
  %v87 = vld [vmem:[%s1 + $0x108] sm:$0xf]
  %v88 = vld [vmem:[%s1 + $0x10c] sm:$0xf]
  %v89 = vld [vmem:[%s1 + $0x110] sm:$0xf]
  %v90 = vld [vmem:[%s1 + $0x114] sm:$0xf]
  %v91 = vld [vmem:[%s1 + $0x118] sm:$0xf]
  %v92 = vld [vmem:[%s1 + $0x11c] sm:$0xf]
  %v93 = vld [vmem:[%s2] sm:$0x1]
  %v95 = vlaneseq
  %v96 = vshrl.u32 %v95, 7
  %v97 = vsub.s32 0, %v96
  %v98 = vrot.slane %v93, %v97
  %v106 = vunpack.c.l.b16 %v15
  %v107 = vunpack.c.h.b16 %v15
  %v108 = vunpack.c.l.b16 %v16
  %v109 = vunpack.c.h.b16 %v16
  %v110 = vunpack.c.l.b16 %v17
  %v111 = vunpack.c.l.b16 %v18
  %v112 = vunpack.c.h.b16 %v18
  %v113 = vunpack.c.l.b16 %v19
  %v114 = vunpack.c.h.b16 %v19
  %v115 = vunpack.c.l.b16 %v20
  %v116 = vpack.c.b16 %v111, %v106
  %v117 = vpack.c.b16 %v112, %v107
  %v118 = vpack.c.b16 %v113, %v108
  %v119 = vpack.c.b16 %v114, %v109
  %v120 = vpack.c.b16 %v115, %v110
  %v197 = vunpack.c.l.b16 %v21
  %v198 = vunpack.c.l.b16 %v22
  %v199 = vunpack.c.l.b16 %v23
  %v200 = vunpack.c.l.b16 %v24
  %v201 = vunpack.c.l.b16 %v25
  %v202 = vunpack.c.l.b16 %v26
  %v203 = vunpack.c.l.b16 %v27
  %v204 = vunpack.c.l.b16 %v28
  %v205 = vunpack.c.l.b16 %v29
  %v206 = vunpack.c.l.b16 %v30
  %v207 = vunpack.c.l.b16 %v31
  %v208 = vunpack.c.l.b16 %v32
  %v209 = vunpack.c.l.b16 %v33
  %v210 = vunpack.c.l.b16 %v34
  %v211 = vunpack.c.l.b16 %v35
  %v212 = vunpack.c.l.b16 %v36
  %v213 = vunpack.c.l.b16 %v37
  %v214 = vunpack.c.l.b16 %v38
  %v215 = vunpack.c.l.b16 %v39
  %v216 = vunpack.c.l.b16 %v40
  %v217 = vunpack.c.l.b16 %v41
  %v218 = vunpack.c.l.b16 %v42
  %v219 = vunpack.c.l.b16 %v43
  %v220 = vunpack.c.l.b16 %v44
  %v221 = vunpack.c.l.b16 %v45
  %v222 = vunpack.c.l.b16 %v46
  %v223 = vunpack.c.l.b16 %v47
  %v224 = vunpack.c.l.b16 %v48
  %v225 = vunpack.c.l.b16 %v49
  %v226 = vunpack.c.l.b16 %v50
  %v227 = vunpack.c.l.b16 %v51
  %v228 = vunpack.c.l.b16 %v52
  %v229 = vunpack.c.l.b16 %v53
  %v230 = vunpack.c.l.b16 %v54
  %v231 = vunpack.c.l.b16 %v55
  %v232 = vunpack.c.l.b16 %v56
  %v233 = vunpack.c.l.b16 %v57
  %v234 = vunpack.c.l.b16 %v58
  %v235 = vunpack.c.l.b16 %v59
  %v236 = vunpack.c.l.b16 %v60
  %v237 = vunpack.c.l.b16 %v61
  %v238 = vunpack.c.l.b16 %v62
  %v239 = vunpack.c.l.b16 %v63
  %v240 = vunpack.c.l.b16 %v64
  %v241 = vunpack.c.l.b16 %v65
  %v242 = vunpack.c.l.b16 %v66
  %v243 = vunpack.c.l.b16 %v67
  %v244 = vunpack.c.l.b16 %v68
  %v245 = vunpack.c.l.b16 %v69
  %v246 = vunpack.c.l.b16 %v70
  %v247 = vunpack.c.l.b16 %v71
  %v248 = vunpack.c.l.b16 %v72
  %v249 = vunpack.c.l.b16 %v73
  %v250 = vunpack.c.l.b16 %v74
  %v251 = vunpack.c.l.b16 %v75
  %v252 = vunpack.c.l.b16 %v76
  %v253 = vunpack.c.l.b16 %v77
  %v254 = vunpack.c.l.b16 %v78
  %v255 = vunpack.c.l.b16 %v79
  %v256 = vunpack.c.l.b16 %v80
  %v257 = vunpack.c.l.b16 %v81
  %v258 = vunpack.c.l.b16 %v82
  %v259 = vunpack.c.l.b16 %v83
  %v260 = vunpack.c.l.b16 %v84
  %v261 = vunpack.c.l.b16 %v85
  %v262 = vunpack.c.l.b16 %v86
  %v263 = vunpack.c.l.b16 %v87
  %v264 = vunpack.c.l.b16 %v88
  %v265 = vunpack.c.l.b16 %v89
  %v266 = vunpack.c.l.b16 %v90
  %v267 = vunpack.c.l.b16 %v91
  %v268 = vunpack.c.l.b16 %v92
  %v269 = vpack.c.b16 %v198, %v197
  %v270 = vpack.c.b16 %v200, %v199
  %v271 = vpack.c.b16 %v202, %v201
  %v272 = vpack.c.b16 %v204, %v203
  %v273 = vpack.c.b16 %v206, %v205
  %v274 = vpack.c.b16 %v208, %v207
  %v275 = vpack.c.b16 %v210, %v209
  %v276 = vpack.c.b16 %v212, %v211
  %v277 = vpack.c.b16 %v214, %v213
  %v278 = vpack.c.b16 %v216, %v215
  %v279 = vpack.c.b16 %v218, %v217
  %v280 = vpack.c.b16 %v220, %v219
  %v281 = vpack.c.b16 %v222, %v221
  %v282 = vpack.c.b16 %v224, %v223
  %v283 = vpack.c.b16 %v226, %v225
  %v284 = vpack.c.b16 %v228, %v227
  %v285 = vpack.c.b16 %v230, %v229
  %v286 = vpack.c.b16 %v232, %v231
  %v287 = vpack.c.b16 %v234, %v233
  %v288 = vpack.c.b16 %v236, %v235
  %v289 = vpack.c.b16 %v238, %v237
  %v290 = vpack.c.b16 %v240, %v239
  %v291 = vpack.c.b16 %v242, %v241
  %v292 = vpack.c.b16 %v244, %v243
  %v293 = vpack.c.b16 %v246, %v245
  %v294 = vpack.c.b16 %v248, %v247
  %v295 = vpack.c.b16 %v250, %v249
  %v296 = vpack.c.b16 %v252, %v251
  %v297 = vpack.c.b16 %v254, %v253
  %v298 = vpack.c.b16 %v256, %v255
  %v299 = vpack.c.b16 %v258, %v257
  %v300 = vpack.c.b16 %v260, %v259
  %v301 = vpack.c.b16 %v262, %v261
  %v302 = vpack.c.b16 %v264, %v263
  %v303 = vpack.c.b16 %v266, %v265
  %v304 = vpack.c.b16 %v268, %v267
  %vm341 = vcmask 523264
  %v343 = vsel %vm341, %v120, 0
  %345 = vmatprep.subr.bf16.mxu0 0
  %346 = vmatpush1.bf16.msra.mxu0 %v269
  %347 = vmatprep.subr.bf16.mxu0 0
  %348 = vmatpush1.bf16.msra.mxu0 %v270
  %349 = vmatprep.subr.bf16.mxu0 0
  %350 = vmatpush1.bf16.msra.mxu0 %v271
  %351 = vmatprep.subr.bf16.mxu0 0
  %352 = vmatpush1.bf16.msra.mxu0 %v272
  %353 = vmatprep.subr.bf16.mxu0 0
  %354 = vmatpush1.bf16.msra.mxu0 %v273
  %355 = vmatprep.subr.bf16.mxu0 0
  %356 = vmatpush1.bf16.msra.mxu0 %v274
  %357 = vmatprep.subr.bf16.mxu0 0
  %358 = vmatpush1.bf16.msra.mxu0 %v275
  %359 = vmatprep.subr.bf16.mxu0 0
  %360 = vmatpush1.bf16.msra.mxu0 %v276
  %361 = vmatprep.subr.bf16.mxu0 0
  %362 = vmatpush1.bf16.msra.mxu0 %v277
  %363 = vmatprep.subr.bf16.mxu0 0
  %364 = vmatpush1.bf16.msra.mxu0 %v278
  %365 = vmatprep.subr.bf16.mxu0 0
  %366 = vmatpush1.bf16.msra.mxu0 %v279
  %367 = vmatprep.subr.bf16.mxu0 0
  %368 = vmatpush1.bf16.msra.mxu0 %v280
  %369 = vmatprep.subr.bf16.mxu0 0
  %370 = vmatpush1.bf16.msra.mxu0 %v281
  %371 = vmatprep.subr.bf16.mxu0 0
  %372 = vmatpush1.bf16.msra.mxu0 %v282
  %373 = vmatprep.subr.bf16.mxu0 0
  %374 = vmatpush1.bf16.msra.mxu0 %v283
  %375 = vmatprep.subr.bf16.mxu0 0
  %376 = vmatpush1.bf16.msra.mxu0 %v284
  %377 = vmatprep.mubr.bf16.mxu0 %v117
  %378 = vmatmul.mubr.bf16.gmra.mrb[0].mxu0 %v116
  %v379 = vpop.f32.mrb[0].mxu0
  %v380 = vadd.f32 %v98, %v379
  %v381 = vpop.f32.mrb[0].mxu0
  %v382 = vpop.f32.mrb[0].mxu0
  %v383 = vadd.f32 %v98, %v382
  %v384 = vpop.f32.mrb[0].mxu0
  %385 = vdwg.mxu0
  %386 = vmatprep.subr.bf16.mxu0 0
  %387 = vmatpush1.bf16.msra.mxu0 %v285
  %388 = vmatprep.subr.bf16.mxu0 0
  %389 = vmatpush1.bf16.msra.mxu0 %v286
  %390 = vmatprep.subr.bf16.mxu0 0
  %391 = vmatpush1.bf16.msra.mxu0 %v287
  %392 = vmatprep.subr.bf16.mxu0 0
  %393 = vmatpush1.bf16.msra.mxu0 %v288
  %394 = vmatprep.subr.bf16.mxu0 0
  %395 = vmatpush1.bf16.msra.mxu0 %v289
  %396 = vmatprep.subr.bf16.mxu0 0
  %397 = vmatpush1.bf16.msra.mxu0 %v290
  %398 = vmatprep.subr.bf16.mxu0 0
  %399 = vmatpush1.bf16.msra.mxu0 %v291
  %400 = vmatprep.subr.bf16.mxu0 0
  %401 = vmatpush1.bf16.msra.mxu0 %v292
  %402 = vmatprep.subr.bf16.mxu0 0
  %403 = vmatpush1.bf16.msra.mxu0 %v293
  %404 = vmatprep.subr.bf16.mxu0 0
  %405 = vmatpush1.bf16.msra.mxu0 %v294
  %406 = vmatprep.subr.bf16.mxu0 0
  %407 = vmatpush1.bf16.msra.mxu0 %v295
  %408 = vmatprep.subr.bf16.mxu0 0
  %409 = vmatpush1.bf16.msra.mxu0 %v296
  %410 = vmatprep.subr.bf16.mxu0 0
  %411 = vmatpush1.bf16.msra.mxu0 %v297
  %412 = vmatprep.subr.bf16.mxu0 0
  %413 = vmatpush1.bf16.msra.mxu0 %v298
  %414 = vmatprep.subr.bf16.mxu0 0
  %415 = vmatpush1.bf16.msra.mxu0 %v299
  %416 = vmatprep.subr.bf16.mxu0 0
  %417 = vmatpush1.bf16.msra.mxu0 %v300
  %418 = vmatprep.mubr.bf16.mxu0 %v119
  %419 = vmatmul.mubr.bf16.gmra.mrb[0].mxu0 %v118
  %v420 = vpop.f32.mrb[0].mxu0
  %v421 = vadd.f32 %v380, %v420
  %v422 = vpop.f32.mrb[0].mxu0
  %v423 = vpop.f32.mrb[0].mxu0
  %v424 = vadd.f32 %v383, %v423
  %v425 = vpop.f32.mrb[0].mxu0
  %426 = vdwg.mxu0
  %427 = vmatprep.subr.bf16.mxu0 0
  %428 = vmatpush1.bf16.msra.mxu0 %v301
  %429 = vmatprep.subr.bf16.mxu0 0
  %430 = vmatpush1.bf16.msra.mxu0 %v302
  %431 = vmatprep.subr.bf16.mxu0 0
  %432 = vmatpush1.bf16.msra.mxu0 %v303
  %433 = vmatprep.subr.bf16.mxu0 0
  %434 = vmatpush1.bf16.msra.mxu0 %v304
  %435 = vmatprep.subr.bf16.mxu0 0
  %436 = vmatpush1.bf16.msra.mxu0 0
  %437 = vmatprep.subr.bf16.mxu0 0
  %438 = vmatpush1.bf16.msra.mxu0 0
  %439 = vmatprep.subr.bf16.mxu0 0
  %440 = vmatpush1.bf16.msra.mxu0 0
  %441 = vmatprep.subr.bf16.mxu0 0
  %442 = vmatpush1.bf16.msra.mxu0 0
  %443 = vmatprep.subr.bf16.mxu0 0
  %444 = vmatpush1.bf16.msra.mxu0 0
  %445 = vmatprep.subr.bf16.mxu0 0
  %446 = vmatpush1.bf16.msra.mxu0 0
  %447 = vmatprep.subr.bf16.mxu0 0
  %448 = vmatpush1.bf16.msra.mxu0 0
  %449 = vmatprep.subr.bf16.mxu0 0
  %450 = vmatpush1.bf16.msra.mxu0 0
  %451 = vmatprep.subr.bf16.mxu0 0
  %452 = vmatpush1.bf16.msra.mxu0 0
  %453 = vmatprep.subr.bf16.mxu0 0
  %454 = vmatpush1.bf16.msra.mxu0 0
  %455 = vmatprep.subr.bf16.mxu0 0
  %456 = vmatpush1.bf16.msra.mxu0 0
  %457 = vmatprep.subr.bf16.mxu0 0
  %458 = vmatpush1.bf16.msra.mxu0 0
  %459 = vmatprep.mubr.bf16.mxu0 0
  %460 = vmatmul.mubr.bf16.gmra.mrb[0].mxu0 %v343
  %v461 = vpop.f32.mrb[0].mxu0
  %v462 = vadd.f32 %v421, %v461
  %v463 = vpop.f32.mrb[0].mxu0
  %v464 = vpop.f32.mrb[0].mxu0
  %v465 = vadd.f32 %v424, %v464
  %v466 = vpop.f32.mrb[0].mxu0
  %467 = vdwg.mxu0
  %v468 = vmax.f32 %v462, 0.0
  %v469 = vmax.f32 %v465, 0.0
  %v470 = vpack.c.bf16 %v469, %v468
  %v472 = vunpack.c.l.b16 %v470
  %v473 = vunpack.c.h.b16 %v470
  %v474 = vpack.c.b16 %v472, %v472
  %v475 = vpack.c.b16 %v473, %v473
  %478 = vst [vmem:[%s3] sm:$0xf] %v474
  %479 = vst [vmem:[%s3 + $0x4] sm:$0xf] %v475
  // Predicated region
  $region14: #{simple_generator.28} parent=0 // pred_check
    _
  $region15: #{simple_generator.28} parent=0 // pred_check_branch
    %481 = sbr.rel (0) target = $region17
  $region16: #{simple_generator.28} parent=0 // pred_region
    _
  $region17: #{simple_generator.28} parent=0 // pred_fallthru
    _
  // Predicated region
  $region18: #{simple_generator.28} parent=0 // pred_check
    _
  $region19: #{simple_generator.28} parent=0 // pred_check_branch
    %483 = sbr.rel (0) target = $region21
  $region20: #{simple_generator.28} parent=0 // pred_region
    _
  $region21: #{simple_generator.28} parent=0 // pred_fallthru
    _

// kernel: simple_generator.29
$region0: #{simple_generator.29}
  #allocation0 [shape = 'u32[]', space=smem, size = 0x4, offset = 0x4, fixed_abs, tag = 'smem constant byte address 0x4 - core index']
  #allocation1 [shape = 'u32[144,128]{1,0:T(1,128)}', space=vmem, size = 0x12000, scoped, tag = 'internal scratch']
  %s0 = inlined_call_operand.vmem [shape: bf16[16,864], index: 0, kind: input, shape index: {}]
  %s1 = inlined_call_operand.vmem [shape: bf16[864,128], index: 1, kind: input, shape index: {}]
  %s2 = inlined_call_operand.vmem [shape: f32[1,128], index: 2, kind: input, shape index: {}]
  %s3 = inlined_call_operand.vmem [shape: bf16[16,128], index: 3, kind: output, shape index: {}]
  %s4 = sld [smem:[#allocation0]]
  $region22: #{simple_generator.29} parent=0
    _
  %s6 = ssub.s32 1, %s4
  %s7 = scalar_select 0, %s6, %s4
  // Predicated region
  $region2: #{simple_generator.29} parent=0 // pred_check
    _
  $region3: #{simple_generator.29} parent=0 // pred_check_branch
    %9 = sbr.rel (0) target = $region5
  $region4: #{simple_generator.29} parent=0 // pred_region
    _
  $region5: #{simple_generator.29} parent=0 // pred_fallthru
    _
  // Predicated region
  $region6: #{simple_generator.29} parent=0 // pred_check
    _
  $region7: #{simple_generator.29} parent=0 // pred_check_branch
    %11 = sbr.rel (0) target = $region9
  $region8: #{simple_generator.29} parent=0 // pred_region
    _
  $region9: #{simple_generator.29} parent=0 // pred_fallthru
    _
  // Predicated region
  $region10: #{simple_generator.29} parent=0 // pred_check
    _
  $region11: #{simple_generator.29} parent=0 // pred_check_branch
    %13 = sbr.rel (0) target = $region13
  $region12: #{simple_generator.29} parent=0 // pred_region
    _
  $region13: #{simple_generator.29} parent=0 // pred_fallthru
    _
  %v15 = vld [vmem:[%s0] sm:$0xff]
  %v16 = vld [vmem:[%s0 + $0x8] sm:$0xff]
  %v17 = vld [vmem:[%s0 + $0x10] sm:$0xff]
  %v18 = vld [vmem:[%s0 + $0x18] sm:$0xf]
  %v19 = vld [vmem:[%s0 + $0x1c] sm:$0xff]
  %v20 = vld [vmem:[%s0 + $0x24] sm:$0xff]
  %v21 = vld [vmem:[%s0 + $0x2c] sm:$0xff]
  %v22 = vld [vmem:[%s0 + $0x34] sm:$0xf]
  %v23 = vld [vmem:[%s1] sm:$0xf]
  %v24 = vld [vmem:[%s1 + $0x4] sm:$0xf]
  %v25 = vld [vmem:[%s1 + $0x8] sm:$0xf]
  %v26 = vld [vmem:[%s1 + $0xc] sm:$0xf]
  %v27 = vld [vmem:[%s1 + $0x10] sm:$0xf]
  %v28 = vld [vmem:[%s1 + $0x14] sm:$0xf]
  %v29 = vld [vmem:[%s1 + $0x18] sm:$0xf]
  %v30 = vld [vmem:[%s1 + $0x1c] sm:$0xf]
  %v31 = vld [vmem:[%s1 + $0x20] sm:$0xf]
  %v32 = vld [vmem:[%s1 + $0x24] sm:$0xf]
  %v33 = vld [vmem:[%s1 + $0x28] sm:$0xf]
  %v34 = vld [vmem:[%s1 + $0x2c] sm:$0xf]
  %v35 = vld [vmem:[%s1 + $0x30] sm:$0xf]
  %v36 = vld [vmem:[%s1 + $0x34] sm:$0xf]
  %v37 = vld [vmem:[%s1 + $0x38] sm:$0xf]
  %v38 = vld [vmem:[%s1 + $0x3c] sm:$0xf]
  %v39 = vld [vmem:[%s1 + $0x40] sm:$0xf]
  %v40 = vld [vmem:[%s1 + $0x44] sm:$0xf]
  %v41 = vld [vmem:[%s1 + $0x48] sm:$0xf]
  %v42 = vld [vmem:[%s1 + $0x4c] sm:$0xf]
  %v43 = vld [vmem:[%s1 + $0x50] sm:$0xf]
  %v44 = vld [vmem:[%s1 + $0x54] sm:$0xf]
  %v45 = vld [vmem:[%s1 + $0x58] sm:$0xf]
  %v46 = vld [vmem:[%s1 + $0x5c] sm:$0xf]
  %v47 = vld [vmem:[%s1 + $0x60] sm:$0xf]
  %v48 = vld [vmem:[%s1 + $0x64] sm:$0xf]
  %v49 = vld [vmem:[%s1 + $0x68] sm:$0xf]
  %v50 = vld [vmem:[%s1 + $0x6c] sm:$0xf]
  %v51 = vld [vmem:[%s1 + $0x70] sm:$0xf]
  %v52 = vld [vmem:[%s1 + $0x74] sm:$0xf]
  %v53 = vld [vmem:[%s1 + $0x78] sm:$0xf]
  %v54 = vld [vmem:[%s1 + $0x7c] sm:$0xf]
  %v55 = vld [vmem:[%s1 + $0x80] sm:$0xf]
  %v56 = vld [vmem:[%s1 + $0x84] sm:$0xf]
  %v57 = vld [vmem:[%s1 + $0x88] sm:$0xf]
  %v58 = vld [vmem:[%s1 + $0x8c] sm:$0xf]
  %v59 = vld [vmem:[%s1 + $0x90] sm:$0xf]
  %v60 = vld [vmem:[%s1 + $0x94] sm:$0xf]
  %v61 = vld [vmem:[%s1 + $0x98] sm:$0xf]
  %v62 = vld [vmem:[%s1 + $0x9c] sm:$0xf]
  %v63 = vld [vmem:[%s1 + $0xa0] sm:$0xf]
  %v64 = vld [vmem:[%s1 + $0xa4] sm:$0xf]
  %v65 = vld [vmem:[%s1 + $0xa8] sm:$0xf]
  %v66 = vld [vmem:[%s1 + $0xac] sm:$0xf]
  %v67 = vld [vmem:[%s1 + $0xb0] sm:$0xf]
  %v68 = vld [vmem:[%s1 + $0xb4] sm:$0xf]
  %v69 = vld [vmem:[%s1 + $0xb8] sm:$0xf]
  %v70 = vld [vmem:[%s1 + $0xbc] sm:$0xf]
  %v71 = vld [vmem:[%s1 + $0xc0] sm:$0xf]
  %v72 = vld [vmem:[%s1 + $0xc4] sm:$0xf]
  %v73 = vld [vmem:[%s1 + $0xc8] sm:$0xf]
  %v74 = vld [vmem:[%s1 + $0xcc] sm:$0xf]
  %v75 = vld [vmem:[%s1 + $0xd0] sm:$0xf]
  %v76 = vld [vmem:[%s1 + $0xd4] sm:$0xf]
  %v77 = vld [vmem:[%s1 + $0xd8] sm:$0xf]
  %v78 = vld [vmem:[%s1 + $0xdc] sm:$0xf]
  %v79 = vld [vmem:[%s1 + $0xe0] sm:$0xf]
  %v80 = vld [vmem:[%s1 + $0xe4] sm:$0xf]
  %v81 = vld [vmem:[%s1 + $0xe8] sm:$0xf]
  %v82 = vld [vmem:[%s1 + $0xec] sm:$0xf]
  %v83 = vld [vmem:[%s1 + $0xf0] sm:$0xf]
  %v84 = vld [vmem:[%s1 + $0xf4] sm:$0xf]
  %v85 = vld [vmem:[%s1 + $0xf8] sm:$0xf]
  %v86 = vld [vmem:[%s1 + $0xfc] sm:$0xf]
  %v87 = vld [vmem:[%s1 + $0x100] sm:$0xf]
  %v88 = vld [vmem:[%s1 + $0x104] sm:$0xf]
  %v89 = vld [vmem:[%s1 + $0x108] sm:$0xf]
  %v90 = vld [vmem:[%s1 + $0x10c] sm:$0xf]
  %v91 = vld [vmem:[%s1 + $0x110] sm:$0xf]
  %v92 = vld [vmem:[%s1 + $0x114] sm:$0xf]
  %v93 = vld [vmem:[%s1 + $0x118] sm:$0xf]
  %v94 = vld [vmem:[%s1 + $0x11c] sm:$0xf]
  %v95 = vld [vmem:[%s1 + $0x120] sm:$0xf]
  %v96 = vld [vmem:[%s1 + $0x124] sm:$0xf]
  %v97 = vld [vmem:[%s1 + $0x128] sm:$0xf]
  %v98 = vld [vmem:[%s1 + $0x12c] sm:$0xf]
  %v99 = vld [vmem:[%s1 + $0x130] sm:$0xf]
  %v100 = vld [vmem:[%s1 + $0x134] sm:$0xf]
  %v101 = vld [vmem:[%s1 + $0x138] sm:$0xf]
  %v102 = vld [vmem:[%s1 + $0x13c] sm:$0xf]
  %v103 = vld [vmem:[%s1 + $0x140] sm:$0xf]
  %v104 = vld [vmem:[%s1 + $0x144] sm:$0xf]
  %v105 = vld [vmem:[%s1 + $0x148] sm:$0xf]
  %v106 = vld [vmem:[%s1 + $0x14c] sm:$0xf]
  %v107 = vld [vmem:[%s1 + $0x150] sm:$0xf]
  %v108 = vld [vmem:[%s1 + $0x154] sm:$0xf]
  %v109 = vld [vmem:[%s1 + $0x158] sm:$0xf]
  %v110 = vld [vmem:[%s1 + $0x15c] sm:$0xf]
  %v111 = vld [vmem:[%s1 + $0x160] sm:$0xf]
  %v112 = vld [vmem:[%s1 + $0x164] sm:$0xf]
  %v113 = vld [vmem:[%s1 + $0x168] sm:$0xf]
  %v114 = vld [vmem:[%s1 + $0x16c] sm:$0xf]
  %v115 = vld [vmem:[%s1 + $0x170] sm:$0xf]
  %v116 = vld [vmem:[%s1 + $0x174] sm:$0xf]
  %v117 = vld [vmem:[%s1 + $0x178] sm:$0xf]
  %v118 = vld [vmem:[%s1 + $0x17c] sm:$0xf]
  %v119 = vld [vmem:[%s1 + $0x180] sm:$0xf]
  %v120 = vld [vmem:[%s1 + $0x184] sm:$0xf]
  %v121 = vld [vmem:[%s1 + $0x188] sm:$0xf]
  %v122 = vld [vmem:[%s1 + $0x18c] sm:$0xf]
  %v123 = vld [vmem:[%s1 + $0x190] sm:$0xf]
  %v124 = vld [vmem:[%s1 + $0x194] sm:$0xf]
  %v125 = vld [vmem:[%s1 + $0x198] sm:$0xf]
  %v126 = vld [vmem:[%s1 + $0x19c] sm:$0xf]
  %v127 = vld [vmem:[%s1 + $0x1a0] sm:$0xf]
  %v128 = vld [vmem:[%s1 + $0x1a4] sm:$0xf]
  %v129 = vld [vmem:[%s1 + $0x1a8] sm:$0xf]
  %v130 = vld [vmem:[%s1 + $0x1ac] sm:$0xf]
  %v131 = vld [vmem:[%s2] sm:$0x1]
  %v133 = vlaneseq
  %v134 = vshrl.u32 %v133, 7
  %v135 = vsub.s32 0, %v134
  %v136 = vrot.slane %v131, %v135
  %v146 = vunpack.c.l.b16 %v15
  %v147 = vunpack.c.h.b16 %v15
  %v148 = vunpack.c.l.b16 %v16
  %v149 = vunpack.c.h.b16 %v16
  %v150 = vunpack.c.l.b16 %v17
  %v151 = vunpack.c.h.b16 %v17
  %v152 = vunpack.c.l.b16 %v18
  %v153 = vunpack.c.l.b16 %v19
  %v154 = vunpack.c.h.b16 %v19
  %v155 = vunpack.c.l.b16 %v20
  %v156 = vunpack.c.h.b16 %v20
  %v157 = vunpack.c.l.b16 %v21
  %v158 = vunpack.c.h.b16 %v21
  %v159 = vunpack.c.l.b16 %v22
  %v160 = vpack.c.b16 %v153, %v146
  %v161 = vpack.c.b16 %v154, %v147
  %v162 = vpack.c.b16 %v155, %v148
  %v163 = vpack.c.b16 %v156, %v149
  %v164 = vpack.c.b16 %v157, %v150
  %v165 = vpack.c.b16 %v158, %v151
  %v166 = vpack.c.b16 %v159, %v152
  %v281 = vunpack.c.l.b16 %v23
  %v282 = vunpack.c.l.b16 %v24
  %v283 = vunpack.c.l.b16 %v25
  %v284 = vunpack.c.l.b16 %v26
  %v285 = vunpack.c.l.b16 %v27
  %v286 = vunpack.c.l.b16 %v28
  %v287 = vunpack.c.l.b16 %v29
  %v288 = vunpack.c.l.b16 %v30
  %v289 = vunpack.c.l.b16 %v31
  %v290 = vunpack.c.l.b16 %v32
  %v291 = vunpack.c.l.b16 %v33
  %v292 = vunpack.c.l.b16 %v34
  %v293 = vunpack.c.l.b16 %v35
  %v294 = vunpack.c.l.b16 %v36
  %v295 = vunpack.c.l.b16 %v37
  %v296 = vunpack.c.l.b16 %v38
  %v297 = vunpack.c.l.b16 %v39
  %v298 = vunpack.c.l.b16 %v40
  %v299 = vunpack.c.l.b16 %v41
  %v300 = vunpack.c.l.b16 %v42
  %v301 = vunpack.c.l.b16 %v43
  %v302 = vunpack.c.l.b16 %v44
  %v303 = vunpack.c.l.b16 %v45
  %v304 = vunpack.c.l.b16 %v46
  %v305 = vunpack.c.l.b16 %v47
  %v306 = vunpack.c.l.b16 %v48
  %v307 = vunpack.c.l.b16 %v49
  %v308 = vunpack.c.l.b16 %v50
  %v309 = vunpack.c.l.b16 %v51
  %v310 = vunpack.c.l.b16 %v52
  %v311 = vunpack.c.l.b16 %v53
  %v312 = vunpack.c.l.b16 %v54
  %v313 = vunpack.c.l.b16 %v55
  %v314 = vunpack.c.l.b16 %v56
  %v315 = vunpack.c.l.b16 %v57
  %v316 = vunpack.c.l.b16 %v58
  %v317 = vunpack.c.l.b16 %v59
  %v318 = vunpack.c.l.b16 %v60
  %v319 = vunpack.c.l.b16 %v61
  %v320 = vunpack.c.l.b16 %v62
  %v321 = vunpack.c.l.b16 %v63
  %v322 = vunpack.c.l.b16 %v64
  %v323 = vunpack.c.l.b16 %v65
  %v324 = vunpack.c.l.b16 %v66
  %v325 = vunpack.c.l.b16 %v67
  %v326 = vunpack.c.l.b16 %v68
  %v327 = vunpack.c.l.b16 %v69
  %v328 = vunpack.c.l.b16 %v70
  %v329 = vunpack.c.l.b16 %v71
  %v330 = vunpack.c.l.b16 %v72
  %v331 = vunpack.c.l.b16 %v73
  %v332 = vunpack.c.l.b16 %v74
  %v333 = vunpack.c.l.b16 %v75
  %v334 = vunpack.c.l.b16 %v76
  %v335 = vunpack.c.l.b16 %v77
  %v336 = vunpack.c.l.b16 %v78
  %v337 = vunpack.c.l.b16 %v79
  %v338 = vunpack.c.l.b16 %v80
  %v339 = vunpack.c.l.b16 %v81
  %v340 = vunpack.c.l.b16 %v82
  %v341 = vunpack.c.l.b16 %v83
  %v342 = vunpack.c.l.b16 %v84
  %v343 = vunpack.c.l.b16 %v85
  %v344 = vunpack.c.l.b16 %v86
  %v345 = vunpack.c.l.b16 %v87
  %v346 = vunpack.c.l.b16 %v88
  %v347 = vunpack.c.l.b16 %v89
  %v348 = vunpack.c.l.b16 %v90
  %v349 = vunpack.c.l.b16 %v91
  %v350 = vunpack.c.l.b16 %v92
  %v351 = vunpack.c.l.b16 %v93
  %v352 = vunpack.c.l.b16 %v94
  %v353 = vunpack.c.l.b16 %v95
  %v354 = vunpack.c.l.b16 %v96
  %v355 = vunpack.c.l.b16 %v97
  %v356 = vunpack.c.l.b16 %v98
  %v357 = vunpack.c.l.b16 %v99
  %v358 = vunpack.c.l.b16 %v100
  %v359 = vunpack.c.l.b16 %v101
  %v360 = vunpack.c.l.b16 %v102
  %v361 = vunpack.c.l.b16 %v103
  %v362 = vunpack.c.l.b16 %v104
  %v363 = vunpack.c.l.b16 %v105
  %v364 = vunpack.c.l.b16 %v106
  %v365 = vunpack.c.l.b16 %v107
  %v366 = vunpack.c.l.b16 %v108
  %v367 = vunpack.c.l.b16 %v109
  %v368 = vunpack.c.l.b16 %v110
  %v369 = vunpack.c.l.b16 %v111
  %v370 = vunpack.c.l.b16 %v112
  %v371 = vunpack.c.l.b16 %v113
  %v372 = vunpack.c.l.b16 %v114
  %v373 = vunpack.c.l.b16 %v115
  %v374 = vunpack.c.l.b16 %v116
  %v375 = vunpack.c.l.b16 %v117
  %v376 = vunpack.c.l.b16 %v118
  %v377 = vunpack.c.l.b16 %v119
  %v378 = vunpack.c.l.b16 %v120
  %v379 = vunpack.c.l.b16 %v121
  %v380 = vunpack.c.l.b16 %v122
  %v381 = vunpack.c.l.b16 %v123
  %v382 = vunpack.c.l.b16 %v124
  %v383 = vunpack.c.l.b16 %v125
  %v384 = vunpack.c.l.b16 %v126
  %v385 = vunpack.c.l.b16 %v127
  %v386 = vunpack.c.l.b16 %v128
  %v387 = vunpack.c.l.b16 %v129
  %v388 = vunpack.c.l.b16 %v130
  %v389 = vpack.c.b16 %v282, %v281
  %v390 = vpack.c.b16 %v284, %v283
  %v391 = vpack.c.b16 %v286, %v285
  %v392 = vpack.c.b16 %v288, %v287
  %v393 = vpack.c.b16 %v290, %v289
  %v394 = vpack.c.b16 %v292, %v291
  %v395 = vpack.c.b16 %v294, %v293
  %v396 = vpack.c.b16 %v296, %v295
  %v397 = vpack.c.b16 %v298, %v297
  %v398 = vpack.c.b16 %v300, %v299
  %v399 = vpack.c.b16 %v302, %v301
  %v400 = vpack.c.b16 %v304, %v303
  %v401 = vpack.c.b16 %v306, %v305
  %v402 = vpack.c.b16 %v308, %v307
  %v403 = vpack.c.b16 %v310, %v309
  %v404 = vpack.c.b16 %v312, %v311
  %v405 = vpack.c.b16 %v314, %v313
  %v406 = vpack.c.b16 %v316, %v315
  %v407 = vpack.c.b16 %v318, %v317
  %v408 = vpack.c.b16 %v320, %v319
  %v409 = vpack.c.b16 %v322, %v321
  %v410 = vpack.c.b16 %v324, %v323
  %v411 = vpack.c.b16 %v326, %v325
  %v412 = vpack.c.b16 %v328, %v327
  %v413 = vpack.c.b16 %v330, %v329
  %v414 = vpack.c.b16 %v332, %v331
  %v415 = vpack.c.b16 %v334, %v333
  %v416 = vpack.c.b16 %v336, %v335
  %v417 = vpack.c.b16 %v338, %v337
  %v418 = vpack.c.b16 %v340, %v339
  %v419 = vpack.c.b16 %v342, %v341
  %v420 = vpack.c.b16 %v344, %v343
  %v421 = vpack.c.b16 %v346, %v345
  %v422 = vpack.c.b16 %v348, %v347
  %v423 = vpack.c.b16 %v350, %v349
  %v424 = vpack.c.b16 %v352, %v351
  %v425 = vpack.c.b16 %v354, %v353
  %v426 = vpack.c.b16 %v356, %v355
  %v427 = vpack.c.b16 %v358, %v357
  %v428 = vpack.c.b16 %v360, %v359
  %v429 = vpack.c.b16 %v362, %v361
  %v430 = vpack.c.b16 %v364, %v363
  %v431 = vpack.c.b16 %v366, %v365
  %v432 = vpack.c.b16 %v368, %v367
  %v433 = vpack.c.b16 %v370, %v369
  %v434 = vpack.c.b16 %v372, %v371
  %v435 = vpack.c.b16 %v374, %v373
  %v436 = vpack.c.b16 %v376, %v375
  %v437 = vpack.c.b16 %v378, %v377
  %v438 = vpack.c.b16 %v380, %v379
  %v439 = vpack.c.b16 %v382, %v381
  %v440 = vpack.c.b16 %v384, %v383
  %v441 = vpack.c.b16 %v386, %v385
  %v442 = vpack.c.b16 %v388, %v387
  %vm497 = vcmask 785408
  %v499 = vsel %vm497, %v166, 0
  %501 = vmatprep.subr.bf16.mxu0 0
  %502 = vmatpush1.bf16.msra.mxu0 %v389
  %503 = vmatprep.subr.bf16.mxu0 0
  %504 = vmatpush1.bf16.msra.mxu0 %v390
  %505 = vmatprep.subr.bf16.mxu0 0
  %506 = vmatpush1.bf16.msra.mxu0 %v391
  %507 = vmatprep.subr.bf16.mxu0 0
  %508 = vmatpush1.bf16.msra.mxu0 %v392
  %509 = vmatprep.subr.bf16.mxu0 0
  %510 = vmatpush1.bf16.msra.mxu0 %v393
  %511 = vmatprep.subr.bf16.mxu0 0
  %512 = vmatpush1.bf16.msra.mxu0 %v394
  %513 = vmatprep.subr.bf16.mxu0 0
  %514 = vmatpush1.bf16.msra.mxu0 %v395
  %515 = vmatprep.subr.bf16.mxu0 0
  %516 = vmatpush1.bf16.msra.mxu0 %v396
  %517 = vmatprep.subr.bf16.mxu0 0
  %518 = vmatpush1.bf16.msra.mxu0 %v397
  %519 = vmatprep.subr.bf16.mxu0 0
  %520 = vmatpush1.bf16.msra.mxu0 %v398
  %521 = vmatprep.subr.bf16.mxu0 0
  %522 = vmatpush1.bf16.msra.mxu0 %v399
  %523 = vmatprep.subr.bf16.mxu0 0
  %524 = vmatpush1.bf16.msra.mxu0 %v400
  %525 = vmatprep.subr.bf16.mxu0 0
  %526 = vmatpush1.bf16.msra.mxu0 %v401
  %527 = vmatprep.subr.bf16.mxu0 0
  %528 = vmatpush1.bf16.msra.mxu0 %v402
  %529 = vmatprep.subr.bf16.mxu0 0
  %530 = vmatpush1.bf16.msra.mxu0 %v403
  %531 = vmatprep.subr.bf16.mxu0 0
  %532 = vmatpush1.bf16.msra.mxu0 %v404
  %533 = vmatprep.mubr.bf16.mxu0 %v161
  %534 = vmatmul.mubr.bf16.gmra.mrb[0].mxu0 %v160
  %v535 = vpop.f32.mrb[0].mxu0
  %v536 = vadd.f32 %v136, %v535
  %v537 = vpop.f32.mrb[0].mxu0
  %v538 = vpop.f32.mrb[0].mxu0
  %v539 = vadd.f32 %v136, %v538
  %v540 = vpop.f32.mrb[0].mxu0
  %541 = vdwg.mxu0
  %542 = vmatprep.subr.bf16.mxu0 0
  %543 = vmatpush1.bf16.msra.mxu0 %v405
  %544 = vmatprep.subr.bf16.mxu0 0
  %545 = vmatpush1.bf16.msra.mxu0 %v406
  %546 = vmatprep.subr.bf16.mxu0 0
  %547 = vmatpush1.bf16.msra.mxu0 %v407
  %548 = vmatprep.subr.bf16.mxu0 0
  %549 = vmatpush1.bf16.msra.mxu0 %v408
  %550 = vmatprep.subr.bf16.mxu0 0
  %551 = vmatpush1.bf16.msra.mxu0 %v409
  %552 = vmatprep.subr.bf16.mxu0 0
  %553 = vmatpush1.bf16.msra.mxu0 %v410
  %554 = vmatprep.subr.bf16.mxu0 0
  %555 = vmatpush1.bf16.msra.mxu0 %v411
  %556 = vmatprep.subr.bf16.mxu0 0
  %557 = vmatpush1.bf16.msra.mxu0 %v412
  %558 = vmatprep.subr.bf16.mxu0 0
  %559 = vmatpush1.bf16.msra.mxu0 %v413
  %560 = vmatprep.subr.bf16.mxu0 0
  %561 = vmatpush1.bf16.msra.mxu0 %v414
  %562 = vmatprep.subr.bf16.mxu0 0
  %563 = vmatpush1.bf16.msra.mxu0 %v415
  %564 = vmatprep.subr.bf16.mxu0 0
  %565 = vmatpush1.bf16.msra.mxu0 %v416
  %566 = vmatprep.subr.bf16.mxu0 0
  %567 = vmatpush1.bf16.msra.mxu0 %v417
  %568 = vmatprep.subr.bf16.mxu0 0
  %569 = vmatpush1.bf16.msra.mxu0 %v418
  %570 = vmatprep.subr.bf16.mxu0 0
  %571 = vmatpush1.bf16.msra.mxu0 %v419
  %572 = vmatprep.subr.bf16.mxu0 0
  %573 = vmatpush1.bf16.msra.mxu0 %v420
  %574 = vmatprep.mubr.bf16.mxu0 %v163
  %575 = vmatmul.mubr.bf16.gmra.mrb[0].mxu0 %v162
  %v576 = vpop.f32.mrb[0].mxu0
  %v577 = vadd.f32 %v536, %v576
  %v578 = vpop.f32.mrb[0].mxu0
  %v579 = vpop.f32.mrb[0].mxu0
  %v580 = vadd.f32 %v539, %v579
  %v581 = vpop.f32.mrb[0].mxu0
  %582 = vdwg.mxu0
  %583 = vmatprep.subr.bf16.mxu0 0
  %584 = vmatpush1.bf16.msra.mxu0 %v421
  %585 = vmatprep.subr.bf16.mxu0 0
  %586 = vmatpush1.bf16.msra.mxu0 %v422
  %587 = vmatprep.subr.bf16.mxu0 0
  %588 = vmatpush1.bf16.msra.mxu0 %v423
  %589 = vmatprep.subr.bf16.mxu0 0
  %590 = vmatpush1.bf16.msra.mxu0 %v424
  %591 = vmatprep.subr.bf16.mxu0 0
  %592 = vmatpush1.bf16.msra.mxu0 %v425
  %593 = vmatprep.subr.bf16.mxu0 0
  %594 = vmatpush1.bf16.msra.mxu0 %v426
  %595 = vmatprep.subr.bf16.mxu0 0
  %596 = vmatpush1.bf16.msra.mxu0 %v427
  %597 = vmatprep.subr.bf16.mxu0 0
  %598 = vmatpush1.bf16.msra.mxu0 %v428
  %599 = vmatprep.subr.bf16.mxu0 0
  %600 = vmatpush1.bf16.msra.mxu0 %v429
  %601 = vmatprep.subr.bf16.mxu0 0
  %602 = vmatpush1.bf16.msra.mxu0 %v430
  %603 = vmatprep.subr.bf16.mxu0 0
  %604 = vmatpush1.bf16.msra.mxu0 %v431
  %605 = vmatprep.subr.bf16.mxu0 0
  %606 = vmatpush1.bf16.msra.mxu0 %v432
  %607 = vmatprep.subr.bf16.mxu0 0
  %608 = vmatpush1.bf16.msra.mxu0 %v433
  %609 = vmatprep.subr.bf16.mxu0 0
  %610 = vmatpush1.bf16.msra.mxu0 %v434
  %611 = vmatprep.subr.bf16.mxu0 0
  %612 = vmatpush1.bf16.msra.mxu0 %v435
  %613 = vmatprep.subr.bf16.mxu0 0
  %614 = vmatpush1.bf16.msra.mxu0 %v436
  %615 = vmatprep.mubr.bf16.mxu0 %v165
  %616 = vmatmul.mubr.bf16.gmra.mrb[0].mxu0 %v164
  %v617 = vpop.f32.mrb[0].mxu0
  %v618 = vadd.f32 %v577, %v617
  %v619 = vpop.f32.mrb[0].mxu0
  %v620 = vpop.f32.mrb[0].mxu0
  %v621 = vadd.f32 %v580, %v620
  %v622 = vpop.f32.mrb[0].mxu0
  %623 = vdwg.mxu0
  %624 = vmatprep.subr.bf16.mxu0 0
  %625 = vmatpush1.bf16.msra.mxu0 %v437
  %626 = vmatprep.subr.bf16.mxu0 0
  %627 = vmatpush1.bf16.msra.mxu0 %v438
  %628 = vmatprep.subr.bf16.mxu0 0
  %629 = vmatpush1.bf16.msra.mxu0 %v439
  %630 = vmatprep.subr.bf16.mxu0 0
  %631 = vmatpush1.bf16.msra.mxu0 %v440
  %632 = vmatprep.subr.bf16.mxu0 0
  %633 = vmatpush1.bf16.msra.mxu0 %v441
  %634 = vmatprep.subr.bf16.mxu0 0
  %635 = vmatpush1.bf16.msra.mxu0 %v442
  %636 = vmatprep.subr.bf16.mxu0 0
  %637 = vmatpush1.bf16.msra.mxu0 0
  %638 = vmatprep.subr.bf16.mxu0 0
  %639 = vmatpush1.bf16.msra.mxu0 0
  %640 = vmatprep.subr.bf16.mxu0 0
  %641 = vmatpush1.bf16.msra.mxu0 0
  %642 = vmatprep.subr.bf16.mxu0 0
  %643 = vmatpush1.bf16.msra.mxu0 0
  %644 = vmatprep.subr.bf16.mxu0 0
  %645 = vmatpush1.bf16.msra.mxu0 0
  %646 = vmatprep.subr.bf16.mxu0 0
  %647 = vmatpush1.bf16.msra.mxu0 0
  %648 = vmatprep.subr.bf16.mxu0 0
  %649 = vmatpush1.bf16.msra.mxu0 0
  %650 = vmatprep.subr.bf16.mxu0 0
  %651 = vmatpush1.bf16.msra.mxu0 0
  %652 = vmatprep.subr.bf16.mxu0 0
  %653 = vmatpush1.bf16.msra.mxu0 0
  %654 = vmatprep.subr.bf16.mxu0 0
  %655 = vmatpush1.bf16.msra.mxu0 0
  %656 = vmatprep.mubr.bf16.mxu0 0
  %657 = vmatmul.mubr.bf16.gmra.mrb[0].mxu0 %v499
  %v658 = vpop.f32.mrb[0].mxu0
  %v659 = vadd.f32 %v618, %v658
  %v660 = vpop.f32.mrb[0].mxu0
  %v661 = vpop.f32.mrb[0].mxu0
  %v662 = vadd.f32 %v621, %v661
  %v663 = vpop.f32.mrb[0].mxu0
  %664 = vdwg.mxu0
  %v665 = vmax.f32 %v659, 0.0
  %v666 = vmax.f32 %v662, 0.0
  %v667 = vpack.c.bf16 %v666, %v665
  %v669 = vunpack.c.l.b16 %v667
  %v670 = vunpack.c.h.b16 %v667
  %v671 = vpack.c.b16 %v669, %v669
  %v672 = vpack.c.b16 %v670, %v670
  %675 = vst [vmem:[%s3] sm:$0xf] %v671
  %676 = vst [vmem:[%s3 + $0x4] sm:$0xf] %v672
  // Predicated region
  $region14: #{simple_generator.29} parent=0 // pred_check
    _
  $region15: #{simple_generator.29} parent=0 // pred_check_branch
    %678 = sbr.rel (0) target = $region17
  $region16: #{simple_generator.29} parent=0 // pred_region
    _
  $region17: #{simple_generator.29} parent=0 // pred_fallthru
    _
  // Predicated region
  $region18: #{simple_generator.29} parent=0 // pred_check
    _
  $region19: #{simple_generator.29} parent=0 // pred_check_branch
    %680 = sbr.rel (0) target = $region21
  $region20: #{simple_generator.29} parent=0 // pred_region
    _
  $region21: #{simple_generator.29} parent=0 // pred_fallthru
    _

// kernel: simple_generator.33
$region0: #{simple_generator.33}
  #allocation0 [shape = 'u32[]', space=smem, size = 0x4, offset = 0x4, fixed_abs, tag = 'smem constant byte address 0x4 - core index']
  #allocation1 [shape = 'u32[144,128]{1,0:T(1,128)}', space=vmem, size = 0x12000, scoped, tag = 'internal scratch']
  %s0 = inlined_call_operand.vmem [shape: bf16[16,1152], index: 0, kind: input, shape index: {}]
  %s1 = inlined_call_operand.vmem [shape: bf16[1152,128], index: 1, kind: input, shape index: {}]
  %s2 = inlined_call_operand.vmem [shape: f32[1,128], index: 2, kind: input, shape index: {}]
  %s3 = inlined_call_operand.vmem [shape: bf16[16,128], index: 3, kind: input, shape index: {}]
  %s4 = inlined_call_operand.vmem [shape: bf16[16,128], index: 4, kind: output, shape index: {}]
  %s5 = sld [smem:[#allocation0]]
  $region26: #{simple_generator.33} parent=0
    _
  %s7 = ssub.s32 1, %s5
  %s8 = scalar_select 0, %s7, %s5
  // Predicated region
  $region2: #{simple_generator.33} parent=0 // pred_check
    _
  $region3: #{simple_generator.33} parent=0 // pred_check_branch
    %10 = sbr.rel (0) target = $region5
  $region4: #{simple_generator.33} parent=0 // pred_region
    _
  $region5: #{simple_generator.33} parent=0 // pred_fallthru
    _
  // Predicated region
  $region6: #{simple_generator.33} parent=0 // pred_check
    _
  $region7: #{simple_generator.33} parent=0 // pred_check_branch
    %12 = sbr.rel (0) target = $region9
  $region8: #{simple_generator.33} parent=0 // pred_region
    _
  $region9: #{simple_generator.33} parent=0 // pred_fallthru
    _
  // Predicated region
  $region10: #{simple_generator.33} parent=0 // pred_check
    _
  $region11: #{simple_generator.33} parent=0 // pred_check_branch
    %14 = sbr.rel (0) target = $region13
  $region12: #{simple_generator.33} parent=0 // pred_region
    _
  $region13: #{simple_generator.33} parent=0 // pred_fallthru
    _
  // Predicated region
  $region14: #{simple_generator.33} parent=0 // pred_check
    _
  $region15: #{simple_generator.33} parent=0 // pred_check_branch
    %16 = sbr.rel (0) target = $region17
  $region16: #{simple_generator.33} parent=0 // pred_region
    _
  $region17: #{simple_generator.33} parent=0 // pred_fallthru
    _
  %v18 = vld [vmem:[%s0] sm:$0xff]
  %v19 = vld [vmem:[%s0 + $0x8] sm:$0xff]
  %v20 = vld [vmem:[%s0 + $0x10] sm:$0xff]
  %v21 = vld [vmem:[%s0 + $0x18] sm:$0xff]
  %v22 = vld [vmem:[%s0 + $0x20] sm:$0xf]
  %v23 = vld [vmem:[%s0 + $0x24] sm:$0xff]
  %v24 = vld [vmem:[%s0 + $0x2c] sm:$0xff]
  %v25 = vld [vmem:[%s0 + $0x34] sm:$0xff]
  %v26 = vld [vmem:[%s0 + $0x3c] sm:$0xff]
  %v27 = vld [vmem:[%s0 + $0x44] sm:$0xf]
  %v28 = vld [vmem:[%s1] sm:$0xf]
  %v29 = vld [vmem:[%s1 + $0x4] sm:$0xf]
  %v30 = vld [vmem:[%s1 + $0x8] sm:$0xf]
  %v31 = vld [vmem:[%s1 + $0xc] sm:$0xf]
  %v32 = vld [vmem:[%s1 + $0x10] sm:$0xf]
  %v33 = vld [vmem:[%s1 + $0x14] sm:$0xf]
  %v34 = vld [vmem:[%s1 + $0x18] sm:$0xf]
  %v35 = vld [vmem:[%s1 + $0x1c] sm:$0xf]
  %v36 = vld [vmem:[%s1 + $0x20] sm:$0xf]
  %v37 = vld [vmem:[%s1 + $0x24] sm:$0xf]
  %v38 = vld [vmem:[%s1 + $0x28] sm:$0xf]
  %v39 = vld [vmem:[%s1 + $0x2c] sm:$0xf]
  %v40 = vld [vmem:[%s1 + $0x30] sm:$0xf]
  %v41 = vld [vmem:[%s1 + $0x34] sm:$0xf]
  %v42 = vld [vmem:[%s1 + $0x38] sm:$0xf]
  %v43 = vld [vmem:[%s1 + $0x3c] sm:$0xf]
  %v44 = vld [vmem:[%s1 + $0x40] sm:$0xf]
  %v45 = vld [vmem:[%s1 + $0x44] sm:$0xf]
  %v46 = vld [vmem:[%s1 + $0x48] sm:$0xf]
  %v47 = vld [vmem:[%s1 + $0x4c] sm:$0xf]
  %v48 = vld [vmem:[%s1 + $0x50] sm:$0xf]
  %v49 = vld [vmem:[%s1 + $0x54] sm:$0xf]
  %v50 = vld [vmem:[%s1 + $0x58] sm:$0xf]
  %v51 = vld [vmem:[%s1 + $0x5c] sm:$0xf]
  %v52 = vld [vmem:[%s1 + $0x60] sm:$0xf]
  %v53 = vld [vmem:[%s1 + $0x64] sm:$0xf]
  %v54 = vld [vmem:[%s1 + $0x68] sm:$0xf]
  %v55 = vld [vmem:[%s1 + $0x6c] sm:$0xf]
  %v56 = vld [vmem:[%s1 + $0x70] sm:$0xf]
  %v57 = vld [vmem:[%s1 + $0x74] sm:$0xf]
  %v58 = vld [vmem:[%s1 + $0x78] sm:$0xf]
  %v59 = vld [vmem:[%s1 + $0x7c] sm:$0xf]
  %v60 = vld [vmem:[%s1 + $0x80] sm:$0xf]
  %v61 = vld [vmem:[%s1 + $0x84] sm:$0xf]
  %v62 = vld [vmem:[%s1 + $0x88] sm:$0xf]
  %v63 = vld [vmem:[%s1 + $0x8c] sm:$0xf]
  %v64 = vld [vmem:[%s1 + $0x90] sm:$0xf]
  %v65 = vld [vmem:[%s1 + $0x94] sm:$0xf]
  %v66 = vld [vmem:[%s1 + $0x98] sm:$0xf]
  %v67 = vld [vmem:[%s1 + $0x9c] sm:$0xf]
  %v68 = vld [vmem:[%s1 + $0xa0] sm:$0xf]
  %v69 = vld [vmem:[%s1 + $0xa4] sm:$0xf]
  %v70 = vld [vmem:[%s1 + $0xa8] sm:$0xf]
  %v71 = vld [vmem:[%s1 + $0xac] sm:$0xf]
  %v72 = vld [vmem:[%s1 + $0xb0] sm:$0xf]
  %v73 = vld [vmem:[%s1 + $0xb4] sm:$0xf]
  %v74 = vld [vmem:[%s1 + $0xb8] sm:$0xf]
  %v75 = vld [vmem:[%s1 + $0xbc] sm:$0xf]
  %v76 = vld [vmem:[%s1 + $0xc0] sm:$0xf]
  %v77 = vld [vmem:[%s1 + $0xc4] sm:$0xf]
  %v78 = vld [vmem:[%s1 + $0xc8] sm:$0xf]
  %v79 = vld [vmem:[%s1 + $0xcc] sm:$0xf]
  %v80 = vld [vmem:[%s1 + $0xd0] sm:$0xf]
  %v81 = vld [vmem:[%s1 + $0xd4] sm:$0xf]
  %v82 = vld [vmem:[%s1 + $0xd8] sm:$0xf]
  %v83 = vld [vmem:[%s1 + $0xdc] sm:$0xf]
  %v84 = vld [vmem:[%s1 + $0xe0] sm:$0xf]
  %v85 = vld [vmem:[%s1 + $0xe4] sm:$0xf]
  %v86 = vld [vmem:[%s1 + $0xe8] sm:$0xf]
  %v87 = vld [vmem:[%s1 + $0xec] sm:$0xf]
  %v88 = vld [vmem:[%s1 + $0xf0] sm:$0xf]
  %v89 = vld [vmem:[%s1 + $0xf4] sm:$0xf]
  %v90 = vld [vmem:[%s1 + $0xf8] sm:$0xf]
  %v91 = vld [vmem:[%s1 + $0xfc] sm:$0xf]
  %v92 = vld [vmem:[%s1 + $0x100] sm:$0xf]
  %v93 = vld [vmem:[%s1 + $0x104] sm:$0xf]
  %v94 = vld [vmem:[%s1 + $0x108] sm:$0xf]
  %v95 = vld [vmem:[%s1 + $0x10c] sm:$0xf]
  %v96 = vld [vmem:[%s1 + $0x110] sm:$0xf]
  %v97 = vld [vmem:[%s1 + $0x114] sm:$0xf]
  %v98 = vld [vmem:[%s1 + $0x118] sm:$0xf]
  %v99 = vld [vmem:[%s1 + $0x11c] sm:$0xf]
  %v100 = vld [vmem:[%s1 + $0x120] sm:$0xf]
  %v101 = vld [vmem:[%s1 + $0x124] sm:$0xf]
  %v102 = vld [vmem:[%s1 + $0x128] sm:$0xf]
  %v103 = vld [vmem:[%s1 + $0x12c] sm:$0xf]
  %v104 = vld [vmem:[%s1 + $0x130] sm:$0xf]
  %v105 = vld [vmem:[%s1 + $0x134] sm:$0xf]
  %v106 = vld [vmem:[%s1 + $0x138] sm:$0xf]
  %v107 = vld [vmem:[%s1 + $0x13c] sm:$0xf]
  %v108 = vld [vmem:[%s1 + $0x140] sm:$0xf]
  %v109 = vld [vmem:[%s1 + $0x144] sm:$0xf]
  %v110 = vld [vmem:[%s1 + $0x148] sm:$0xf]
  %v111 = vld [vmem:[%s1 + $0x14c] sm:$0xf]
  %v112 = vld [vmem:[%s1 + $0x150] sm:$0xf]
  %v113 = vld [vmem:[%s1 + $0x154] sm:$0xf]
  %v114 = vld [vmem:[%s1 + $0x158] sm:$0xf]
  %v115 = vld [vmem:[%s1 + $0x15c] sm:$0xf]
  %v116 = vld [vmem:[%s1 + $0x160] sm:$0xf]
  %v117 = vld [vmem:[%s1 + $0x164] sm:$0xf]
  %v118 = vld [vmem:[%s1 + $0x168] sm:$0xf]
  %v119 = vld [vmem:[%s1 + $0x16c] sm:$0xf]
  %v120 = vld [vmem:[%s1 + $0x170] sm:$0xf]
  %v121 = vld [vmem:[%s1 + $0x174] sm:$0xf]
  %v122 = vld [vmem:[%s1 + $0x178] sm:$0xf]
  %v123 = vld [vmem:[%s1 + $0x17c] sm:$0xf]
  %v124 = vld [vmem:[%s1 + $0x180] sm:$0xf]
  %v125 = vld [vmem:[%s1 + $0x184] sm:$0xf]
  %v126 = vld [vmem:[%s1 + $0x188] sm:$0xf]
  %v127 = vld [vmem:[%s1 + $0x18c] sm:$0xf]
  %v128 = vld [vmem:[%s1 + $0x190] sm:$0xf]
  %v129 = vld [vmem:[%s1 + $0x194] sm:$0xf]
  %v130 = vld [vmem:[%s1 + $0x198] sm:$0xf]
  %v131 = vld [vmem:[%s1 + $0x19c] sm:$0xf]
  %v132 = vld [vmem:[%s1 + $0x1a0] sm:$0xf]
  %v133 = vld [vmem:[%s1 + $0x1a4] sm:$0xf]
  %v134 = vld [vmem:[%s1 + $0x1a8] sm:$0xf]
  %v135 = vld [vmem:[%s1 + $0x1ac] sm:$0xf]
  %v136 = vld [vmem:[%s1 + $0x1b0] sm:$0xf]
  %v137 = vld [vmem:[%s1 + $0x1b4] sm:$0xf]
  %v138 = vld [vmem:[%s1 + $0x1b8] sm:$0xf]
  %v139 = vld [vmem:[%s1 + $0x1bc] sm:$0xf]
  %v140 = vld [vmem:[%s1 + $0x1c0] sm:$0xf]
  %v141 = vld [vmem:[%s1 + $0x1c4] sm:$0xf]
  %v142 = vld [vmem:[%s1 + $0x1c8] sm:$0xf]
  %v143 = vld [vmem:[%s1 + $0x1cc] sm:$0xf]
  %v144 = vld [vmem:[%s1 + $0x1d0] sm:$0xf]
  %v145 = vld [vmem:[%s1 + $0x1d4] sm:$0xf]
  %v146 = vld [vmem:[%s1 + $0x1d8] sm:$0xf]
  %v147 = vld [vmem:[%s1 + $0x1dc] sm:$0xf]
  %v148 = vld [vmem:[%s1 + $0x1e0] sm:$0xf]
  %v149 = vld [vmem:[%s1 + $0x1e4] sm:$0xf]
  %v150 = vld [vmem:[%s1 + $0x1e8] sm:$0xf]
  %v151 = vld [vmem:[%s1 + $0x1ec] sm:$0xf]
  %v152 = vld [vmem:[%s1 + $0x1f0] sm:$0xf]
  %v153 = vld [vmem:[%s1 + $0x1f4] sm:$0xf]
  %v154 = vld [vmem:[%s1 + $0x1f8] sm:$0xf]
  %v155 = vld [vmem:[%s1 + $0x1fc] sm:$0xf]
  %v156 = vld [vmem:[%s1 + $0x200] sm:$0xf]
  %v157 = vld [vmem:[%s1 + $0x204] sm:$0xf]
  %v158 = vld [vmem:[%s1 + $0x208] sm:$0xf]
  %v159 = vld [vmem:[%s1 + $0x20c] sm:$0xf]
  %v160 = vld [vmem:[%s1 + $0x210] sm:$0xf]
  %v161 = vld [vmem:[%s1 + $0x214] sm:$0xf]
  %v162 = vld [vmem:[%s1 + $0x218] sm:$0xf]
  %v163 = vld [vmem:[%s1 + $0x21c] sm:$0xf]
  %v164 = vld [vmem:[%s1 + $0x220] sm:$0xf]
  %v165 = vld [vmem:[%s1 + $0x224] sm:$0xf]
  %v166 = vld [vmem:[%s1 + $0x228] sm:$0xf]
  %v167 = vld [vmem:[%s1 + $0x22c] sm:$0xf]
  %v168 = vld [vmem:[%s1 + $0x230] sm:$0xf]
  %v169 = vld [vmem:[%s1 + $0x234] sm:$0xf]
  %v170 = vld [vmem:[%s1 + $0x238] sm:$0xf]
  %v171 = vld [vmem:[%s1 + $0x23c] sm:$0xf]
  %v172 = vld [vmem:[%s2] sm:$0x1]
  %v174 = vlaneseq
  %v175 = vshrl.u32 %v174, 7
  %v176 = vsub.s32 0, %v175
  %v177 = vrot.slane %v172, %v176
  %v189 = vunpack.c.l.b16 %v18
  %v190 = vunpack.c.h.b16 %v18
  %v191 = vunpack.c.l.b16 %v19
  %v192 = vunpack.c.h.b16 %v19
  %v193 = vunpack.c.l.b16 %v20
  %v194 = vunpack.c.h.b16 %v20
  %v195 = vunpack.c.l.b16 %v21
  %v196 = vunpack.c.h.b16 %v21
  %v197 = vunpack.c.l.b16 %v22
  %v198 = vunpack.c.l.b16 %v23
  %v199 = vunpack.c.h.b16 %v23
  %v200 = vunpack.c.l.b16 %v24
  %v201 = vunpack.c.h.b16 %v24
  %v202 = vunpack.c.l.b16 %v25
  %v203 = vunpack.c.h.b16 %v25
  %v204 = vunpack.c.l.b16 %v26
  %v205 = vunpack.c.h.b16 %v26
  %v206 = vunpack.c.l.b16 %v27
  %v207 = vpack.c.b16 %v198, %v189
  %v208 = vpack.c.b16 %v199, %v190
  %v209 = vpack.c.b16 %v200, %v191
  %v210 = vpack.c.b16 %v201, %v192
  %v211 = vpack.c.b16 %v202, %v193
  %v212 = vpack.c.b16 %v203, %v194
  %v213 = vpack.c.b16 %v204, %v195
  %v214 = vpack.c.b16 %v205, %v196
  %v215 = vpack.c.b16 %v206, %v197
  %v369 = vunpack.c.l.b16 %v28
  %v370 = vunpack.c.l.b16 %v29
  %v371 = vunpack.c.l.b16 %v30
  %v372 = vunpack.c.l.b16 %v31
  %v373 = vunpack.c.l.b16 %v32
  %v374 = vunpack.c.l.b16 %v33
  %v375 = vunpack.c.l.b16 %v34
  %v376 = vunpack.c.l.b16 %v35
  %v377 = vunpack.c.l.b16 %v36
  %v378 = vunpack.c.l.b16 %v37
  %v379 = vunpack.c.l.b16 %v38
  %v380 = vunpack.c.l.b16 %v39
  %v381 = vunpack.c.l.b16 %v40
  %v382 = vunpack.c.l.b16 %v41
  %v383 = vunpack.c.l.b16 %v42
  %v384 = vunpack.c.l.b16 %v43
  %v385 = vunpack.c.l.b16 %v44
  %v386 = vunpack.c.l.b16 %v45
  %v387 = vunpack.c.l.b16 %v46
  %v388 = vunpack.c.l.b16 %v47
  %v389 = vunpack.c.l.b16 %v48
  %v390 = vunpack.c.l.b16 %v49
  %v391 = vunpack.c.l.b16 %v50
  %v392 = vunpack.c.l.b16 %v51
  %v393 = vunpack.c.l.b16 %v52
  %v394 = vunpack.c.l.b16 %v53
  %v395 = vunpack.c.l.b16 %v54
  %v396 = vunpack.c.l.b16 %v55
  %v397 = vunpack.c.l.b16 %v56
  %v398 = vunpack.c.l.b16 %v57
  %v399 = vunpack.c.l.b16 %v58
  %v400 = vunpack.c.l.b16 %v59
  %v401 = vunpack.c.l.b16 %v60
  %v402 = vunpack.c.l.b16 %v61
  %v403 = vunpack.c.l.b16 %v62
  %v404 = vunpack.c.l.b16 %v63
  %v405 = vunpack.c.l.b16 %v64
  %v406 = vunpack.c.l.b16 %v65
  %v407 = vunpack.c.l.b16 %v66
  %v408 = vunpack.c.l.b16 %v67
  %v409 = vunpack.c.l.b16 %v68
  %v410 = vunpack.c.l.b16 %v69
  %v411 = vunpack.c.l.b16 %v70
  %v412 = vunpack.c.l.b16 %v71
  %v413 = vunpack.c.l.b16 %v72
  %v414 = vunpack.c.l.b16 %v73
  %v415 = vunpack.c.l.b16 %v74
  %v416 = vunpack.c.l.b16 %v75
  %v417 = vunpack.c.l.b16 %v76
  %v418 = vunpack.c.l.b16 %v77
  %v419 = vunpack.c.l.b16 %v78
  %v420 = vunpack.c.l.b16 %v79
  %v421 = vunpack.c.l.b16 %v80
  %v422 = vunpack.c.l.b16 %v81
  %v423 = vunpack.c.l.b16 %v82
  %v424 = vunpack.c.l.b16 %v83
  %v425 = vunpack.c.l.b16 %v84
  %v426 = vunpack.c.l.b16 %v85
  %v427 = vunpack.c.l.b16 %v86
  %v428 = vunpack.c.l.b16 %v87
  %v429 = vunpack.c.l.b16 %v88
  %v430 = vunpack.c.l.b16 %v89
  %v431 = vunpack.c.l.b16 %v90
  %v432 = vunpack.c.l.b16 %v91
  %v433 = vunpack.c.l.b16 %v92
  %v434 = vunpack.c.l.b16 %v93
  %v435 = vunpack.c.l.b16 %v94
  %v436 = vunpack.c.l.b16 %v95
  %v437 = vunpack.c.l.b16 %v96
  %v438 = vunpack.c.l.b16 %v97
  %v439 = vunpack.c.l.b16 %v98
  %v440 = vunpack.c.l.b16 %v99
  %v441 = vunpack.c.l.b16 %v100
  %v442 = vunpack.c.l.b16 %v101
  %v443 = vunpack.c.l.b16 %v102
  %v444 = vunpack.c.l.b16 %v103
  %v445 = vunpack.c.l.b16 %v104
  %v446 = vunpack.c.l.b16 %v105
  %v447 = vunpack.c.l.b16 %v106
  %v448 = vunpack.c.l.b16 %v107
  %v449 = vunpack.c.l.b16 %v108
  %v450 = vunpack.c.l.b16 %v109
  %v451 = vunpack.c.l.b16 %v110
  %v452 = vunpack.c.l.b16 %v111
  %v453 = vunpack.c.l.b16 %v112
  %v454 = vunpack.c.l.b16 %v113
  %v455 = vunpack.c.l.b16 %v114
  %v456 = vunpack.c.l.b16 %v115
  %v457 = vunpack.c.l.b16 %v116
  %v458 = vunpack.c.l.b16 %v117
  %v459 = vunpack.c.l.b16 %v118
  %v460 = vunpack.c.l.b16 %v119
  %v461 = vunpack.c.l.b16 %v120
  %v462 = vunpack.c.l.b16 %v121
  %v463 = vunpack.c.l.b16 %v122
  %v464 = vunpack.c.l.b16 %v123
  %v465 = vunpack.c.l.b16 %v124
  %v466 = vunpack.c.l.b16 %v125
  %v467 = vunpack.c.l.b16 %v126
  %v468 = vunpack.c.l.b16 %v127
  %v469 = vunpack.c.l.b16 %v128
  %v470 = vunpack.c.l.b16 %v129
  %v471 = vunpack.c.l.b16 %v130
  %v472 = vunpack.c.l.b16 %v131
  %v473 = vunpack.c.l.b16 %v132
  %v474 = vunpack.c.l.b16 %v133
  %v475 = vunpack.c.l.b16 %v134
  %v476 = vunpack.c.l.b16 %v135
  %v477 = vunpack.c.l.b16 %v136
  %v478 = vunpack.c.l.b16 %v137
  %v479 = vunpack.c.l.b16 %v138
  %v480 = vunpack.c.l.b16 %v139
  %v481 = vunpack.c.l.b16 %v140
  %v482 = vunpack.c.l.b16 %v141
  %v483 = vunpack.c.l.b16 %v142
  %v484 = vunpack.c.l.b16 %v143
  %v485 = vunpack.c.l.b16 %v144
  %v486 = vunpack.c.l.b16 %v145
  %v487 = vunpack.c.l.b16 %v146
  %v488 = vunpack.c.l.b16 %v147
  %v489 = vunpack.c.l.b16 %v148
  %v490 = vunpack.c.l.b16 %v149
  %v491 = vunpack.c.l.b16 %v150
  %v492 = vunpack.c.l.b16 %v151
  %v493 = vunpack.c.l.b16 %v152
  %v494 = vunpack.c.l.b16 %v153
  %v495 = vunpack.c.l.b16 %v154
  %v496 = vunpack.c.l.b16 %v155
  %v497 = vunpack.c.l.b16 %v156
  %v498 = vunpack.c.l.b16 %v157
  %v499 = vunpack.c.l.b16 %v158
  %v500 = vunpack.c.l.b16 %v159
  %v501 = vunpack.c.l.b16 %v160
  %v502 = vunpack.c.l.b16 %v161
  %v503 = vunpack.c.l.b16 %v162
  %v504 = vunpack.c.l.b16 %v163
  %v505 = vunpack.c.l.b16 %v164
  %v506 = vunpack.c.l.b16 %v165
  %v507 = vunpack.c.l.b16 %v166
  %v508 = vunpack.c.l.b16 %v167
  %v509 = vunpack.c.l.b16 %v168
  %v510 = vunpack.c.l.b16 %v169
  %v511 = vunpack.c.l.b16 %v170
  %v512 = vunpack.c.l.b16 %v171
  %v513 = vpack.c.b16 %v370, %v369
  %v514 = vpack.c.b16 %v372, %v371
  %v515 = vpack.c.b16 %v374, %v373
  %v516 = vpack.c.b16 %v376, %v375
  %v517 = vpack.c.b16 %v378, %v377
  %v518 = vpack.c.b16 %v380, %v379
  %v519 = vpack.c.b16 %v382, %v381
  %v520 = vpack.c.b16 %v384, %v383
  %v521 = vpack.c.b16 %v386, %v385
  %v522 = vpack.c.b16 %v388, %v387
  %v523 = vpack.c.b16 %v390, %v389
  %v524 = vpack.c.b16 %v392, %v391
  %v525 = vpack.c.b16 %v394, %v393
  %v526 = vpack.c.b16 %v396, %v395
  %v527 = vpack.c.b16 %v398, %v397
  %v528 = vpack.c.b16 %v400, %v399
  %v529 = vpack.c.b16 %v402, %v401
  %v530 = vpack.c.b16 %v404, %v403
  %v531 = vpack.c.b16 %v406, %v405
  %v532 = vpack.c.b16 %v408, %v407
  %v533 = vpack.c.b16 %v410, %v409
  %v534 = vpack.c.b16 %v412, %v411
  %v535 = vpack.c.b16 %v414, %v413
  %v536 = vpack.c.b16 %v416, %v415
  %v537 = vpack.c.b16 %v418, %v417
  %v538 = vpack.c.b16 %v420, %v419
  %v539 = vpack.c.b16 %v422, %v421
  %v540 = vpack.c.b16 %v424, %v423
  %v541 = vpack.c.b16 %v426, %v425
  %v542 = vpack.c.b16 %v428, %v427
  %v543 = vpack.c.b16 %v430, %v429
  %v544 = vpack.c.b16 %v432, %v431
  %v545 = vpack.c.b16 %v434, %v433
  %v546 = vpack.c.b16 %v436, %v435
  %v547 = vpack.c.b16 %v438, %v437
  %v548 = vpack.c.b16 %v440, %v439
  %v549 = vpack.c.b16 %v442, %v441
  %v550 = vpack.c.b16 %v444, %v443
  %v551 = vpack.c.b16 %v446, %v445
  %v552 = vpack.c.b16 %v448, %v447
  %v553 = vpack.c.b16 %v450, %v449
  %v554 = vpack.c.b16 %v452, %v451
  %v555 = vpack.c.b16 %v454, %v453
  %v556 = vpack.c.b16 %v456, %v455
  %v557 = vpack.c.b16 %v458, %v457
  %v558 = vpack.c.b16 %v460, %v459
  %v559 = vpack.c.b16 %v462, %v461
  %v560 = vpack.c.b16 %v464, %v463
  %v561 = vpack.c.b16 %v466, %v465
  %v562 = vpack.c.b16 %v468, %v467
  %v563 = vpack.c.b16 %v470, %v469
  %v564 = vpack.c.b16 %v472, %v471
  %v565 = vpack.c.b16 %v474, %v473
  %v566 = vpack.c.b16 %v476, %v475
  %v567 = vpack.c.b16 %v478, %v477
  %v568 = vpack.c.b16 %v480, %v479
  %v569 = vpack.c.b16 %v482, %v481
  %v570 = vpack.c.b16 %v484, %v483
  %v571 = vpack.c.b16 %v486, %v485
  %v572 = vpack.c.b16 %v488, %v487
  %v573 = vpack.c.b16 %v490, %v489
  %v574 = vpack.c.b16 %v492, %v491
  %v575 = vpack.c.b16 %v494, %v493
  %v576 = vpack.c.b16 %v496, %v495
  %v577 = vpack.c.b16 %v498, %v497
  %v578 = vpack.c.b16 %v500, %v499
  %v579 = vpack.c.b16 %v502, %v501
  %v580 = vpack.c.b16 %v504, %v503
  %v581 = vpack.c.b16 %v506, %v505
  %v582 = vpack.c.b16 %v508, %v507
  %v583 = vpack.c.b16 %v510, %v509
  %v584 = vpack.c.b16 %v512, %v511
  %657 = vmatprep.subr.bf16.mxu0 0
  %658 = vmatpush1.bf16.msra.mxu0 %v513
  %659 = vmatprep.subr.bf16.mxu0 0
  %660 = vmatpush1.bf16.msra.mxu0 %v514
  %661 = vmatprep.subr.bf16.mxu0 0
  %662 = vmatpush1.bf16.msra.mxu0 %v515
  %663 = vmatprep.subr.bf16.mxu0 0
  %664 = vmatpush1.bf16.msra.mxu0 %v516
  %665 = vmatprep.subr.bf16.mxu0 0
  %666 = vmatpush1.bf16.msra.mxu0 %v517
  %667 = vmatprep.subr.bf16.mxu0 0
  %668 = vmatpush1.bf16.msra.mxu0 %v518
  %669 = vmatprep.subr.bf16.mxu0 0
  %670 = vmatpush1.bf16.msra.mxu0 %v519
  %671 = vmatprep.subr.bf16.mxu0 0
  %672 = vmatpush1.bf16.msra.mxu0 %v520
  %673 = vmatprep.subr.bf16.mxu0 0
  %674 = vmatpush1.bf16.msra.mxu0 %v521
  %675 = vmatprep.subr.bf16.mxu0 0
  %676 = vmatpush1.bf16.msra.mxu0 %v522
  %677 = vmatprep.subr.bf16.mxu0 0
  %678 = vmatpush1.bf16.msra.mxu0 %v523
  %679 = vmatprep.subr.bf16.mxu0 0
  %680 = vmatpush1.bf16.msra.mxu0 %v524
  %681 = vmatprep.subr.bf16.mxu0 0
  %682 = vmatpush1.bf16.msra.mxu0 %v525
  %683 = vmatprep.subr.bf16.mxu0 0
  %684 = vmatpush1.bf16.msra.mxu0 %v526
  %685 = vmatprep.subr.bf16.mxu0 0
  %686 = vmatpush1.bf16.msra.mxu0 %v527
  %687 = vmatprep.subr.bf16.mxu0 0
  %688 = vmatpush1.bf16.msra.mxu0 %v528
  %689 = vmatprep.mubr.bf16.mxu0 %v208
  %690 = vmatmul.mubr.bf16.gmra.mrb[0].mxu0 %v207
  %v691 = vpop.f32.mrb[0].mxu0
  %v692 = vadd.f32 %v177, %v691
  %v693 = vpop.f32.mrb[0].mxu0
  %v694 = vpop.f32.mrb[0].mxu0
  %v695 = vadd.f32 %v177, %v694
  %v696 = vpop.f32.mrb[0].mxu0
  %697 = vdwg.mxu0
  %698 = vmatprep.subr.bf16.mxu0 0
  %699 = vmatpush1.bf16.msra.mxu0 %v529
  %700 = vmatprep.subr.bf16.mxu0 0
  %701 = vmatpush1.bf16.msra.mxu0 %v530
  %702 = vmatprep.subr.bf16.mxu0 0
  %703 = vmatpush1.bf16.msra.mxu0 %v531
  %704 = vmatprep.subr.bf16.mxu0 0
  %705 = vmatpush1.bf16.msra.mxu0 %v532
  %706 = vmatprep.subr.bf16.mxu0 0
  %707 = vmatpush1.bf16.msra.mxu0 %v533
  %708 = vmatprep.subr.bf16.mxu0 0
  %709 = vmatpush1.bf16.msra.mxu0 %v534
  %710 = vmatprep.subr.bf16.mxu0 0
  %711 = vmatpush1.bf16.msra.mxu0 %v535
  %712 = vmatprep.subr.bf16.mxu0 0
  %713 = vmatpush1.bf16.msra.mxu0 %v536
  %714 = vmatprep.subr.bf16.mxu0 0
  %715 = vmatpush1.bf16.msra.mxu0 %v537
  %716 = vmatprep.subr.bf16.mxu0 0
  %717 = vmatpush1.bf16.msra.mxu0 %v538
  %718 = vmatprep.subr.bf16.mxu0 0
  %719 = vmatpush1.bf16.msra.mxu0 %v539
  %720 = vmatprep.subr.bf16.mxu0 0
  %721 = vmatpush1.bf16.msra.mxu0 %v540
  %722 = vmatprep.subr.bf16.mxu0 0
  %723 = vmatpush1.bf16.msra.mxu0 %v541
  %724 = vmatprep.subr.bf16.mxu0 0
  %725 = vmatpush1.bf16.msra.mxu0 %v542
  %726 = vmatprep.subr.bf16.mxu0 0
  %727 = vmatpush1.bf16.msra.mxu0 %v543
  %728 = vmatprep.subr.bf16.mxu0 0
  %729 = vmatpush1.bf16.msra.mxu0 %v544
  %730 = vmatprep.mubr.bf16.mxu0 %v210
  %731 = vmatmul.mubr.bf16.gmra.mrb[0].mxu0 %v209
  %v732 = vpop.f32.mrb[0].mxu0
  %v733 = vadd.f32 %v692, %v732
  %v734 = vpop.f32.mrb[0].mxu0
  %v735 = vpop.f32.mrb[0].mxu0
  %v736 = vadd.f32 %v695, %v735
  %v737 = vpop.f32.mrb[0].mxu0
  %738 = vdwg.mxu0
  %739 = vmatprep.subr.bf16.mxu0 0
  %740 = vmatpush1.bf16.msra.mxu0 %v545
  %741 = vmatprep.subr.bf16.mxu0 0
  %742 = vmatpush1.bf16.msra.mxu0 %v546
  %743 = vmatprep.subr.bf16.mxu0 0
  %744 = vmatpush1.bf16.msra.mxu0 %v547
  %745 = vmatprep.subr.bf16.mxu0 0
  %746 = vmatpush1.bf16.msra.mxu0 %v548
  %747 = vmatprep.subr.bf16.mxu0 0
  %748 = vmatpush1.bf16.msra.mxu0 %v549
  %749 = vmatprep.subr.bf16.mxu0 0
  %750 = vmatpush1.bf16.msra.mxu0 %v550
  %751 = vmatprep.subr.bf16.mxu0 0
  %752 = vmatpush1.bf16.msra.mxu0 %v551
  %753 = vmatprep.subr.bf16.mxu0 0
  %754 = vmatpush1.bf16.msra.mxu0 %v552
  %755 = vmatprep.subr.bf16.mxu0 0
  %756 = vmatpush1.bf16.msra.mxu0 %v553
  %757 = vmatprep.subr.bf16.mxu0 0
  %758 = vmatpush1.bf16.msra.mxu0 %v554
  %759 = vmatprep.subr.bf16.mxu0 0
  %760 = vmatpush1.bf16.msra.mxu0 %v555
  %761 = vmatprep.subr.bf16.mxu0 0
  %762 = vmatpush1.bf16.msra.mxu0 %v556
  %763 = vmatprep.subr.bf16.mxu0 0
  %764 = vmatpush1.bf16.msra.mxu0 %v557
  %765 = vmatprep.subr.bf16.mxu0 0
  %766 = vmatpush1.bf16.msra.mxu0 %v558
  %767 = vmatprep.subr.bf16.mxu0 0
  %768 = vmatpush1.bf16.msra.mxu0 %v559
  %769 = vmatprep.subr.bf16.mxu0 0
  %770 = vmatpush1.bf16.msra.mxu0 %v560
  %771 = vmatprep.mubr.bf16.mxu0 %v212
  %772 = vmatmul.mubr.bf16.gmra.mrb[0].mxu0 %v211
  %v773 = vpop.f32.mrb[0].mxu0
  %v774 = vadd.f32 %v733, %v773
  %v775 = vpop.f32.mrb[0].mxu0
  %v776 = vpop.f32.mrb[0].mxu0
  %v777 = vadd.f32 %v736, %v776
  %v778 = vpop.f32.mrb[0].mxu0
  %779 = vdwg.mxu0
  %780 = vmatprep.subr.bf16.mxu0 0
  %781 = vmatpush1.bf16.msra.mxu0 %v561
  %782 = vmatprep.subr.bf16.mxu0 0
  %783 = vmatpush1.bf16.msra.mxu0 %v562
  %784 = vmatprep.subr.bf16.mxu0 0
  %785 = vmatpush1.bf16.msra.mxu0 %v563
  %786 = vmatprep.subr.bf16.mxu0 0
  %787 = vmatpush1.bf16.msra.mxu0 %v564
  %788 = vmatprep.subr.bf16.mxu0 0
  %789 = vmatpush1.bf16.msra.mxu0 %v565
  %790 = vmatprep.subr.bf16.mxu0 0
  %791 = vmatpush1.bf16.msra.mxu0 %v566
  %792 = vmatprep.subr.bf16.mxu0 0
  %793 = vmatpush1.bf16.msra.mxu0 %v567
  %794 = vmatprep.subr.bf16.mxu0 0
  %795 = vmatpush1.bf16.msra.mxu0 %v568
  %796 = vmatprep.subr.bf16.mxu0 0
  %797 = vmatpush1.bf16.msra.mxu0 %v569
  %798 = vmatprep.subr.bf16.mxu0 0
  %799 = vmatpush1.bf16.msra.mxu0 %v570
  %800 = vmatprep.subr.bf16.mxu0 0
  %801 = vmatpush1.bf16.msra.mxu0 %v571
  %802 = vmatprep.subr.bf16.mxu0 0
  %803 = vmatpush1.bf16.msra.mxu0 %v572
  %804 = vmatprep.subr.bf16.mxu0 0
  %805 = vmatpush1.bf16.msra.mxu0 %v573
  %806 = vmatprep.subr.bf16.mxu0 0
  %807 = vmatpush1.bf16.msra.mxu0 %v574
  %808 = vmatprep.subr.bf16.mxu0 0
  %809 = vmatpush1.bf16.msra.mxu0 %v575
  %810 = vmatprep.subr.bf16.mxu0 0
  %811 = vmatpush1.bf16.msra.mxu0 %v576
  %812 = vmatprep.mubr.bf16.mxu0 %v214
  %813 = vmatmul.mubr.bf16.gmra.mrb[0].mxu0 %v213
  %v814 = vpop.f32.mrb[0].mxu0
  %v815 = vadd.f32 %v774, %v814
  %v816 = vpop.f32.mrb[0].mxu0
  %v817 = vpop.f32.mrb[0].mxu0
  %v818 = vadd.f32 %v777, %v817
  %v819 = vpop.f32.mrb[0].mxu0
  %820 = vdwg.mxu0
  %821 = vmatprep.subr.bf16.mxu0 0
  %822 = vmatpush1.bf16.msra.mxu0 %v577
  %823 = vmatprep.subr.bf16.mxu0 0
  %824 = vmatpush1.bf16.msra.mxu0 %v578
  %825 = vmatprep.subr.bf16.mxu0 0
  %826 = vmatpush1.bf16.msra.mxu0 %v579
  %827 = vmatprep.subr.bf16.mxu0 0
  %828 = vmatpush1.bf16.msra.mxu0 %v580
  %829 = vmatprep.subr.bf16.mxu0 0
  %830 = vmatpush1.bf16.msra.mxu0 %v581
  %831 = vmatprep.subr.bf16.mxu0 0
  %832 = vmatpush1.bf16.msra.mxu0 %v582
  %833 = vmatprep.subr.bf16.mxu0 0
  %834 = vmatpush1.bf16.msra.mxu0 %v583
  %835 = vmatprep.subr.bf16.mxu0 0
  %836 = vmatpush1.bf16.msra.mxu0 %v584
  %837 = vmatprep.subr.bf16.mxu0 0
  %838 = vmatpush1.bf16.msra.mxu0 0
  %839 = vmatprep.subr.bf16.mxu0 0
  %840 = vmatpush1.bf16.msra.mxu0 0
  %841 = vmatprep.subr.bf16.mxu0 0
  %842 = vmatpush1.bf16.msra.mxu0 0
  %843 = vmatprep.subr.bf16.mxu0 0
  %844 = vmatpush1.bf16.msra.mxu0 0
  %845 = vmatprep.subr.bf16.mxu0 0
  %846 = vmatpush1.bf16.msra.mxu0 0
  %847 = vmatprep.subr.bf16.mxu0 0
  %848 = vmatpush1.bf16.msra.mxu0 0
  %849 = vmatprep.subr.bf16.mxu0 0
  %850 = vmatpush1.bf16.msra.mxu0 0
  %851 = vmatprep.subr.bf16.mxu0 0
  %852 = vmatpush1.bf16.msra.mxu0 0
  %853 = vmatprep.mubr.bf16.mxu0 0
  %854 = vmatmul.mubr.bf16.gmra.mrb[0].mxu0 %v215
  %v855 = vpop.f32.mrb[0].mxu0
  %v856 = vadd.f32 %v815, %v855
  %v857 = vpop.f32.mrb[0].mxu0
  %v858 = vpop.f32.mrb[0].mxu0
  %v859 = vadd.f32 %v818, %v858
  %v860 = vpop.f32.mrb[0].mxu0
  %861 = vdwg.mxu0
  %v862 = vld [vmem:[%s3] sm:$0xf]
  %v863 = vld [vmem:[%s3 + $0x4] sm:$0xf]
  %v864 = vunpack.c.l.bf16 %v862
  %v865 = vunpack.c.l.bf16 %v863
  %v866 = vadd.f32 %v856, %v864
  %v867 = vadd.f32 %v859, %v865
  %v868 = vmax.f32 %v866, 0.0
  %v869 = vmax.f32 %v867, 0.0
  %v870 = vpack.c.bf16 %v869, %v868
  %v872 = vunpack.c.l.b16 %v870
  %v873 = vunpack.c.h.b16 %v870
  %v874 = vpack.c.b16 %v872, %v872
  %v875 = vpack.c.b16 %v873, %v873
  %878 = vst [vmem:[%s4] sm:$0xf] %v874
  %879 = vst [vmem:[%s4 + $0x4] sm:$0xf] %v875
  // Predicated region
  $region18: #{simple_generator.33} parent=0 // pred_check
    _
  $region19: #{simple_generator.33} parent=0 // pred_check_branch
    %881 = sbr.rel (0) target = $region21
  $region20: #{simple_generator.33} parent=0 // pred_region
    _
  $region21: #{simple_generator.33} parent=0 // pred_fallthru
    _
  // Predicated region
  $region22: #{simple_generator.33} parent=0 // pred_check
    _
  $region23: #{simple_generator.33} parent=0 // pred_check_branch
    %883 = sbr.rel (0) target = $region25
  $region24: #{simple_generator.33} parent=0 // pred_region
    _
  $region25: #{simple_generator.33} parent=0 // pred_fallthru
    _

// kernel: simple_generator.31
$region0: #{simple_generator.31}
  #allocation0 [shape = 'u32[]', space=smem, size = 0x4, offset = 0x4, fixed_abs, tag = 'smem constant byte address 0x4 - core index']
  #allocation1 [shape = 'u32[144,128]{1,0:T(1,128)}', space=vmem, size = 0x12000, scoped, tag = 'internal scratch']
  %s0 = inlined_call_operand.vmem [shape: bf16[16,1152], index: 0, kind: input, shape index: {}]
  %s1 = inlined_call_operand.vmem [shape: bf16[1152,128], index: 1, kind: input, shape index: {}]
  %s2 = inlined_call_operand.vmem [shape: f32[1,128], index: 2, kind: input, shape index: {}]
  %s3 = inlined_call_operand.vmem [shape: bf16[16,128], index: 3, kind: output, shape index: {}]
  %s4 = sld [smem:[#allocation0]]
  $region22: #{simple_generator.31} parent=0
    _
  %s6 = ssub.s32 1, %s4
  %s7 = scalar_select 0, %s6, %s4
  // Predicated region
  $region2: #{simple_generator.31} parent=0 // pred_check
    _
  $region3: #{simple_generator.31} parent=0 // pred_check_branch
    %9 = sbr.rel (0) target = $region5
  $region4: #{simple_generator.31} parent=0 // pred_region
    _
  $region5: #{simple_generator.31} parent=0 // pred_fallthru
    _
  // Predicated region
  $region6: #{simple_generator.31} parent=0 // pred_check
    _
  $region7: #{simple_generator.31} parent=0 // pred_check_branch
    %11 = sbr.rel (0) target = $region9
  $region8: #{simple_generator.31} parent=0 // pred_region
    _
  $region9: #{simple_generator.31} parent=0 // pred_fallthru
    _
  // Predicated region
  $region10: #{simple_generator.31} parent=0 // pred_check
    _
  $region11: #{simple_generator.31} parent=0 // pred_check_branch
    %13 = sbr.rel (0) target = $region13
  $region12: #{simple_generator.31} parent=0 // pred_region
    _
  $region13: #{simple_generator.31} parent=0 // pred_fallthru
    _
  %v15 = vld [vmem:[%s0] sm:$0xff]
  %v16 = vld [vmem:[%s0 + $0x8] sm:$0xff]
  %v17 = vld [vmem:[%s0 + $0x10] sm:$0xff]
  %v18 = vld [vmem:[%s0 + $0x18] sm:$0xff]
  %v19 = vld [vmem:[%s0 + $0x20] sm:$0xf]
  %v20 = vld [vmem:[%s0 + $0x24] sm:$0xff]
  %v21 = vld [vmem:[%s0 + $0x2c] sm:$0xff]
  %v22 = vld [vmem:[%s0 + $0x34] sm:$0xff]
  %v23 = vld [vmem:[%s0 + $0x3c] sm:$0xff]
  %v24 = vld [vmem:[%s0 + $0x44] sm:$0xf]
  %v25 = vld [vmem:[%s1] sm:$0xf]
  %v26 = vld [vmem:[%s1 + $0x4] sm:$0xf]
  %v27 = vld [vmem:[%s1 + $0x8] sm:$0xf]
  %v28 = vld [vmem:[%s1 + $0xc] sm:$0xf]
  %v29 = vld [vmem:[%s1 + $0x10] sm:$0xf]
  %v30 = vld [vmem:[%s1 + $0x14] sm:$0xf]
  %v31 = vld [vmem:[%s1 + $0x18] sm:$0xf]
  %v32 = vld [vmem:[%s1 + $0x1c] sm:$0xf]
  %v33 = vld [vmem:[%s1 + $0x20] sm:$0xf]
  %v34 = vld [vmem:[%s1 + $0x24] sm:$0xf]
  %v35 = vld [vmem:[%s1 + $0x28] sm:$0xf]
  %v36 = vld [vmem:[%s1 + $0x2c] sm:$0xf]
  %v37 = vld [vmem:[%s1 + $0x30] sm:$0xf]
  %v38 = vld [vmem:[%s1 + $0x34] sm:$0xf]
  %v39 = vld [vmem:[%s1 + $0x38] sm:$0xf]
  %v40 = vld [vmem:[%s1 + $0x3c] sm:$0xf]
  %v41 = vld [vmem:[%s1 + $0x40] sm:$0xf]
  %v42 = vld [vmem:[%s1 + $0x44] sm:$0xf]
  %v43 = vld [vmem:[%s1 + $0x48] sm:$0xf]
  %v44 = vld [vmem:[%s1 + $0x4c] sm:$0xf]
  %v45 = vld [vmem:[%s1 + $0x50] sm:$0xf]
  %v46 = vld [vmem:[%s1 + $0x54] sm:$0xf]
  %v47 = vld [vmem:[%s1 + $0x58] sm:$0xf]
  %v48 = vld [vmem:[%s1 + $0x5c] sm:$0xf]
  %v49 = vld [vmem:[%s1 + $0x60] sm:$0xf]
  %v50 = vld [vmem:[%s1 + $0x64] sm:$0xf]
  %v51 = vld [vmem:[%s1 + $0x68] sm:$0xf]
  %v52 = vld [vmem:[%s1 + $0x6c] sm:$0xf]
  %v53 = vld [vmem:[%s1 + $0x70] sm:$0xf]
  %v54 = vld [vmem:[%s1 + $0x74] sm:$0xf]
  %v55 = vld [vmem:[%s1 + $0x78] sm:$0xf]
  %v56 = vld [vmem:[%s1 + $0x7c] sm:$0xf]
  %v57 = vld [vmem:[%s1 + $0x80] sm:$0xf]
  %v58 = vld [vmem:[%s1 + $0x84] sm:$0xf]
  %v59 = vld [vmem:[%s1 + $0x88] sm:$0xf]
  %v60 = vld [vmem:[%s1 + $0x8c] sm:$0xf]
  %v61 = vld [vmem:[%s1 + $0x90] sm:$0xf]
  %v62 = vld [vmem:[%s1 + $0x94] sm:$0xf]
  %v63 = vld [vmem:[%s1 + $0x98] sm:$0xf]
  %v64 = vld [vmem:[%s1 + $0x9c] sm:$0xf]
  %v65 = vld [vmem:[%s1 + $0xa0] sm:$0xf]
  %v66 = vld [vmem:[%s1 + $0xa4] sm:$0xf]
  %v67 = vld [vmem:[%s1 + $0xa8] sm:$0xf]
  %v68 = vld [vmem:[%s1 + $0xac] sm:$0xf]
  %v69 = vld [vmem:[%s1 + $0xb0] sm:$0xf]
  %v70 = vld [vmem:[%s1 + $0xb4] sm:$0xf]
  %v71 = vld [vmem:[%s1 + $0xb8] sm:$0xf]
  %v72 = vld [vmem:[%s1 + $0xbc] sm:$0xf]
  %v73 = vld [vmem:[%s1 + $0xc0] sm:$0xf]
  %v74 = vld [vmem:[%s1 + $0xc4] sm:$0xf]
  %v75 = vld [vmem:[%s1 + $0xc8] sm:$0xf]
  %v76 = vld [vmem:[%s1 + $0xcc] sm:$0xf]
  %v77 = vld [vmem:[%s1 + $0xd0] sm:$0xf]
  %v78 = vld [vmem:[%s1 + $0xd4] sm:$0xf]
  %v79 = vld [vmem:[%s1 + $0xd8] sm:$0xf]
  %v80 = vld [vmem:[%s1 + $0xdc] sm:$0xf]
  %v81 = vld [vmem:[%s1 + $0xe0] sm:$0xf]
  %v82 = vld [vmem:[%s1 + $0xe4] sm:$0xf]
  %v83 = vld [vmem:[%s1 + $0xe8] sm:$0xf]
  %v84 = vld [vmem:[%s1 + $0xec] sm:$0xf]
  %v85 = vld [vmem:[%s1 + $0xf0] sm:$0xf]
  %v86 = vld [vmem:[%s1 + $0xf4] sm:$0xf]
  %v87 = vld [vmem:[%s1 + $0xf8] sm:$0xf]
  %v88 = vld [vmem:[%s1 + $0xfc] sm:$0xf]
  %v89 = vld [vmem:[%s1 + $0x100] sm:$0xf]
  %v90 = vld [vmem:[%s1 + $0x104] sm:$0xf]
  %v91 = vld [vmem:[%s1 + $0x108] sm:$0xf]
  %v92 = vld [vmem:[%s1 + $0x10c] sm:$0xf]
  %v93 = vld [vmem:[%s1 + $0x110] sm:$0xf]
  %v94 = vld [vmem:[%s1 + $0x114] sm:$0xf]
  %v95 = vld [vmem:[%s1 + $0x118] sm:$0xf]
  %v96 = vld [vmem:[%s1 + $0x11c] sm:$0xf]
  %v97 = vld [vmem:[%s1 + $0x120] sm:$0xf]
  %v98 = vld [vmem:[%s1 + $0x124] sm:$0xf]
  %v99 = vld [vmem:[%s1 + $0x128] sm:$0xf]
  %v100 = vld [vmem:[%s1 + $0x12c] sm:$0xf]
  %v101 = vld [vmem:[%s1 + $0x130] sm:$0xf]
  %v102 = vld [vmem:[%s1 + $0x134] sm:$0xf]
  %v103 = vld [vmem:[%s1 + $0x138] sm:$0xf]
  %v104 = vld [vmem:[%s1 + $0x13c] sm:$0xf]
  %v105 = vld [vmem:[%s1 + $0x140] sm:$0xf]
  %v106 = vld [vmem:[%s1 + $0x144] sm:$0xf]
  %v107 = vld [vmem:[%s1 + $0x148] sm:$0xf]
  %v108 = vld [vmem:[%s1 + $0x14c] sm:$0xf]
  %v109 = vld [vmem:[%s1 + $0x150] sm:$0xf]
  %v110 = vld [vmem:[%s1 + $0x154] sm:$0xf]
  %v111 = vld [vmem:[%s1 + $0x158] sm:$0xf]
  %v112 = vld [vmem:[%s1 + $0x15c] sm:$0xf]
  %v113 = vld [vmem:[%s1 + $0x160] sm:$0xf]
  %v114 = vld [vmem:[%s1 + $0x164] sm:$0xf]
  %v115 = vld [vmem:[%s1 + $0x168] sm:$0xf]
  %v116 = vld [vmem:[%s1 + $0x16c] sm:$0xf]
  %v117 = vld [vmem:[%s1 + $0x170] sm:$0xf]
  %v118 = vld [vmem:[%s1 + $0x174] sm:$0xf]
  %v119 = vld [vmem:[%s1 + $0x178] sm:$0xf]
  %v120 = vld [vmem:[%s1 + $0x17c] sm:$0xf]
  %v121 = vld [vmem:[%s1 + $0x180] sm:$0xf]
  %v122 = vld [vmem:[%s1 + $0x184] sm:$0xf]
  %v123 = vld [vmem:[%s1 + $0x188] sm:$0xf]
  %v124 = vld [vmem:[%s1 + $0x18c] sm:$0xf]
  %v125 = vld [vmem:[%s1 + $0x190] sm:$0xf]
  %v126 = vld [vmem:[%s1 + $0x194] sm:$0xf]
  %v127 = vld [vmem:[%s1 + $0x198] sm:$0xf]
  %v128 = vld [vmem:[%s1 + $0x19c] sm:$0xf]
  %v129 = vld [vmem:[%s1 + $0x1a0] sm:$0xf]
  %v130 = vld [vmem:[%s1 + $0x1a4] sm:$0xf]
  %v131 = vld [vmem:[%s1 + $0x1a8] sm:$0xf]
  %v132 = vld [vmem:[%s1 + $0x1ac] sm:$0xf]
  %v133 = vld [vmem:[%s1 + $0x1b0] sm:$0xf]
  %v134 = vld [vmem:[%s1 + $0x1b4] sm:$0xf]
  %v135 = vld [vmem:[%s1 + $0x1b8] sm:$0xf]
  %v136 = vld [vmem:[%s1 + $0x1bc] sm:$0xf]
  %v137 = vld [vmem:[%s1 + $0x1c0] sm:$0xf]
  %v138 = vld [vmem:[%s1 + $0x1c4] sm:$0xf]
  %v139 = vld [vmem:[%s1 + $0x1c8] sm:$0xf]
  %v140 = vld [vmem:[%s1 + $0x1cc] sm:$0xf]
  %v141 = vld [vmem:[%s1 + $0x1d0] sm:$0xf]
  %v142 = vld [vmem:[%s1 + $0x1d4] sm:$0xf]
  %v143 = vld [vmem:[%s1 + $0x1d8] sm:$0xf]
  %v144 = vld [vmem:[%s1 + $0x1dc] sm:$0xf]
  %v145 = vld [vmem:[%s1 + $0x1e0] sm:$0xf]
  %v146 = vld [vmem:[%s1 + $0x1e4] sm:$0xf]
  %v147 = vld [vmem:[%s1 + $0x1e8] sm:$0xf]
  %v148 = vld [vmem:[%s1 + $0x1ec] sm:$0xf]
  %v149 = vld [vmem:[%s1 + $0x1f0] sm:$0xf]
  %v150 = vld [vmem:[%s1 + $0x1f4] sm:$0xf]
  %v151 = vld [vmem:[%s1 + $0x1f8] sm:$0xf]
  %v152 = vld [vmem:[%s1 + $0x1fc] sm:$0xf]
  %v153 = vld [vmem:[%s1 + $0x200] sm:$0xf]
  %v154 = vld [vmem:[%s1 + $0x204] sm:$0xf]
  %v155 = vld [vmem:[%s1 + $0x208] sm:$0xf]
  %v156 = vld [vmem:[%s1 + $0x20c] sm:$0xf]
  %v157 = vld [vmem:[%s1 + $0x210] sm:$0xf]
  %v158 = vld [vmem:[%s1 + $0x214] sm:$0xf]
  %v159 = vld [vmem:[%s1 + $0x218] sm:$0xf]
  %v160 = vld [vmem:[%s1 + $0x21c] sm:$0xf]
  %v161 = vld [vmem:[%s1 + $0x220] sm:$0xf]
  %v162 = vld [vmem:[%s1 + $0x224] sm:$0xf]
  %v163 = vld [vmem:[%s1 + $0x228] sm:$0xf]
  %v164 = vld [vmem:[%s1 + $0x22c] sm:$0xf]
  %v165 = vld [vmem:[%s1 + $0x230] sm:$0xf]
  %v166 = vld [vmem:[%s1 + $0x234] sm:$0xf]
  %v167 = vld [vmem:[%s1 + $0x238] sm:$0xf]
  %v168 = vld [vmem:[%s1 + $0x23c] sm:$0xf]
  %v169 = vld [vmem:[%s2] sm:$0x1]
  %v171 = vlaneseq
  %v172 = vshrl.u32 %v171, 7
  %v173 = vsub.s32 0, %v172
  %v174 = vrot.slane %v169, %v173
  %v186 = vunpack.c.l.b16 %v15
  %v187 = vunpack.c.h.b16 %v15
  %v188 = vunpack.c.l.b16 %v16
  %v189 = vunpack.c.h.b16 %v16
  %v190 = vunpack.c.l.b16 %v17
  %v191 = vunpack.c.h.b16 %v17
  %v192 = vunpack.c.l.b16 %v18
  %v193 = vunpack.c.h.b16 %v18
  %v194 = vunpack.c.l.b16 %v19
  %v195 = vunpack.c.l.b16 %v20
  %v196 = vunpack.c.h.b16 %v20
  %v197 = vunpack.c.l.b16 %v21
  %v198 = vunpack.c.h.b16 %v21
  %v199 = vunpack.c.l.b16 %v22
  %v200 = vunpack.c.h.b16 %v22
  %v201 = vunpack.c.l.b16 %v23
  %v202 = vunpack.c.h.b16 %v23
  %v203 = vunpack.c.l.b16 %v24
  %v204 = vpack.c.b16 %v195, %v186
  %v205 = vpack.c.b16 %v196, %v187
  %v206 = vpack.c.b16 %v197, %v188
  %v207 = vpack.c.b16 %v198, %v189
  %v208 = vpack.c.b16 %v199, %v190
  %v209 = vpack.c.b16 %v200, %v191
  %v210 = vpack.c.b16 %v201, %v192
  %v211 = vpack.c.b16 %v202, %v193
  %v212 = vpack.c.b16 %v203, %v194
  %v366 = vunpack.c.l.b16 %v25
  %v367 = vunpack.c.l.b16 %v26
  %v368 = vunpack.c.l.b16 %v27
  %v369 = vunpack.c.l.b16 %v28
  %v370 = vunpack.c.l.b16 %v29
  %v371 = vunpack.c.l.b16 %v30
  %v372 = vunpack.c.l.b16 %v31
  %v373 = vunpack.c.l.b16 %v32
  %v374 = vunpack.c.l.b16 %v33
  %v375 = vunpack.c.l.b16 %v34
  %v376 = vunpack.c.l.b16 %v35
  %v377 = vunpack.c.l.b16 %v36
  %v378 = vunpack.c.l.b16 %v37
  %v379 = vunpack.c.l.b16 %v38
  %v380 = vunpack.c.l.b16 %v39
  %v381 = vunpack.c.l.b16 %v40
  %v382 = vunpack.c.l.b16 %v41
  %v383 = vunpack.c.l.b16 %v42
  %v384 = vunpack.c.l.b16 %v43
  %v385 = vunpack.c.l.b16 %v44
  %v386 = vunpack.c.l.b16 %v45
  %v387 = vunpack.c.l.b16 %v46
  %v388 = vunpack.c.l.b16 %v47
  %v389 = vunpack.c.l.b16 %v48
  %v390 = vunpack.c.l.b16 %v49
  %v391 = vunpack.c.l.b16 %v50
  %v392 = vunpack.c.l.b16 %v51
  %v393 = vunpack.c.l.b16 %v52
  %v394 = vunpack.c.l.b16 %v53
  %v395 = vunpack.c.l.b16 %v54
  %v396 = vunpack.c.l.b16 %v55
  %v397 = vunpack.c.l.b16 %v56
  %v398 = vunpack.c.l.b16 %v57
  %v399 = vunpack.c.l.b16 %v58
  %v400 = vunpack.c.l.b16 %v59
  %v401 = vunpack.c.l.b16 %v60
  %v402 = vunpack.c.l.b16 %v61
  %v403 = vunpack.c.l.b16 %v62
  %v404 = vunpack.c.l.b16 %v63
  %v405 = vunpack.c.l.b16 %v64
  %v406 = vunpack.c.l.b16 %v65
  %v407 = vunpack.c.l.b16 %v66
  %v408 = vunpack.c.l.b16 %v67
  %v409 = vunpack.c.l.b16 %v68
  %v410 = vunpack.c.l.b16 %v69
  %v411 = vunpack.c.l.b16 %v70
  %v412 = vunpack.c.l.b16 %v71
  %v413 = vunpack.c.l.b16 %v72
  %v414 = vunpack.c.l.b16 %v73
  %v415 = vunpack.c.l.b16 %v74
  %v416 = vunpack.c.l.b16 %v75
  %v417 = vunpack.c.l.b16 %v76
  %v418 = vunpack.c.l.b16 %v77
  %v419 = vunpack.c.l.b16 %v78
  %v420 = vunpack.c.l.b16 %v79
  %v421 = vunpack.c.l.b16 %v80
  %v422 = vunpack.c.l.b16 %v81
  %v423 = vunpack.c.l.b16 %v82
  %v424 = vunpack.c.l.b16 %v83
  %v425 = vunpack.c.l.b16 %v84
  %v426 = vunpack.c.l.b16 %v85
  %v427 = vunpack.c.l.b16 %v86
  %v428 = vunpack.c.l.b16 %v87
  %v429 = vunpack.c.l.b16 %v88
  %v430 = vunpack.c.l.b16 %v89
  %v431 = vunpack.c.l.b16 %v90
  %v432 = vunpack.c.l.b16 %v91
  %v433 = vunpack.c.l.b16 %v92
  %v434 = vunpack.c.l.b16 %v93
  %v435 = vunpack.c.l.b16 %v94
  %v436 = vunpack.c.l.b16 %v95
  %v437 = vunpack.c.l.b16 %v96
  %v438 = vunpack.c.l.b16 %v97
  %v439 = vunpack.c.l.b16 %v98
  %v440 = vunpack.c.l.b16 %v99
  %v441 = vunpack.c.l.b16 %v100
  %v442 = vunpack.c.l.b16 %v101
  %v443 = vunpack.c.l.b16 %v102
  %v444 = vunpack.c.l.b16 %v103
  %v445 = vunpack.c.l.b16 %v104
  %v446 = vunpack.c.l.b16 %v105
  %v447 = vunpack.c.l.b16 %v106
  %v448 = vunpack.c.l.b16 %v107
  %v449 = vunpack.c.l.b16 %v108
  %v450 = vunpack.c.l.b16 %v109
  %v451 = vunpack.c.l.b16 %v110
  %v452 = vunpack.c.l.b16 %v111
  %v453 = vunpack.c.l.b16 %v112
  %v454 = vunpack.c.l.b16 %v113
  %v455 = vunpack.c.l.b16 %v114
  %v456 = vunpack.c.l.b16 %v115
  %v457 = vunpack.c.l.b16 %v116
  %v458 = vunpack.c.l.b16 %v117
  %v459 = vunpack.c.l.b16 %v118
  %v460 = vunpack.c.l.b16 %v119
  %v461 = vunpack.c.l.b16 %v120
  %v462 = vunpack.c.l.b16 %v121
  %v463 = vunpack.c.l.b16 %v122
  %v464 = vunpack.c.l.b16 %v123
  %v465 = vunpack.c.l.b16 %v124
  %v466 = vunpack.c.l.b16 %v125
  %v467 = vunpack.c.l.b16 %v126
  %v468 = vunpack.c.l.b16 %v127
  %v469 = vunpack.c.l.b16 %v128
  %v470 = vunpack.c.l.b16 %v129
  %v471 = vunpack.c.l.b16 %v130
  %v472 = vunpack.c.l.b16 %v131
  %v473 = vunpack.c.l.b16 %v132
  %v474 = vunpack.c.l.b16 %v133
  %v475 = vunpack.c.l.b16 %v134
  %v476 = vunpack.c.l.b16 %v135
  %v477 = vunpack.c.l.b16 %v136
  %v478 = vunpack.c.l.b16 %v137
  %v479 = vunpack.c.l.b16 %v138
  %v480 = vunpack.c.l.b16 %v139
  %v481 = vunpack.c.l.b16 %v140
  %v482 = vunpack.c.l.b16 %v141
  %v483 = vunpack.c.l.b16 %v142
  %v484 = vunpack.c.l.b16 %v143
  %v485 = vunpack.c.l.b16 %v144
  %v486 = vunpack.c.l.b16 %v145
  %v487 = vunpack.c.l.b16 %v146
  %v488 = vunpack.c.l.b16 %v147
  %v489 = vunpack.c.l.b16 %v148
  %v490 = vunpack.c.l.b16 %v149
  %v491 = vunpack.c.l.b16 %v150
  %v492 = vunpack.c.l.b16 %v151
  %v493 = vunpack.c.l.b16 %v152
  %v494 = vunpack.c.l.b16 %v153
  %v495 = vunpack.c.l.b16 %v154
  %v496 = vunpack.c.l.b16 %v155
  %v497 = vunpack.c.l.b16 %v156
  %v498 = vunpack.c.l.b16 %v157
  %v499 = vunpack.c.l.b16 %v158
  %v500 = vunpack.c.l.b16 %v159
  %v501 = vunpack.c.l.b16 %v160
  %v502 = vunpack.c.l.b16 %v161
  %v503 = vunpack.c.l.b16 %v162
  %v504 = vunpack.c.l.b16 %v163
  %v505 = vunpack.c.l.b16 %v164
  %v506 = vunpack.c.l.b16 %v165
  %v507 = vunpack.c.l.b16 %v166
  %v508 = vunpack.c.l.b16 %v167
  %v509 = vunpack.c.l.b16 %v168
  %v510 = vpack.c.b16 %v367, %v366
  %v511 = vpack.c.b16 %v369, %v368
  %v512 = vpack.c.b16 %v371, %v370
  %v513 = vpack.c.b16 %v373, %v372
  %v514 = vpack.c.b16 %v375, %v374
  %v515 = vpack.c.b16 %v377, %v376
  %v516 = vpack.c.b16 %v379, %v378
  %v517 = vpack.c.b16 %v381, %v380
  %v518 = vpack.c.b16 %v383, %v382
  %v519 = vpack.c.b16 %v385, %v384
  %v520 = vpack.c.b16 %v387, %v386
  %v521 = vpack.c.b16 %v389, %v388
  %v522 = vpack.c.b16 %v391, %v390
  %v523 = vpack.c.b16 %v393, %v392
  %v524 = vpack.c.b16 %v395, %v394
  %v525 = vpack.c.b16 %v397, %v396
  %v526 = vpack.c.b16 %v399, %v398
  %v527 = vpack.c.b16 %v401, %v400
  %v528 = vpack.c.b16 %v403, %v402
  %v529 = vpack.c.b16 %v405, %v404
  %v530 = vpack.c.b16 %v407, %v406
  %v531 = vpack.c.b16 %v409, %v408
  %v532 = vpack.c.b16 %v411, %v410
  %v533 = vpack.c.b16 %v413, %v412
  %v534 = vpack.c.b16 %v415, %v414
  %v535 = vpack.c.b16 %v417, %v416
  %v536 = vpack.c.b16 %v419, %v418
  %v537 = vpack.c.b16 %v421, %v420
  %v538 = vpack.c.b16 %v423, %v422
  %v539 = vpack.c.b16 %v425, %v424
  %v540 = vpack.c.b16 %v427, %v426
  %v541 = vpack.c.b16 %v429, %v428
  %v542 = vpack.c.b16 %v431, %v430
  %v543 = vpack.c.b16 %v433, %v432
  %v544 = vpack.c.b16 %v435, %v434
  %v545 = vpack.c.b16 %v437, %v436
  %v546 = vpack.c.b16 %v439, %v438
  %v547 = vpack.c.b16 %v441, %v440
  %v548 = vpack.c.b16 %v443, %v442
  %v549 = vpack.c.b16 %v445, %v444
  %v550 = vpack.c.b16 %v447, %v446
  %v551 = vpack.c.b16 %v449, %v448
  %v552 = vpack.c.b16 %v451, %v450
  %v553 = vpack.c.b16 %v453, %v452
  %v554 = vpack.c.b16 %v455, %v454
  %v555 = vpack.c.b16 %v457, %v456
  %v556 = vpack.c.b16 %v459, %v458
  %v557 = vpack.c.b16 %v461, %v460
  %v558 = vpack.c.b16 %v463, %v462
  %v559 = vpack.c.b16 %v465, %v464
  %v560 = vpack.c.b16 %v467, %v466
  %v561 = vpack.c.b16 %v469, %v468
  %v562 = vpack.c.b16 %v471, %v470
  %v563 = vpack.c.b16 %v473, %v472
  %v564 = vpack.c.b16 %v475, %v474
  %v565 = vpack.c.b16 %v477, %v476
  %v566 = vpack.c.b16 %v479, %v478
  %v567 = vpack.c.b16 %v481, %v480
  %v568 = vpack.c.b16 %v483, %v482
  %v569 = vpack.c.b16 %v485, %v484
  %v570 = vpack.c.b16 %v487, %v486
  %v571 = vpack.c.b16 %v489, %v488
  %v572 = vpack.c.b16 %v491, %v490
  %v573 = vpack.c.b16 %v493, %v492
  %v574 = vpack.c.b16 %v495, %v494
  %v575 = vpack.c.b16 %v497, %v496
  %v576 = vpack.c.b16 %v499, %v498
  %v577 = vpack.c.b16 %v501, %v500
  %v578 = vpack.c.b16 %v503, %v502
  %v579 = vpack.c.b16 %v505, %v504
  %v580 = vpack.c.b16 %v507, %v506
  %v581 = vpack.c.b16 %v509, %v508
  %654 = vmatprep.subr.bf16.mxu0 0
  %655 = vmatpush1.bf16.msra.mxu0 %v510
  %656 = vmatprep.subr.bf16.mxu0 0
  %657 = vmatpush1.bf16.msra.mxu0 %v511
  %658 = vmatprep.subr.bf16.mxu0 0
  %659 = vmatpush1.bf16.msra.mxu0 %v512
  %660 = vmatprep.subr.bf16.mxu0 0
  %661 = vmatpush1.bf16.msra.mxu0 %v513
  %662 = vmatprep.subr.bf16.mxu0 0
  %663 = vmatpush1.bf16.msra.mxu0 %v514
  %664 = vmatprep.subr.bf16.mxu0 0
  %665 = vmatpush1.bf16.msra.mxu0 %v515
  %666 = vmatprep.subr.bf16.mxu0 0
  %667 = vmatpush1.bf16.msra.mxu0 %v516
  %668 = vmatprep.subr.bf16.mxu0 0
  %669 = vmatpush1.bf16.msra.mxu0 %v517
  %670 = vmatprep.subr.bf16.mxu0 0
  %671 = vmatpush1.bf16.msra.mxu0 %v518
  %672 = vmatprep.subr.bf16.mxu0 0
  %673 = vmatpush1.bf16.msra.mxu0 %v519
  %674 = vmatprep.subr.bf16.mxu0 0
  %675 = vmatpush1.bf16.msra.mxu0 %v520
  %676 = vmatprep.subr.bf16.mxu0 0
  %677 = vmatpush1.bf16.msra.mxu0 %v521
  %678 = vmatprep.subr.bf16.mxu0 0
  %679 = vmatpush1.bf16.msra.mxu0 %v522
  %680 = vmatprep.subr.bf16.mxu0 0
  %681 = vmatpush1.bf16.msra.mxu0 %v523
  %682 = vmatprep.subr.bf16.mxu0 0
  %683 = vmatpush1.bf16.msra.mxu0 %v524
  %684 = vmatprep.subr.bf16.mxu0 0
  %685 = vmatpush1.bf16.msra.mxu0 %v525
  %686 = vmatprep.mubr.bf16.mxu0 %v205
  %687 = vmatmul.mubr.bf16.gmra.mrb[0].mxu0 %v204
  %v688 = vpop.f32.mrb[0].mxu0
  %v689 = vadd.f32 %v174, %v688
  %v690 = vpop.f32.mrb[0].mxu0
  %v691 = vpop.f32.mrb[0].mxu0
  %v692 = vadd.f32 %v174, %v691
  %v693 = vpop.f32.mrb[0].mxu0
  %694 = vdwg.mxu0
  %695 = vmatprep.subr.bf16.mxu0 0
  %696 = vmatpush1.bf16.msra.mxu0 %v526
  %697 = vmatprep.subr.bf16.mxu0 0
  %698 = vmatpush1.bf16.msra.mxu0 %v527
  %699 = vmatprep.subr.bf16.mxu0 0
  %700 = vmatpush1.bf16.msra.mxu0 %v528
  %701 = vmatprep.subr.bf16.mxu0 0
  %702 = vmatpush1.bf16.msra.mxu0 %v529
  %703 = vmatprep.subr.bf16.mxu0 0
  %704 = vmatpush1.bf16.msra.mxu0 %v530
  %705 = vmatprep.subr.bf16.mxu0 0
  %706 = vmatpush1.bf16.msra.mxu0 %v531
  %707 = vmatprep.subr.bf16.mxu0 0
  %708 = vmatpush1.bf16.msra.mxu0 %v532
  %709 = vmatprep.subr.bf16.mxu0 0
  %710 = vmatpush1.bf16.msra.mxu0 %v533
  %711 = vmatprep.subr.bf16.mxu0 0
  %712 = vmatpush1.bf16.msra.mxu0 %v534
  %713 = vmatprep.subr.bf16.mxu0 0
  %714 = vmatpush1.bf16.msra.mxu0 %v535
  %715 = vmatprep.subr.bf16.mxu0 0
  %716 = vmatpush1.bf16.msra.mxu0 %v536
  %717 = vmatprep.subr.bf16.mxu0 0
  %718 = vmatpush1.bf16.msra.mxu0 %v537
  %719 = vmatprep.subr.bf16.mxu0 0
  %720 = vmatpush1.bf16.msra.mxu0 %v538
  %721 = vmatprep.subr.bf16.mxu0 0
  %722 = vmatpush1.bf16.msra.mxu0 %v539
  %723 = vmatprep.subr.bf16.mxu0 0
  %724 = vmatpush1.bf16.msra.mxu0 %v540
  %725 = vmatprep.subr.bf16.mxu0 0
  %726 = vmatpush1.bf16.msra.mxu0 %v541
  %727 = vmatprep.mubr.bf16.mxu0 %v207
  %728 = vmatmul.mubr.bf16.gmra.mrb[0].mxu0 %v206
  %v729 = vpop.f32.mrb[0].mxu0
  %v730 = vadd.f32 %v689, %v729
  %v731 = vpop.f32.mrb[0].mxu0
  %v732 = vpop.f32.mrb[0].mxu0
  %v733 = vadd.f32 %v692, %v732
  %v734 = vpop.f32.mrb[0].mxu0
  %735 = vdwg.mxu0
  %736 = vmatprep.subr.bf16.mxu0 0
  %737 = vmatpush1.bf16.msra.mxu0 %v542
  %738 = vmatprep.subr.bf16.mxu0 0
  %739 = vmatpush1.bf16.msra.mxu0 %v543
  %740 = vmatprep.subr.bf16.mxu0 0
  %741 = vmatpush1.bf16.msra.mxu0 %v544
  %742 = vmatprep.subr.bf16.mxu0 0
  %743 = vmatpush1.bf16.msra.mxu0 %v545
  %744 = vmatprep.subr.bf16.mxu0 0
  %745 = vmatpush1.bf16.msra.mxu0 %v546
  %746 = vmatprep.subr.bf16.mxu0 0
  %747 = vmatpush1.bf16.msra.mxu0 %v547
  %748 = vmatprep.subr.bf16.mxu0 0
  %749 = vmatpush1.bf16.msra.mxu0 %v548
  %750 = vmatprep.subr.bf16.mxu0 0
  %751 = vmatpush1.bf16.msra.mxu0 %v549
  %752 = vmatprep.subr.bf16.mxu0 0
  %753 = vmatpush1.bf16.msra.mxu0 %v550
  %754 = vmatprep.subr.bf16.mxu0 0
  %755 = vmatpush1.bf16.msra.mxu0 %v551
  %756 = vmatprep.subr.bf16.mxu0 0
  %757 = vmatpush1.bf16.msra.mxu0 %v552
  %758 = vmatprep.subr.bf16.mxu0 0
  %759 = vmatpush1.bf16.msra.mxu0 %v553
  %760 = vmatprep.subr.bf16.mxu0 0
  %761 = vmatpush1.bf16.msra.mxu0 %v554
  %762 = vmatprep.subr.bf16.mxu0 0
  %763 = vmatpush1.bf16.msra.mxu0 %v555
  %764 = vmatprep.subr.bf16.mxu0 0
  %765 = vmatpush1.bf16.msra.mxu0 %v556
  %766 = vmatprep.subr.bf16.mxu0 0
  %767 = vmatpush1.bf16.msra.mxu0 %v557
  %768 = vmatprep.mubr.bf16.mxu0 %v209
  %769 = vmatmul.mubr.bf16.gmra.mrb[0].mxu0 %v208
  %v770 = vpop.f32.mrb[0].mxu0
  %v771 = vadd.f32 %v730, %v770
  %v772 = vpop.f32.mrb[0].mxu0
  %v773 = vpop.f32.mrb[0].mxu0
  %v774 = vadd.f32 %v733, %v773
  %v775 = vpop.f32.mrb[0].mxu0
  %776 = vdwg.mxu0
  %777 = vmatprep.subr.bf16.mxu0 0
  %778 = vmatpush1.bf16.msra.mxu0 %v558
  %779 = vmatprep.subr.bf16.mxu0 0
  %780 = vmatpush1.bf16.msra.mxu0 %v559
  %781 = vmatprep.subr.bf16.mxu0 0
  %782 = vmatpush1.bf16.msra.mxu0 %v560
  %783 = vmatprep.subr.bf16.mxu0 0
  %784 = vmatpush1.bf16.msra.mxu0 %v561
  %785 = vmatprep.subr.bf16.mxu0 0
  %786 = vmatpush1.bf16.msra.mxu0 %v562
  %787 = vmatprep.subr.bf16.mxu0 0
  %788 = vmatpush1.bf16.msra.mxu0 %v563
  %789 = vmatprep.subr.bf16.mxu0 0
  %790 = vmatpush1.bf16.msra.mxu0 %v564
  %791 = vmatprep.subr.bf16.mxu0 0
  %792 = vmatpush1.bf16.msra.mxu0 %v565
  %793 = vmatprep.subr.bf16.mxu0 0
  %794 = vmatpush1.bf16.msra.mxu0 %v566
  %795 = vmatprep.subr.bf16.mxu0 0
  %796 = vmatpush1.bf16.msra.mxu0 %v567
  %797 = vmatprep.subr.bf16.mxu0 0
  %798 = vmatpush1.bf16.msra.mxu0 %v568
  %799 = vmatprep.subr.bf16.mxu0 0
  %800 = vmatpush1.bf16.msra.mxu0 %v569
  %801 = vmatprep.subr.bf16.mxu0 0
  %802 = vmatpush1.bf16.msra.mxu0 %v570
  %803 = vmatprep.subr.bf16.mxu0 0
  %804 = vmatpush1.bf16.msra.mxu0 %v571
  %805 = vmatprep.subr.bf16.mxu0 0
  %806 = vmatpush1.bf16.msra.mxu0 %v572
  %807 = vmatprep.subr.bf16.mxu0 0
  %808 = vmatpush1.bf16.msra.mxu0 %v573
  %809 = vmatprep.mubr.bf16.mxu0 %v211
  %810 = vmatmul.mubr.bf16.gmra.mrb[0].mxu0 %v210
  %v811 = vpop.f32.mrb[0].mxu0
  %v812 = vadd.f32 %v771, %v811
  %v813 = vpop.f32.mrb[0].mxu0
  %v814 = vpop.f32.mrb[0].mxu0
  %v815 = vadd.f32 %v774, %v814
  %v816 = vpop.f32.mrb[0].mxu0
  %817 = vdwg.mxu0
  %818 = vmatprep.subr.bf16.mxu0 0
  %819 = vmatpush1.bf16.msra.mxu0 %v574
  %820 = vmatprep.subr.bf16.mxu0 0
  %821 = vmatpush1.bf16.msra.mxu0 %v575
  %822 = vmatprep.subr.bf16.mxu0 0
  %823 = vmatpush1.bf16.msra.mxu0 %v576
  %824 = vmatprep.subr.bf16.mxu0 0
  %825 = vmatpush1.bf16.msra.mxu0 %v577
  %826 = vmatprep.subr.bf16.mxu0 0
  %827 = vmatpush1.bf16.msra.mxu0 %v578
  %828 = vmatprep.subr.bf16.mxu0 0
  %829 = vmatpush1.bf16.msra.mxu0 %v579
  %830 = vmatprep.subr.bf16.mxu0 0
  %831 = vmatpush1.bf16.msra.mxu0 %v580
  %832 = vmatprep.subr.bf16.mxu0 0
  %833 = vmatpush1.bf16.msra.mxu0 %v581
  %834 = vmatprep.subr.bf16.mxu0 0
  %835 = vmatpush1.bf16.msra.mxu0 0
  %836 = vmatprep.subr.bf16.mxu0 0
  %837 = vmatpush1.bf16.msra.mxu0 0
  %838 = vmatprep.subr.bf16.mxu0 0
  %839 = vmatpush1.bf16.msra.mxu0 0
  %840 = vmatprep.subr.bf16.mxu0 0
  %841 = vmatpush1.bf16.msra.mxu0 0
  %842 = vmatprep.subr.bf16.mxu0 0
  %843 = vmatpush1.bf16.msra.mxu0 0
  %844 = vmatprep.subr.bf16.mxu0 0
  %845 = vmatpush1.bf16.msra.mxu0 0
  %846 = vmatprep.subr.bf16.mxu0 0
  %847 = vmatpush1.bf16.msra.mxu0 0
  %848 = vmatprep.subr.bf16.mxu0 0
  %849 = vmatpush1.bf16.msra.mxu0 0
  %850 = vmatprep.mubr.bf16.mxu0 0
  %851 = vmatmul.mubr.bf16.gmra.mrb[0].mxu0 %v212
  %v852 = vpop.f32.mrb[0].mxu0
  %v853 = vadd.f32 %v812, %v852
  %v854 = vpop.f32.mrb[0].mxu0
  %v855 = vpop.f32.mrb[0].mxu0
  %v856 = vadd.f32 %v815, %v855
  %v857 = vpop.f32.mrb[0].mxu0
  %858 = vdwg.mxu0
  %v859 = vmax.f32 %v853, 0.0
  %v860 = vmax.f32 %v856, 0.0
  %v861 = vpack.c.bf16 %v860, %v859
  %v863 = vunpack.c.l.b16 %v861
  %v864 = vunpack.c.h.b16 %v861
  %v865 = vpack.c.b16 %v863, %v863
  %v866 = vpack.c.b16 %v864, %v864
  %869 = vst [vmem:[%s3] sm:$0xf] %v865
  %870 = vst [vmem:[%s3 + $0x4] sm:$0xf] %v866
  // Predicated region
  $region14: #{simple_generator.31} parent=0 // pred_check
    _
  $region15: #{simple_generator.31} parent=0 // pred_check_branch
    %872 = sbr.rel (0) target = $region17
  $region16: #{simple_generator.31} parent=0 // pred_region
    _
  $region17: #{simple_generator.31} parent=0 // pred_fallthru
    _
  // Predicated region
  $region18: #{simple_generator.31} parent=0 // pred_check
    _
  $region19: #{simple_generator.31} parent=0 // pred_check_branch
    %874 = sbr.rel (0) target = $region21
  $region20: #{simple_generator.31} parent=0 // pred_region
    _
  $region21: #{simple_generator.31} parent=0 // pred_fallthru
    _

// kernel: simple_generator.41
$region0: #{simple_generator.41}
  #allocation0 [shape = 'u32[]', space=smem, size = 0x4, offset = 0x4, fixed_abs, tag = 'smem constant byte address 0x4 - core index']
  #allocation1 [shape = 'u32[144,128]{1,0:T(1,128)}', space=vmem, size = 0x12000, scoped, tag = 'internal scratch']
  %s0 = inlined_call_operand.vmem [shape: bf16[16,1152], index: 0, kind: input, shape index: {}]
  %s1 = inlined_call_operand.vmem [shape: bf16[1152,128], index: 1, kind: input, shape index: {}]
  %s2 = inlined_call_operand.vmem [shape: f32[1,128], index: 2, kind: input, shape index: {}]
  %s3 = inlined_call_operand.vmem [shape: bf16[16,128], index: 3, kind: input, shape index: {}]
  %s4 = inlined_call_operand.vmem [shape: bf16[16,128], index: 4, kind: output, shape index: {}]
  %s5 = sld [smem:[#allocation0]]
  $region26: #{simple_generator.41} parent=0
    _
  %s7 = ssub.s32 1, %s5
  %s8 = scalar_select 0, %s7, %s5
  // Predicated region
  $region2: #{simple_generator.41} parent=0 // pred_check
    _
  $region3: #{simple_generator.41} parent=0 // pred_check_branch
    %10 = sbr.rel (0) target = $region5
  $region4: #{simple_generator.41} parent=0 // pred_region
    _
  $region5: #{simple_generator.41} parent=0 // pred_fallthru
    _
  // Predicated region
  $region6: #{simple_generator.41} parent=0 // pred_check
    _
  $region7: #{simple_generator.41} parent=0 // pred_check_branch
    %12 = sbr.rel (0) target = $region9
  $region8: #{simple_generator.41} parent=0 // pred_region
    _
  $region9: #{simple_generator.41} parent=0 // pred_fallthru
    _
  // Predicated region
  $region10: #{simple_generator.41} parent=0 // pred_check
    _
  $region11: #{simple_generator.41} parent=0 // pred_check_branch
    %14 = sbr.rel (0) target = $region13
  $region12: #{simple_generator.41} parent=0 // pred_region
    _
  $region13: #{simple_generator.41} parent=0 // pred_fallthru
    _
  // Predicated region
  $region14: #{simple_generator.41} parent=0 // pred_check
    _
  $region15: #{simple_generator.41} parent=0 // pred_check_branch
    %16 = sbr.rel (0) target = $region17
  $region16: #{simple_generator.41} parent=0 // pred_region
    _
  $region17: #{simple_generator.41} parent=0 // pred_fallthru
    _
  %v18 = vld [vmem:[%s0] sm:$0xff]
  %v19 = vld [vmem:[%s0 + $0x8] sm:$0xff]
  %v20 = vld [vmem:[%s0 + $0x10] sm:$0xff]
  %v21 = vld [vmem:[%s0 + $0x18] sm:$0xff]
  %v22 = vld [vmem:[%s0 + $0x20] sm:$0xf]
  %v23 = vld [vmem:[%s0 + $0x24] sm:$0xff]
  %v24 = vld [vmem:[%s0 + $0x2c] sm:$0xff]
  %v25 = vld [vmem:[%s0 + $0x34] sm:$0xff]
  %v26 = vld [vmem:[%s0 + $0x3c] sm:$0xff]
  %v27 = vld [vmem:[%s0 + $0x44] sm:$0xf]
  %v28 = vld [vmem:[%s1] sm:$0xf]
  %v29 = vld [vmem:[%s1 + $0x4] sm:$0xf]
  %v30 = vld [vmem:[%s1 + $0x8] sm:$0xf]
  %v31 = vld [vmem:[%s1 + $0xc] sm:$0xf]
  %v32 = vld [vmem:[%s1 + $0x10] sm:$0xf]
  %v33 = vld [vmem:[%s1 + $0x14] sm:$0xf]
  %v34 = vld [vmem:[%s1 + $0x18] sm:$0xf]
  %v35 = vld [vmem:[%s1 + $0x1c] sm:$0xf]
  %v36 = vld [vmem:[%s1 + $0x20] sm:$0xf]
  %v37 = vld [vmem:[%s1 + $0x24] sm:$0xf]
  %v38 = vld [vmem:[%s1 + $0x28] sm:$0xf]
  %v39 = vld [vmem:[%s1 + $0x2c] sm:$0xf]
  %v40 = vld [vmem:[%s1 + $0x30] sm:$0xf]
  %v41 = vld [vmem:[%s1 + $0x34] sm:$0xf]
  %v42 = vld [vmem:[%s1 + $0x38] sm:$0xf]
  %v43 = vld [vmem:[%s1 + $0x3c] sm:$0xf]
  %v44 = vld [vmem:[%s1 + $0x40] sm:$0xf]
  %v45 = vld [vmem:[%s1 + $0x44] sm:$0xf]
  %v46 = vld [vmem:[%s1 + $0x48] sm:$0xf]
  %v47 = vld [vmem:[%s1 + $0x4c] sm:$0xf]
  %v48 = vld [vmem:[%s1 + $0x50] sm:$0xf]
  %v49 = vld [vmem:[%s1 + $0x54] sm:$0xf]
  %v50 = vld [vmem:[%s1 + $0x58] sm:$0xf]
  %v51 = vld [vmem:[%s1 + $0x5c] sm:$0xf]
  %v52 = vld [vmem:[%s1 + $0x60] sm:$0xf]
  %v53 = vld [vmem:[%s1 + $0x64] sm:$0xf]
  %v54 = vld [vmem:[%s1 + $0x68] sm:$0xf]
  %v55 = vld [vmem:[%s1 + $0x6c] sm:$0xf]
  %v56 = vld [vmem:[%s1 + $0x70] sm:$0xf]
  %v57 = vld [vmem:[%s1 + $0x74] sm:$0xf]
  %v58 = vld [vmem:[%s1 + $0x78] sm:$0xf]
  %v59 = vld [vmem:[%s1 + $0x7c] sm:$0xf]
  %v60 = vld [vmem:[%s1 + $0x80] sm:$0xf]
  %v61 = vld [vmem:[%s1 + $0x84] sm:$0xf]
  %v62 = vld [vmem:[%s1 + $0x88] sm:$0xf]
  %v63 = vld [vmem:[%s1 + $0x8c] sm:$0xf]
  %v64 = vld [vmem:[%s1 + $0x90] sm:$0xf]
  %v65 = vld [vmem:[%s1 + $0x94] sm:$0xf]
  %v66 = vld [vmem:[%s1 + $0x98] sm:$0xf]
  %v67 = vld [vmem:[%s1 + $0x9c] sm:$0xf]
  %v68 = vld [vmem:[%s1 + $0xa0] sm:$0xf]
  %v69 = vld [vmem:[%s1 + $0xa4] sm:$0xf]
  %v70 = vld [vmem:[%s1 + $0xa8] sm:$0xf]
  %v71 = vld [vmem:[%s1 + $0xac] sm:$0xf]
  %v72 = vld [vmem:[%s1 + $0xb0] sm:$0xf]
  %v73 = vld [vmem:[%s1 + $0xb4] sm:$0xf]
  %v74 = vld [vmem:[%s1 + $0xb8] sm:$0xf]
  %v75 = vld [vmem:[%s1 + $0xbc] sm:$0xf]
  %v76 = vld [vmem:[%s1 + $0xc0] sm:$0xf]
  %v77 = vld [vmem:[%s1 + $0xc4] sm:$0xf]
  %v78 = vld [vmem:[%s1 + $0xc8] sm:$0xf]
  %v79 = vld [vmem:[%s1 + $0xcc] sm:$0xf]
  %v80 = vld [vmem:[%s1 + $0xd0] sm:$0xf]
  %v81 = vld [vmem:[%s1 + $0xd4] sm:$0xf]
  %v82 = vld [vmem:[%s1 + $0xd8] sm:$0xf]
  %v83 = vld [vmem:[%s1 + $0xdc] sm:$0xf]
  %v84 = vld [vmem:[%s1 + $0xe0] sm:$0xf]
  %v85 = vld [vmem:[%s1 + $0xe4] sm:$0xf]
  %v86 = vld [vmem:[%s1 + $0xe8] sm:$0xf]
  %v87 = vld [vmem:[%s1 + $0xec] sm:$0xf]
  %v88 = vld [vmem:[%s1 + $0xf0] sm:$0xf]
  %v89 = vld [vmem:[%s1 + $0xf4] sm:$0xf]
  %v90 = vld [vmem:[%s1 + $0xf8] sm:$0xf]
  %v91 = vld [vmem:[%s1 + $0xfc] sm:$0xf]
  %v92 = vld [vmem:[%s1 + $0x100] sm:$0xf]
  %v93 = vld [vmem:[%s1 + $0x104] sm:$0xf]
  %v94 = vld [vmem:[%s1 + $0x108] sm:$0xf]
  %v95 = vld [vmem:[%s1 + $0x10c] sm:$0xf]
  %v96 = vld [vmem:[%s1 + $0x110] sm:$0xf]
  %v97 = vld [vmem:[%s1 + $0x114] sm:$0xf]
  %v98 = vld [vmem:[%s1 + $0x118] sm:$0xf]
  %v99 = vld [vmem:[%s1 + $0x11c] sm:$0xf]
  %v100 = vld [vmem:[%s1 + $0x120] sm:$0xf]
  %v101 = vld [vmem:[%s1 + $0x124] sm:$0xf]
  %v102 = vld [vmem:[%s1 + $0x128] sm:$0xf]
  %v103 = vld [vmem:[%s1 + $0x12c] sm:$0xf]
  %v104 = vld [vmem:[%s1 + $0x130] sm:$0xf]
  %v105 = vld [vmem:[%s1 + $0x134] sm:$0xf]
  %v106 = vld [vmem:[%s1 + $0x138] sm:$0xf]
  %v107 = vld [vmem:[%s1 + $0x13c] sm:$0xf]
  %v108 = vld [vmem:[%s1 + $0x140] sm:$0xf]
  %v109 = vld [vmem:[%s1 + $0x144] sm:$0xf]
  %v110 = vld [vmem:[%s1 + $0x148] sm:$0xf]
  %v111 = vld [vmem:[%s1 + $0x14c] sm:$0xf]
  %v112 = vld [vmem:[%s1 + $0x150] sm:$0xf]
  %v113 = vld [vmem:[%s1 + $0x154] sm:$0xf]
  %v114 = vld [vmem:[%s1 + $0x158] sm:$0xf]
  %v115 = vld [vmem:[%s1 + $0x15c] sm:$0xf]
  %v116 = vld [vmem:[%s1 + $0x160] sm:$0xf]
  %v117 = vld [vmem:[%s1 + $0x164] sm:$0xf]
  %v118 = vld [vmem:[%s1 + $0x168] sm:$0xf]
  %v119 = vld [vmem:[%s1 + $0x16c] sm:$0xf]
  %v120 = vld [vmem:[%s1 + $0x170] sm:$0xf]
  %v121 = vld [vmem:[%s1 + $0x174] sm:$0xf]
  %v122 = vld [vmem:[%s1 + $0x178] sm:$0xf]
  %v123 = vld [vmem:[%s1 + $0x17c] sm:$0xf]
  %v124 = vld [vmem:[%s1 + $0x180] sm:$0xf]
  %v125 = vld [vmem:[%s1 + $0x184] sm:$0xf]
  %v126 = vld [vmem:[%s1 + $0x188] sm:$0xf]
  %v127 = vld [vmem:[%s1 + $0x18c] sm:$0xf]
  %v128 = vld [vmem:[%s1 + $0x190] sm:$0xf]
  %v129 = vld [vmem:[%s1 + $0x194] sm:$0xf]
  %v130 = vld [vmem:[%s1 + $0x198] sm:$0xf]
  %v131 = vld [vmem:[%s1 + $0x19c] sm:$0xf]
  %v132 = vld [vmem:[%s1 + $0x1a0] sm:$0xf]
  %v133 = vld [vmem:[%s1 + $0x1a4] sm:$0xf]
  %v134 = vld [vmem:[%s1 + $0x1a8] sm:$0xf]
  %v135 = vld [vmem:[%s1 + $0x1ac] sm:$0xf]
  %v136 = vld [vmem:[%s1 + $0x1b0] sm:$0xf]
  %v137 = vld [vmem:[%s1 + $0x1b4] sm:$0xf]
  %v138 = vld [vmem:[%s1 + $0x1b8] sm:$0xf]
  %v139 = vld [vmem:[%s1 + $0x1bc] sm:$0xf]
  %v140 = vld [vmem:[%s1 + $0x1c0] sm:$0xf]
  %v141 = vld [vmem:[%s1 + $0x1c4] sm:$0xf]
  %v142 = vld [vmem:[%s1 + $0x1c8] sm:$0xf]
  %v143 = vld [vmem:[%s1 + $0x1cc] sm:$0xf]
  %v144 = vld [vmem:[%s1 + $0x1d0] sm:$0xf]
  %v145 = vld [vmem:[%s1 + $0x1d4] sm:$0xf]
  %v146 = vld [vmem:[%s1 + $0x1d8] sm:$0xf]
  %v147 = vld [vmem:[%s1 + $0x1dc] sm:$0xf]
  %v148 = vld [vmem:[%s1 + $0x1e0] sm:$0xf]
  %v149 = vld [vmem:[%s1 + $0x1e4] sm:$0xf]
  %v150 = vld [vmem:[%s1 + $0x1e8] sm:$0xf]
  %v151 = vld [vmem:[%s1 + $0x1ec] sm:$0xf]
  %v152 = vld [vmem:[%s1 + $0x1f0] sm:$0xf]
  %v153 = vld [vmem:[%s1 + $0x1f4] sm:$0xf]
  %v154 = vld [vmem:[%s1 + $0x1f8] sm:$0xf]
  %v155 = vld [vmem:[%s1 + $0x1fc] sm:$0xf]
  %v156 = vld [vmem:[%s1 + $0x200] sm:$0xf]
  %v157 = vld [vmem:[%s1 + $0x204] sm:$0xf]
  %v158 = vld [vmem:[%s1 + $0x208] sm:$0xf]
  %v159 = vld [vmem:[%s1 + $0x20c] sm:$0xf]
  %v160 = vld [vmem:[%s1 + $0x210] sm:$0xf]
  %v161 = vld [vmem:[%s1 + $0x214] sm:$0xf]
  %v162 = vld [vmem:[%s1 + $0x218] sm:$0xf]
  %v163 = vld [vmem:[%s1 + $0x21c] sm:$0xf]
  %v164 = vld [vmem:[%s1 + $0x220] sm:$0xf]
  %v165 = vld [vmem:[%s1 + $0x224] sm:$0xf]
  %v166 = vld [vmem:[%s1 + $0x228] sm:$0xf]
  %v167 = vld [vmem:[%s1 + $0x22c] sm:$0xf]
  %v168 = vld [vmem:[%s1 + $0x230] sm:$0xf]
  %v169 = vld [vmem:[%s1 + $0x234] sm:$0xf]
  %v170 = vld [vmem:[%s1 + $0x238] sm:$0xf]
  %v171 = vld [vmem:[%s1 + $0x23c] sm:$0xf]
  %v172 = vld [vmem:[%s2] sm:$0x1]
  %v174 = vlaneseq
  %v175 = vshrl.u32 %v174, 7
  %v176 = vsub.s32 0, %v175
  %v177 = vrot.slane %v172, %v176
  %v189 = vunpack.c.l.b16 %v18
  %v190 = vunpack.c.h.b16 %v18
  %v191 = vunpack.c.l.b16 %v19
  %v192 = vunpack.c.h.b16 %v19
  %v193 = vunpack.c.l.b16 %v20
  %v194 = vunpack.c.h.b16 %v20
  %v195 = vunpack.c.l.b16 %v21
  %v196 = vunpack.c.h.b16 %v21
  %v197 = vunpack.c.l.b16 %v22
  %v198 = vunpack.c.l.b16 %v23
  %v199 = vunpack.c.h.b16 %v23
  %v200 = vunpack.c.l.b16 %v24
  %v201 = vunpack.c.h.b16 %v24
  %v202 = vunpack.c.l.b16 %v25
  %v203 = vunpack.c.h.b16 %v25
  %v204 = vunpack.c.l.b16 %v26
  %v205 = vunpack.c.h.b16 %v26
  %v206 = vunpack.c.l.b16 %v27
  %v207 = vpack.c.b16 %v198, %v189
  %v208 = vpack.c.b16 %v199, %v190
  %v209 = vpack.c.b16 %v200, %v191
  %v210 = vpack.c.b16 %v201, %v192
  %v211 = vpack.c.b16 %v202, %v193
  %v212 = vpack.c.b16 %v203, %v194
  %v213 = vpack.c.b16 %v204, %v195
  %v214 = vpack.c.b16 %v205, %v196
  %v215 = vpack.c.b16 %v206, %v197
  %v369 = vunpack.c.l.b16 %v28
  %v370 = vunpack.c.l.b16 %v29
  %v371 = vunpack.c.l.b16 %v30
  %v372 = vunpack.c.l.b16 %v31
  %v373 = vunpack.c.l.b16 %v32
  %v374 = vunpack.c.l.b16 %v33
  %v375 = vunpack.c.l.b16 %v34
  %v376 = vunpack.c.l.b16 %v35
  %v377 = vunpack.c.l.b16 %v36
  %v378 = vunpack.c.l.b16 %v37
  %v379 = vunpack.c.l.b16 %v38
  %v380 = vunpack.c.l.b16 %v39
  %v381 = vunpack.c.l.b16 %v40
  %v382 = vunpack.c.l.b16 %v41
  %v383 = vunpack.c.l.b16 %v42
  %v384 = vunpack.c.l.b16 %v43
  %v385 = vunpack.c.l.b16 %v44
  %v386 = vunpack.c.l.b16 %v45
  %v387 = vunpack.c.l.b16 %v46
  %v388 = vunpack.c.l.b16 %v47
  %v389 = vunpack.c.l.b16 %v48
  %v390 = vunpack.c.l.b16 %v49
  %v391 = vunpack.c.l.b16 %v50
  %v392 = vunpack.c.l.b16 %v51
  %v393 = vunpack.c.l.b16 %v52
  %v394 = vunpack.c.l.b16 %v53
  %v395 = vunpack.c.l.b16 %v54
  %v396 = vunpack.c.l.b16 %v55
  %v397 = vunpack.c.l.b16 %v56
  %v398 = vunpack.c.l.b16 %v57
  %v399 = vunpack.c.l.b16 %v58
  %v400 = vunpack.c.l.b16 %v59
  %v401 = vunpack.c.l.b16 %v60
  %v402 = vunpack.c.l.b16 %v61
  %v403 = vunpack.c.l.b16 %v62
  %v404 = vunpack.c.l.b16 %v63
  %v405 = vunpack.c.l.b16 %v64
  %v406 = vunpack.c.l.b16 %v65
  %v407 = vunpack.c.l.b16 %v66
  %v408 = vunpack.c.l.b16 %v67
  %v409 = vunpack.c.l.b16 %v68
  %v410 = vunpack.c.l.b16 %v69
  %v411 = vunpack.c.l.b16 %v70
  %v412 = vunpack.c.l.b16 %v71
  %v413 = vunpack.c.l.b16 %v72
  %v414 = vunpack.c.l.b16 %v73
  %v415 = vunpack.c.l.b16 %v74
  %v416 = vunpack.c.l.b16 %v75
  %v417 = vunpack.c.l.b16 %v76
  %v418 = vunpack.c.l.b16 %v77
  %v419 = vunpack.c.l.b16 %v78
  %v420 = vunpack.c.l.b16 %v79
  %v421 = vunpack.c.l.b16 %v80
  %v422 = vunpack.c.l.b16 %v81
  %v423 = vunpack.c.l.b16 %v82
  %v424 = vunpack.c.l.b16 %v83
  %v425 = vunpack.c.l.b16 %v84
  %v426 = vunpack.c.l.b16 %v85
  %v427 = vunpack.c.l.b16 %v86
  %v428 = vunpack.c.l.b16 %v87
  %v429 = vunpack.c.l.b16 %v88
  %v430 = vunpack.c.l.b16 %v89
  %v431 = vunpack.c.l.b16 %v90
  %v432 = vunpack.c.l.b16 %v91
  %v433 = vunpack.c.l.b16 %v92
  %v434 = vunpack.c.l.b16 %v93
  %v435 = vunpack.c.l.b16 %v94
  %v436 = vunpack.c.l.b16 %v95
  %v437 = vunpack.c.l.b16 %v96
  %v438 = vunpack.c.l.b16 %v97
  %v439 = vunpack.c.l.b16 %v98
  %v440 = vunpack.c.l.b16 %v99
  %v441 = vunpack.c.l.b16 %v100
  %v442 = vunpack.c.l.b16 %v101
  %v443 = vunpack.c.l.b16 %v102
  %v444 = vunpack.c.l.b16 %v103
  %v445 = vunpack.c.l.b16 %v104
  %v446 = vunpack.c.l.b16 %v105
  %v447 = vunpack.c.l.b16 %v106
  %v448 = vunpack.c.l.b16 %v107
  %v449 = vunpack.c.l.b16 %v108
  %v450 = vunpack.c.l.b16 %v109
  %v451 = vunpack.c.l.b16 %v110
  %v452 = vunpack.c.l.b16 %v111
  %v453 = vunpack.c.l.b16 %v112
  %v454 = vunpack.c.l.b16 %v113
  %v455 = vunpack.c.l.b16 %v114
  %v456 = vunpack.c.l.b16 %v115
  %v457 = vunpack.c.l.b16 %v116
  %v458 = vunpack.c.l.b16 %v117
  %v459 = vunpack.c.l.b16 %v118
  %v460 = vunpack.c.l.b16 %v119
  %v461 = vunpack.c.l.b16 %v120
  %v462 = vunpack.c.l.b16 %v121
  %v463 = vunpack.c.l.b16 %v122
  %v464 = vunpack.c.l.b16 %v123
  %v465 = vunpack.c.l.b16 %v124
  %v466 = vunpack.c.l.b16 %v125
  %v467 = vunpack.c.l.b16 %v126
  %v468 = vunpack.c.l.b16 %v127
  %v469 = vunpack.c.l.b16 %v128
  %v470 = vunpack.c.l.b16 %v129
  %v471 = vunpack.c.l.b16 %v130
  %v472 = vunpack.c.l.b16 %v131
  %v473 = vunpack.c.l.b16 %v132
  %v474 = vunpack.c.l.b16 %v133
  %v475 = vunpack.c.l.b16 %v134
  %v476 = vunpack.c.l.b16 %v135
  %v477 = vunpack.c.l.b16 %v136
  %v478 = vunpack.c.l.b16 %v137
  %v479 = vunpack.c.l.b16 %v138
  %v480 = vunpack.c.l.b16 %v139
  %v481 = vunpack.c.l.b16 %v140
  %v482 = vunpack.c.l.b16 %v141
  %v483 = vunpack.c.l.b16 %v142
  %v484 = vunpack.c.l.b16 %v143
  %v485 = vunpack.c.l.b16 %v144
  %v486 = vunpack.c.l.b16 %v145
  %v487 = vunpack.c.l.b16 %v146
  %v488 = vunpack.c.l.b16 %v147
  %v489 = vunpack.c.l.b16 %v148
  %v490 = vunpack.c.l.b16 %v149
  %v491 = vunpack.c.l.b16 %v150
  %v492 = vunpack.c.l.b16 %v151
  %v493 = vunpack.c.l.b16 %v152
  %v494 = vunpack.c.l.b16 %v153
  %v495 = vunpack.c.l.b16 %v154
  %v496 = vunpack.c.l.b16 %v155
  %v497 = vunpack.c.l.b16 %v156
  %v498 = vunpack.c.l.b16 %v157
  %v499 = vunpack.c.l.b16 %v158
  %v500 = vunpack.c.l.b16 %v159
  %v501 = vunpack.c.l.b16 %v160
  %v502 = vunpack.c.l.b16 %v161
  %v503 = vunpack.c.l.b16 %v162
  %v504 = vunpack.c.l.b16 %v163
  %v505 = vunpack.c.l.b16 %v164
  %v506 = vunpack.c.l.b16 %v165
  %v507 = vunpack.c.l.b16 %v166
  %v508 = vunpack.c.l.b16 %v167
  %v509 = vunpack.c.l.b16 %v168
  %v510 = vunpack.c.l.b16 %v169
  %v511 = vunpack.c.l.b16 %v170
  %v512 = vunpack.c.l.b16 %v171
  %v513 = vpack.c.b16 %v370, %v369
  %v514 = vpack.c.b16 %v372, %v371
  %v515 = vpack.c.b16 %v374, %v373
  %v516 = vpack.c.b16 %v376, %v375
  %v517 = vpack.c.b16 %v378, %v377
  %v518 = vpack.c.b16 %v380, %v379
  %v519 = vpack.c.b16 %v382, %v381
  %v520 = vpack.c.b16 %v384, %v383
  %v521 = vpack.c.b16 %v386, %v385
  %v522 = vpack.c.b16 %v388, %v387
  %v523 = vpack.c.b16 %v390, %v389
  %v524 = vpack.c.b16 %v392, %v391
  %v525 = vpack.c.b16 %v394, %v393
  %v526 = vpack.c.b16 %v396, %v395
  %v527 = vpack.c.b16 %v398, %v397
  %v528 = vpack.c.b16 %v400, %v399
  %v529 = vpack.c.b16 %v402, %v401
  %v530 = vpack.c.b16 %v404, %v403
  %v531 = vpack.c.b16 %v406, %v405
  %v532 = vpack.c.b16 %v408, %v407
  %v533 = vpack.c.b16 %v410, %v409
  %v534 = vpack.c.b16 %v412, %v411
  %v535 = vpack.c.b16 %v414, %v413
  %v536 = vpack.c.b16 %v416, %v415
  %v537 = vpack.c.b16 %v418, %v417
  %v538 = vpack.c.b16 %v420, %v419
  %v539 = vpack.c.b16 %v422, %v421
  %v540 = vpack.c.b16 %v424, %v423
  %v541 = vpack.c.b16 %v426, %v425
  %v542 = vpack.c.b16 %v428, %v427
  %v543 = vpack.c.b16 %v430, %v429
  %v544 = vpack.c.b16 %v432, %v431
  %v545 = vpack.c.b16 %v434, %v433
  %v546 = vpack.c.b16 %v436, %v435
  %v547 = vpack.c.b16 %v438, %v437
  %v548 = vpack.c.b16 %v440, %v439
  %v549 = vpack.c.b16 %v442, %v441
  %v550 = vpack.c.b16 %v444, %v443
  %v551 = vpack.c.b16 %v446, %v445
  %v552 = vpack.c.b16 %v448, %v447
  %v553 = vpack.c.b16 %v450, %v449
  %v554 = vpack.c.b16 %v452, %v451
  %v555 = vpack.c.b16 %v454, %v453
  %v556 = vpack.c.b16 %v456, %v455
  %v557 = vpack.c.b16 %v458, %v457
  %v558 = vpack.c.b16 %v460, %v459
  %v559 = vpack.c.b16 %v462, %v461
  %v560 = vpack.c.b16 %v464, %v463
  %v561 = vpack.c.b16 %v466, %v465
  %v562 = vpack.c.b16 %v468, %v467
  %v563 = vpack.c.b16 %v470, %v469
  %v564 = vpack.c.b16 %v472, %v471
  %v565 = vpack.c.b16 %v474, %v473
  %v566 = vpack.c.b16 %v476, %v475
  %v567 = vpack.c.b16 %v478, %v477
  %v568 = vpack.c.b16 %v480, %v479
  %v569 = vpack.c.b16 %v482, %v481
  %v570 = vpack.c.b16 %v484, %v483
  %v571 = vpack.c.b16 %v486, %v485
  %v572 = vpack.c.b16 %v488, %v487
  %v573 = vpack.c.b16 %v490, %v489
  %v574 = vpack.c.b16 %v492, %v491
  %v575 = vpack.c.b16 %v494, %v493
  %v576 = vpack.c.b16 %v496, %v495
  %v577 = vpack.c.b16 %v498, %v497
  %v578 = vpack.c.b16 %v500, %v499
  %v579 = vpack.c.b16 %v502, %v501
  %v580 = vpack.c.b16 %v504, %v503
  %v581 = vpack.c.b16 %v506, %v505
  %v582 = vpack.c.b16 %v508, %v507
  %v583 = vpack.c.b16 %v510, %v509
  %v584 = vpack.c.b16 %v512, %v511
  %657 = vmatprep.subr.bf16.mxu0 0
  %658 = vmatpush1.bf16.msra.mxu0 %v513
  %659 = vmatprep.subr.bf16.mxu0 0
  %660 = vmatpush1.bf16.msra.mxu0 %v514
  %661 = vmatprep.subr.bf16.mxu0 0
  %662 = vmatpush1.bf16.msra.mxu0 %v515
  %663 = vmatprep.subr.bf16.mxu0 0
  %664 = vmatpush1.bf16.msra.mxu0 %v516
  %665 = vmatprep.subr.bf16.mxu0 0
  %666 = vmatpush1.bf16.msra.mxu0 %v517
  %667 = vmatprep.subr.bf16.mxu0 0
  %668 = vmatpush1.bf16.msra.mxu0 %v518
  %669 = vmatprep.subr.bf16.mxu0 0
  %670 = vmatpush1.bf16.msra.mxu0 %v519
  %671 = vmatprep.subr.bf16.mxu0 0
  %672 = vmatpush1.bf16.msra.mxu0 %v520
  %673 = vmatprep.subr.bf16.mxu0 0
  %674 = vmatpush1.bf16.msra.mxu0 %v521
  %675 = vmatprep.subr.bf16.mxu0 0
  %676 = vmatpush1.bf16.msra.mxu0 %v522
  %677 = vmatprep.subr.bf16.mxu0 0
  %678 = vmatpush1.bf16.msra.mxu0 %v523
  %679 = vmatprep.subr.bf16.mxu0 0
  %680 = vmatpush1.bf16.msra.mxu0 %v524
  %681 = vmatprep.subr.bf16.mxu0 0
  %682 = vmatpush1.bf16.msra.mxu0 %v525
  %683 = vmatprep.subr.bf16.mxu0 0
  %684 = vmatpush1.bf16.msra.mxu0 %v526
  %685 = vmatprep.subr.bf16.mxu0 0
  %686 = vmatpush1.bf16.msra.mxu0 %v527
  %687 = vmatprep.subr.bf16.mxu0 0
  %688 = vmatpush1.bf16.msra.mxu0 %v528
  %689 = vmatprep.mubr.bf16.mxu0 %v208
  %690 = vmatmul.mubr.bf16.gmra.mrb[0].mxu0 %v207
  %v691 = vpop.f32.mrb[0].mxu0
  %v692 = vadd.f32 %v177, %v691
  %v693 = vpop.f32.mrb[0].mxu0
  %v694 = vpop.f32.mrb[0].mxu0
  %v695 = vadd.f32 %v177, %v694
  %v696 = vpop.f32.mrb[0].mxu0
  %697 = vdwg.mxu0
  %698 = vmatprep.subr.bf16.mxu0 0
  %699 = vmatpush1.bf16.msra.mxu0 %v529
  %700 = vmatprep.subr.bf16.mxu0 0
  %701 = vmatpush1.bf16.msra.mxu0 %v530
  %702 = vmatprep.subr.bf16.mxu0 0
  %703 = vmatpush1.bf16.msra.mxu0 %v531
  %704 = vmatprep.subr.bf16.mxu0 0
  %705 = vmatpush1.bf16.msra.mxu0 %v532
  %706 = vmatprep.subr.bf16.mxu0 0
  %707 = vmatpush1.bf16.msra.mxu0 %v533
  %708 = vmatprep.subr.bf16.mxu0 0
  %709 = vmatpush1.bf16.msra.mxu0 %v534
  %710 = vmatprep.subr.bf16.mxu0 0
  %711 = vmatpush1.bf16.msra.mxu0 %v535
  %712 = vmatprep.subr.bf16.mxu0 0
  %713 = vmatpush1.bf16.msra.mxu0 %v536
  %714 = vmatprep.subr.bf16.mxu0 0
  %715 = vmatpush1.bf16.msra.mxu0 %v537
  %716 = vmatprep.subr.bf16.mxu0 0
  %717 = vmatpush1.bf16.msra.mxu0 %v538
  %718 = vmatprep.subr.bf16.mxu0 0
  %719 = vmatpush1.bf16.msra.mxu0 %v539
  %720 = vmatprep.subr.bf16.mxu0 0
  %721 = vmatpush1.bf16.msra.mxu0 %v540
  %722 = vmatprep.subr.bf16.mxu0 0
  %723 = vmatpush1.bf16.msra.mxu0 %v541
  %724 = vmatprep.subr.bf16.mxu0 0
  %725 = vmatpush1.bf16.msra.mxu0 %v542
  %726 = vmatprep.subr.bf16.mxu0 0
  %727 = vmatpush1.bf16.msra.mxu0 %v543
  %728 = vmatprep.subr.bf16.mxu0 0
  %729 = vmatpush1.bf16.msra.mxu0 %v544
  %730 = vmatprep.mubr.bf16.mxu0 %v210
  %731 = vmatmul.mubr.bf16.gmra.mrb[0].mxu0 %v209
  %v732 = vpop.f32.mrb[0].mxu0
  %v733 = vadd.f32 %v692, %v732
  %v734 = vpop.f32.mrb[0].mxu0
  %v735 = vpop.f32.mrb[0].mxu0
  %v736 = vadd.f32 %v695, %v735
  %v737 = vpop.f32.mrb[0].mxu0
  %738 = vdwg.mxu0
  %739 = vmatprep.subr.bf16.mxu0 0
  %740 = vmatpush1.bf16.msra.mxu0 %v545
  %741 = vmatprep.subr.bf16.mxu0 0
  %742 = vmatpush1.bf16.msra.mxu0 %v546
  %743 = vmatprep.subr.bf16.mxu0 0
  %744 = vmatpush1.bf16.msra.mxu0 %v547
  %745 = vmatprep.subr.bf16.mxu0 0
  %746 = vmatpush1.bf16.msra.mxu0 %v548
  %747 = vmatprep.subr.bf16.mxu0 0
  %748 = vmatpush1.bf16.msra.mxu0 %v549
  %749 = vmatprep.subr.bf16.mxu0 0
  %750 = vmatpush1.bf16.msra.mxu0 %v550
  %751 = vmatprep.subr.bf16.mxu0 0
  %752 = vmatpush1.bf16.msra.mxu0 %v551
  %753 = vmatprep.subr.bf16.mxu0 0
  %754 = vmatpush1.bf16.msra.mxu0 %v552
  %755 = vmatprep.subr.bf16.mxu0 0
  %756 = vmatpush1.bf16.msra.mxu0 %v553
  %757 = vmatprep.subr.bf16.mxu0 0
  %758 = vmatpush1.bf16.msra.mxu0 %v554
  %759 = vmatprep.subr.bf16.mxu0 0
  %760 = vmatpush1.bf16.msra.mxu0 %v555
  %761 = vmatprep.subr.bf16.mxu0 0
  %762 = vmatpush1.bf16.msra.mxu0 %v556
  %763 = vmatprep.subr.bf16.mxu0 0
  %764 = vmatpush1.bf16.msra.mxu0 %v557
  %765 = vmatprep.subr.bf16.mxu0 0
  %766 = vmatpush1.bf16.msra.mxu0 %v558
  %767 = vmatprep.subr.bf16.mxu0 0
  %768 = vmatpush1.bf16.msra.mxu0 %v559
  %769 = vmatprep.subr.bf16.mxu0 0
  %770 = vmatpush1.bf16.msra.mxu0 %v560
  %771 = vmatprep.mubr.bf16.mxu0 %v212
  %772 = vmatmul.mubr.bf16.gmra.mrb[0].mxu0 %v211
  %v773 = vpop.f32.mrb[0].mxu0
  %v774 = vadd.f32 %v733, %v773
  %v775 = vpop.f32.mrb[0].mxu0
  %v776 = vpop.f32.mrb[0].mxu0
  %v777 = vadd.f32 %v736, %v776
  %v778 = vpop.f32.mrb[0].mxu0
  %779 = vdwg.mxu0
  %780 = vmatprep.subr.bf16.mxu0 0
  %781 = vmatpush1.bf16.msra.mxu0 %v561
  %782 = vmatprep.subr.bf16.mxu0 0
  %783 = vmatpush1.bf16.msra.mxu0 %v562
  %784 = vmatprep.subr.bf16.mxu0 0
  %785 = vmatpush1.bf16.msra.mxu0 %v563
  %786 = vmatprep.subr.bf16.mxu0 0
  %787 = vmatpush1.bf16.msra.mxu0 %v564
  %788 = vmatprep.subr.bf16.mxu0 0
  %789 = vmatpush1.bf16.msra.mxu0 %v565
  %790 = vmatprep.subr.bf16.mxu0 0
  %791 = vmatpush1.bf16.msra.mxu0 %v566
  %792 = vmatprep.subr.bf16.mxu0 0
  %793 = vmatpush1.bf16.msra.mxu0 %v567
  %794 = vmatprep.subr.bf16.mxu0 0
  %795 = vmatpush1.bf16.msra.mxu0 %v568
  %796 = vmatprep.subr.bf16.mxu0 0
  %797 = vmatpush1.bf16.msra.mxu0 %v569
  %798 = vmatprep.subr.bf16.mxu0 0
  %799 = vmatpush1.bf16.msra.mxu0 %v570
  %800 = vmatprep.subr.bf16.mxu0 0
  %801 = vmatpush1.bf16.msra.mxu0 %v571
  %802 = vmatprep.subr.bf16.mxu0 0
  %803 = vmatpush1.bf16.msra.mxu0 %v572
  %804 = vmatprep.subr.bf16.mxu0 0
  %805 = vmatpush1.bf16.msra.mxu0 %v573
  %806 = vmatprep.subr.bf16.mxu0 0
  %807 = vmatpush1.bf16.msra.mxu0 %v574
  %808 = vmatprep.subr.bf16.mxu0 0
  %809 = vmatpush1.bf16.msra.mxu0 %v575
  %810 = vmatprep.subr.bf16.mxu0 0
  %811 = vmatpush1.bf16.msra.mxu0 %v576
  %812 = vmatprep.mubr.bf16.mxu0 %v214
  %813 = vmatmul.mubr.bf16.gmra.mrb[0].mxu0 %v213
  %v814 = vpop.f32.mrb[0].mxu0
  %v815 = vadd.f32 %v774, %v814
  %v816 = vpop.f32.mrb[0].mxu0
  %v817 = vpop.f32.mrb[0].mxu0
  %v818 = vadd.f32 %v777, %v817
  %v819 = vpop.f32.mrb[0].mxu0
  %820 = vdwg.mxu0
  %821 = vmatprep.subr.bf16.mxu0 0
  %822 = vmatpush1.bf16.msra.mxu0 %v577
  %823 = vmatprep.subr.bf16.mxu0 0
  %824 = vmatpush1.bf16.msra.mxu0 %v578
  %825 = vmatprep.subr.bf16.mxu0 0
  %826 = vmatpush1.bf16.msra.mxu0 %v579
  %827 = vmatprep.subr.bf16.mxu0 0
  %828 = vmatpush1.bf16.msra.mxu0 %v580
  %829 = vmatprep.subr.bf16.mxu0 0
  %830 = vmatpush1.bf16.msra.mxu0 %v581
  %831 = vmatprep.subr.bf16.mxu0 0
  %832 = vmatpush1.bf16.msra.mxu0 %v582
  %833 = vmatprep.subr.bf16.mxu0 0
  %834 = vmatpush1.bf16.msra.mxu0 %v583
  %835 = vmatprep.subr.bf16.mxu0 0
  %836 = vmatpush1.bf16.msra.mxu0 %v584
  %837 = vmatprep.subr.bf16.mxu0 0
  %838 = vmatpush1.bf16.msra.mxu0 0
  %839 = vmatprep.subr.bf16.mxu0 0
  %840 = vmatpush1.bf16.msra.mxu0 0
  %841 = vmatprep.subr.bf16.mxu0 0
  %842 = vmatpush1.bf16.msra.mxu0 0
  %843 = vmatprep.subr.bf16.mxu0 0
  %844 = vmatpush1.bf16.msra.mxu0 0
  %845 = vmatprep.subr.bf16.mxu0 0
  %846 = vmatpush1.bf16.msra.mxu0 0
  %847 = vmatprep.subr.bf16.mxu0 0
  %848 = vmatpush1.bf16.msra.mxu0 0
  %849 = vmatprep.subr.bf16.mxu0 0
  %850 = vmatpush1.bf16.msra.mxu0 0
  %851 = vmatprep.subr.bf16.mxu0 0
  %852 = vmatpush1.bf16.msra.mxu0 0
  %853 = vmatprep.mubr.bf16.mxu0 0
  %854 = vmatmul.mubr.bf16.gmra.mrb[0].mxu0 %v215
  %v855 = vpop.f32.mrb[0].mxu0
  %v856 = vadd.f32 %v815, %v855
  %v857 = vpop.f32.mrb[0].mxu0
  %v858 = vpop.f32.mrb[0].mxu0
  %v859 = vadd.f32 %v818, %v858
  %v860 = vpop.f32.mrb[0].mxu0
  %861 = vdwg.mxu0
  %v862 = vld [vmem:[%s3] sm:$0xf]
  %v863 = vld [vmem:[%s3 + $0x4] sm:$0xf]
  %v864 = vunpack.c.l.bf16 %v862
  %v865 = vunpack.c.l.bf16 %v863
  %v866 = vmax.f32 %v856, 0.0
  %v867 = vmax.f32 %v859, 0.0
  %v868 = vadd.f32 %v866, %v864
  %v869 = vadd.f32 %v867, %v865
  %v870 = vpack.c.bf16 %v869, %v868
  %v872 = vunpack.c.l.b16 %v870
  %v873 = vunpack.c.h.b16 %v870
  %v874 = vpack.c.b16 %v872, %v872
  %v875 = vpack.c.b16 %v873, %v873
  %878 = vst [vmem:[%s4] sm:$0xf] %v874
  %879 = vst [vmem:[%s4 + $0x4] sm:$0xf] %v875
  // Predicated region
  $region18: #{simple_generator.41} parent=0 // pred_check
    _
  $region19: #{simple_generator.41} parent=0 // pred_check_branch
    %881 = sbr.rel (0) target = $region21
  $region20: #{simple_generator.41} parent=0 // pred_region
    _
  $region21: #{simple_generator.41} parent=0 // pred_fallthru
    _
  // Predicated region
  $region22: #{simple_generator.41} parent=0 // pred_check
    _
  $region23: #{simple_generator.41} parent=0 // pred_check_branch
    %883 = sbr.rel (0) target = $region25
  $region24: #{simple_generator.41} parent=0 // pred_region
    _
  $region25: #{simple_generator.41} parent=0 // pred_fallthru
    _

// kernel: simple_generator.43
$region0: #{simple_generator.43}
  #allocation0 [shape = 'u32[]', space=smem, size = 0x4, offset = 0x4, fixed_abs, tag = 'smem constant byte address 0x4 - core index']
  #allocation1 [shape = 'u32[144,128]{1,0:T(1,128)}', space=vmem, size = 0x12000, scoped, tag = 'internal scratch']
  %s0 = inlined_call_operand.vmem [shape: bf16[32,864], index: 0, kind: input, shape index: {}]
  %s1 = inlined_call_operand.vmem [shape: bf16[864,128], index: 1, kind: input, shape index: {}]
  %s2 = inlined_call_operand.vmem [shape: f32[1,128], index: 2, kind: input, shape index: {}]
  %s3 = inlined_call_operand.vmem [shape: bf16[32,128], index: 3, kind: input, shape index: {}]
  %s4 = inlined_call_operand.vmem [shape: bf16[32,128], index: 4, kind: output, shape index: {}]
  %s5 = sld [smem:[#allocation0]]
  $region26: #{simple_generator.43} parent=0
    _
  %s7 = ssub.s32 1, %s5
  %s8 = scalar_select 0, %s7, %s5
  // Predicated region
  $region2: #{simple_generator.43} parent=0 // pred_check
    _
  $region3: #{simple_generator.43} parent=0 // pred_check_branch
    %10 = sbr.rel (0) target = $region5
  $region4: #{simple_generator.43} parent=0 // pred_region
    _
  $region5: #{simple_generator.43} parent=0 // pred_fallthru
    _
  // Predicated region
  $region6: #{simple_generator.43} parent=0 // pred_check
    _
  $region7: #{simple_generator.43} parent=0 // pred_check_branch
    %12 = sbr.rel (0) target = $region9
  $region8: #{simple_generator.43} parent=0 // pred_region
    _
  $region9: #{simple_generator.43} parent=0 // pred_fallthru
    _
  // Predicated region
  $region10: #{simple_generator.43} parent=0 // pred_check
    _
  $region11: #{simple_generator.43} parent=0 // pred_check_branch
    %14 = sbr.rel (0) target = $region13
  $region12: #{simple_generator.43} parent=0 // pred_region
    _
  $region13: #{simple_generator.43} parent=0 // pred_fallthru
    _
  // Predicated region
  $region14: #{simple_generator.43} parent=0 // pred_check
    _
  $region15: #{simple_generator.43} parent=0 // pred_check_branch
    %16 = sbr.rel (0) target = $region17
  $region16: #{simple_generator.43} parent=0 // pred_region
    _
  $region17: #{simple_generator.43} parent=0 // pred_fallthru
    _
  %v18 = vld [vmem:[%s0] sm:$0xff]
  %v19 = vld [vmem:[%s0 + $0x8] sm:$0xff]
  %v20 = vld [vmem:[%s0 + $0x10] sm:$0xff]
  %v21 = vld [vmem:[%s0 + $0x18] sm:$0xf]
  %v22 = vld [vmem:[%s0 + $0x1c] sm:$0xff]
  %v23 = vld [vmem:[%s0 + $0x24] sm:$0xff]
  %v24 = vld [vmem:[%s0 + $0x2c] sm:$0xff]
  %v25 = vld [vmem:[%s0 + $0x34] sm:$0xf]
  %v26 = vld [vmem:[%s0 + $0x38] sm:$0xff]
  %v27 = vld [vmem:[%s0 + $0x40] sm:$0xff]
  %v28 = vld [vmem:[%s0 + $0x48] sm:$0xff]
  %v29 = vld [vmem:[%s0 + $0x50] sm:$0xf]
  %v30 = vld [vmem:[%s0 + $0x54] sm:$0xff]
  %v31 = vld [vmem:[%s0 + $0x5c] sm:$0xff]
  %v32 = vld [vmem:[%s0 + $0x64] sm:$0xff]
  %v33 = vld [vmem:[%s0 + $0x6c] sm:$0xf]
  %v34 = vld [vmem:[%s1] sm:$0xf]
  %v35 = vld [vmem:[%s1 + $0x4] sm:$0xf]
  %v36 = vld [vmem:[%s1 + $0x8] sm:$0xf]
  %v37 = vld [vmem:[%s1 + $0xc] sm:$0xf]
  %v38 = vld [vmem:[%s1 + $0x10] sm:$0xf]
  %v39 = vld [vmem:[%s1 + $0x14] sm:$0xf]
  %v40 = vld [vmem:[%s1 + $0x18] sm:$0xf]
  %v41 = vld [vmem:[%s1 + $0x1c] sm:$0xf]
  %v42 = vld [vmem:[%s1 + $0x20] sm:$0xf]
  %v43 = vld [vmem:[%s1 + $0x24] sm:$0xf]
  %v44 = vld [vmem:[%s1 + $0x28] sm:$0xf]
  %v45 = vld [vmem:[%s1 + $0x2c] sm:$0xf]
  %v46 = vld [vmem:[%s1 + $0x30] sm:$0xf]
  %v47 = vld [vmem:[%s1 + $0x34] sm:$0xf]
  %v48 = vld [vmem:[%s1 + $0x38] sm:$0xf]
  %v49 = vld [vmem:[%s1 + $0x3c] sm:$0xf]
  %v50 = vld [vmem:[%s1 + $0x40] sm:$0xf]
  %v51 = vld [vmem:[%s1 + $0x44] sm:$0xf]
  %v52 = vld [vmem:[%s1 + $0x48] sm:$0xf]
  %v53 = vld [vmem:[%s1 + $0x4c] sm:$0xf]
  %v54 = vld [vmem:[%s1 + $0x50] sm:$0xf]
  %v55 = vld [vmem:[%s1 + $0x54] sm:$0xf]
  %v56 = vld [vmem:[%s1 + $0x58] sm:$0xf]
  %v57 = vld [vmem:[%s1 + $0x5c] sm:$0xf]
  %v58 = vld [vmem:[%s1 + $0x60] sm:$0xf]
  %v59 = vld [vmem:[%s1 + $0x64] sm:$0xf]
  %v60 = vld [vmem:[%s1 + $0x68] sm:$0xf]
  %v61 = vld [vmem:[%s1 + $0x6c] sm:$0xf]
  %v62 = vld [vmem:[%s1 + $0x70] sm:$0xf]
  %v63 = vld [vmem:[%s1 + $0x74] sm:$0xf]
  %v64 = vld [vmem:[%s1 + $0x78] sm:$0xf]
  %v65 = vld [vmem:[%s1 + $0x7c] sm:$0xf]
  %v66 = vld [vmem:[%s1 + $0x80] sm:$0xf]
  %v67 = vld [vmem:[%s1 + $0x84] sm:$0xf]
  %v68 = vld [vmem:[%s1 + $0x88] sm:$0xf]
  %v69 = vld [vmem:[%s1 + $0x8c] sm:$0xf]
  %v70 = vld [vmem:[%s1 + $0x90] sm:$0xf]
  %v71 = vld [vmem:[%s1 + $0x94] sm:$0xf]
  %v72 = vld [vmem:[%s1 + $0x98] sm:$0xf]
  %v73 = vld [vmem:[%s1 + $0x9c] sm:$0xf]
  %v74 = vld [vmem:[%s1 + $0xa0] sm:$0xf]
  %v75 = vld [vmem:[%s1 + $0xa4] sm:$0xf]
  %v76 = vld [vmem:[%s1 + $0xa8] sm:$0xf]
  %v77 = vld [vmem:[%s1 + $0xac] sm:$0xf]
  %v78 = vld [vmem:[%s1 + $0xb0] sm:$0xf]
  %v79 = vld [vmem:[%s1 + $0xb4] sm:$0xf]
  %v80 = vld [vmem:[%s1 + $0xb8] sm:$0xf]
  %v81 = vld [vmem:[%s1 + $0xbc] sm:$0xf]
  %v82 = vld [vmem:[%s1 + $0xc0] sm:$0xf]
  %v83 = vld [vmem:[%s1 + $0xc4] sm:$0xf]
  %v84 = vld [vmem:[%s1 + $0xc8] sm:$0xf]
  %v85 = vld [vmem:[%s1 + $0xcc] sm:$0xf]
  %v86 = vld [vmem:[%s1 + $0xd0] sm:$0xf]
  %v87 = vld [vmem:[%s1 + $0xd4] sm:$0xf]
  %v88 = vld [vmem:[%s1 + $0xd8] sm:$0xf]
  %v89 = vld [vmem:[%s1 + $0xdc] sm:$0xf]
  %v90 = vld [vmem:[%s1 + $0xe0] sm:$0xf]
  %v91 = vld [vmem:[%s1 + $0xe4] sm:$0xf]
  %v92 = vld [vmem:[%s1 + $0xe8] sm:$0xf]
  %v93 = vld [vmem:[%s1 + $0xec] sm:$0xf]
  %v94 = vld [vmem:[%s1 + $0xf0] sm:$0xf]
  %v95 = vld [vmem:[%s1 + $0xf4] sm:$0xf]
  %v96 = vld [vmem:[%s1 + $0xf8] sm:$0xf]
  %v97 = vld [vmem:[%s1 + $0xfc] sm:$0xf]
  %v98 = vld [vmem:[%s1 + $0x100] sm:$0xf]
  %v99 = vld [vmem:[%s1 + $0x104] sm:$0xf]
  %v100 = vld [vmem:[%s1 + $0x108] sm:$0xf]
  %v101 = vld [vmem:[%s1 + $0x10c] sm:$0xf]
  %v102 = vld [vmem:[%s1 + $0x110] sm:$0xf]
  %v103 = vld [vmem:[%s1 + $0x114] sm:$0xf]
  %v104 = vld [vmem:[%s1 + $0x118] sm:$0xf]
  %v105 = vld [vmem:[%s1 + $0x11c] sm:$0xf]
  %v106 = vld [vmem:[%s1 + $0x120] sm:$0xf]
  %v107 = vld [vmem:[%s1 + $0x124] sm:$0xf]
  %v108 = vld [vmem:[%s1 + $0x128] sm:$0xf]
  %v109 = vld [vmem:[%s1 + $0x12c] sm:$0xf]
  %v110 = vld [vmem:[%s1 + $0x130] sm:$0xf]
  %v111 = vld [vmem:[%s1 + $0x134] sm:$0xf]
  %v112 = vld [vmem:[%s1 + $0x138] sm:$0xf]
  %v113 = vld [vmem:[%s1 + $0x13c] sm:$0xf]
  %v114 = vld [vmem:[%s1 + $0x140] sm:$0xf]
  %v115 = vld [vmem:[%s1 + $0x144] sm:$0xf]
  %v116 = vld [vmem:[%s1 + $0x148] sm:$0xf]
  %v117 = vld [vmem:[%s1 + $0x14c] sm:$0xf]
  %v118 = vld [vmem:[%s1 + $0x150] sm:$0xf]
  %v119 = vld [vmem:[%s1 + $0x154] sm:$0xf]
  %v120 = vld [vmem:[%s1 + $0x158] sm:$0xf]
  %v121 = vld [vmem:[%s1 + $0x15c] sm:$0xf]
  %v122 = vld [vmem:[%s1 + $0x160] sm:$0xf]
  %v123 = vld [vmem:[%s1 + $0x164] sm:$0xf]
  %v124 = vld [vmem:[%s1 + $0x168] sm:$0xf]
  %v125 = vld [vmem:[%s1 + $0x16c] sm:$0xf]
  %v126 = vld [vmem:[%s1 + $0x170] sm:$0xf]
  %v127 = vld [vmem:[%s1 + $0x174] sm:$0xf]
  %v128 = vld [vmem:[%s1 + $0x178] sm:$0xf]
  %v129 = vld [vmem:[%s1 + $0x17c] sm:$0xf]
  %v130 = vld [vmem:[%s1 + $0x180] sm:$0xf]
  %v131 = vld [vmem:[%s1 + $0x184] sm:$0xf]
  %v132 = vld [vmem:[%s1 + $0x188] sm:$0xf]
  %v133 = vld [vmem:[%s1 + $0x18c] sm:$0xf]
  %v134 = vld [vmem:[%s1 + $0x190] sm:$0xf]
  %v135 = vld [vmem:[%s1 + $0x194] sm:$0xf]
  %v136 = vld [vmem:[%s1 + $0x198] sm:$0xf]
  %v137 = vld [vmem:[%s1 + $0x19c] sm:$0xf]
  %v138 = vld [vmem:[%s1 + $0x1a0] sm:$0xf]
  %v139 = vld [vmem:[%s1 + $0x1a4] sm:$0xf]
  %v140 = vld [vmem:[%s1 + $0x1a8] sm:$0xf]
  %v141 = vld [vmem:[%s1 + $0x1ac] sm:$0xf]
  %v142 = vld [vmem:[%s2] sm:$0x1]
  %v144 = vlaneseq
  %v145 = vshrl.u32 %v144, 7
  %v146 = vsub.s32 0, %v145
  %v147 = vrot.slane %v142, %v146
  %v165 = vunpack.c.l.b16 %v18
  %v166 = vunpack.c.h.b16 %v18
  %v167 = vunpack.c.l.b16 %v19
  %v168 = vunpack.c.h.b16 %v19
  %v169 = vunpack.c.l.b16 %v20
  %v170 = vunpack.c.h.b16 %v20
  %v171 = vunpack.c.l.b16 %v21
  %v172 = vunpack.c.l.b16 %v22
  %v173 = vunpack.c.h.b16 %v22
  %v174 = vunpack.c.l.b16 %v23
  %v175 = vunpack.c.h.b16 %v23
  %v176 = vunpack.c.l.b16 %v24
  %v177 = vunpack.c.h.b16 %v24
  %v178 = vunpack.c.l.b16 %v25
  %v179 = vunpack.c.l.b16 %v26
  %v180 = vunpack.c.h.b16 %v26
  %v181 = vunpack.c.l.b16 %v27
  %v182 = vunpack.c.h.b16 %v27
  %v183 = vunpack.c.l.b16 %v28
  %v184 = vunpack.c.h.b16 %v28
  %v185 = vunpack.c.l.b16 %v29
  %v186 = vunpack.c.l.b16 %v30
  %v187 = vunpack.c.h.b16 %v30
  %v188 = vunpack.c.l.b16 %v31
  %v189 = vunpack.c.h.b16 %v31
  %v190 = vunpack.c.l.b16 %v32
  %v191 = vunpack.c.h.b16 %v32
  %v192 = vunpack.c.l.b16 %v33
  %v193 = vpack.c.b16 %v172, %v165
  %v194 = vpack.c.b16 %v173, %v166
  %v195 = vpack.c.b16 %v174, %v167
  %v196 = vpack.c.b16 %v175, %v168
  %v197 = vpack.c.b16 %v176, %v169
  %v198 = vpack.c.b16 %v177, %v170
  %v199 = vpack.c.b16 %v178, %v171
  %v200 = vpack.c.b16 %v186, %v179
  %v201 = vpack.c.b16 %v187, %v180
  %v202 = vpack.c.b16 %v188, %v181
  %v203 = vpack.c.b16 %v189, %v182
  %v204 = vpack.c.b16 %v190, %v183
  %v205 = vpack.c.b16 %v191, %v184
  %v206 = vpack.c.b16 %v192, %v185
  %v327 = vunpack.c.l.b16 %v34
  %v328 = vunpack.c.l.b16 %v35
  %v329 = vunpack.c.l.b16 %v36
  %v330 = vunpack.c.l.b16 %v37
  %v331 = vunpack.c.l.b16 %v38
  %v332 = vunpack.c.l.b16 %v39
  %v333 = vunpack.c.l.b16 %v40
  %v334 = vunpack.c.l.b16 %v41
  %v335 = vunpack.c.l.b16 %v42
  %v336 = vunpack.c.l.b16 %v43
  %v337 = vunpack.c.l.b16 %v44
  %v338 = vunpack.c.l.b16 %v45
  %v339 = vunpack.c.l.b16 %v46
  %v340 = vunpack.c.l.b16 %v47
  %v341 = vunpack.c.l.b16 %v48
  %v342 = vunpack.c.l.b16 %v49
  %v343 = vunpack.c.l.b16 %v50
  %v344 = vunpack.c.l.b16 %v51
  %v345 = vunpack.c.l.b16 %v52
  %v346 = vunpack.c.l.b16 %v53
  %v347 = vunpack.c.l.b16 %v54
  %v348 = vunpack.c.l.b16 %v55
  %v349 = vunpack.c.l.b16 %v56
  %v350 = vunpack.c.l.b16 %v57
  %v351 = vunpack.c.l.b16 %v58
  %v352 = vunpack.c.l.b16 %v59
  %v353 = vunpack.c.l.b16 %v60
  %v354 = vunpack.c.l.b16 %v61
  %v355 = vunpack.c.l.b16 %v62
  %v356 = vunpack.c.l.b16 %v63
  %v357 = vunpack.c.l.b16 %v64
  %v358 = vunpack.c.l.b16 %v65
  %v359 = vunpack.c.l.b16 %v66
  %v360 = vunpack.c.l.b16 %v67
  %v361 = vunpack.c.l.b16 %v68
  %v362 = vunpack.c.l.b16 %v69
  %v363 = vunpack.c.l.b16 %v70
  %v364 = vunpack.c.l.b16 %v71
  %v365 = vunpack.c.l.b16 %v72
  %v366 = vunpack.c.l.b16 %v73
  %v367 = vunpack.c.l.b16 %v74
  %v368 = vunpack.c.l.b16 %v75
  %v369 = vunpack.c.l.b16 %v76
  %v370 = vunpack.c.l.b16 %v77
  %v371 = vunpack.c.l.b16 %v78
  %v372 = vunpack.c.l.b16 %v79
  %v373 = vunpack.c.l.b16 %v80
  %v374 = vunpack.c.l.b16 %v81
  %v375 = vunpack.c.l.b16 %v82
  %v376 = vunpack.c.l.b16 %v83
  %v377 = vunpack.c.l.b16 %v84
  %v378 = vunpack.c.l.b16 %v85
  %v379 = vunpack.c.l.b16 %v86
  %v380 = vunpack.c.l.b16 %v87
  %v381 = vunpack.c.l.b16 %v88
  %v382 = vunpack.c.l.b16 %v89
  %v383 = vunpack.c.l.b16 %v90
  %v384 = vunpack.c.l.b16 %v91
  %v385 = vunpack.c.l.b16 %v92
  %v386 = vunpack.c.l.b16 %v93
  %v387 = vunpack.c.l.b16 %v94
  %v388 = vunpack.c.l.b16 %v95
  %v389 = vunpack.c.l.b16 %v96
  %v390 = vunpack.c.l.b16 %v97
  %v391 = vunpack.c.l.b16 %v98
  %v392 = vunpack.c.l.b16 %v99
  %v393 = vunpack.c.l.b16 %v100
  %v394 = vunpack.c.l.b16 %v101
  %v395 = vunpack.c.l.b16 %v102
  %v396 = vunpack.c.l.b16 %v103
  %v397 = vunpack.c.l.b16 %v104
  %v398 = vunpack.c.l.b16 %v105
  %v399 = vunpack.c.l.b16 %v106
  %v400 = vunpack.c.l.b16 %v107
  %v401 = vunpack.c.l.b16 %v108
  %v402 = vunpack.c.l.b16 %v109
  %v403 = vunpack.c.l.b16 %v110
  %v404 = vunpack.c.l.b16 %v111
  %v405 = vunpack.c.l.b16 %v112
  %v406 = vunpack.c.l.b16 %v113
  %v407 = vunpack.c.l.b16 %v114
  %v408 = vunpack.c.l.b16 %v115
  %v409 = vunpack.c.l.b16 %v116
  %v410 = vunpack.c.l.b16 %v117
  %v411 = vunpack.c.l.b16 %v118
  %v412 = vunpack.c.l.b16 %v119
  %v413 = vunpack.c.l.b16 %v120
  %v414 = vunpack.c.l.b16 %v121
  %v415 = vunpack.c.l.b16 %v122
  %v416 = vunpack.c.l.b16 %v123
  %v417 = vunpack.c.l.b16 %v124
  %v418 = vunpack.c.l.b16 %v125
  %v419 = vunpack.c.l.b16 %v126
  %v420 = vunpack.c.l.b16 %v127
  %v421 = vunpack.c.l.b16 %v128
  %v422 = vunpack.c.l.b16 %v129
  %v423 = vunpack.c.l.b16 %v130
  %v424 = vunpack.c.l.b16 %v131
  %v425 = vunpack.c.l.b16 %v132
  %v426 = vunpack.c.l.b16 %v133
  %v427 = vunpack.c.l.b16 %v134
  %v428 = vunpack.c.l.b16 %v135
  %v429 = vunpack.c.l.b16 %v136
  %v430 = vunpack.c.l.b16 %v137
  %v431 = vunpack.c.l.b16 %v138
  %v432 = vunpack.c.l.b16 %v139
  %v433 = vunpack.c.l.b16 %v140
  %v434 = vunpack.c.l.b16 %v141
  %v435 = vpack.c.b16 %v328, %v327
  %v436 = vpack.c.b16 %v330, %v329
  %v437 = vpack.c.b16 %v332, %v331
  %v438 = vpack.c.b16 %v334, %v333
  %v439 = vpack.c.b16 %v336, %v335
  %v440 = vpack.c.b16 %v338, %v337
  %v441 = vpack.c.b16 %v340, %v339
  %v442 = vpack.c.b16 %v342, %v341
  %v443 = vpack.c.b16 %v344, %v343
  %v444 = vpack.c.b16 %v346, %v345
  %v445 = vpack.c.b16 %v348, %v347
  %v446 = vpack.c.b16 %v350, %v349
  %v447 = vpack.c.b16 %v352, %v351
  %v448 = vpack.c.b16 %v354, %v353
  %v449 = vpack.c.b16 %v356, %v355
  %v450 = vpack.c.b16 %v358, %v357
  %v451 = vpack.c.b16 %v360, %v359
  %v452 = vpack.c.b16 %v362, %v361
  %v453 = vpack.c.b16 %v364, %v363
  %v454 = vpack.c.b16 %v366, %v365
  %v455 = vpack.c.b16 %v368, %v367
  %v456 = vpack.c.b16 %v370, %v369
  %v457 = vpack.c.b16 %v372, %v371
  %v458 = vpack.c.b16 %v374, %v373
  %v459 = vpack.c.b16 %v376, %v375
  %v460 = vpack.c.b16 %v378, %v377
  %v461 = vpack.c.b16 %v380, %v379
  %v462 = vpack.c.b16 %v382, %v381
  %v463 = vpack.c.b16 %v384, %v383
  %v464 = vpack.c.b16 %v386, %v385
  %v465 = vpack.c.b16 %v388, %v387
  %v466 = vpack.c.b16 %v390, %v389
  %v467 = vpack.c.b16 %v392, %v391
  %v468 = vpack.c.b16 %v394, %v393
  %v469 = vpack.c.b16 %v396, %v395
  %v470 = vpack.c.b16 %v398, %v397
  %v471 = vpack.c.b16 %v400, %v399
  %v472 = vpack.c.b16 %v402, %v401
  %v473 = vpack.c.b16 %v404, %v403
  %v474 = vpack.c.b16 %v406, %v405
  %v475 = vpack.c.b16 %v408, %v407
  %v476 = vpack.c.b16 %v410, %v409
  %v477 = vpack.c.b16 %v412, %v411
  %v478 = vpack.c.b16 %v414, %v413
  %v479 = vpack.c.b16 %v416, %v415
  %v480 = vpack.c.b16 %v418, %v417
  %v481 = vpack.c.b16 %v420, %v419
  %v482 = vpack.c.b16 %v422, %v421
  %v483 = vpack.c.b16 %v424, %v423
  %v484 = vpack.c.b16 %v426, %v425
  %v485 = vpack.c.b16 %v428, %v427
  %v486 = vpack.c.b16 %v430, %v429
  %v487 = vpack.c.b16 %v432, %v431
  %v488 = vpack.c.b16 %v434, %v433
  %vm543 = vcmask 785408
  %v545 = vsel %vm543, %v199, 0
  %v548 = vsel %vm543, %v206, 0
  %550 = vmatprep.subr.bf16.mxu0 0
  %551 = vmatpush1.bf16.msra.mxu0 %v435
  %552 = vmatprep.subr.bf16.mxu0 0
  %553 = vmatpush1.bf16.msra.mxu0 %v436
  %554 = vmatprep.subr.bf16.mxu0 0
  %555 = vmatpush1.bf16.msra.mxu0 %v437
  %556 = vmatprep.subr.bf16.mxu0 0
  %557 = vmatpush1.bf16.msra.mxu0 %v438
  %558 = vmatprep.subr.bf16.mxu0 0
  %559 = vmatpush1.bf16.msra.mxu0 %v439
  %560 = vmatprep.subr.bf16.mxu0 0
  %561 = vmatpush1.bf16.msra.mxu0 %v440
  %562 = vmatprep.subr.bf16.mxu0 0
  %563 = vmatpush1.bf16.msra.mxu0 %v441
  %564 = vmatprep.subr.bf16.mxu0 0
  %565 = vmatpush1.bf16.msra.mxu0 %v442
  %566 = vmatprep.subr.bf16.mxu0 0
  %567 = vmatpush1.bf16.msra.mxu0 %v443
  %568 = vmatprep.subr.bf16.mxu0 0
  %569 = vmatpush1.bf16.msra.mxu0 %v444
  %570 = vmatprep.subr.bf16.mxu0 0
  %571 = vmatpush1.bf16.msra.mxu0 %v445
  %572 = vmatprep.subr.bf16.mxu0 0
  %573 = vmatpush1.bf16.msra.mxu0 %v446
  %574 = vmatprep.subr.bf16.mxu0 0
  %575 = vmatpush1.bf16.msra.mxu0 %v447
  %576 = vmatprep.subr.bf16.mxu0 0
  %577 = vmatpush1.bf16.msra.mxu0 %v448
  %578 = vmatprep.subr.bf16.mxu0 0
  %579 = vmatpush1.bf16.msra.mxu0 %v449
  %580 = vmatprep.subr.bf16.mxu0 0
  %581 = vmatpush1.bf16.msra.mxu0 %v450
  %582 = vmatprep.mubr.bf16.mxu0 %v194
  %583 = vmatmul.mubr.bf16.gmra.mrb[0].mxu0 %v193
  %v584 = vpop.f32.mrb[0].mxu0
  %v585 = vadd.f32 %v147, %v584
  %v586 = vpop.f32.mrb[0].mxu0
  %v587 = vpop.f32.mrb[0].mxu0
  %v588 = vadd.f32 %v147, %v587
  %v589 = vpop.f32.mrb[0].mxu0
  %590 = vmatprep.mubr.bf16.mxu0 %v201
  %591 = vmatmul.mubr.bf16.gmra.mrb[0].mxu0 %v200
  %v592 = vpop.f32.mrb[0].mxu0
  %v593 = vadd.f32 %v147, %v592
  %v594 = vpop.f32.mrb[0].mxu0
  %v595 = vpop.f32.mrb[0].mxu0
  %v596 = vadd.f32 %v147, %v595
  %v597 = vpop.f32.mrb[0].mxu0
  %598 = vdwg.mxu0
  %599 = vmatprep.subr.bf16.mxu0 0
  %600 = vmatpush1.bf16.msra.mxu0 %v451
  %601 = vmatprep.subr.bf16.mxu0 0
  %602 = vmatpush1.bf16.msra.mxu0 %v452
  %603 = vmatprep.subr.bf16.mxu0 0
  %604 = vmatpush1.bf16.msra.mxu0 %v453
  %605 = vmatprep.subr.bf16.mxu0 0
  %606 = vmatpush1.bf16.msra.mxu0 %v454
  %607 = vmatprep.subr.bf16.mxu0 0
  %608 = vmatpush1.bf16.msra.mxu0 %v455
  %609 = vmatprep.subr.bf16.mxu0 0
  %610 = vmatpush1.bf16.msra.mxu0 %v456
  %611 = vmatprep.subr.bf16.mxu0 0
  %612 = vmatpush1.bf16.msra.mxu0 %v457
  %613 = vmatprep.subr.bf16.mxu0 0
  %614 = vmatpush1.bf16.msra.mxu0 %v458
  %615 = vmatprep.subr.bf16.mxu0 0
  %616 = vmatpush1.bf16.msra.mxu0 %v459
  %617 = vmatprep.subr.bf16.mxu0 0
  %618 = vmatpush1.bf16.msra.mxu0 %v460
  %619 = vmatprep.subr.bf16.mxu0 0
  %620 = vmatpush1.bf16.msra.mxu0 %v461
  %621 = vmatprep.subr.bf16.mxu0 0
  %622 = vmatpush1.bf16.msra.mxu0 %v462
  %623 = vmatprep.subr.bf16.mxu0 0
  %624 = vmatpush1.bf16.msra.mxu0 %v463
  %625 = vmatprep.subr.bf16.mxu0 0
  %626 = vmatpush1.bf16.msra.mxu0 %v464
  %627 = vmatprep.subr.bf16.mxu0 0
  %628 = vmatpush1.bf16.msra.mxu0 %v465
  %629 = vmatprep.subr.bf16.mxu0 0
  %630 = vmatpush1.bf16.msra.mxu0 %v466
  %631 = vmatprep.mubr.bf16.mxu0 %v196
  %632 = vmatmul.mubr.bf16.gmra.mrb[0].mxu0 %v195
  %v633 = vpop.f32.mrb[0].mxu0
  %v634 = vadd.f32 %v585, %v633
  %v635 = vpop.f32.mrb[0].mxu0
  %v636 = vpop.f32.mrb[0].mxu0
  %v637 = vadd.f32 %v588, %v636
  %v638 = vpop.f32.mrb[0].mxu0
  %639 = vmatprep.mubr.bf16.mxu0 %v203
  %640 = vmatmul.mubr.bf16.gmra.mrb[0].mxu0 %v202
  %v641 = vpop.f32.mrb[0].mxu0
  %v642 = vadd.f32 %v593, %v641
  %v643 = vpop.f32.mrb[0].mxu0
  %v644 = vpop.f32.mrb[0].mxu0
  %v645 = vadd.f32 %v596, %v644
  %v646 = vpop.f32.mrb[0].mxu0
  %647 = vdwg.mxu0
  %648 = vmatprep.subr.bf16.mxu0 0
  %649 = vmatpush1.bf16.msra.mxu0 %v467
  %650 = vmatprep.subr.bf16.mxu0 0
  %651 = vmatpush1.bf16.msra.mxu0 %v468
  %652 = vmatprep.subr.bf16.mxu0 0
  %653 = vmatpush1.bf16.msra.mxu0 %v469
  %654 = vmatprep.subr.bf16.mxu0 0
  %655 = vmatpush1.bf16.msra.mxu0 %v470
  %656 = vmatprep.subr.bf16.mxu0 0
  %657 = vmatpush1.bf16.msra.mxu0 %v471
  %658 = vmatprep.subr.bf16.mxu0 0
  %659 = vmatpush1.bf16.msra.mxu0 %v472
  %660 = vmatprep.subr.bf16.mxu0 0
  %661 = vmatpush1.bf16.msra.mxu0 %v473
  %662 = vmatprep.subr.bf16.mxu0 0
  %663 = vmatpush1.bf16.msra.mxu0 %v474
  %664 = vmatprep.subr.bf16.mxu0 0
  %665 = vmatpush1.bf16.msra.mxu0 %v475
  %666 = vmatprep.subr.bf16.mxu0 0
  %667 = vmatpush1.bf16.msra.mxu0 %v476
  %668 = vmatprep.subr.bf16.mxu0 0
  %669 = vmatpush1.bf16.msra.mxu0 %v477
  %670 = vmatprep.subr.bf16.mxu0 0
  %671 = vmatpush1.bf16.msra.mxu0 %v478
  %672 = vmatprep.subr.bf16.mxu0 0
  %673 = vmatpush1.bf16.msra.mxu0 %v479
  %674 = vmatprep.subr.bf16.mxu0 0
  %675 = vmatpush1.bf16.msra.mxu0 %v480
  %676 = vmatprep.subr.bf16.mxu0 0
  %677 = vmatpush1.bf16.msra.mxu0 %v481
  %678 = vmatprep.subr.bf16.mxu0 0
  %679 = vmatpush1.bf16.msra.mxu0 %v482
  %680 = vmatprep.mubr.bf16.mxu0 %v198
  %681 = vmatmul.mubr.bf16.gmra.mrb[0].mxu0 %v197
  %v682 = vpop.f32.mrb[0].mxu0
  %v683 = vadd.f32 %v634, %v682
  %v684 = vpop.f32.mrb[0].mxu0
  %v685 = vpop.f32.mrb[0].mxu0
  %v686 = vadd.f32 %v637, %v685
  %v687 = vpop.f32.mrb[0].mxu0
  %688 = vmatprep.mubr.bf16.mxu0 %v205
  %689 = vmatmul.mubr.bf16.gmra.mrb[0].mxu0 %v204
  %v690 = vpop.f32.mrb[0].mxu0
  %v691 = vadd.f32 %v642, %v690
  %v692 = vpop.f32.mrb[0].mxu0
  %v693 = vpop.f32.mrb[0].mxu0
  %v694 = vadd.f32 %v645, %v693
  %v695 = vpop.f32.mrb[0].mxu0
  %696 = vdwg.mxu0
  %697 = vmatprep.subr.bf16.mxu0 0
  %698 = vmatpush1.bf16.msra.mxu0 %v483
  %699 = vmatprep.subr.bf16.mxu0 0
  %700 = vmatpush1.bf16.msra.mxu0 %v484
  %701 = vmatprep.subr.bf16.mxu0 0
  %702 = vmatpush1.bf16.msra.mxu0 %v485
  %703 = vmatprep.subr.bf16.mxu0 0
  %704 = vmatpush1.bf16.msra.mxu0 %v486
  %705 = vmatprep.subr.bf16.mxu0 0
  %706 = vmatpush1.bf16.msra.mxu0 %v487
  %707 = vmatprep.subr.bf16.mxu0 0
  %708 = vmatpush1.bf16.msra.mxu0 %v488
  %709 = vmatprep.subr.bf16.mxu0 0
  %710 = vmatpush1.bf16.msra.mxu0 0
  %711 = vmatprep.subr.bf16.mxu0 0
  %712 = vmatpush1.bf16.msra.mxu0 0
  %713 = vmatprep.subr.bf16.mxu0 0
  %714 = vmatpush1.bf16.msra.mxu0 0
  %715 = vmatprep.subr.bf16.mxu0 0
  %716 = vmatpush1.bf16.msra.mxu0 0
  %717 = vmatprep.subr.bf16.mxu0 0
  %718 = vmatpush1.bf16.msra.mxu0 0
  %719 = vmatprep.subr.bf16.mxu0 0
  %720 = vmatpush1.bf16.msra.mxu0 0
  %721 = vmatprep.subr.bf16.mxu0 0
  %722 = vmatpush1.bf16.msra.mxu0 0
  %723 = vmatprep.subr.bf16.mxu0 0
  %724 = vmatpush1.bf16.msra.mxu0 0
  %725 = vmatprep.subr.bf16.mxu0 0
  %726 = vmatpush1.bf16.msra.mxu0 0
  %727 = vmatprep.subr.bf16.mxu0 0
  %728 = vmatpush1.bf16.msra.mxu0 0
  %729 = vmatprep.mubr.bf16.mxu0 0
  %730 = vmatmul.mubr.bf16.gmra.mrb[0].mxu0 %v545
  %v731 = vpop.f32.mrb[0].mxu0
  %v732 = vadd.f32 %v683, %v731
  %v733 = vpop.f32.mrb[0].mxu0
  %v734 = vpop.f32.mrb[0].mxu0
  %v735 = vadd.f32 %v686, %v734
  %v736 = vpop.f32.mrb[0].mxu0
  %737 = vmatprep.mubr.bf16.mxu0 0
  %738 = vmatmul.mubr.bf16.gmra.mrb[0].mxu0 %v548
  %v739 = vpop.f32.mrb[0].mxu0
  %v740 = vadd.f32 %v691, %v739
  %v741 = vpop.f32.mrb[0].mxu0
  %v742 = vpop.f32.mrb[0].mxu0
  %v743 = vadd.f32 %v694, %v742
  %v744 = vpop.f32.mrb[0].mxu0
  %745 = vdwg.mxu0
  %v746 = vld [vmem:[%s3] sm:$0xf]
  %v747 = vld [vmem:[%s3 + $0x4] sm:$0xf]
  %v748 = vld [vmem:[%s3 + $0x8] sm:$0xf]
  %v749 = vld [vmem:[%s3 + $0xc] sm:$0xf]
  %v750 = vunpack.c.l.bf16 %v746
  %v751 = vunpack.c.l.bf16 %v747
  %v752 = vunpack.c.l.bf16 %v748
  %v753 = vunpack.c.l.bf16 %v749
  %v754 = vmax.f32 %v732, 0.0
  %v755 = vmax.f32 %v735, 0.0
  %v756 = vmax.f32 %v740, 0.0
  %v757 = vmax.f32 %v743, 0.0
  %v758 = vadd.f32 %v754, %v750
  %v759 = vadd.f32 %v755, %v751
  %v760 = vadd.f32 %v756, %v752
  %v761 = vadd.f32 %v757, %v753
  %v762 = vpack.c.bf16 %v759, %v758
  %v763 = vpack.c.bf16 %v761, %v760
  %v766 = vunpack.c.l.b16 %v762
  %v767 = vunpack.c.h.b16 %v762
  %v768 = vunpack.c.l.b16 %v763
  %v769 = vunpack.c.h.b16 %v763
  %v770 = vpack.c.b16 %v766, %v766
  %v771 = vpack.c.b16 %v767, %v767
  %v772 = vpack.c.b16 %v768, %v768
  %v773 = vpack.c.b16 %v769, %v769
  %778 = vst [vmem:[%s4] sm:$0xf] %v770
  %779 = vst [vmem:[%s4 + $0x4] sm:$0xf] %v771
  %780 = vst [vmem:[%s4 + $0x8] sm:$0xf] %v772
  %781 = vst [vmem:[%s4 + $0xc] sm:$0xf] %v773
  // Predicated region
  $region18: #{simple_generator.43} parent=0 // pred_check
    _
  $region19: #{simple_generator.43} parent=0 // pred_check_branch
    %783 = sbr.rel (0) target = $region21
  $region20: #{simple_generator.43} parent=0 // pred_region
    _
  $region21: #{simple_generator.43} parent=0 // pred_fallthru
    _
  // Predicated region
  $region22: #{simple_generator.43} parent=0 // pred_check
    _
  $region23: #{simple_generator.43} parent=0 // pred_check_branch
    %785 = sbr.rel (0) target = $region25
  $region24: #{simple_generator.43} parent=0 // pred_region
    _
  $region25: #{simple_generator.43} parent=0 // pred_fallthru
    _

// kernel: simple_generator.45
$region0: #{simple_generator.45}
  #allocation0 [shape = 'u32[]', space=smem, size = 0x4, offset = 0x4, fixed_abs, tag = 'smem constant byte address 0x4 - core index']
  #allocation1 [shape = 'u32[144,128]{1,0:T(1,128)}', space=vmem, size = 0x12000, scoped, tag = 'internal scratch']
  %s0 = inlined_call_operand.vmem [shape: bf16[128,576], index: 0, kind: input, shape index: {}]
  %s1 = inlined_call_operand.vmem [shape: bf16[576,128], index: 1, kind: input, shape index: {}]
  %s2 = inlined_call_operand.vmem [shape: f32[1,128], index: 2, kind: input, shape index: {}]
  %s3 = inlined_call_operand.vmem [shape: bf16[128,128], index: 3, kind: input, shape index: {}]
  %s4 = inlined_call_operand.vmem [shape: bf16[128,128], index: 4, kind: output, shape index: {}]
  %s5 = sld [smem:[#allocation0]]
  $region26: #{simple_generator.45} parent=0
    _
  %s7 = ssub.s32 1, %s5
  %s8 = scalar_select 0, %s7, %s5
  // Predicated region
  $region2: #{simple_generator.45} parent=0 // pred_check
    _
  $region3: #{simple_generator.45} parent=0 // pred_check_branch
    %10 = sbr.rel (0) target = $region5
  $region4: #{simple_generator.45} parent=0 // pred_region
    _
  $region5: #{simple_generator.45} parent=0 // pred_fallthru
    _
  // Predicated region
  $region6: #{simple_generator.45} parent=0 // pred_check
    _
  $region7: #{simple_generator.45} parent=0 // pred_check_branch
    %12 = sbr.rel (0) target = $region9
  $region8: #{simple_generator.45} parent=0 // pred_region
    _
  $region9: #{simple_generator.45} parent=0 // pred_fallthru
    _
  // Predicated region
  $region10: #{simple_generator.45} parent=0 // pred_check
    _
  $region11: #{simple_generator.45} parent=0 // pred_check_branch
    %14 = sbr.rel (0) target = $region13
  $region12: #{simple_generator.45} parent=0 // pred_region
    _
  $region13: #{simple_generator.45} parent=0 // pred_fallthru
    _
  // Predicated region
  $region14: #{simple_generator.45} parent=0 // pred_check
    _
  $region15: #{simple_generator.45} parent=0 // pred_check_branch
    %16 = sbr.rel (0) target = $region17
  $region16: #{simple_generator.45} parent=0 // pred_region
    _
  $region17: #{simple_generator.45} parent=0 // pred_fallthru
    _
  %v18 = vld [vmem:[%s0] sm:$0xff]
  %v19 = vld [vmem:[%s0 + $0x8] sm:$0xff]
  %v20 = vld [vmem:[%s0 + $0x10] sm:$0xf]
  %v21 = vld [vmem:[%s0 + $0x14] sm:$0xff]
  %v22 = vld [vmem:[%s0 + $0x1c] sm:$0xff]
  %v23 = vld [vmem:[%s0 + $0x24] sm:$0xf]
  %v24 = vld [vmem:[%s0 + $0x28] sm:$0xff]
  %v25 = vld [vmem:[%s0 + $0x30] sm:$0xff]
  %v26 = vld [vmem:[%s0 + $0x38] sm:$0xf]
  %v27 = vld [vmem:[%s0 + $0x3c] sm:$0xff]
  %v28 = vld [vmem:[%s0 + $0x44] sm:$0xff]
  %v29 = vld [vmem:[%s0 + $0x4c] sm:$0xf]
  %v30 = vld [vmem:[%s0 + $0x50] sm:$0xff]
  %v31 = vld [vmem:[%s0 + $0x58] sm:$0xff]
  %v32 = vld [vmem:[%s0 + $0x60] sm:$0xf]
  %v33 = vld [vmem:[%s0 + $0x64] sm:$0xff]
  %v34 = vld [vmem:[%s0 + $0x6c] sm:$0xff]
  %v35 = vld [vmem:[%s0 + $0x74] sm:$0xf]
  %v36 = vld [vmem:[%s0 + $0x78] sm:$0xff]
  %v37 = vld [vmem:[%s0 + $0x80] sm:$0xff]
  %v38 = vld [vmem:[%s0 + $0x88] sm:$0xf]
  %v39 = vld [vmem:[%s0 + $0x8c] sm:$0xff]
  %v40 = vld [vmem:[%s0 + $0x94] sm:$0xff]
  %v41 = vld [vmem:[%s0 + $0x9c] sm:$0xf]
  %v42 = vld [vmem:[%s0 + $0xa0] sm:$0xff]
  %v43 = vld [vmem:[%s0 + $0xa8] sm:$0xff]
  %v44 = vld [vmem:[%s0 + $0xb0] sm:$0xf]
  %v45 = vld [vmem:[%s0 + $0xb4] sm:$0xff]
  %v46 = vld [vmem:[%s0 + $0xbc] sm:$0xff]
  %v47 = vld [vmem:[%s0 + $0xc4] sm:$0xf]
  %v48 = vld [vmem:[%s0 + $0xc8] sm:$0xff]
  %v49 = vld [vmem:[%s0 + $0xd0] sm:$0xff]
  %v50 = vld [vmem:[%s0 + $0xd8] sm:$0xf]
  %v51 = vld [vmem:[%s0 + $0xdc] sm:$0xff]
  %v52 = vld [vmem:[%s0 + $0xe4] sm:$0xff]
  %v53 = vld [vmem:[%s0 + $0xec] sm:$0xf]
  %v54 = vld [vmem:[%s0 + $0xf0] sm:$0xff]
  %v55 = vld [vmem:[%s0 + $0xf8] sm:$0xff]
  %v56 = vld [vmem:[%s0 + $0x100] sm:$0xf]
  %v57 = vld [vmem:[%s0 + $0x104] sm:$0xff]
  %v58 = vld [vmem:[%s0 + $0x10c] sm:$0xff]
  %v59 = vld [vmem:[%s0 + $0x114] sm:$0xf]
  %v60 = vld [vmem:[%s0 + $0x118] sm:$0xff]
  %v61 = vld [vmem:[%s0 + $0x120] sm:$0xff]
  %v62 = vld [vmem:[%s0 + $0x128] sm:$0xf]
  %v63 = vld [vmem:[%s0 + $0x12c] sm:$0xff]
  %v64 = vld [vmem:[%s0 + $0x134] sm:$0xff]
  %v65 = vld [vmem:[%s0 + $0x13c] sm:$0xf]
  %v66 = vld [vmem:[%s1] sm:$0xf]
  %v67 = vld [vmem:[%s1 + $0x4] sm:$0xf]
  %v68 = vld [vmem:[%s1 + $0x8] sm:$0xf]
  %v69 = vld [vmem:[%s1 + $0xc] sm:$0xf]
  %v70 = vld [vmem:[%s1 + $0x10] sm:$0xf]
  %v71 = vld [vmem:[%s1 + $0x14] sm:$0xf]
  %v72 = vld [vmem:[%s1 + $0x18] sm:$0xf]
  %v73 = vld [vmem:[%s1 + $0x1c] sm:$0xf]
  %v74 = vld [vmem:[%s1 + $0x20] sm:$0xf]
  %v75 = vld [vmem:[%s1 + $0x24] sm:$0xf]
  %v76 = vld [vmem:[%s1 + $0x28] sm:$0xf]
  %v77 = vld [vmem:[%s1 + $0x2c] sm:$0xf]
  %v78 = vld [vmem:[%s1 + $0x30] sm:$0xf]
  %v79 = vld [vmem:[%s1 + $0x34] sm:$0xf]
  %v80 = vld [vmem:[%s1 + $0x38] sm:$0xf]
  %v81 = vld [vmem:[%s1 + $0x3c] sm:$0xf]
  %v82 = vld [vmem:[%s1 + $0x40] sm:$0xf]
  %v83 = vld [vmem:[%s1 + $0x44] sm:$0xf]
  %v84 = vld [vmem:[%s1 + $0x48] sm:$0xf]
  %v85 = vld [vmem:[%s1 + $0x4c] sm:$0xf]
  %v86 = vld [vmem:[%s1 + $0x50] sm:$0xf]
  %v87 = vld [vmem:[%s1 + $0x54] sm:$0xf]
  %v88 = vld [vmem:[%s1 + $0x58] sm:$0xf]
  %v89 = vld [vmem:[%s1 + $0x5c] sm:$0xf]
  %v90 = vld [vmem:[%s1 + $0x60] sm:$0xf]
  %v91 = vld [vmem:[%s1 + $0x64] sm:$0xf]
  %v92 = vld [vmem:[%s1 + $0x68] sm:$0xf]
  %v93 = vld [vmem:[%s1 + $0x6c] sm:$0xf]
  %v94 = vld [vmem:[%s1 + $0x70] sm:$0xf]
  %v95 = vld [vmem:[%s1 + $0x74] sm:$0xf]
  %v96 = vld [vmem:[%s1 + $0x78] sm:$0xf]
  %v97 = vld [vmem:[%s1 + $0x7c] sm:$0xf]
  %v98 = vld [vmem:[%s1 + $0x80] sm:$0xf]
  %v99 = vld [vmem:[%s1 + $0x84] sm:$0xf]
  %v100 = vld [vmem:[%s1 + $0x88] sm:$0xf]
  %v101 = vld [vmem:[%s1 + $0x8c] sm:$0xf]
  %v102 = vld [vmem:[%s1 + $0x90] sm:$0xf]
  %v103 = vld [vmem:[%s1 + $0x94] sm:$0xf]
  %v104 = vld [vmem:[%s1 + $0x98] sm:$0xf]
  %v105 = vld [vmem:[%s1 + $0x9c] sm:$0xf]
  %v106 = vld [vmem:[%s1 + $0xa0] sm:$0xf]
  %v107 = vld [vmem:[%s1 + $0xa4] sm:$0xf]
  %v108 = vld [vmem:[%s1 + $0xa8] sm:$0xf]
  %v109 = vld [vmem:[%s1 + $0xac] sm:$0xf]
  %v110 = vld [vmem:[%s1 + $0xb0] sm:$0xf]
  %v111 = vld [vmem:[%s1 + $0xb4] sm:$0xf]
  %v112 = vld [vmem:[%s1 + $0xb8] sm:$0xf]
  %v113 = vld [vmem:[%s1 + $0xbc] sm:$0xf]
  %v114 = vld [vmem:[%s1 + $0xc0] sm:$0xf]
  %v115 = vld [vmem:[%s1 + $0xc4] sm:$0xf]
  %v116 = vld [vmem:[%s1 + $0xc8] sm:$0xf]
  %v117 = vld [vmem:[%s1 + $0xcc] sm:$0xf]
  %v118 = vld [vmem:[%s1 + $0xd0] sm:$0xf]
  %v119 = vld [vmem:[%s1 + $0xd4] sm:$0xf]
  %v120 = vld [vmem:[%s1 + $0xd8] sm:$0xf]
  %v121 = vld [vmem:[%s1 + $0xdc] sm:$0xf]
  %v122 = vld [vmem:[%s1 + $0xe0] sm:$0xf]
  %v123 = vld [vmem:[%s1 + $0xe4] sm:$0xf]
  %v124 = vld [vmem:[%s1 + $0xe8] sm:$0xf]
  %v125 = vld [vmem:[%s1 + $0xec] sm:$0xf]
  %v126 = vld [vmem:[%s1 + $0xf0] sm:$0xf]
  %v127 = vld [vmem:[%s1 + $0xf4] sm:$0xf]
  %v128 = vld [vmem:[%s1 + $0xf8] sm:$0xf]
  %v129 = vld [vmem:[%s1 + $0xfc] sm:$0xf]
  %v130 = vld [vmem:[%s1 + $0x100] sm:$0xf]
  %v131 = vld [vmem:[%s1 + $0x104] sm:$0xf]
  %v132 = vld [vmem:[%s1 + $0x108] sm:$0xf]
  %v133 = vld [vmem:[%s1 + $0x10c] sm:$0xf]
  %v134 = vld [vmem:[%s1 + $0x110] sm:$0xf]
  %v135 = vld [vmem:[%s1 + $0x114] sm:$0xf]
  %v136 = vld [vmem:[%s1 + $0x118] sm:$0xf]
  %v137 = vld [vmem:[%s1 + $0x11c] sm:$0xf]
  %v138 = vld [vmem:[%s2] sm:$0x1]
  %v140 = vlaneseq
  %v141 = vshrl.u32 %v140, 7
  %v142 = vsub.s32 0, %v141
  %v143 = vrot.slane %v138, %v142
  %v193 = vunpack.c.l.b16 %v18
  %v194 = vunpack.c.h.b16 %v18
  %v195 = vunpack.c.l.b16 %v19
  %v196 = vunpack.c.h.b16 %v19
  %v197 = vunpack.c.l.b16 %v20
  %v198 = vunpack.c.l.b16 %v21
  %v199 = vunpack.c.h.b16 %v21
  %v200 = vunpack.c.l.b16 %v22
  %v201 = vunpack.c.h.b16 %v22
  %v202 = vunpack.c.l.b16 %v23
  %v203 = vunpack.c.l.b16 %v24
  %v204 = vunpack.c.h.b16 %v24
  %v205 = vunpack.c.l.b16 %v25
  %v206 = vunpack.c.h.b16 %v25
  %v207 = vunpack.c.l.b16 %v26
  %v208 = vunpack.c.l.b16 %v27
  %v209 = vunpack.c.h.b16 %v27
  %v210 = vunpack.c.l.b16 %v28
  %v211 = vunpack.c.h.b16 %v28
  %v212 = vunpack.c.l.b16 %v29
  %v213 = vunpack.c.l.b16 %v30
  %v214 = vunpack.c.h.b16 %v30
  %v215 = vunpack.c.l.b16 %v31
  %v216 = vunpack.c.h.b16 %v31
  %v217 = vunpack.c.l.b16 %v32
  %v218 = vunpack.c.l.b16 %v33
  %v219 = vunpack.c.h.b16 %v33
  %v220 = vunpack.c.l.b16 %v34
  %v221 = vunpack.c.h.b16 %v34
  %v222 = vunpack.c.l.b16 %v35
  %v223 = vunpack.c.l.b16 %v36
  %v224 = vunpack.c.h.b16 %v36
  %v225 = vunpack.c.l.b16 %v37
  %v226 = vunpack.c.h.b16 %v37
  %v227 = vunpack.c.l.b16 %v38
  %v228 = vunpack.c.l.b16 %v39
  %v229 = vunpack.c.h.b16 %v39
  %v230 = vunpack.c.l.b16 %v40
  %v231 = vunpack.c.h.b16 %v40
  %v232 = vunpack.c.l.b16 %v41
  %v233 = vunpack.c.l.b16 %v42
  %v234 = vunpack.c.h.b16 %v42
  %v235 = vunpack.c.l.b16 %v43
  %v236 = vunpack.c.h.b16 %v43
  %v237 = vunpack.c.l.b16 %v44
  %v238 = vunpack.c.l.b16 %v45
  %v239 = vunpack.c.h.b16 %v45
  %v240 = vunpack.c.l.b16 %v46
  %v241 = vunpack.c.h.b16 %v46
  %v242 = vunpack.c.l.b16 %v47
  %v243 = vunpack.c.l.b16 %v48
  %v244 = vunpack.c.h.b16 %v48
  %v245 = vunpack.c.l.b16 %v49
  %v246 = vunpack.c.h.b16 %v49
  %v247 = vunpack.c.l.b16 %v50
  %v248 = vunpack.c.l.b16 %v51
  %v249 = vunpack.c.h.b16 %v51
  %v250 = vunpack.c.l.b16 %v52
  %v251 = vunpack.c.h.b16 %v52
  %v252 = vunpack.c.l.b16 %v53
  %v253 = vunpack.c.l.b16 %v54
  %v254 = vunpack.c.h.b16 %v54
  %v255 = vunpack.c.l.b16 %v55
  %v256 = vunpack.c.h.b16 %v55
  %v257 = vunpack.c.l.b16 %v56
  %v258 = vunpack.c.l.b16 %v57
  %v259 = vunpack.c.h.b16 %v57
  %v260 = vunpack.c.l.b16 %v58
  %v261 = vunpack.c.h.b16 %v58
  %v262 = vunpack.c.l.b16 %v59
  %v263 = vunpack.c.l.b16 %v60
  %v264 = vunpack.c.h.b16 %v60
  %v265 = vunpack.c.l.b16 %v61
  %v266 = vunpack.c.h.b16 %v61
  %v267 = vunpack.c.l.b16 %v62
  %v268 = vunpack.c.l.b16 %v63
  %v269 = vunpack.c.h.b16 %v63
  %v270 = vunpack.c.l.b16 %v64
  %v271 = vunpack.c.h.b16 %v64
  %v272 = vunpack.c.l.b16 %v65
  %v273 = vpack.c.b16 %v198, %v193
  %v274 = vpack.c.b16 %v199, %v194
  %v275 = vpack.c.b16 %v200, %v195
  %v276 = vpack.c.b16 %v201, %v196
  %v277 = vpack.c.b16 %v202, %v197
  %v278 = vpack.c.b16 %v208, %v203
  %v279 = vpack.c.b16 %v209, %v204
  %v280 = vpack.c.b16 %v210, %v205
  %v281 = vpack.c.b16 %v211, %v206
  %v282 = vpack.c.b16 %v212, %v207
  %v283 = vpack.c.b16 %v218, %v213
  %v284 = vpack.c.b16 %v219, %v214
  %v285 = vpack.c.b16 %v220, %v215
  %v286 = vpack.c.b16 %v221, %v216
  %v287 = vpack.c.b16 %v222, %v217
  %v288 = vpack.c.b16 %v228, %v223
  %v289 = vpack.c.b16 %v229, %v224
  %v290 = vpack.c.b16 %v230, %v225
  %v291 = vpack.c.b16 %v231, %v226
  %v292 = vpack.c.b16 %v232, %v227
  %v293 = vpack.c.b16 %v238, %v233
  %v294 = vpack.c.b16 %v239, %v234
  %v295 = vpack.c.b16 %v240, %v235
  %v296 = vpack.c.b16 %v241, %v236
  %v297 = vpack.c.b16 %v242, %v237
  %v298 = vpack.c.b16 %v248, %v243
  %v299 = vpack.c.b16 %v249, %v244
  %v300 = vpack.c.b16 %v250, %v245
  %v301 = vpack.c.b16 %v251, %v246
  %v302 = vpack.c.b16 %v252, %v247
  %v303 = vpack.c.b16 %v258, %v253
  %v304 = vpack.c.b16 %v259, %v254
  %v305 = vpack.c.b16 %v260, %v255
  %v306 = vpack.c.b16 %v261, %v256
  %v307 = vpack.c.b16 %v262, %v257
  %v308 = vpack.c.b16 %v268, %v263
  %v309 = vpack.c.b16 %v269, %v264
  %v310 = vpack.c.b16 %v270, %v265
  %v311 = vpack.c.b16 %v271, %v266
  %v312 = vpack.c.b16 %v272, %v267
  %v417 = vunpack.c.l.b16 %v66
  %v418 = vunpack.c.l.b16 %v67
  %v419 = vunpack.c.l.b16 %v68
  %v420 = vunpack.c.l.b16 %v69
  %v421 = vunpack.c.l.b16 %v70
  %v422 = vunpack.c.l.b16 %v71
  %v423 = vunpack.c.l.b16 %v72
  %v424 = vunpack.c.l.b16 %v73
  %v425 = vunpack.c.l.b16 %v74
  %v426 = vunpack.c.l.b16 %v75
  %v427 = vunpack.c.l.b16 %v76
  %v428 = vunpack.c.l.b16 %v77
  %v429 = vunpack.c.l.b16 %v78
  %v430 = vunpack.c.l.b16 %v79
  %v431 = vunpack.c.l.b16 %v80
  %v432 = vunpack.c.l.b16 %v81
  %v433 = vunpack.c.l.b16 %v82
  %v434 = vunpack.c.l.b16 %v83
  %v435 = vunpack.c.l.b16 %v84
  %v436 = vunpack.c.l.b16 %v85
  %v437 = vunpack.c.l.b16 %v86
  %v438 = vunpack.c.l.b16 %v87
  %v439 = vunpack.c.l.b16 %v88
  %v440 = vunpack.c.l.b16 %v89
  %v441 = vunpack.c.l.b16 %v90
  %v442 = vunpack.c.l.b16 %v91
  %v443 = vunpack.c.l.b16 %v92
  %v444 = vunpack.c.l.b16 %v93
  %v445 = vunpack.c.l.b16 %v94
  %v446 = vunpack.c.l.b16 %v95
  %v447 = vunpack.c.l.b16 %v96
  %v448 = vunpack.c.l.b16 %v97
  %v449 = vunpack.c.l.b16 %v98
  %v450 = vunpack.c.l.b16 %v99
  %v451 = vunpack.c.l.b16 %v100
  %v452 = vunpack.c.l.b16 %v101
  %v453 = vunpack.c.l.b16 %v102
  %v454 = vunpack.c.l.b16 %v103
  %v455 = vunpack.c.l.b16 %v104
  %v456 = vunpack.c.l.b16 %v105
  %v457 = vunpack.c.l.b16 %v106
  %v458 = vunpack.c.l.b16 %v107
  %v459 = vunpack.c.l.b16 %v108
  %v460 = vunpack.c.l.b16 %v109
  %v461 = vunpack.c.l.b16 %v110
  %v462 = vunpack.c.l.b16 %v111
  %v463 = vunpack.c.l.b16 %v112
  %v464 = vunpack.c.l.b16 %v113
  %v465 = vunpack.c.l.b16 %v114
  %v466 = vunpack.c.l.b16 %v115
  %v467 = vunpack.c.l.b16 %v116
  %v468 = vunpack.c.l.b16 %v117
  %v469 = vunpack.c.l.b16 %v118
  %v470 = vunpack.c.l.b16 %v119
  %v471 = vunpack.c.l.b16 %v120
  %v472 = vunpack.c.l.b16 %v121
  %v473 = vunpack.c.l.b16 %v122
  %v474 = vunpack.c.l.b16 %v123
  %v475 = vunpack.c.l.b16 %v124
  %v476 = vunpack.c.l.b16 %v125
  %v477 = vunpack.c.l.b16 %v126
  %v478 = vunpack.c.l.b16 %v127
  %v479 = vunpack.c.l.b16 %v128
  %v480 = vunpack.c.l.b16 %v129
  %v481 = vunpack.c.l.b16 %v130
  %v482 = vunpack.c.l.b16 %v131
  %v483 = vunpack.c.l.b16 %v132
  %v484 = vunpack.c.l.b16 %v133
  %v485 = vunpack.c.l.b16 %v134
  %v486 = vunpack.c.l.b16 %v135
  %v487 = vunpack.c.l.b16 %v136
  %v488 = vunpack.c.l.b16 %v137
  %v489 = vpack.c.b16 %v418, %v417
  %v490 = vpack.c.b16 %v420, %v419
  %v491 = vpack.c.b16 %v422, %v421
  %v492 = vpack.c.b16 %v424, %v423
  %v493 = vpack.c.b16 %v426, %v425
  %v494 = vpack.c.b16 %v428, %v427
  %v495 = vpack.c.b16 %v430, %v429
  %v496 = vpack.c.b16 %v432, %v431
  %v497 = vpack.c.b16 %v434, %v433
  %v498 = vpack.c.b16 %v436, %v435
  %v499 = vpack.c.b16 %v438, %v437
  %v500 = vpack.c.b16 %v440, %v439
  %v501 = vpack.c.b16 %v442, %v441
  %v502 = vpack.c.b16 %v444, %v443
  %v503 = vpack.c.b16 %v446, %v445
  %v504 = vpack.c.b16 %v448, %v447
  %v505 = vpack.c.b16 %v450, %v449
  %v506 = vpack.c.b16 %v452, %v451
  %v507 = vpack.c.b16 %v454, %v453
  %v508 = vpack.c.b16 %v456, %v455
  %v509 = vpack.c.b16 %v458, %v457
  %v510 = vpack.c.b16 %v460, %v459
  %v511 = vpack.c.b16 %v462, %v461
  %v512 = vpack.c.b16 %v464, %v463
  %v513 = vpack.c.b16 %v466, %v465
  %v514 = vpack.c.b16 %v468, %v467
  %v515 = vpack.c.b16 %v470, %v469
  %v516 = vpack.c.b16 %v472, %v471
  %v517 = vpack.c.b16 %v474, %v473
  %v518 = vpack.c.b16 %v476, %v475
  %v519 = vpack.c.b16 %v478, %v477
  %v520 = vpack.c.b16 %v480, %v479
  %v521 = vpack.c.b16 %v482, %v481
  %v522 = vpack.c.b16 %v484, %v483
  %v523 = vpack.c.b16 %v486, %v485
  %v524 = vpack.c.b16 %v488, %v487
  %vm561 = vcmask 523264
  %v563 = vsel %vm561, %v277, 0
  %v566 = vsel %vm561, %v282, 0
  %v569 = vsel %vm561, %v287, 0
  %v572 = vsel %vm561, %v292, 0
  %v575 = vsel %vm561, %v297, 0
  %v578 = vsel %vm561, %v302, 0
  %v581 = vsel %vm561, %v307, 0
  %v584 = vsel %vm561, %v312, 0
  %586 = vmatprep.subr.bf16.mxu0 0
  %587 = vmatpush1.bf16.msra.mxu0 %v489
  %588 = vmatprep.subr.bf16.mxu0 0
  %589 = vmatpush1.bf16.msra.mxu0 %v490
  %590 = vmatprep.subr.bf16.mxu0 0
  %591 = vmatpush1.bf16.msra.mxu0 %v491
  %592 = vmatprep.subr.bf16.mxu0 0
  %593 = vmatpush1.bf16.msra.mxu0 %v492
  %594 = vmatprep.subr.bf16.mxu0 0
  %595 = vmatpush1.bf16.msra.mxu0 %v493
  %596 = vmatprep.subr.bf16.mxu0 0
  %597 = vmatpush1.bf16.msra.mxu0 %v494
  %598 = vmatprep.subr.bf16.mxu0 0
  %599 = vmatpush1.bf16.msra.mxu0 %v495
  %600 = vmatprep.subr.bf16.mxu0 0
  %601 = vmatpush1.bf16.msra.mxu0 %v496
  %602 = vmatprep.subr.bf16.mxu0 0
  %603 = vmatpush1.bf16.msra.mxu0 %v497
  %604 = vmatprep.subr.bf16.mxu0 0
  %605 = vmatpush1.bf16.msra.mxu0 %v498
  %606 = vmatprep.subr.bf16.mxu0 0
  %607 = vmatpush1.bf16.msra.mxu0 %v499
  %608 = vmatprep.subr.bf16.mxu0 0
  %609 = vmatpush1.bf16.msra.mxu0 %v500
  %610 = vmatprep.subr.bf16.mxu0 0
  %611 = vmatpush1.bf16.msra.mxu0 %v501
  %612 = vmatprep.subr.bf16.mxu0 0
  %613 = vmatpush1.bf16.msra.mxu0 %v502
  %614 = vmatprep.subr.bf16.mxu0 0
  %615 = vmatpush1.bf16.msra.mxu0 %v503
  %616 = vmatprep.subr.bf16.mxu0 0
  %617 = vmatpush1.bf16.msra.mxu0 %v504
  %618 = vmatprep.mubr.bf16.mxu0 %v274
  %619 = vmatmul.mubr.bf16.gmra.mrb[0].mxu0 %v273
  %v620 = vpop.f32.mrb[0].mxu0
  %v621 = vadd.f32 %v143, %v620
  %v622 = vpop.f32.mrb[0].mxu0
  %v623 = vpop.f32.mrb[0].mxu0
  %v624 = vadd.f32 %v143, %v623
  %v625 = vpop.f32.mrb[0].mxu0
  %626 = vmatprep.mubr.bf16.mxu0 %v279
  %627 = vmatmul.mubr.bf16.gmra.mrb[0].mxu0 %v278
  %v628 = vpop.f32.mrb[0].mxu0
  %v629 = vadd.f32 %v143, %v628
  %v630 = vpop.f32.mrb[0].mxu0
  %v631 = vpop.f32.mrb[0].mxu0
  %v632 = vadd.f32 %v143, %v631
  %v633 = vpop.f32.mrb[0].mxu0
  %634 = vmatprep.mubr.bf16.mxu0 %v284
  %635 = vmatmul.mubr.bf16.gmra.mrb[0].mxu0 %v283
  %v636 = vpop.f32.mrb[0].mxu0
  %v637 = vadd.f32 %v143, %v636
  %v638 = vpop.f32.mrb[0].mxu0
  %v639 = vpop.f32.mrb[0].mxu0
  %v640 = vadd.f32 %v143, %v639
  %v641 = vpop.f32.mrb[0].mxu0
  %642 = vmatprep.mubr.bf16.mxu0 %v289
  %643 = vmatmul.mubr.bf16.gmra.mrb[0].mxu0 %v288
  %v644 = vpop.f32.mrb[0].mxu0
  %v645 = vadd.f32 %v143, %v644
  %v646 = vpop.f32.mrb[0].mxu0
  %v647 = vpop.f32.mrb[0].mxu0
  %v648 = vadd.f32 %v143, %v647
  %v649 = vpop.f32.mrb[0].mxu0
  %650 = vmatprep.mubr.bf16.mxu0 %v294
  %651 = vmatmul.mubr.bf16.gmra.mrb[0].mxu0 %v293
  %v652 = vpop.f32.mrb[0].mxu0
  %v653 = vadd.f32 %v143, %v652
  %v654 = vpop.f32.mrb[0].mxu0
  %v655 = vpop.f32.mrb[0].mxu0
  %v656 = vadd.f32 %v143, %v655
  %v657 = vpop.f32.mrb[0].mxu0
  %658 = vmatprep.mubr.bf16.mxu0 %v299
  %659 = vmatmul.mubr.bf16.gmra.mrb[0].mxu0 %v298
  %v660 = vpop.f32.mrb[0].mxu0
  %v661 = vadd.f32 %v143, %v660
  %v662 = vpop.f32.mrb[0].mxu0
  %v663 = vpop.f32.mrb[0].mxu0
  %v664 = vadd.f32 %v143, %v663
  %v665 = vpop.f32.mrb[0].mxu0
  %666 = vmatprep.mubr.bf16.mxu0 %v304
  %667 = vmatmul.mubr.bf16.gmra.mrb[0].mxu0 %v303
  %v668 = vpop.f32.mrb[0].mxu0
  %v669 = vadd.f32 %v143, %v668
  %v670 = vpop.f32.mrb[0].mxu0
  %v671 = vpop.f32.mrb[0].mxu0
  %v672 = vadd.f32 %v143, %v671
  %v673 = vpop.f32.mrb[0].mxu0
  %674 = vmatprep.mubr.bf16.mxu0 %v309
  %675 = vmatmul.mubr.bf16.gmra.mrb[0].mxu0 %v308
  %v676 = vpop.f32.mrb[0].mxu0
  %v677 = vadd.f32 %v143, %v676
  %v678 = vpop.f32.mrb[0].mxu0
  %v679 = vpop.f32.mrb[0].mxu0
  %v680 = vadd.f32 %v143, %v679
  %v681 = vpop.f32.mrb[0].mxu0
  %682 = vdwg.mxu0
  %683 = vmatprep.subr.bf16.mxu0 0
  %684 = vmatpush1.bf16.msra.mxu0 %v505
  %685 = vmatprep.subr.bf16.mxu0 0
  %686 = vmatpush1.bf16.msra.mxu0 %v506
  %687 = vmatprep.subr.bf16.mxu0 0
  %688 = vmatpush1.bf16.msra.mxu0 %v507
  %689 = vmatprep.subr.bf16.mxu0 0
  %690 = vmatpush1.bf16.msra.mxu0 %v508
  %691 = vmatprep.subr.bf16.mxu0 0
  %692 = vmatpush1.bf16.msra.mxu0 %v509
  %693 = vmatprep.subr.bf16.mxu0 0
  %694 = vmatpush1.bf16.msra.mxu0 %v510
  %695 = vmatprep.subr.bf16.mxu0 0
  %696 = vmatpush1.bf16.msra.mxu0 %v511
  %697 = vmatprep.subr.bf16.mxu0 0
  %698 = vmatpush1.bf16.msra.mxu0 %v512
  %699 = vmatprep.subr.bf16.mxu0 0
  %700 = vmatpush1.bf16.msra.mxu0 %v513
  %701 = vmatprep.subr.bf16.mxu0 0
  %702 = vmatpush1.bf16.msra.mxu0 %v514
  %703 = vmatprep.subr.bf16.mxu0 0
  %704 = vmatpush1.bf16.msra.mxu0 %v515
  %705 = vmatprep.subr.bf16.mxu0 0
  %706 = vmatpush1.bf16.msra.mxu0 %v516
  %707 = vmatprep.subr.bf16.mxu0 0
  %708 = vmatpush1.bf16.msra.mxu0 %v517
  %709 = vmatprep.subr.bf16.mxu0 0
  %710 = vmatpush1.bf16.msra.mxu0 %v518
  %711 = vmatprep.subr.bf16.mxu0 0
  %712 = vmatpush1.bf16.msra.mxu0 %v519
  %713 = vmatprep.subr.bf16.mxu0 0
  %714 = vmatpush1.bf16.msra.mxu0 %v520
  %715 = vmatprep.mubr.bf16.mxu0 %v276
  %716 = vmatmul.mubr.bf16.gmra.mrb[0].mxu0 %v275
  %v717 = vpop.f32.mrb[0].mxu0
  %v718 = vadd.f32 %v621, %v717
  %v719 = vpop.f32.mrb[0].mxu0
  %v720 = vpop.f32.mrb[0].mxu0
  %v721 = vadd.f32 %v624, %v720
  %v722 = vpop.f32.mrb[0].mxu0
  %723 = vmatprep.mubr.bf16.mxu0 %v281
  %724 = vmatmul.mubr.bf16.gmra.mrb[0].mxu0 %v280
  %v725 = vpop.f32.mrb[0].mxu0
  %v726 = vadd.f32 %v629, %v725
  %v727 = vpop.f32.mrb[0].mxu0
  %v728 = vpop.f32.mrb[0].mxu0
  %v729 = vadd.f32 %v632, %v728
  %v730 = vpop.f32.mrb[0].mxu0
  %731 = vmatprep.mubr.bf16.mxu0 %v286
  %732 = vmatmul.mubr.bf16.gmra.mrb[0].mxu0 %v285
  %v733 = vpop.f32.mrb[0].mxu0
  %v734 = vadd.f32 %v637, %v733
  %v735 = vpop.f32.mrb[0].mxu0
  %v736 = vpop.f32.mrb[0].mxu0
  %v737 = vadd.f32 %v640, %v736
  %v738 = vpop.f32.mrb[0].mxu0
  %739 = vmatprep.mubr.bf16.mxu0 %v291
  %740 = vmatmul.mubr.bf16.gmra.mrb[0].mxu0 %v290
  %v741 = vpop.f32.mrb[0].mxu0
  %v742 = vadd.f32 %v645, %v741
  %v743 = vpop.f32.mrb[0].mxu0
  %v744 = vpop.f32.mrb[0].mxu0
  %v745 = vadd.f32 %v648, %v744
  %v746 = vpop.f32.mrb[0].mxu0
  %747 = vmatprep.mubr.bf16.mxu0 %v296
  %748 = vmatmul.mubr.bf16.gmra.mrb[0].mxu0 %v295
  %v749 = vpop.f32.mrb[0].mxu0
  %v750 = vadd.f32 %v653, %v749
  %v751 = vpop.f32.mrb[0].mxu0
  %v752 = vpop.f32.mrb[0].mxu0
  %v753 = vadd.f32 %v656, %v752
  %v754 = vpop.f32.mrb[0].mxu0
  %755 = vmatprep.mubr.bf16.mxu0 %v301
  %756 = vmatmul.mubr.bf16.gmra.mrb[0].mxu0 %v300
  %v757 = vpop.f32.mrb[0].mxu0
  %v758 = vadd.f32 %v661, %v757
  %v759 = vpop.f32.mrb[0].mxu0
  %v760 = vpop.f32.mrb[0].mxu0
  %v761 = vadd.f32 %v664, %v760
  %v762 = vpop.f32.mrb[0].mxu0
  %763 = vmatprep.mubr.bf16.mxu0 %v306
  %764 = vmatmul.mubr.bf16.gmra.mrb[0].mxu0 %v305
  %v765 = vpop.f32.mrb[0].mxu0
  %v766 = vadd.f32 %v669, %v765
  %v767 = vpop.f32.mrb[0].mxu0
  %v768 = vpop.f32.mrb[0].mxu0
  %v769 = vadd.f32 %v672, %v768
  %v770 = vpop.f32.mrb[0].mxu0
  %771 = vmatprep.mubr.bf16.mxu0 %v311
  %772 = vmatmul.mubr.bf16.gmra.mrb[0].mxu0 %v310
  %v773 = vpop.f32.mrb[0].mxu0
  %v774 = vadd.f32 %v677, %v773
  %v775 = vpop.f32.mrb[0].mxu0
  %v776 = vpop.f32.mrb[0].mxu0
  %v777 = vadd.f32 %v680, %v776
  %v778 = vpop.f32.mrb[0].mxu0
  %779 = vdwg.mxu0
  %780 = vmatprep.subr.bf16.mxu0 0
  %781 = vmatpush1.bf16.msra.mxu0 %v521
  %782 = vmatprep.subr.bf16.mxu0 0
  %783 = vmatpush1.bf16.msra.mxu0 %v522
  %784 = vmatprep.subr.bf16.mxu0 0
  %785 = vmatpush1.bf16.msra.mxu0 %v523
  %786 = vmatprep.subr.bf16.mxu0 0
  %787 = vmatpush1.bf16.msra.mxu0 %v524
  %788 = vmatprep.subr.bf16.mxu0 0
  %789 = vmatpush1.bf16.msra.mxu0 0
  %790 = vmatprep.subr.bf16.mxu0 0
  %791 = vmatpush1.bf16.msra.mxu0 0
  %792 = vmatprep.subr.bf16.mxu0 0
  %793 = vmatpush1.bf16.msra.mxu0 0
  %794 = vmatprep.subr.bf16.mxu0 0
  %795 = vmatpush1.bf16.msra.mxu0 0
  %796 = vmatprep.subr.bf16.mxu0 0
  %797 = vmatpush1.bf16.msra.mxu0 0
  %798 = vmatprep.subr.bf16.mxu0 0
  %799 = vmatpush1.bf16.msra.mxu0 0
  %800 = vmatprep.subr.bf16.mxu0 0
  %801 = vmatpush1.bf16.msra.mxu0 0
  %802 = vmatprep.subr.bf16.mxu0 0
  %803 = vmatpush1.bf16.msra.mxu0 0
  %804 = vmatprep.subr.bf16.mxu0 0
  %805 = vmatpush1.bf16.msra.mxu0 0
  %806 = vmatprep.subr.bf16.mxu0 0
  %807 = vmatpush1.bf16.msra.mxu0 0
  %808 = vmatprep.subr.bf16.mxu0 0
  %809 = vmatpush1.bf16.msra.mxu0 0
  %810 = vmatprep.subr.bf16.mxu0 0
  %811 = vmatpush1.bf16.msra.mxu0 0
  %812 = vmatprep.mubr.bf16.mxu0 0
  %813 = vmatmul.mubr.bf16.gmra.mrb[0].mxu0 %v563
  %v814 = vpop.f32.mrb[0].mxu0
  %v815 = vadd.f32 %v718, %v814
  %v816 = vpop.f32.mrb[0].mxu0
  %v817 = vpop.f32.mrb[0].mxu0
  %v818 = vadd.f32 %v721, %v817
  %v819 = vpop.f32.mrb[0].mxu0
  %820 = vmatprep.mubr.bf16.mxu0 0
  %821 = vmatmul.mubr.bf16.gmra.mrb[0].mxu0 %v566
  %v822 = vpop.f32.mrb[0].mxu0
  %v823 = vadd.f32 %v726, %v822
  %v824 = vpop.f32.mrb[0].mxu0
  %v825 = vpop.f32.mrb[0].mxu0
  %v826 = vadd.f32 %v729, %v825
  %v827 = vpop.f32.mrb[0].mxu0
  %828 = vmatprep.mubr.bf16.mxu0 0
  %829 = vmatmul.mubr.bf16.gmra.mrb[0].mxu0 %v569
  %v830 = vpop.f32.mrb[0].mxu0
  %v831 = vadd.f32 %v734, %v830
  %v832 = vpop.f32.mrb[0].mxu0
  %v833 = vpop.f32.mrb[0].mxu0
  %v834 = vadd.f32 %v737, %v833
  %v835 = vpop.f32.mrb[0].mxu0
  %836 = vmatprep.mubr.bf16.mxu0 0
  %837 = vmatmul.mubr.bf16.gmra.mrb[0].mxu0 %v572
  %v838 = vpop.f32.mrb[0].mxu0
  %v839 = vadd.f32 %v742, %v838
  %v840 = vpop.f32.mrb[0].mxu0
  %v841 = vpop.f32.mrb[0].mxu0
  %v842 = vadd.f32 %v745, %v841
  %v843 = vpop.f32.mrb[0].mxu0
  %844 = vmatprep.mubr.bf16.mxu0 0
  %845 = vmatmul.mubr.bf16.gmra.mrb[0].mxu0 %v575
  %v846 = vpop.f32.mrb[0].mxu0
  %v847 = vadd.f32 %v750, %v846
  %v848 = vpop.f32.mrb[0].mxu0
  %v849 = vpop.f32.mrb[0].mxu0
  %v850 = vadd.f32 %v753, %v849
  %v851 = vpop.f32.mrb[0].mxu0
  %852 = vmatprep.mubr.bf16.mxu0 0
  %853 = vmatmul.mubr.bf16.gmra.mrb[0].mxu0 %v578
  %v854 = vpop.f32.mrb[0].mxu0
  %v855 = vadd.f32 %v758, %v854
  %v856 = vpop.f32.mrb[0].mxu0
  %v857 = vpop.f32.mrb[0].mxu0
  %v858 = vadd.f32 %v761, %v857
  %v859 = vpop.f32.mrb[0].mxu0
  %860 = vmatprep.mubr.bf16.mxu0 0
  %861 = vmatmul.mubr.bf16.gmra.mrb[0].mxu0 %v581
  %v862 = vpop.f32.mrb[0].mxu0
  %v863 = vadd.f32 %v766, %v862
  %v864 = vpop.f32.mrb[0].mxu0
  %v865 = vpop.f32.mrb[0].mxu0
  %v866 = vadd.f32 %v769, %v865
  %v867 = vpop.f32.mrb[0].mxu0
  %868 = vmatprep.mubr.bf16.mxu0 0
  %869 = vmatmul.mubr.bf16.gmra.mrb[0].mxu0 %v584
  %v870 = vpop.f32.mrb[0].mxu0
  %v871 = vadd.f32 %v774, %v870
  %v872 = vpop.f32.mrb[0].mxu0
  %v873 = vpop.f32.mrb[0].mxu0
  %v874 = vadd.f32 %v777, %v873
  %v875 = vpop.f32.mrb[0].mxu0
  %876 = vdwg.mxu0
  %v877 = vld [vmem:[%s3] sm:$0xf]
  %v878 = vld [vmem:[%s3 + $0x4] sm:$0xf]
  %v879 = vld [vmem:[%s3 + $0x8] sm:$0xf]
  %v880 = vld [vmem:[%s3 + $0xc] sm:$0xf]
  %v881 = vld [vmem:[%s3 + $0x10] sm:$0xf]
  %v882 = vld [vmem:[%s3 + $0x14] sm:$0xf]
  %v883 = vld [vmem:[%s3 + $0x18] sm:$0xf]
  %v884 = vld [vmem:[%s3 + $0x1c] sm:$0xf]
  %v885 = vld [vmem:[%s3 + $0x20] sm:$0xf]
  %v886 = vld [vmem:[%s3 + $0x24] sm:$0xf]
  %v887 = vld [vmem:[%s3 + $0x28] sm:$0xf]
  %v888 = vld [vmem:[%s3 + $0x2c] sm:$0xf]
  %v889 = vld [vmem:[%s3 + $0x30] sm:$0xf]
  %v890 = vld [vmem:[%s3 + $0x34] sm:$0xf]
  %v891 = vld [vmem:[%s3 + $0x38] sm:$0xf]
  %v892 = vld [vmem:[%s3 + $0x3c] sm:$0xf]
  %v893 = vunpack.c.l.bf16 %v877
  %v894 = vunpack.c.l.bf16 %v878
  %v895 = vunpack.c.l.bf16 %v879
  %v896 = vunpack.c.l.bf16 %v880
  %v897 = vunpack.c.l.bf16 %v881
  %v898 = vunpack.c.l.bf16 %v882
  %v899 = vunpack.c.l.bf16 %v883
  %v900 = vunpack.c.l.bf16 %v884
  %v901 = vunpack.c.l.bf16 %v885
  %v902 = vunpack.c.l.bf16 %v886
  %v903 = vunpack.c.l.bf16 %v887
  %v904 = vunpack.c.l.bf16 %v888
  %v905 = vunpack.c.l.bf16 %v889
  %v906 = vunpack.c.l.bf16 %v890
  %v907 = vunpack.c.l.bf16 %v891
  %v908 = vunpack.c.l.bf16 %v892
  %v909 = vmax.f32 %v815, 0.0
  %v910 = vmax.f32 %v818, 0.0
  %v911 = vmax.f32 %v823, 0.0
  %v912 = vmax.f32 %v826, 0.0
  %v913 = vmax.f32 %v831, 0.0
  %v914 = vmax.f32 %v834, 0.0
  %v915 = vmax.f32 %v839, 0.0
  %v916 = vmax.f32 %v842, 0.0
  %v917 = vmax.f32 %v847, 0.0
  %v918 = vmax.f32 %v850, 0.0
  %v919 = vmax.f32 %v855, 0.0
  %v920 = vmax.f32 %v858, 0.0
  %v921 = vmax.f32 %v863, 0.0
  %v922 = vmax.f32 %v866, 0.0
  %v923 = vmax.f32 %v871, 0.0
  %v924 = vmax.f32 %v874, 0.0
  %v925 = vadd.f32 %v909, %v893
  %v926 = vadd.f32 %v910, %v894
  %v927 = vadd.f32 %v911, %v895
  %v928 = vadd.f32 %v912, %v896
  %v929 = vadd.f32 %v913, %v897
  %v930 = vadd.f32 %v914, %v898
  %v931 = vadd.f32 %v915, %v899
  %v932 = vadd.f32 %v916, %v900
  %v933 = vadd.f32 %v917, %v901
  %v934 = vadd.f32 %v918, %v902
  %v935 = vadd.f32 %v919, %v903
  %v936 = vadd.f32 %v920, %v904
  %v937 = vadd.f32 %v921, %v905
  %v938 = vadd.f32 %v922, %v906
  %v939 = vadd.f32 %v923, %v907
  %v940 = vadd.f32 %v924, %v908
  %v941 = vpack.c.bf16 %v926, %v925
  %v942 = vpack.c.bf16 %v928, %v927
  %v943 = vpack.c.bf16 %v930, %v929
  %v944 = vpack.c.bf16 %v932, %v931
  %v945 = vpack.c.bf16 %v934, %v933
  %v946 = vpack.c.bf16 %v936, %v935
  %v947 = vpack.c.bf16 %v938, %v937
  %v948 = vpack.c.bf16 %v940, %v939
  %v957 = vunpack.c.l.b16 %v941
  %v958 = vunpack.c.h.b16 %v941
  %v959 = vunpack.c.l.b16 %v942
  %v960 = vunpack.c.h.b16 %v942
  %v961 = vunpack.c.l.b16 %v943
  %v962 = vunpack.c.h.b16 %v943
  %v963 = vunpack.c.l.b16 %v944
  %v964 = vunpack.c.h.b16 %v944
  %v965 = vunpack.c.l.b16 %v945
  %v966 = vunpack.c.h.b16 %v945
  %v967 = vunpack.c.l.b16 %v946
  %v968 = vunpack.c.h.b16 %v946
  %v969 = vunpack.c.l.b16 %v947
  %v970 = vunpack.c.h.b16 %v947
  %v971 = vunpack.c.l.b16 %v948
  %v972 = vunpack.c.h.b16 %v948
  %v973 = vpack.c.b16 %v957, %v957
  %v974 = vpack.c.b16 %v958, %v958
  %v975 = vpack.c.b16 %v959, %v959
  %v976 = vpack.c.b16 %v960, %v960
  %v977 = vpack.c.b16 %v961, %v961
  %v978 = vpack.c.b16 %v962, %v962
  %v979 = vpack.c.b16 %v963, %v963
  %v980 = vpack.c.b16 %v964, %v964
  %v981 = vpack.c.b16 %v965, %v965
  %v982 = vpack.c.b16 %v966, %v966
  %v983 = vpack.c.b16 %v967, %v967
  %v984 = vpack.c.b16 %v968, %v968
  %v985 = vpack.c.b16 %v969, %v969
  %v986 = vpack.c.b16 %v970, %v970
  %v987 = vpack.c.b16 %v971, %v971
  %v988 = vpack.c.b16 %v972, %v972
  %1005 = vst [vmem:[%s4] sm:$0xf] %v973
  %1006 = vst [vmem:[%s4 + $0x4] sm:$0xf] %v974
  %1007 = vst [vmem:[%s4 + $0x8] sm:$0xf] %v975
  %1008 = vst [vmem:[%s4 + $0xc] sm:$0xf] %v976
  %1009 = vst [vmem:[%s4 + $0x10] sm:$0xf] %v977
  %1010 = vst [vmem:[%s4 + $0x14] sm:$0xf] %v978
  %1011 = vst [vmem:[%s4 + $0x18] sm:$0xf] %v979
  %1012 = vst [vmem:[%s4 + $0x1c] sm:$0xf] %v980
  %1013 = vst [vmem:[%s4 + $0x20] sm:$0xf] %v981
  %1014 = vst [vmem:[%s4 + $0x24] sm:$0xf] %v982
  %1015 = vst [vmem:[%s4 + $0x28] sm:$0xf] %v983
  %1016 = vst [vmem:[%s4 + $0x2c] sm:$0xf] %v984
  %1017 = vst [vmem:[%s4 + $0x30] sm:$0xf] %v985
  %1018 = vst [vmem:[%s4 + $0x34] sm:$0xf] %v986
  %1019 = vst [vmem:[%s4 + $0x38] sm:$0xf] %v987
  %1020 = vst [vmem:[%s4 + $0x3c] sm:$0xf] %v988
  // Predicated region
  $region18: #{simple_generator.45} parent=0 // pred_check
    _
  $region19: #{simple_generator.45} parent=0 // pred_check_branch
    %1022 = sbr.rel (0) target = $region21
  $region20: #{simple_generator.45} parent=0 // pred_region
    _
  $region21: #{simple_generator.45} parent=0 // pred_fallthru
    _
  // Predicated region
  $region22: #{simple_generator.45} parent=0 // pred_check
    _
  $region23: #{simple_generator.45} parent=0 // pred_check_branch
    %1024 = sbr.rel (0) target = $region25
  $region24: #{simple_generator.45} parent=0 // pred_region
    _
  $region25: #{simple_generator.45} parent=0 // pred_fallthru
    _

// kernel: simple_generator.47
$region0: #{simple_generator.47}
  #allocation0 [shape = 'u32[]', space=smem, size = 0x4, offset = 0x4, fixed_abs, tag = 'smem constant byte address 0x4 - core index']
  #allocation1 [shape = 'u32[144,128]{1,0:T(1,128)}', space=vmem, size = 0x12000, scoped, tag = 'internal scratch']
  %s0 = inlined_call_operand.vmem [shape: bf16[512,288], index: 0, kind: input, shape index: {}]
  %s1 = inlined_call_operand.vmem [shape: bf16[288,128], index: 1, kind: input, shape index: {}]
  %s2 = inlined_call_operand.vmem [shape: f32[1,128], index: 2, kind: input, shape index: {}]
  %s3 = inlined_call_operand.vmem [shape: bf16[512,128], index: 3, kind: output, shape index: {}]
  %s4 = sld [smem:[#allocation0]]
  $region45: #{simple_generator.47} parent=0
    _
  %s6 = ssub.s32 1, %s4
  %s7 = scalar_select 0, %s6, %s4
  loop: start=0, step=1, limit=4
  $region2: #{simple_generator.47} parent=0 // loop_pre_header
    _
  $region3: #{simple_generator.47} parent=0 // loop_header
    %s9 = sphi 0, %s13
    %p10 = scmp.ge.s32.totalorder %s9, 4
    %s19 = sphi 0, %s21
    %s22 = sphi 0, %s19
    %s23 = sphi 0, %s22
    %s39 = sphi 0, %s23
    %s43 = sphi 0, %s43
    %s45 = sphi 0, %s43
    %s46 = sphi 0, %s45
    %s60 = sphi 0, %s46
    %s64 = sphi 0, %s64
    %s66 = sphi 0, %s64
    %s67 = sphi 0, %s66
    %s81 = sphi 0, %s67
    %s87 = sphi 0, %s89
    %s90 = sphi 0, %s87
    %s91 = sphi 0, %s90
    %s107 = sphi 0, %s91
  $region4: #{simple_generator.47} parent=0 // loop_header_branch
    %12 = sbr.rel (%p10) target = $region8
  $region5: #{simple_generator.47} parent=0 // loop_body
    %s14 = ssub.s32 %s9, 1
    %s15 = ssub.s32 %s9, 2
    %s16 = sadd.s32 %s9, 1
    %s17 = ssub.s32 %s9, %s16
    %p18 = scmp.eq.s32.totalorder %s17, 0
    %s20 = sadd.s32 %s19, 1
    %s21 = scalar_select %p18, %s19, %s20
    %p24 = pneg %p18
    %p25 = scmp.eq.s32.totalorder %s9, 1
    %p26 = por %p24, %p25
    %p27 = scmp.ne.s32.totalorder %s19, %s22
    %p28 = scmp.eq.s32.totalorder %s9, 0
    %p29 = por %p27, %p28
    %p30 = scmp.ne.s32.totalorder %s19, %s22
    %p31 = scmp.eq.s32.totalorder %s14, 1
    %p32 = por %p30, %p31
    %p33 = scmp.ne.s32.totalorder %s22, %s23
    %p34 = scmp.eq.s32.totalorder %s14, 0
    %p35 = por %p33, %p34
    %p36 = scmp.ne.s32.totalorder %s22, %s23
    %p37 = scmp.eq.s32.totalorder %s15, 1
    %p38 = por %p36, %p37
    %p40 = scmp.ne.s32.totalorder %s23, %s39
    %p41 = scmp.eq.s32.totalorder %s15, 0
    %p42 = por %p40, %p41
    %s44 = sadd.s32 %s43, 1
    %p47 = scmp.eq.s32.totalorder %s9, 1
    %p48 = scmp.ne.s32.totalorder %s43, %s45
    %p49 = scmp.eq.s32.totalorder %s9, 0
    %p50 = por %p48, %p49
    %p51 = scmp.ne.s32.totalorder %s43, %s45
    %p52 = scmp.eq.s32.totalorder %s14, 1
    %p53 = por %p51, %p52
    %p54 = scmp.ne.s32.totalorder %s45, %s46
    %p55 = scmp.eq.s32.totalorder %s14, 0
    %p56 = por %p54, %p55
    %p57 = scmp.ne.s32.totalorder %s45, %s46
    %p58 = scmp.eq.s32.totalorder %s15, 1
    %p59 = por %p57, %p58
    %p61 = scmp.ne.s32.totalorder %s46, %s60
    %p62 = scmp.eq.s32.totalorder %s15, 0
    %p63 = por %p61, %p62
    %s65 = sadd.s32 %s64, 1
    %p68 = scmp.eq.s32.totalorder %s9, 1
    %p69 = scmp.ne.s32.totalorder %s64, %s66
    %p70 = scmp.eq.s32.totalorder %s9, 0
    %p71 = por %p69, %p70
    %p72 = scmp.ne.s32.totalorder %s64, %s66
    %p73 = scmp.eq.s32.totalorder %s14, 1
    %p74 = por %p72, %p73
    %p75 = scmp.ne.s32.totalorder %s66, %s67
    %p76 = scmp.eq.s32.totalorder %s14, 0
    %p77 = por %p75, %p76
    %p78 = scmp.ne.s32.totalorder %s66, %s67
    %p79 = scmp.eq.s32.totalorder %s15, 1
    %p80 = por %p78, %p79
    %p82 = scmp.ne.s32.totalorder %s67, %s81
    %p83 = scmp.eq.s32.totalorder %s15, 0
    %p84 = por %p82, %p83
    %s85 = ssub.s32 %s9, %s16
    %p86 = scmp.eq.s32.totalorder %s85, 0
    %s88 = sadd.s32 %s87, 1
    %s89 = scalar_select %p86, %s87, %s88
    %p92 = pneg %p86
    %p93 = scmp.eq.s32.totalorder %s9, 1
    %p94 = por %p92, %p93
    %p95 = scmp.ne.s32.totalorder %s87, %s90
    %p96 = scmp.eq.s32.totalorder %s9, 0
    %p97 = por %p95, %p96
    %p98 = scmp.ne.s32.totalorder %s87, %s90
    %p99 = scmp.eq.s32.totalorder %s14, 1
    %p100 = por %p98, %p99
    %p101 = scmp.ne.s32.totalorder %s90, %s91
    %p102 = scmp.eq.s32.totalorder %s14, 0
    %p103 = por %p101, %p102
    %p104 = scmp.ne.s32.totalorder %s90, %s91
    %p105 = scmp.eq.s32.totalorder %s15, 1
    %p106 = por %p104, %p105
    %p108 = scmp.ne.s32.totalorder %s91, %s107
    %p109 = scmp.eq.s32.totalorder %s15, 0
    %p110 = por %p108, %p109
    %p111 = scmp.le.s32.totalorder 1, %s9
    %p112 = scmp.lt.s32.totalorder %s9, 3
    %p113 = pnand %p111, %p112
    %p114 = pneg %p113
    // Predicated region
    $region9: #{simple_generator.47} parent=5 // pred_check
      _
    $region10: #{simple_generator.47} parent=5 // pred_check_branch
      %116 = sbr.rel (%p113) target = $region12
    $region11: #{simple_generator.47} parent=5 // pred_region
      %s117 = ssub.s32 %s9, 1
      // Predicated region
      $region13: #{simple_generator.47} parent=11 // pred_check
        %p118 = pneg %p56
      $region14: #{simple_generator.47} parent=11 // pred_check_branch
        %120 = sbr.rel (%p118) target = $region16
      $region15: #{simple_generator.47} parent=11 // pred_region
        _
      $region16: #{simple_generator.47} parent=11 // pred_fallthru
        _
      // Predicated region
      $region17: #{simple_generator.47} parent=11 // pred_check
        %p121 = pneg %p77
      $region18: #{simple_generator.47} parent=11 // pred_check_branch
        %123 = sbr.rel (%p121) target = $region20
      $region19: #{simple_generator.47} parent=11 // pred_region
        _
      $region20: #{simple_generator.47} parent=11 // pred_fallthru
        _
    $region12: #{simple_generator.47} parent=5 // pred_fallthru
      _
    %p124 = scmp.lt.s32.totalorder %s9, 2
    // Predicated region
    $region21: #{simple_generator.47} parent=5 // pred_check
      %p125 = pneg %p124
    $region22: #{simple_generator.47} parent=5 // pred_check_branch
      %127 = sbr.rel (%p125) target = $region24
    $region23: #{simple_generator.47} parent=5 // pred_region
      // Predicated region
      $region25: #{simple_generator.47} parent=23 // pred_check
        %p128 = pneg %p29
      $region26: #{simple_generator.47} parent=23 // pred_check_branch
        %130 = sbr.rel (%p128) target = $region28
      $region27: #{simple_generator.47} parent=23 // pred_region
        %s131 = smul.u32 32, %s9
        %p132 = scmp.lt.s32.totalorder %s131, 63
        %s133 = scalar_select %p132, %s131, 63
        %s134 = smul.addr %s133, 3
        %s135 = smul.addr %s134, 4
        %s136 = scalar_lea.vmem %s0, %s135
        %s137 = smul.u32 32, %s9
      $region28: #{simple_generator.47} parent=23 // pred_fallthru
        _
    $region24: #{simple_generator.47} parent=5 // pred_fallthru
      _
    %p138 = scmp.le.s32.totalorder 1, %s9
    %p139 = scmp.lt.s32.totalorder %s9, 3
    %p140 = pnand %p138, %p139
    %p141 = pneg %p140
    // Predicated region
    $region29: #{simple_generator.47} parent=5 // pred_check
      _
    $region30: #{simple_generator.47} parent=5 // pred_check_branch
      %143 = sbr.rel (%p140) target = $region32
    $region31: #{simple_generator.47} parent=5 // pred_region
      %s144 = ssub.s32 %s9, 1
      %s145 = smul.u32 32, %s14
      %p146 = scmp.lt.s32.totalorder %s145, 63
      %s147 = scalar_select %p146, %s145, 63
      %s148 = smul.addr %s147, 3
      %s149 = smul.addr %s148, 4
      %s150 = scalar_lea.vmem %s0, %s149
      %p151 = pneg %p35
      %p152 = pneg %p32
      %p153 = pneg %p56
      %p154 = pneg %p53
      %p155 = pneg %p77
      %p156 = pneg %p74
      %p157 = pneg %p103
      %p158 = pneg %p100
      %s159 = smul.u32 32, %s14
      %p160 = scmp.lt.s32.totalorder %s159, 63
      %s161 = scalar_select %p160, %s159, 63
      %s162 = smul.addr %s161, 4
      %s163 = scalar_lea.vmem %s3, %s162
      %s164 = smul.u32 32, %s14
      %p165 = scmp.lt.s32.totalorder %s164, 63
      %s166 = scalar_select %p165, %s164, 63
      %s167 = smul.addr %s166, 3
      %s168 = smul.addr %s167, 4
      %s169 = scalar_lea.vmem %s0, %s168
      %s170 = smul.u32 32, %s14
      %s171 = smul.u32 32, %s14
      %p172 = scmp.lt.s32.totalorder %s171, 63
      %s173 = scalar_select %p172, %s171, 63
      %s174 = smul.addr %s173, 4
      %s175 = scalar_lea.vmem %s3, %s174
      %s176 = smul.u32 32, %s14
      %v178 = vld [vmem:[%s169] sm:$0xff]
      %v179 = vld [vmem:[%s169 + $0x8] sm:$0xf]
      %v180 = vld [vmem:[%s169 + $0xc] sm:$0xff]
      %v181 = vld [vmem:[%s169 + $0x14] sm:$0xf]
      %v182 = vld [vmem:[%s169 + $0x18] sm:$0xff]
      %v183 = vld [vmem:[%s169 + $0x20] sm:$0xf]
      %v184 = vld [vmem:[%s169 + $0x24] sm:$0xff]
      %v185 = vld [vmem:[%s169 + $0x2c] sm:$0xf]
      %v186 = vld [vmem:[%s169 + $0x30] sm:$0xff]
      %v187 = vld [vmem:[%s169 + $0x38] sm:$0xf]
      %v188 = vld [vmem:[%s169 + $0x3c] sm:$0xff]
      %v189 = vld [vmem:[%s169 + $0x44] sm:$0xf]
      %v190 = vld [vmem:[%s169 + $0x48] sm:$0xff]
      %v191 = vld [vmem:[%s169 + $0x50] sm:$0xf]
      %v192 = vld [vmem:[%s169 + $0x54] sm:$0xff]
      %v193 = vld [vmem:[%s169 + $0x5c] sm:$0xf]
      %v194 = vld [vmem:[%s169 + $0x60] sm:$0xff]
      %v195 = vld [vmem:[%s169 + $0x68] sm:$0xf]
      %v196 = vld [vmem:[%s169 + $0x6c] sm:$0xff]
      %v197 = vld [vmem:[%s169 + $0x74] sm:$0xf]
      %v198 = vld [vmem:[%s169 + $0x78] sm:$0xff]
      %v199 = vld [vmem:[%s169 + $0x80] sm:$0xf]
      %v200 = vld [vmem:[%s169 + $0x84] sm:$0xff]
      %v201 = vld [vmem:[%s169 + $0x8c] sm:$0xf]
      %v202 = vld [vmem:[%s169 + $0x90] sm:$0xff]
      %v203 = vld [vmem:[%s169 + $0x98] sm:$0xf]
      %v204 = vld [vmem:[%s169 + $0x9c] sm:$0xff]
      %v205 = vld [vmem:[%s169 + $0xa4] sm:$0xf]
      %v206 = vld [vmem:[%s169 + $0xa8] sm:$0xff]
      %v207 = vld [vmem:[%s169 + $0xb0] sm:$0xf]
      %v208 = vld [vmem:[%s169 + $0xb4] sm:$0xff]
      %v209 = vld [vmem:[%s169 + $0xbc] sm:$0xf]
      %v210 = vld [vmem:[%s169 + $0xc0] sm:$0xff]
      %v211 = vld [vmem:[%s169 + $0xc8] sm:$0xf]
      %v212 = vld [vmem:[%s169 + $0xcc] sm:$0xff]
      %v213 = vld [vmem:[%s169 + $0xd4] sm:$0xf]
      %v214 = vld [vmem:[%s169 + $0xd8] sm:$0xff]
      %v215 = vld [vmem:[%s169 + $0xe0] sm:$0xf]
      %v216 = vld [vmem:[%s169 + $0xe4] sm:$0xff]
      %v217 = vld [vmem:[%s169 + $0xec] sm:$0xf]
      %v218 = vld [vmem:[%s169 + $0xf0] sm:$0xff]
      %v219 = vld [vmem:[%s169 + $0xf8] sm:$0xf]
      %v220 = vld [vmem:[%s169 + $0xfc] sm:$0xff]
      %v221 = vld [vmem:[%s169 + $0x104] sm:$0xf]
      %v222 = vld [vmem:[%s169 + $0x108] sm:$0xff]
      %v223 = vld [vmem:[%s169 + $0x110] sm:$0xf]
      %v224 = vld [vmem:[%s169 + $0x114] sm:$0xff]
      %v225 = vld [vmem:[%s169 + $0x11c] sm:$0xf]
      %v226 = vld [vmem:[%s169 + $0x120] sm:$0xff]
      %v227 = vld [vmem:[%s169 + $0x128] sm:$0xf]
      %v228 = vld [vmem:[%s169 + $0x12c] sm:$0xff]
      %v229 = vld [vmem:[%s169 + $0x134] sm:$0xf]
      %v230 = vld [vmem:[%s169 + $0x138] sm:$0xff]
      %v231 = vld [vmem:[%s169 + $0x140] sm:$0xf]
      %v232 = vld [vmem:[%s169 + $0x144] sm:$0xff]
      %v233 = vld [vmem:[%s169 + $0x14c] sm:$0xf]
      %v234 = vld [vmem:[%s169 + $0x150] sm:$0xff]
      %v235 = vld [vmem:[%s169 + $0x158] sm:$0xf]
      %v236 = vld [vmem:[%s169 + $0x15c] sm:$0xff]
      %v237 = vld [vmem:[%s169 + $0x164] sm:$0xf]
      %v238 = vld [vmem:[%s169 + $0x168] sm:$0xff]
      %v239 = vld [vmem:[%s169 + $0x170] sm:$0xf]
      %v240 = vld [vmem:[%s169 + $0x174] sm:$0xff]
      %v241 = vld [vmem:[%s169 + $0x17c] sm:$0xf]
      %v242 = vld [vmem:[%s1] sm:$0xf]
      %v243 = vld [vmem:[%s1 + $0x4] sm:$0xf]
      %v244 = vld [vmem:[%s1 + $0x8] sm:$0xf]
      %v245 = vld [vmem:[%s1 + $0xc] sm:$0xf]
      %v246 = vld [vmem:[%s1 + $0x10] sm:$0xf]
      %v247 = vld [vmem:[%s1 + $0x14] sm:$0xf]
      %v248 = vld [vmem:[%s1 + $0x18] sm:$0xf]
      %v249 = vld [vmem:[%s1 + $0x1c] sm:$0xf]
      %v250 = vld [vmem:[%s1 + $0x20] sm:$0xf]
      %v251 = vld [vmem:[%s1 + $0x24] sm:$0xf]
      %v252 = vld [vmem:[%s1 + $0x28] sm:$0xf]
      %v253 = vld [vmem:[%s1 + $0x2c] sm:$0xf]
      %v254 = vld [vmem:[%s1 + $0x30] sm:$0xf]
      %v255 = vld [vmem:[%s1 + $0x34] sm:$0xf]
      %v256 = vld [vmem:[%s1 + $0x38] sm:$0xf]
      %v257 = vld [vmem:[%s1 + $0x3c] sm:$0xf]
      %v258 = vld [vmem:[%s1 + $0x40] sm:$0xf]
      %v259 = vld [vmem:[%s1 + $0x44] sm:$0xf]
      %v260 = vld [vmem:[%s1 + $0x48] sm:$0xf]
      %v261 = vld [vmem:[%s1 + $0x4c] sm:$0xf]
      %v262 = vld [vmem:[%s1 + $0x50] sm:$0xf]
      %v263 = vld [vmem:[%s1 + $0x54] sm:$0xf]
      %v264 = vld [vmem:[%s1 + $0x58] sm:$0xf]
      %v265 = vld [vmem:[%s1 + $0x5c] sm:$0xf]
      %v266 = vld [vmem:[%s1 + $0x60] sm:$0xf]
      %v267 = vld [vmem:[%s1 + $0x64] sm:$0xf]
      %v268 = vld [vmem:[%s1 + $0x68] sm:$0xf]
      %v269 = vld [vmem:[%s1 + $0x6c] sm:$0xf]
      %v270 = vld [vmem:[%s1 + $0x70] sm:$0xf]
      %v271 = vld [vmem:[%s1 + $0x74] sm:$0xf]
      %v272 = vld [vmem:[%s1 + $0x78] sm:$0xf]
      %v273 = vld [vmem:[%s1 + $0x7c] sm:$0xf]
      %v274 = vld [vmem:[%s1 + $0x80] sm:$0xf]
      %v275 = vld [vmem:[%s1 + $0x84] sm:$0xf]
      %v276 = vld [vmem:[%s1 + $0x88] sm:$0xf]
      %v277 = vld [vmem:[%s1 + $0x8c] sm:$0xf]
      %v278 = vld [vmem:[%s2] sm:$0x1]
      %v280 = vlaneseq
      %v281 = vshrl.u32 %v280, 7
      %v282 = vsub.s32 0, %v281
      %v283 = vrot.slane %v278, %v282
      %v349 = vunpack.c.l.b16 %v178
      %v350 = vunpack.c.h.b16 %v178
      %v351 = vunpack.c.l.b16 %v179
      %v352 = vunpack.c.l.b16 %v180
      %v353 = vunpack.c.h.b16 %v180
      %v354 = vunpack.c.l.b16 %v181
      %v355 = vunpack.c.l.b16 %v182
      %v356 = vunpack.c.h.b16 %v182
      %v357 = vunpack.c.l.b16 %v183
      %v358 = vunpack.c.l.b16 %v184
      %v359 = vunpack.c.h.b16 %v184
      %v360 = vunpack.c.l.b16 %v185
      %v361 = vunpack.c.l.b16 %v186
      %v362 = vunpack.c.h.b16 %v186
      %v363 = vunpack.c.l.b16 %v187
      %v364 = vunpack.c.l.b16 %v188
      %v365 = vunpack.c.h.b16 %v188
      %v366 = vunpack.c.l.b16 %v189
      %v367 = vunpack.c.l.b16 %v190
      %v368 = vunpack.c.h.b16 %v190
      %v369 = vunpack.c.l.b16 %v191
      %v370 = vunpack.c.l.b16 %v192
      %v371 = vunpack.c.h.b16 %v192
      %v372 = vunpack.c.l.b16 %v193
      %v373 = vunpack.c.l.b16 %v194
      %v374 = vunpack.c.h.b16 %v194
      %v375 = vunpack.c.l.b16 %v195
      %v376 = vunpack.c.l.b16 %v196
      %v377 = vunpack.c.h.b16 %v196
      %v378 = vunpack.c.l.b16 %v197
      %v379 = vunpack.c.l.b16 %v198
      %v380 = vunpack.c.h.b16 %v198
      %v381 = vunpack.c.l.b16 %v199
      %v382 = vunpack.c.l.b16 %v200
      %v383 = vunpack.c.h.b16 %v200
      %v384 = vunpack.c.l.b16 %v201
      %v385 = vunpack.c.l.b16 %v202
      %v386 = vunpack.c.h.b16 %v202
      %v387 = vunpack.c.l.b16 %v203
      %v388 = vunpack.c.l.b16 %v204
      %v389 = vunpack.c.h.b16 %v204
      %v390 = vunpack.c.l.b16 %v205
      %v391 = vunpack.c.l.b16 %v206
      %v392 = vunpack.c.h.b16 %v206
      %v393 = vunpack.c.l.b16 %v207
      %v394 = vunpack.c.l.b16 %v208
      %v395 = vunpack.c.h.b16 %v208
      %v396 = vunpack.c.l.b16 %v209
      %v397 = vunpack.c.l.b16 %v210
      %v398 = vunpack.c.h.b16 %v210
      %v399 = vunpack.c.l.b16 %v211
      %v400 = vunpack.c.l.b16 %v212
      %v401 = vunpack.c.h.b16 %v212
      %v402 = vunpack.c.l.b16 %v213
      %v403 = vunpack.c.l.b16 %v214
      %v404 = vunpack.c.h.b16 %v214
      %v405 = vunpack.c.l.b16 %v215
      %v406 = vunpack.c.l.b16 %v216
      %v407 = vunpack.c.h.b16 %v216
      %v408 = vunpack.c.l.b16 %v217
      %v409 = vunpack.c.l.b16 %v218
      %v410 = vunpack.c.h.b16 %v218
      %v411 = vunpack.c.l.b16 %v219
      %v412 = vunpack.c.l.b16 %v220
      %v413 = vunpack.c.h.b16 %v220
      %v414 = vunpack.c.l.b16 %v221
      %v415 = vunpack.c.l.b16 %v222
      %v416 = vunpack.c.h.b16 %v222
      %v417 = vunpack.c.l.b16 %v223
      %v418 = vunpack.c.l.b16 %v224
      %v419 = vunpack.c.h.b16 %v224
      %v420 = vunpack.c.l.b16 %v225
      %v421 = vunpack.c.l.b16 %v226
      %v422 = vunpack.c.h.b16 %v226
      %v423 = vunpack.c.l.b16 %v227
      %v424 = vunpack.c.l.b16 %v228
      %v425 = vunpack.c.h.b16 %v228
      %v426 = vunpack.c.l.b16 %v229
      %v427 = vunpack.c.l.b16 %v230
      %v428 = vunpack.c.h.b16 %v230
      %v429 = vunpack.c.l.b16 %v231
      %v430 = vunpack.c.l.b16 %v232
      %v431 = vunpack.c.h.b16 %v232
      %v432 = vunpack.c.l.b16 %v233
      %v433 = vunpack.c.l.b16 %v234
      %v434 = vunpack.c.h.b16 %v234
      %v435 = vunpack.c.l.b16 %v235
      %v436 = vunpack.c.l.b16 %v236
      %v437 = vunpack.c.h.b16 %v236
      %v438 = vunpack.c.l.b16 %v237
      %v439 = vunpack.c.l.b16 %v238
      %v440 = vunpack.c.h.b16 %v238
      %v441 = vunpack.c.l.b16 %v239
      %v442 = vunpack.c.l.b16 %v240
      %v443 = vunpack.c.h.b16 %v240
      %v444 = vunpack.c.l.b16 %v241
      %v445 = vpack.c.b16 %v352, %v349
      %v446 = vpack.c.b16 %v353, %v350
      %v447 = vpack.c.b16 %v354, %v351
      %v448 = vpack.c.b16 %v358, %v355
      %v449 = vpack.c.b16 %v359, %v356
      %v450 = vpack.c.b16 %v360, %v357
      %v451 = vpack.c.b16 %v364, %v361
      %v452 = vpack.c.b16 %v365, %v362
      %v453 = vpack.c.b16 %v366, %v363
      %v454 = vpack.c.b16 %v370, %v367
      %v455 = vpack.c.b16 %v371, %v368
      %v456 = vpack.c.b16 %v372, %v369
      %v457 = vpack.c.b16 %v376, %v373
      %v458 = vpack.c.b16 %v377, %v374
      %v459 = vpack.c.b16 %v378, %v375
      %v460 = vpack.c.b16 %v382, %v379
      %v461 = vpack.c.b16 %v383, %v380
      %v462 = vpack.c.b16 %v384, %v381
      %v463 = vpack.c.b16 %v388, %v385
      %v464 = vpack.c.b16 %v389, %v386
      %v465 = vpack.c.b16 %v390, %v387
      %v466 = vpack.c.b16 %v394, %v391
      %v467 = vpack.c.b16 %v395, %v392
      %v468 = vpack.c.b16 %v396, %v393
      %v469 = vpack.c.b16 %v400, %v397
      %v470 = vpack.c.b16 %v401, %v398
      %v471 = vpack.c.b16 %v402, %v399
      %v472 = vpack.c.b16 %v406, %v403
      %v473 = vpack.c.b16 %v407, %v404
      %v474 = vpack.c.b16 %v408, %v405
      %v475 = vpack.c.b16 %v412, %v409
      %v476 = vpack.c.b16 %v413, %v410
      %v477 = vpack.c.b16 %v414, %v411
      %v478 = vpack.c.b16 %v418, %v415
      %v479 = vpack.c.b16 %v419, %v416
      %v480 = vpack.c.b16 %v420, %v417
      %v481 = vpack.c.b16 %v424, %v421
      %v482 = vpack.c.b16 %v425, %v422
      %v483 = vpack.c.b16 %v426, %v423
      %v484 = vpack.c.b16 %v430, %v427
      %v485 = vpack.c.b16 %v431, %v428
      %v486 = vpack.c.b16 %v432, %v429
      %v487 = vpack.c.b16 %v436, %v433
      %v488 = vpack.c.b16 %v437, %v434
      %v489 = vpack.c.b16 %v438, %v435
      %v490 = vpack.c.b16 %v442, %v439
      %v491 = vpack.c.b16 %v443, %v440
      %v492 = vpack.c.b16 %v444, %v441
      %v561 = vunpack.c.l.b16 %v242
      %v562 = vunpack.c.l.b16 %v243
      %v563 = vunpack.c.l.b16 %v244
      %v564 = vunpack.c.l.b16 %v245
      %v565 = vunpack.c.l.b16 %v246
      %v566 = vunpack.c.l.b16 %v247
      %v567 = vunpack.c.l.b16 %v248
      %v568 = vunpack.c.l.b16 %v249
      %v569 = vunpack.c.l.b16 %v250
      %v570 = vunpack.c.l.b16 %v251
      %v571 = vunpack.c.l.b16 %v252
      %v572 = vunpack.c.l.b16 %v253
      %v573 = vunpack.c.l.b16 %v254
      %v574 = vunpack.c.l.b16 %v255
      %v575 = vunpack.c.l.b16 %v256
      %v576 = vunpack.c.l.b16 %v257
      %v577 = vunpack.c.l.b16 %v258
      %v578 = vunpack.c.l.b16 %v259
      %v579 = vunpack.c.l.b16 %v260
      %v580 = vunpack.c.l.b16 %v261
      %v581 = vunpack.c.l.b16 %v262
      %v582 = vunpack.c.l.b16 %v263
      %v583 = vunpack.c.l.b16 %v264
      %v584 = vunpack.c.l.b16 %v265
      %v585 = vunpack.c.l.b16 %v266
      %v586 = vunpack.c.l.b16 %v267
      %v587 = vunpack.c.l.b16 %v268
      %v588 = vunpack.c.l.b16 %v269
      %v589 = vunpack.c.l.b16 %v270
      %v590 = vunpack.c.l.b16 %v271
      %v591 = vunpack.c.l.b16 %v272
      %v592 = vunpack.c.l.b16 %v273
      %v593 = vunpack.c.l.b16 %v274
      %v594 = vunpack.c.l.b16 %v275
      %v595 = vunpack.c.l.b16 %v276
      %v596 = vunpack.c.l.b16 %v277
      %v597 = vpack.c.b16 %v562, %v561
      %v598 = vpack.c.b16 %v564, %v563
      %v599 = vpack.c.b16 %v566, %v565
      %v600 = vpack.c.b16 %v568, %v567
      %v601 = vpack.c.b16 %v570, %v569
      %v602 = vpack.c.b16 %v572, %v571
      %v603 = vpack.c.b16 %v574, %v573
      %v604 = vpack.c.b16 %v576, %v575
      %v605 = vpack.c.b16 %v578, %v577
      %v606 = vpack.c.b16 %v580, %v579
      %v607 = vpack.c.b16 %v582, %v581
      %v608 = vpack.c.b16 %v584, %v583
      %v609 = vpack.c.b16 %v586, %v585
      %v610 = vpack.c.b16 %v588, %v587
      %v611 = vpack.c.b16 %v590, %v589
      %v612 = vpack.c.b16 %v592, %v591
      %v613 = vpack.c.b16 %v594, %v593
      %v614 = vpack.c.b16 %v596, %v595
      %vm633 = vcmask 261120
      %v635 = vsel %vm633, %v447, 0
      %v638 = vsel %vm633, %v450, 0
      %v641 = vsel %vm633, %v453, 0
      %v644 = vsel %vm633, %v456, 0
      %v647 = vsel %vm633, %v459, 0
      %v650 = vsel %vm633, %v462, 0
      %v653 = vsel %vm633, %v465, 0
      %v656 = vsel %vm633, %v468, 0
      %v659 = vsel %vm633, %v471, 0
      %v662 = vsel %vm633, %v474, 0
      %v665 = vsel %vm633, %v477, 0
      %v668 = vsel %vm633, %v480, 0
      %v671 = vsel %vm633, %v483, 0
      %v674 = vsel %vm633, %v486, 0
      %v677 = vsel %vm633, %v489, 0
      %v680 = vsel %vm633, %v492, 0
      %682 = vmatprep.subr.bf16.mxu0 0
      %683 = vmatpush1.bf16.msra.mxu0 %v597
      %684 = vmatprep.subr.bf16.mxu0 0
      %685 = vmatpush1.bf16.msra.mxu0 %v598
      %686 = vmatprep.subr.bf16.mxu0 0
      %687 = vmatpush1.bf16.msra.mxu0 %v599
      %688 = vmatprep.subr.bf16.mxu0 0
      %689 = vmatpush1.bf16.msra.mxu0 %v600
      %690 = vmatprep.subr.bf16.mxu0 0
      %691 = vmatpush1.bf16.msra.mxu0 %v601
      %692 = vmatprep.subr.bf16.mxu0 0
      %693 = vmatpush1.bf16.msra.mxu0 %v602
      %694 = vmatprep.subr.bf16.mxu0 0
      %695 = vmatpush1.bf16.msra.mxu0 %v603
      %696 = vmatprep.subr.bf16.mxu0 0
      %697 = vmatpush1.bf16.msra.mxu0 %v604
      %698 = vmatprep.subr.bf16.mxu0 0
      %699 = vmatpush1.bf16.msra.mxu0 %v605
      %700 = vmatprep.subr.bf16.mxu0 0
      %701 = vmatpush1.bf16.msra.mxu0 %v606
      %702 = vmatprep.subr.bf16.mxu0 0
      %703 = vmatpush1.bf16.msra.mxu0 %v607
      %704 = vmatprep.subr.bf16.mxu0 0
      %705 = vmatpush1.bf16.msra.mxu0 %v608
      %706 = vmatprep.subr.bf16.mxu0 0
      %707 = vmatpush1.bf16.msra.mxu0 %v609
      %708 = vmatprep.subr.bf16.mxu0 0
      %709 = vmatpush1.bf16.msra.mxu0 %v610
      %710 = vmatprep.subr.bf16.mxu0 0
      %711 = vmatpush1.bf16.msra.mxu0 %v611
      %712 = vmatprep.subr.bf16.mxu0 0
      %713 = vmatpush1.bf16.msra.mxu0 %v612
      %714 = vmatprep.mubr.bf16.mxu0 %v446
      %715 = vmatmul.mubr.bf16.gmra.mrb[0].mxu0 %v445
      %v716 = vpop.f32.mrb[0].mxu0
      %v717 = vadd.f32 %v283, %v716
      %v718 = vpop.f32.mrb[0].mxu0
      %v719 = vpop.f32.mrb[0].mxu0
      %v720 = vadd.f32 %v283, %v719
      %v721 = vpop.f32.mrb[0].mxu0
      %722 = vmatprep.mubr.bf16.mxu0 %v449
      %723 = vmatmul.mubr.bf16.gmra.mrb[0].mxu0 %v448
      %v724 = vpop.f32.mrb[0].mxu0
      %v725 = vadd.f32 %v283, %v724
      %v726 = vpop.f32.mrb[0].mxu0
      %v727 = vpop.f32.mrb[0].mxu0
      %v728 = vadd.f32 %v283, %v727
      %v729 = vpop.f32.mrb[0].mxu0
      %730 = vmatprep.mubr.bf16.mxu0 %v452
      %731 = vmatmul.mubr.bf16.gmra.mrb[0].mxu0 %v451
      %v732 = vpop.f32.mrb[0].mxu0
      %v733 = vadd.f32 %v283, %v732
      %v734 = vpop.f32.mrb[0].mxu0
      %v735 = vpop.f32.mrb[0].mxu0
      %v736 = vadd.f32 %v283, %v735
      %v737 = vpop.f32.mrb[0].mxu0
      %738 = vmatprep.mubr.bf16.mxu0 %v455
      %739 = vmatmul.mubr.bf16.gmra.mrb[0].mxu0 %v454
      %v740 = vpop.f32.mrb[0].mxu0
      %v741 = vadd.f32 %v283, %v740
      %v742 = vpop.f32.mrb[0].mxu0
      %v743 = vpop.f32.mrb[0].mxu0
      %v744 = vadd.f32 %v283, %v743
      %v745 = vpop.f32.mrb[0].mxu0
      %746 = vmatprep.mubr.bf16.mxu0 %v458
      %747 = vmatmul.mubr.bf16.gmra.mrb[0].mxu0 %v457
      %v748 = vpop.f32.mrb[0].mxu0
      %v749 = vadd.f32 %v283, %v748
      %v750 = vpop.f32.mrb[0].mxu0
      %v751 = vpop.f32.mrb[0].mxu0
      %v752 = vadd.f32 %v283, %v751
      %v753 = vpop.f32.mrb[0].mxu0
      %754 = vmatprep.mubr.bf16.mxu0 %v461
      %755 = vmatmul.mubr.bf16.gmra.mrb[0].mxu0 %v460
      %v756 = vpop.f32.mrb[0].mxu0
      %v757 = vadd.f32 %v283, %v756
      %v758 = vpop.f32.mrb[0].mxu0
      %v759 = vpop.f32.mrb[0].mxu0
      %v760 = vadd.f32 %v283, %v759
      %v761 = vpop.f32.mrb[0].mxu0
      %762 = vmatprep.mubr.bf16.mxu0 %v464
      %763 = vmatmul.mubr.bf16.gmra.mrb[0].mxu0 %v463
      %v764 = vpop.f32.mrb[0].mxu0
      %v765 = vadd.f32 %v283, %v764
      %v766 = vpop.f32.mrb[0].mxu0
      %v767 = vpop.f32.mrb[0].mxu0
      %v768 = vadd.f32 %v283, %v767
      %v769 = vpop.f32.mrb[0].mxu0
      %770 = vmatprep.mubr.bf16.mxu0 %v467
      %771 = vmatmul.mubr.bf16.gmra.mrb[0].mxu0 %v466
      %v772 = vpop.f32.mrb[0].mxu0
      %v773 = vadd.f32 %v283, %v772
      %v774 = vpop.f32.mrb[0].mxu0
      %v775 = vpop.f32.mrb[0].mxu0
      %v776 = vadd.f32 %v283, %v775
      %v777 = vpop.f32.mrb[0].mxu0
      %778 = vmatprep.mubr.bf16.mxu0 %v470
      %779 = vmatmul.mubr.bf16.gmra.mrb[0].mxu0 %v469
      %v780 = vpop.f32.mrb[0].mxu0
      %v781 = vadd.f32 %v283, %v780
      %v782 = vpop.f32.mrb[0].mxu0
      %v783 = vpop.f32.mrb[0].mxu0
      %v784 = vadd.f32 %v283, %v783
      %v785 = vpop.f32.mrb[0].mxu0
      %786 = vmatprep.mubr.bf16.mxu0 %v473
      %787 = vmatmul.mubr.bf16.gmra.mrb[0].mxu0 %v472
      %v788 = vpop.f32.mrb[0].mxu0
      %v789 = vadd.f32 %v283, %v788
      %v790 = vpop.f32.mrb[0].mxu0
      %v791 = vpop.f32.mrb[0].mxu0
      %v792 = vadd.f32 %v283, %v791
      %v793 = vpop.f32.mrb[0].mxu0
      %794 = vmatprep.mubr.bf16.mxu0 %v476
      %795 = vmatmul.mubr.bf16.gmra.mrb[0].mxu0 %v475
      %v796 = vpop.f32.mrb[0].mxu0
      %v797 = vadd.f32 %v283, %v796
      %v798 = vpop.f32.mrb[0].mxu0
      %v799 = vpop.f32.mrb[0].mxu0
      %v800 = vadd.f32 %v283, %v799
      %v801 = vpop.f32.mrb[0].mxu0
      %802 = vmatprep.mubr.bf16.mxu0 %v479
      %803 = vmatmul.mubr.bf16.gmra.mrb[0].mxu0 %v478
      %v804 = vpop.f32.mrb[0].mxu0
      %v805 = vadd.f32 %v283, %v804
      %v806 = vpop.f32.mrb[0].mxu0
      %v807 = vpop.f32.mrb[0].mxu0
      %v808 = vadd.f32 %v283, %v807
      %v809 = vpop.f32.mrb[0].mxu0
      %810 = vmatprep.mubr.bf16.mxu0 %v482
      %811 = vmatmul.mubr.bf16.gmra.mrb[0].mxu0 %v481
      %v812 = vpop.f32.mrb[0].mxu0
      %v813 = vadd.f32 %v283, %v812
      %v814 = vpop.f32.mrb[0].mxu0
      %v815 = vpop.f32.mrb[0].mxu0
      %v816 = vadd.f32 %v283, %v815
      %v817 = vpop.f32.mrb[0].mxu0
      %818 = vmatprep.mubr.bf16.mxu0 %v485
      %819 = vmatmul.mubr.bf16.gmra.mrb[0].mxu0 %v484
      %v820 = vpop.f32.mrb[0].mxu0
      %v821 = vadd.f32 %v283, %v820
      %v822 = vpop.f32.mrb[0].mxu0
      %v823 = vpop.f32.mrb[0].mxu0
      %v824 = vadd.f32 %v283, %v823
      %v825 = vpop.f32.mrb[0].mxu0
      %826 = vmatprep.mubr.bf16.mxu0 %v488
      %827 = vmatmul.mubr.bf16.gmra.mrb[0].mxu0 %v487
      %v828 = vpop.f32.mrb[0].mxu0
      %v829 = vadd.f32 %v283, %v828
      %v830 = vpop.f32.mrb[0].mxu0
      %v831 = vpop.f32.mrb[0].mxu0
      %v832 = vadd.f32 %v283, %v831
      %v833 = vpop.f32.mrb[0].mxu0
      %834 = vmatprep.mubr.bf16.mxu0 %v491
      %835 = vmatmul.mubr.bf16.gmra.mrb[0].mxu0 %v490
      %v836 = vpop.f32.mrb[0].mxu0
      %v837 = vadd.f32 %v283, %v836
      %v838 = vpop.f32.mrb[0].mxu0
      %v839 = vpop.f32.mrb[0].mxu0
      %v840 = vadd.f32 %v283, %v839
      %v841 = vpop.f32.mrb[0].mxu0
      %842 = vdwg.mxu0
      %843 = vmatprep.subr.bf16.mxu0 0
      %844 = vmatpush1.bf16.msra.mxu0 %v613
      %845 = vmatprep.subr.bf16.mxu0 0
      %846 = vmatpush1.bf16.msra.mxu0 %v614
      %847 = vmatprep.subr.bf16.mxu0 0
      %848 = vmatpush1.bf16.msra.mxu0 0
      %849 = vmatprep.subr.bf16.mxu0 0
      %850 = vmatpush1.bf16.msra.mxu0 0
      %851 = vmatprep.subr.bf16.mxu0 0
      %852 = vmatpush1.bf16.msra.mxu0 0
      %853 = vmatprep.subr.bf16.mxu0 0
      %854 = vmatpush1.bf16.msra.mxu0 0
      %855 = vmatprep.subr.bf16.mxu0 0
      %856 = vmatpush1.bf16.msra.mxu0 0
      %857 = vmatprep.subr.bf16.mxu0 0
      %858 = vmatpush1.bf16.msra.mxu0 0
      %859 = vmatprep.subr.bf16.mxu0 0
      %860 = vmatpush1.bf16.msra.mxu0 0
      %861 = vmatprep.subr.bf16.mxu0 0
      %862 = vmatpush1.bf16.msra.mxu0 0
      %863 = vmatprep.subr.bf16.mxu0 0
      %864 = vmatpush1.bf16.msra.mxu0 0
      %865 = vmatprep.subr.bf16.mxu0 0
      %866 = vmatpush1.bf16.msra.mxu0 0
      %867 = vmatprep.subr.bf16.mxu0 0
      %868 = vmatpush1.bf16.msra.mxu0 0
      %869 = vmatprep.subr.bf16.mxu0 0
      %870 = vmatpush1.bf16.msra.mxu0 0
      %871 = vmatprep.subr.bf16.mxu0 0
      %872 = vmatpush1.bf16.msra.mxu0 0
      %873 = vmatprep.subr.bf16.mxu0 0
      %874 = vmatpush1.bf16.msra.mxu0 0
      %875 = vmatprep.mubr.bf16.mxu0 0
      %876 = vmatmul.mubr.bf16.gmra.mrb[0].mxu0 %v635
      %v877 = vpop.f32.mrb[0].mxu0
      %v878 = vadd.f32 %v717, %v877
      %v879 = vpop.f32.mrb[0].mxu0
      %v880 = vpop.f32.mrb[0].mxu0
      %v881 = vadd.f32 %v720, %v880
      %v882 = vpop.f32.mrb[0].mxu0
      %883 = vmatprep.mubr.bf16.mxu0 0
      %884 = vmatmul.mubr.bf16.gmra.mrb[0].mxu0 %v638
      %v885 = vpop.f32.mrb[0].mxu0
      %v886 = vadd.f32 %v725, %v885
      %v887 = vpop.f32.mrb[0].mxu0
      %v888 = vpop.f32.mrb[0].mxu0
      %v889 = vadd.f32 %v728, %v888
      %v890 = vpop.f32.mrb[0].mxu0
      %891 = vmatprep.mubr.bf16.mxu0 0
      %892 = vmatmul.mubr.bf16.gmra.mrb[0].mxu0 %v641
      %v893 = vpop.f32.mrb[0].mxu0
      %v894 = vadd.f32 %v733, %v893
      %v895 = vpop.f32.mrb[0].mxu0
      %v896 = vpop.f32.mrb[0].mxu0
      %v897 = vadd.f32 %v736, %v896
      %v898 = vpop.f32.mrb[0].mxu0
      %899 = vmatprep.mubr.bf16.mxu0 0
      %900 = vmatmul.mubr.bf16.gmra.mrb[0].mxu0 %v644
      %v901 = vpop.f32.mrb[0].mxu0
      %v902 = vadd.f32 %v741, %v901
      %v903 = vpop.f32.mrb[0].mxu0
      %v904 = vpop.f32.mrb[0].mxu0
      %v905 = vadd.f32 %v744, %v904
      %v906 = vpop.f32.mrb[0].mxu0
      %907 = vmatprep.mubr.bf16.mxu0 0
      %908 = vmatmul.mubr.bf16.gmra.mrb[0].mxu0 %v647
      %v909 = vpop.f32.mrb[0].mxu0
      %v910 = vadd.f32 %v749, %v909
      %v911 = vpop.f32.mrb[0].mxu0
      %v912 = vpop.f32.mrb[0].mxu0
      %v913 = vadd.f32 %v752, %v912
      %v914 = vpop.f32.mrb[0].mxu0
      %915 = vmatprep.mubr.bf16.mxu0 0
      %916 = vmatmul.mubr.bf16.gmra.mrb[0].mxu0 %v650
      %v917 = vpop.f32.mrb[0].mxu0
      %v918 = vadd.f32 %v757, %v917
      %v919 = vpop.f32.mrb[0].mxu0
      %v920 = vpop.f32.mrb[0].mxu0
      %v921 = vadd.f32 %v760, %v920
      %v922 = vpop.f32.mrb[0].mxu0
      %923 = vmatprep.mubr.bf16.mxu0 0
      %924 = vmatmul.mubr.bf16.gmra.mrb[0].mxu0 %v653
      %v925 = vpop.f32.mrb[0].mxu0
      %v926 = vadd.f32 %v765, %v925
      %v927 = vpop.f32.mrb[0].mxu0
      %v928 = vpop.f32.mrb[0].mxu0
      %v929 = vadd.f32 %v768, %v928
      %v930 = vpop.f32.mrb[0].mxu0
      %931 = vmatprep.mubr.bf16.mxu0 0
      %932 = vmatmul.mubr.bf16.gmra.mrb[0].mxu0 %v656
      %v933 = vpop.f32.mrb[0].mxu0
      %v934 = vadd.f32 %v773, %v933
      %v935 = vpop.f32.mrb[0].mxu0
      %v936 = vpop.f32.mrb[0].mxu0
      %v937 = vadd.f32 %v776, %v936
      %v938 = vpop.f32.mrb[0].mxu0
      %939 = vmatprep.mubr.bf16.mxu0 0
      %940 = vmatmul.mubr.bf16.gmra.mrb[0].mxu0 %v659
      %v941 = vpop.f32.mrb[0].mxu0
      %v942 = vadd.f32 %v781, %v941
      %v943 = vpop.f32.mrb[0].mxu0
      %v944 = vpop.f32.mrb[0].mxu0
      %v945 = vadd.f32 %v784, %v944
      %v946 = vpop.f32.mrb[0].mxu0
      %947 = vmatprep.mubr.bf16.mxu0 0
      %948 = vmatmul.mubr.bf16.gmra.mrb[0].mxu0 %v662
      %v949 = vpop.f32.mrb[0].mxu0
      %v950 = vadd.f32 %v789, %v949
      %v951 = vpop.f32.mrb[0].mxu0
      %v952 = vpop.f32.mrb[0].mxu0
      %v953 = vadd.f32 %v792, %v952
      %v954 = vpop.f32.mrb[0].mxu0
      %955 = vmatprep.mubr.bf16.mxu0 0
      %956 = vmatmul.mubr.bf16.gmra.mrb[0].mxu0 %v665
      %v957 = vpop.f32.mrb[0].mxu0
      %v958 = vadd.f32 %v797, %v957
      %v959 = vpop.f32.mrb[0].mxu0
      %v960 = vpop.f32.mrb[0].mxu0
      %v961 = vadd.f32 %v800, %v960
      %v962 = vpop.f32.mrb[0].mxu0
      %963 = vmatprep.mubr.bf16.mxu0 0
      %964 = vmatmul.mubr.bf16.gmra.mrb[0].mxu0 %v668
      %v965 = vpop.f32.mrb[0].mxu0
      %v966 = vadd.f32 %v805, %v965
      %v967 = vpop.f32.mrb[0].mxu0
      %v968 = vpop.f32.mrb[0].mxu0
      %v969 = vadd.f32 %v808, %v968
      %v970 = vpop.f32.mrb[0].mxu0
      %971 = vmatprep.mubr.bf16.mxu0 0
      %972 = vmatmul.mubr.bf16.gmra.mrb[0].mxu0 %v671
      %v973 = vpop.f32.mrb[0].mxu0
      %v974 = vadd.f32 %v813, %v973
      %v975 = vpop.f32.mrb[0].mxu0
      %v976 = vpop.f32.mrb[0].mxu0
      %v977 = vadd.f32 %v816, %v976
      %v978 = vpop.f32.mrb[0].mxu0
      %979 = vmatprep.mubr.bf16.mxu0 0
      %980 = vmatmul.mubr.bf16.gmra.mrb[0].mxu0 %v674
      %v981 = vpop.f32.mrb[0].mxu0
      %v982 = vadd.f32 %v821, %v981
      %v983 = vpop.f32.mrb[0].mxu0
      %v984 = vpop.f32.mrb[0].mxu0
      %v985 = vadd.f32 %v824, %v984
      %v986 = vpop.f32.mrb[0].mxu0
      %987 = vmatprep.mubr.bf16.mxu0 0
      %988 = vmatmul.mubr.bf16.gmra.mrb[0].mxu0 %v677
      %v989 = vpop.f32.mrb[0].mxu0
      %v990 = vadd.f32 %v829, %v989
      %v991 = vpop.f32.mrb[0].mxu0
      %v992 = vpop.f32.mrb[0].mxu0
      %v993 = vadd.f32 %v832, %v992
      %v994 = vpop.f32.mrb[0].mxu0
      %995 = vmatprep.mubr.bf16.mxu0 0
      %996 = vmatmul.mubr.bf16.gmra.mrb[0].mxu0 %v680
      %v997 = vpop.f32.mrb[0].mxu0
      %v998 = vadd.f32 %v837, %v997
      %v999 = vpop.f32.mrb[0].mxu0
      %v1000 = vpop.f32.mrb[0].mxu0
      %v1001 = vadd.f32 %v840, %v1000
      %v1002 = vpop.f32.mrb[0].mxu0
      %1003 = vdwg.mxu0
      %v1004 = vtanh.pop %v878
      %v1005 = vtanh.pop %v881
      %v1006 = vtanh.pop %v886
      %v1007 = vtanh.pop %v889
      %v1008 = vtanh.pop %v894
      %v1009 = vtanh.pop %v897
      %v1010 = vtanh.pop %v902
      %v1011 = vtanh.pop %v905
      %v1012 = vtanh.pop %v910
      %v1013 = vtanh.pop %v913
      %v1014 = vtanh.pop %v918
      %v1015 = vtanh.pop %v921
      %v1016 = vtanh.pop %v926
      %v1017 = vtanh.pop %v929
      %v1018 = vtanh.pop %v934
      %v1019 = vtanh.pop %v937
      %v1020 = vtanh.pop %v942
      %v1021 = vtanh.pop %v945
      %v1022 = vtanh.pop %v950
      %v1023 = vtanh.pop %v953
      %v1024 = vtanh.pop %v958
      %v1025 = vtanh.pop %v961
      %v1026 = vtanh.pop %v966
      %v1027 = vtanh.pop %v969
      %v1028 = vtanh.pop %v974
      %v1029 = vtanh.pop %v977
      %v1030 = vtanh.pop %v982
      %v1031 = vtanh.pop %v985
      %v1032 = vtanh.pop %v990
      %v1033 = vtanh.pop %v993
      %v1034 = vtanh.pop %v998
      %v1035 = vtanh.pop %v1001
      %v1036 = vpack.c.bf16 %v1005, %v1004
      %v1037 = vpack.c.bf16 %v1007, %v1006
      %v1038 = vpack.c.bf16 %v1009, %v1008
      %v1039 = vpack.c.bf16 %v1011, %v1010
      %v1040 = vpack.c.bf16 %v1013, %v1012
      %v1041 = vpack.c.bf16 %v1015, %v1014
      %v1042 = vpack.c.bf16 %v1017, %v1016
      %v1043 = vpack.c.bf16 %v1019, %v1018
      %v1044 = vpack.c.bf16 %v1021, %v1020
      %v1045 = vpack.c.bf16 %v1023, %v1022
      %v1046 = vpack.c.bf16 %v1025, %v1024
      %v1047 = vpack.c.bf16 %v1027, %v1026
      %v1048 = vpack.c.bf16 %v1029, %v1028
      %v1049 = vpack.c.bf16 %v1031, %v1030
      %v1050 = vpack.c.bf16 %v1033, %v1032
      %v1051 = vpack.c.bf16 %v1035, %v1034
      %v1068 = vunpack.c.l.b16 %v1036
      %v1069 = vunpack.c.h.b16 %v1036
      %v1070 = vunpack.c.l.b16 %v1037
      %v1071 = vunpack.c.h.b16 %v1037
      %v1072 = vunpack.c.l.b16 %v1038
      %v1073 = vunpack.c.h.b16 %v1038
      %v1074 = vunpack.c.l.b16 %v1039
      %v1075 = vunpack.c.h.b16 %v1039
      %v1076 = vunpack.c.l.b16 %v1040
      %v1077 = vunpack.c.h.b16 %v1040
      %v1078 = vunpack.c.l.b16 %v1041
      %v1079 = vunpack.c.h.b16 %v1041
      %v1080 = vunpack.c.l.b16 %v1042
      %v1081 = vunpack.c.h.b16 %v1042
      %v1082 = vunpack.c.l.b16 %v1043
      %v1083 = vunpack.c.h.b16 %v1043
      %v1084 = vunpack.c.l.b16 %v1044
      %v1085 = vunpack.c.h.b16 %v1044
      %v1086 = vunpack.c.l.b16 %v1045
      %v1087 = vunpack.c.h.b16 %v1045
      %v1088 = vunpack.c.l.b16 %v1046
      %v1089 = vunpack.c.h.b16 %v1046
      %v1090 = vunpack.c.l.b16 %v1047
      %v1091 = vunpack.c.h.b16 %v1047
      %v1092 = vunpack.c.l.b16 %v1048
      %v1093 = vunpack.c.h.b16 %v1048
      %v1094 = vunpack.c.l.b16 %v1049
      %v1095 = vunpack.c.h.b16 %v1049
      %v1096 = vunpack.c.l.b16 %v1050
      %v1097 = vunpack.c.h.b16 %v1050
      %v1098 = vunpack.c.l.b16 %v1051
      %v1099 = vunpack.c.h.b16 %v1051
      %v1100 = vpack.c.b16 %v1068, %v1068
      %v1101 = vpack.c.b16 %v1069, %v1069
      %v1102 = vpack.c.b16 %v1070, %v1070
      %v1103 = vpack.c.b16 %v1071, %v1071
      %v1104 = vpack.c.b16 %v1072, %v1072
      %v1105 = vpack.c.b16 %v1073, %v1073
      %v1106 = vpack.c.b16 %v1074, %v1074
      %v1107 = vpack.c.b16 %v1075, %v1075
      %v1108 = vpack.c.b16 %v1076, %v1076
      %v1109 = vpack.c.b16 %v1077, %v1077
      %v1110 = vpack.c.b16 %v1078, %v1078
      %v1111 = vpack.c.b16 %v1079, %v1079
      %v1112 = vpack.c.b16 %v1080, %v1080
      %v1113 = vpack.c.b16 %v1081, %v1081
      %v1114 = vpack.c.b16 %v1082, %v1082
      %v1115 = vpack.c.b16 %v1083, %v1083
      %v1116 = vpack.c.b16 %v1084, %v1084
      %v1117 = vpack.c.b16 %v1085, %v1085
      %v1118 = vpack.c.b16 %v1086, %v1086
      %v1119 = vpack.c.b16 %v1087, %v1087
      %v1120 = vpack.c.b16 %v1088, %v1088
      %v1121 = vpack.c.b16 %v1089, %v1089
      %v1122 = vpack.c.b16 %v1090, %v1090
      %v1123 = vpack.c.b16 %v1091, %v1091
      %v1124 = vpack.c.b16 %v1092, %v1092
      %v1125 = vpack.c.b16 %v1093, %v1093
      %v1126 = vpack.c.b16 %v1094, %v1094
      %v1127 = vpack.c.b16 %v1095, %v1095
      %v1128 = vpack.c.b16 %v1096, %v1096
      %v1129 = vpack.c.b16 %v1097, %v1097
      %v1130 = vpack.c.b16 %v1098, %v1098
      %v1131 = vpack.c.b16 %v1099, %v1099
      %1164 = vst [vmem:[%s175] sm:$0xf] %v1100
      %1165 = vst [vmem:[%s175 + $0x4] sm:$0xf] %v1101
      %1166 = vst [vmem:[%s175 + $0x8] sm:$0xf] %v1102
      %1167 = vst [vmem:[%s175 + $0xc] sm:$0xf] %v1103
      %1168 = vst [vmem:[%s175 + $0x10] sm:$0xf] %v1104
      %1169 = vst [vmem:[%s175 + $0x14] sm:$0xf] %v1105
      %1170 = vst [vmem:[%s175 + $0x18] sm:$0xf] %v1106
      %1171 = vst [vmem:[%s175 + $0x1c] sm:$0xf] %v1107
      %1172 = vst [vmem:[%s175 + $0x20] sm:$0xf] %v1108
      %1173 = vst [vmem:[%s175 + $0x24] sm:$0xf] %v1109
      %1174 = vst [vmem:[%s175 + $0x28] sm:$0xf] %v1110
      %1175 = vst [vmem:[%s175 + $0x2c] sm:$0xf] %v1111
      %1176 = vst [vmem:[%s175 + $0x30] sm:$0xf] %v1112
      %1177 = vst [vmem:[%s175 + $0x34] sm:$0xf] %v1113
      %1178 = vst [vmem:[%s175 + $0x38] sm:$0xf] %v1114
      %1179 = vst [vmem:[%s175 + $0x3c] sm:$0xf] %v1115
      %1180 = vst [vmem:[%s175 + $0x40] sm:$0xf] %v1116
      %1181 = vst [vmem:[%s175 + $0x44] sm:$0xf] %v1117
      %1182 = vst [vmem:[%s175 + $0x48] sm:$0xf] %v1118
      %1183 = vst [vmem:[%s175 + $0x4c] sm:$0xf] %v1119
      %1184 = vst [vmem:[%s175 + $0x50] sm:$0xf] %v1120
      %1185 = vst [vmem:[%s175 + $0x54] sm:$0xf] %v1121
      %1186 = vst [vmem:[%s175 + $0x58] sm:$0xf] %v1122
      %1187 = vst [vmem:[%s175 + $0x5c] sm:$0xf] %v1123
      %1188 = vst [vmem:[%s175 + $0x60] sm:$0xf] %v1124
      %1189 = vst [vmem:[%s175 + $0x64] sm:$0xf] %v1125
      %1190 = vst [vmem:[%s175 + $0x68] sm:$0xf] %v1126
      %1191 = vst [vmem:[%s175 + $0x6c] sm:$0xf] %v1127
      %1192 = vst [vmem:[%s175 + $0x70] sm:$0xf] %v1128
      %1193 = vst [vmem:[%s175 + $0x74] sm:$0xf] %v1129
      %1194 = vst [vmem:[%s175 + $0x78] sm:$0xf] %v1130
      %1195 = vst [vmem:[%s175 + $0x7c] sm:$0xf] %v1131
      %s1196 = smul.u32 32, %s14
      %p1197 = scmp.lt.s32.totalorder %s1196, 63
      %s1198 = scalar_select %p1197, %s1196, 63
      %s1199 = smul.addr %s1198, 4
      %s1200 = scalar_lea.vmem %s3, %s1199
      // Predicated region
      $region33: #{simple_generator.47} parent=31 // pred_check
        %p1201 = pneg %p100
      $region34: #{simple_generator.47} parent=31 // pred_check_branch
        %1203 = sbr.rel (%p1201) target = $region36
      $region35: #{simple_generator.47} parent=31 // pred_region
        %s1204 = smul.u32 32, %s14
      $region36: #{simple_generator.47} parent=31 // pred_fallthru
        _
    $region32: #{simple_generator.47} parent=5 // pred_fallthru
      _
    %p1205 = scmp.le.s32.totalorder 2, %s9
    // Predicated region
    $region37: #{simple_generator.47} parent=5 // pred_check
      %p1206 = pneg %p1205
    $region38: #{simple_generator.47} parent=5 // pred_check_branch
      %1208 = sbr.rel (%p1206) target = $region40
    $region39: #{simple_generator.47} parent=5 // pred_region
      %s1209 = ssub.s32 %s9, 2
      // Predicated region
      $region41: #{simple_generator.47} parent=39 // pred_check
        %p1210 = pneg %p106
      $region42: #{simple_generator.47} parent=39 // pred_check_branch
        %1212 = sbr.rel (%p1210) target = $region44
      $region43: #{simple_generator.47} parent=39 // pred_region
        %s1213 = smul.u32 32, %s15
        %p1214 = scmp.lt.s32.totalorder %s1213, 63
        %s1215 = scalar_select %p1214, %s1213, 63
        %s1216 = smul.addr %s1215, 4
        %s1217 = scalar_lea.vmem %s3, %s1216
      $region44: #{simple_generator.47} parent=39 // pred_fallthru
        _
    $region40: #{simple_generator.47} parent=5 // pred_fallthru
      _
  $region6: #{simple_generator.47} parent=0 // loop_footer
    %s13 = sadd.s32 1, %s9
  $region7: #{simple_generator.47} parent=0 // loop_footer_branch
    %8 = sbr.rel target = $region3
  $region8: #{simple_generator.47} parent=0 // loop_exit
    _

</llo_original>
